<compile_context>
chip_gen: v6e
topology: v6e:2x2x1
jax: 0.10.0
libtpu: 0.0.40
codegen_flags: <defaults>
</compile_context>

<pallas_src>
import jax
import jax.numpy as jnp
from jax import lax
from jax.experimental import pallas as pl
from jax.experimental.pallas import tpu as pltpu

VOCAB_SIZE = 512          # V (multiple of 128 -> lane dense)
EMBED_DIM = 128           # D (padded to 128 -> full-K MXU tiles)
CONTEXT_SIZE = 2          # words on each side
C = 2 * CONTEXT_SIZE      # context words per example
BATCH = 1024              # contexts per call (amortizes launch overhead)
TILE_B = 512              # batch tile: grid=(2,) -> 1 tile per v7x TC,
                          # only 2 serial steps on v5e/v6e


def cbow_kernel(idx_ref, emb_ref, wt_ref, b_ref, out_ref):
    # idx_ref : VMEM i32  [TB, C]  -- context word indices for this batch tile
    # emb_ref : VMEM bf16 [V, D]   -- embedding table (resident across the grid)
    # wt_ref  : VMEM bf16 [D, V]   -- linear weight, pre-transposed (resident)
    # b_ref   : VMEM f32  [1, V]   -- linear bias
    # out_ref : VMEM bf16 [TB, V]  -- log-probabilities for this batch tile
    tb, c = idx_ref.shape
    v, d = emb_ref.shape

    # ---- Embedding gather + context sum as a one-hot matmul on the MXU ----
    # counts[b, w] = #times word w appears in context b (0..C).
    # Built entirely in int32, then ONE cast to bf16 (exact: values <= C).
    ids = idx_ref[...]                                           # [TB, C] i32
    vocab = lax.broadcasted_iota(jnp.int32, (tb, v), 1)          # [TB, V] i32
    counts = jnp.zeros((tb, v), dtype=jnp.int32)
    for cc in range(c):                                          # tiny static unroll
        counts = counts + (ids[:, cc:cc + 1] == vocab).astype(jnp.int32)
    counts_bf16 = counts.astype(jnp.bfloat16)                    # single cast

    embeds = jnp.dot(counts_bf16, emb_ref[...],
                     preferred_element_type=jnp.float32)         # [TB, D] f32

    # ---- Linear layer on the MXU (bf16 inputs, f32 accumulation) ----
    logits = jnp.dot(embeds.astype(jnp.bfloat16), wt_ref[...],
                     preferred_element_type=jnp.float32)         # [TB, V] f32
    logits = logits + b_ref[...]

    # ---- Stable log-softmax along vocab (lane) axis, f32 math, bf16 store ----
    m = jnp.max(logits, axis=-1, keepdims=True)
    shifted = logits - m
    lse = jnp.log(jnp.sum(jnp.exp(shifted), axis=-1, keepdims=True))
    out_ref[...] = (shifted - lse).astype(out_ref.dtype)


@jax.jit
def cbow_forward(indices, embedding_bf16, weight_t_bf16, bias):
    """indices: i32 [B, C]; embedding: bf16 [V, D]; weight_t: bf16 [D, V]; bias: f32 [1, V]."""
    b, c = indices.shape
    v, d = embedding_bf16.shape
    nb = b // TILE_B

    cost = pl.CostEstimate(
        flops=2 * b * v * d          # one-hot "gather" matmul
              + 2 * b * d * v        # linear layer
              + 6 * b * v,           # counts build + softmax elementwise
        transcendentals=b * v + b,   # exp + log
        bytes_accessed=(b * c * 4) + (v * d * 2) + (d * v * 2) + (v * 4)
                       + (b * v * 2),
    )

    return pl.pallas_call(
        cbow_kernel,
        out_shape=jax.ShapeDtypeStruct((b, v), jnp.bfloat16),
        grid=(nb,),
        in_specs=[
            pl.BlockSpec((TILE_B, c), lambda i: (i, 0)),   # indices (batch-tiled)
            pl.BlockSpec((v, d), lambda i: (0, 0)),        # embedding table
            pl.BlockSpec((d, v), lambda i: (0, 0)),        # weight^T
            pl.BlockSpec((1, v), lambda i: (0, 0)),        # bias
        ],
        out_specs=pl.BlockSpec((TILE_B, v), lambda i: (i, 0)),
        compiler_params=pltpu.CompilerParams(
            dimension_semantics=("parallel",)),            # megacore split on v7x
        cost_estimate=cost,
    )(indices, embedding_bf16, weight_t_bf16, bias)


def cbow_reference(indices, embedding_bf16, weight_t_bf16, bias):
    # Same math (and same bf16 compute path) in plain JAX for verification.
    rows = jnp.take(embedding_bf16, indices, axis=0).astype(jnp.float32)  # [B, C, D]
    embeds = rows.sum(axis=1).astype(jnp.bfloat16)                        # [B, D]
    logits = jnp.dot(embeds, weight_t_bf16,
                     preferred_element_type=jnp.float32) + bias
    return jax.nn.log_softmax(logits, axis=-1)


if __name__ == "__main__":
    key = jax.random.PRNGKey(0)
    k_emb, k_w, k_b, k_idx = jax.random.split(key, 4)

    embedding = jax.random.normal(
        k_emb, (VOCAB_SIZE, EMBED_DIM), jnp.float32).astype(jnp.bfloat16)
    # Pre-transposed once at parameter-creation time (no per-call transpose op).
    weight_t = (0.1 * jax.random.normal(
        k_w, (EMBED_DIM, VOCAB_SIZE), jnp.float32)).astype(jnp.bfloat16)
    bias = 0.1 * jax.random.normal(k_b, (1, VOCAB_SIZE), jnp.float32)
    indices = jax.random.randint(k_idx, (BATCH, C), 0, VOCAB_SIZE, dtype=jnp.int32)

    out = jax.block_until_ready(cbow_forward(indices, embedding, weight_t, bias))

    ref = cbow_reference(indices, embedding, weight_t, bias)
    assert out.shape == (BATCH, VOCAB_SIZE)
    out_f32 = out.astype(jnp.float32)
    max_err = float(jnp.max(jnp.abs(out_f32 - ref)))
    # Tolerance covers the bf16 quantization of the stored log-probs.
    assert jnp.allclose(out_f32, ref, atol=1.5e-1, rtol=2e-2), f"max_err={max_err}"

    print("KERNEL_OK")
</pallas_src>

<mosaic_0001>
module attributes {stable_mosaic.version = 11 : i64} {
  func.func @cbow_kernel(%arg0: i32, %arg1: memref<512x4xi32, #tpu.memory_space<vmem>>, %arg2: memref<512x128xbf16, #tpu.memory_space<vmem>>, %arg3: memref<128x512xbf16, #tpu.memory_space<vmem>>, %arg4: memref<1x512xf32, #tpu.memory_space<vmem>>, %arg5: memref<512x512xbf16, #tpu.memory_space<vmem>>) attributes {dimension_semantics = [#tpu.dimension_semantics<parallel>], iteration_bounds = array<i64: 2>, scalar_prefetch = 0 : i64, scratch_operands = 0 : i64, tpu.core_type = #tpu.core_type<tc>, window_params = [{transform_indices = @transform_0, window_bounds = array<i64: 512, 4>}, {pipeline_mode = #tpu.pipeline_mode<synchronous>, transform_indices = @transform_1, window_bounds = array<i64: 512, 128>}, {pipeline_mode = #tpu.pipeline_mode<synchronous>, transform_indices = @transform_2, window_bounds = array<i64: 128, 512>}, {pipeline_mode = #tpu.pipeline_mode<synchronous>, transform_indices = @transform_3, window_bounds = array<i64: 1, 512>}, {transform_indices = @transform_4, window_bounds = array<i64: 512, 512>}]} {
    %c0 = arith.constant 0 : index
    %c0_0 = arith.constant 0 : index
    %0 = vector.load %arg1[%c0, %c0_0] : memref<512x4xi32, #tpu.memory_space<vmem>>, vector<512x4xi32>
    %1 = tpu.iota {dimensions = array<i32: 1>} : vector<512x512xi32>
    %c0_i32 = arith.constant 0 : i32
    %2 = vector.broadcast %c0_i32 : i32 to vector<512x512xi32>
    %3 = vector.extract_strided_slice %0 {offsets = [0, 0], sizes = [512, 1], strides = [1, 1]} : vector<512x4xi32> to vector<512x1xi32>
    %4 = vector.broadcast %3 : vector<512x1xi32> to vector<512x512xi32>
    %5 = arith.cmpi eq, %4, %1 : vector<512x512xi32>
    %6 = arith.extui %5 : vector<512x512xi1> to vector<512x512xi32>
    %7 = arith.addi %2, %6 : vector<512x512xi32>
    %8 = vector.extract_strided_slice %0 {offsets = [0, 1], sizes = [512, 1], strides = [1, 1]} : vector<512x4xi32> to vector<512x1xi32>
    %9 = vector.broadcast %8 : vector<512x1xi32> to vector<512x512xi32>
    %10 = arith.cmpi eq, %9, %1 : vector<512x512xi32>
    %11 = arith.extui %10 : vector<512x512xi1> to vector<512x512xi32>
    %12 = arith.addi %7, %11 : vector<512x512xi32>
    %13 = vector.extract_strided_slice %0 {offsets = [0, 2], sizes = [512, 1], strides = [1, 1]} : vector<512x4xi32> to vector<512x1xi32>
    %14 = vector.broadcast %13 : vector<512x1xi32> to vector<512x512xi32>
    %15 = arith.cmpi eq, %14, %1 : vector<512x512xi32>
    %16 = arith.extui %15 : vector<512x512xi1> to vector<512x512xi32>
    %17 = arith.addi %12, %16 : vector<512x512xi32>
    %18 = vector.extract_strided_slice %0 {offsets = [0, 3], sizes = [512, 1], strides = [1, 1]} : vector<512x4xi32> to vector<512x1xi32>
    %19 = vector.broadcast %18 : vector<512x1xi32> to vector<512x512xi32>
    %20 = arith.cmpi eq, %19, %1 : vector<512x512xi32>
    %21 = arith.extui %20 : vector<512x512xi1> to vector<512x512xi32>
    %22 = arith.addi %17, %21 : vector<512x512xi32>
    %23 = arith.sitofp %22 : vector<512x512xi32> to vector<512x512xbf16>
    %c0_1 = arith.constant 0 : index
    %c0_2 = arith.constant 0 : index
    %24 = vector.load %arg2[%c0_1, %c0_2] : memref<512x128xbf16, #tpu.memory_space<vmem>>, vector<512x128xbf16>
    %cst = arith.constant dense<0.000000e+00> : vector<512x128xf32>
    %25 = tpu.matmul %23, %24, %cst {dimension_numbers = #tpu.dot_dimension_numbers<[1], [0], [0], [1], [0, 0, 1, 1], [], []>} : vector<512x512xbf16>, vector<512x128xbf16>, vector<512x128xf32> -> vector<512x128xf32>
    %26 = arith.truncf %25 : vector<512x128xf32> to vector<512x128xbf16>
    %c0_3 = arith.constant 0 : index
    %c0_4 = arith.constant 0 : index
    %27 = vector.load %arg3[%c0_3, %c0_4] : memref<128x512xbf16, #tpu.memory_space<vmem>>, vector<128x512xbf16>
    %cst_5 = arith.constant dense<0.000000e+00> : vector<512x512xf32>
    %28 = tpu.matmul %26, %27, %cst_5 {dimension_numbers = #tpu.dot_dimension_numbers<[1], [0], [0], [1], [0, 0, 1, 1], [], []>} : vector<512x128xbf16>, vector<128x512xbf16>, vector<512x512xf32> -> vector<512x512xf32>
    %c0_6 = arith.constant 0 : index
    %c0_7 = arith.constant 0 : index
    %29 = vector.load %arg4[%c0_6, %c0_7] : memref<1x512xf32, #tpu.memory_space<vmem>>, vector<1x512xf32>
    %30 = vector.broadcast %29 : vector<1x512xf32> to vector<512x512xf32>
    %31 = arith.addf %28, %30 : vector<512x512xf32>
    %cst_8 = arith.constant dense<0xFF800000> : vector<512xf32>
    %32 = vector.multi_reduction <maximumf>, %31, %cst_8 [1] : vector<512x512xf32> to vector<512xf32>
    %33 = vector.shape_cast %32 : vector<512xf32> to vector<512x1xf32>
    %34 = vector.broadcast %33 : vector<512x1xf32> to vector<512x512xf32>
    %35 = arith.subf %31, %34 : vector<512x512xf32>
    %36 = math.exp %35 : vector<512x512xf32>
    %cst_9 = arith.constant dense<0.000000e+00> : vector<512xf32>
    %37 = vector.multi_reduction <add>, %36, %cst_9 [1] : vector<512x512xf32> to vector<512xf32>
    %38 = vector.shape_cast %37 : vector<512xf32> to vector<512x1xf32>
    %39 = math.log %38 : vector<512x1xf32>
    %40 = vector.broadcast %39 : vector<512x1xf32> to vector<512x512xf32>
    %41 = arith.subf %35, %40 : vector<512x512xf32>
    %42 = arith.truncf %41 : vector<512x512xf32> to vector<512x512xbf16>
    %c0_10 = arith.constant 0 : index
    %c0_11 = arith.constant 0 : index
    %43 = vector.load %arg5[%c0_10, %c0_11] : memref<512x512xbf16, #tpu.memory_space<vmem>>, vector<512x512xbf16>
    tpu.vector_store %arg5[%c0_10, %c0_11], %42 {strides = array<i32>} : memref<512x512xbf16, #tpu.memory_space<vmem>>, vector<512x512xbf16>,
    return
  }
  func.func @transform_0(%arg0: i32) -> (i32, i32) {
    %c0_i32 = arith.constant 0 : i32
    %c0_i32_0 = arith.constant 0 : i32
    return %arg0, %c0_i32 : i32, i32
  }
  func.func @transform_1(%arg0: i32) -> (i32, i32) {
    %c0_i32 = arith.constant 0 : i32
    %c0_i32_0 = arith.constant 0 : i32
    %c0_i32_1 = arith.constant 0 : i32
    return %c0_i32, %c0_i32_0 : i32, i32
  }
  func.func @transform_2(%arg0: i32) -> (i32, i32) {
    %c0_i32 = arith.constant 0 : i32
    %c0_i32_0 = arith.constant 0 : i32
    %c0_i32_1 = arith.constant 0 : i32
    return %c0_i32, %c0_i32_0 : i32, i32
  }
  func.func @transform_3(%arg0: i32) -> (i32, i32) {
    %c0_i32 = arith.constant 0 : i32
    %c0_i32_0 = arith.constant 0 : i32
    %c0_i32_1 = arith.constant 0 : i32
    return %c0_i32, %c0_i32_0 : i32, i32
  }
  func.func @transform_4(%arg0: i32) -> (i32, i32) {
    %c0_i32 = arith.constant 0 : i32
    %c0_i32_0 = arith.constant 0 : i32
    return %arg0, %c0_i32 : i32, i32
  }
}

</mosaic_0001>

<llo_original>
// kernel: cbow_forward.1
$region0: #{cbow_forward.1}
  #allocation0 [shape = 'u32[]', space=smem, size = 0x4, offset = 0x4, fixed_abs, tag = 'smem constant byte address 0x4 - core index']
  #allocation1 [shape = 'u32[144,128]{1,0:T(1,128)}', space=vmem, size = 0x12000, scoped, tag = 'internal scratch']
  %s0 = inlined_call_operand.vmem [shape: s32[1024,4], index: 0, kind: input, shape index: {}]
  %s1 = inlined_call_operand.vmem [shape: bf16[512,128], index: 1, kind: input, shape index: {}]
  %s2 = inlined_call_operand.vmem [shape: bf16[128,512], index: 2, kind: input, shape index: {}]
  %s3 = inlined_call_operand.vmem [shape: f32[1,512], index: 3, kind: input, shape index: {}]
  %s4 = inlined_call_operand.hbm [shape: bf16[1024,512], index: 4, kind: output, shape index: {}]
  %s5 = sld [smem:[#allocation0]]
  $region49: #{cbow_forward.1} parent=0
    _
  %s7 = ssub.s32 1, %s5
  %s8 = scalar_select 0, %s7, %s5
  $region1: #{cbow_forward.1} parent=0
    #allocation2 [shape = 'u8[1048576]{0}', space=vmem, size = 0x100000, scoped, tag = 'output window, operand 0']
    #allocation3 [shape = 's32[2]{0}', space=sflag, size = 0x8, scoped, tag = 'scoped memory for cbow_forward.1']
    %9 = vsyncpa [#allocation3], 0
    %s10 = scalar_lea.sflag [#allocation3], 1
    %11 = vsyncpa %s10, 0
    loop: start=0, step=1, limit=4
    $region2: #{cbow_forward.1} parent=1 // loop_pre_header
      _
    $region3: #{cbow_forward.1} parent=1 // loop_header
      %s13 = sphi 0, %s17
      %p14 = scmp.ge.s32.totalorder %s13, 4
      %s23 = sphi 0, %s25
      %s26 = sphi 0, %s23
      %s27 = sphi 0, %s26
      %s43 = sphi 0, %s27
      %s47 = sphi 0, %s47
      %s49 = sphi 0, %s47
      %s50 = sphi 0, %s49
      %s64 = sphi 0, %s50
      %s68 = sphi 0, %s68
      %s70 = sphi 0, %s68
      %s71 = sphi 0, %s70
      %s85 = sphi 0, %s71
      %s89 = sphi 0, %s89
      %s91 = sphi 0, %s89
      %s92 = sphi 0, %s91
      %s106 = sphi 0, %s92
      %s112 = sphi 0, %s114
      %s115 = sphi 0, %s112
      %s116 = sphi 0, %s115
      %s132 = sphi 0, %s116
    $region4: #{cbow_forward.1} parent=1 // loop_header_branch
      %16 = sbr.rel (%p14) target = $region8
    $region5: #{cbow_forward.1} parent=1 // loop_body
      %s18 = ssub.s32 %s13, 1
      %s19 = ssub.s32 %s13, 2
      %s20 = sadd.s32 %s13, 1
      %s21 = ssub.s32 %s13, %s20
      %p22 = scmp.eq.s32.totalorder %s21, 0
      %s24 = sadd.s32 %s23, 1
      %s25 = scalar_select %p22, %s23, %s24
      %p28 = pneg %p22
      %p29 = scmp.eq.s32.totalorder %s13, 1
      %p30 = por %p28, %p29
      %p31 = scmp.ne.s32.totalorder %s23, %s26
      %p32 = scmp.eq.s32.totalorder %s13, 0
      %p33 = por %p31, %p32
      %p34 = scmp.ne.s32.totalorder %s23, %s26
      %p35 = scmp.eq.s32.totalorder %s18, 1
      %p36 = por %p34, %p35
      %p37 = scmp.ne.s32.totalorder %s26, %s27
      %p38 = scmp.eq.s32.totalorder %s18, 0
      %p39 = por %p37, %p38
      %p40 = scmp.ne.s32.totalorder %s26, %s27
      %p41 = scmp.eq.s32.totalorder %s19, 1
      %p42 = por %p40, %p41
      %p44 = scmp.ne.s32.totalorder %s27, %s43
      %p45 = scmp.eq.s32.totalorder %s19, 0
      %p46 = por %p44, %p45
      %s48 = sadd.s32 %s47, 1
      %p51 = scmp.eq.s32.totalorder %s13, 1
      %p52 = scmp.ne.s32.totalorder %s47, %s49
      %p53 = scmp.eq.s32.totalorder %s13, 0
      %p54 = por %p52, %p53
      %p55 = scmp.ne.s32.totalorder %s47, %s49
      %p56 = scmp.eq.s32.totalorder %s18, 1
      %p57 = por %p55, %p56
      %p58 = scmp.ne.s32.totalorder %s49, %s50
      %p59 = scmp.eq.s32.totalorder %s18, 0
      %p60 = por %p58, %p59
      %p61 = scmp.ne.s32.totalorder %s49, %s50
      %p62 = scmp.eq.s32.totalorder %s19, 1
      %p63 = por %p61, %p62
      %p65 = scmp.ne.s32.totalorder %s50, %s64
      %p66 = scmp.eq.s32.totalorder %s19, 0
      %p67 = por %p65, %p66
      %s69 = sadd.s32 %s68, 1
      %p72 = scmp.eq.s32.totalorder %s13, 1
      %p73 = scmp.ne.s32.totalorder %s68, %s70
      %p74 = scmp.eq.s32.totalorder %s13, 0
      %p75 = por %p73, %p74
      %p76 = scmp.ne.s32.totalorder %s68, %s70
      %p77 = scmp.eq.s32.totalorder %s18, 1
      %p78 = por %p76, %p77
      %p79 = scmp.ne.s32.totalorder %s70, %s71
      %p80 = scmp.eq.s32.totalorder %s18, 0
      %p81 = por %p79, %p80
      %p82 = scmp.ne.s32.totalorder %s70, %s71
      %p83 = scmp.eq.s32.totalorder %s19, 1
      %p84 = por %p82, %p83
      %p86 = scmp.ne.s32.totalorder %s71, %s85
      %p87 = scmp.eq.s32.totalorder %s19, 0
      %p88 = por %p86, %p87
      %s90 = sadd.s32 %s89, 1
      %p93 = scmp.eq.s32.totalorder %s13, 1
      %p94 = scmp.ne.s32.totalorder %s89, %s91
      %p95 = scmp.eq.s32.totalorder %s13, 0
      %p96 = por %p94, %p95
      %p97 = scmp.ne.s32.totalorder %s89, %s91
      %p98 = scmp.eq.s32.totalorder %s18, 1
      %p99 = por %p97, %p98
      %p100 = scmp.ne.s32.totalorder %s91, %s92
      %p101 = scmp.eq.s32.totalorder %s18, 0
      %p102 = por %p100, %p101
      %p103 = scmp.ne.s32.totalorder %s91, %s92
      %p104 = scmp.eq.s32.totalorder %s19, 1
      %p105 = por %p103, %p104
      %p107 = scmp.ne.s32.totalorder %s92, %s106
      %p108 = scmp.eq.s32.totalorder %s19, 0
      %p109 = por %p107, %p108
      %s110 = ssub.s32 %s13, %s20
      %p111 = scmp.eq.s32.totalorder %s110, 0
      %s113 = sadd.s32 %s112, 1
      %s114 = scalar_select %p111, %s112, %s113
      %p117 = pneg %p111
      %p118 = scmp.eq.s32.totalorder %s13, 1
      %p119 = por %p117, %p118
      %p120 = scmp.ne.s32.totalorder %s112, %s115
      %p121 = scmp.eq.s32.totalorder %s13, 0
      %p122 = por %p120, %p121
      %p123 = scmp.ne.s32.totalorder %s112, %s115
      %p124 = scmp.eq.s32.totalorder %s18, 1
      %p125 = por %p123, %p124
      %p126 = scmp.ne.s32.totalorder %s115, %s116
      %p127 = scmp.eq.s32.totalorder %s18, 0
      %p128 = por %p126, %p127
      %p129 = scmp.ne.s32.totalorder %s115, %s116
      %p130 = scmp.eq.s32.totalorder %s19, 1
      %p131 = por %p129, %p130
      %p133 = scmp.ne.s32.totalorder %s116, %s132
      %p134 = scmp.eq.s32.totalorder %s19, 0
      %p135 = por %p133, %p134
      %p136 = scmp.le.s32.totalorder 1, %s13
      %p137 = scmp.lt.s32.totalorder %s13, 3
      %p138 = pnand %p136, %p137
      %p139 = pneg %p138
      // Predicated region
      $region9: #{cbow_forward.1} parent=5 // pred_check
        _
      $region10: #{cbow_forward.1} parent=5 // pred_check_branch
        %141 = sbr.rel (%p138) target = $region12
      $region11: #{cbow_forward.1} parent=5 // pred_region
        %s142 = ssub.s32 %s13, 1
        // Predicated region
        $region13: #{cbow_forward.1} parent=11 // pred_check
          %p143 = pneg %p60
        $region14: #{cbow_forward.1} parent=11 // pred_check_branch
          %145 = sbr.rel (%p143) target = $region16
        $region15: #{cbow_forward.1} parent=11 // pred_region
          _
        $region16: #{cbow_forward.1} parent=11 // pred_fallthru
          _
        // Predicated region
        $region17: #{cbow_forward.1} parent=11 // pred_check
          %p146 = pneg %p81
        $region18: #{cbow_forward.1} parent=11 // pred_check_branch
          %148 = sbr.rel (%p146) target = $region20
        $region19: #{cbow_forward.1} parent=11 // pred_region
          _
        $region20: #{cbow_forward.1} parent=11 // pred_fallthru
          _
        // Predicated region
        $region21: #{cbow_forward.1} parent=11 // pred_check
          %p149 = pneg %p102
        $region22: #{cbow_forward.1} parent=11 // pred_check_branch
          %151 = sbr.rel (%p149) target = $region24
        $region23: #{cbow_forward.1} parent=11 // pred_region
          _
        $region24: #{cbow_forward.1} parent=11 // pred_fallthru
          _
      $region12: #{cbow_forward.1} parent=5 // pred_fallthru
        _
      %p152 = scmp.lt.s32.totalorder %s13, 2
      // Predicated region
      $region25: #{cbow_forward.1} parent=5 // pred_check
        %p153 = pneg %p152
      $region26: #{cbow_forward.1} parent=5 // pred_check_branch
        %155 = sbr.rel (%p153) target = $region28
      $region27: #{cbow_forward.1} parent=5 // pred_region
        // Predicated region
        $region29: #{cbow_forward.1} parent=27 // pred_check
          %p156 = pneg %p33
        $region30: #{cbow_forward.1} parent=27 // pred_check_branch
          %158 = sbr.rel (%p156) target = $region32
        $region31: #{cbow_forward.1} parent=27 // pred_region
          %s159 = smul.u32 64, %s13
          %p160 = scmp.lt.s32.totalorder %s159, 127
          %s161 = scalar_select %p160, %s159, 127
          %s162 = smul.addr %s161, 8
          %s163 = scalar_lea.vmem %s0, %s162
          %s164 = smul.u32 64, %s13
        $region32: #{cbow_forward.1} parent=27 // pred_fallthru
          _
      $region28: #{cbow_forward.1} parent=5 // pred_fallthru
        _
      %p165 = scmp.le.s32.totalorder 1, %s13
      %p166 = scmp.lt.s32.totalorder %s13, 3
      %p167 = pnand %p165, %p166
      %p168 = pneg %p167
      // Predicated region
      $region33: #{cbow_forward.1} parent=5 // pred_check
        _
      $region34: #{cbow_forward.1} parent=5 // pred_check_branch
        %170 = sbr.rel (%p167) target = $region36
      $region35: #{cbow_forward.1} parent=5 // pred_region
        %s171 = ssub.s32 %s13, 1
        %s172 = smul.u32 64, %s18
        %p173 = scmp.lt.s32.totalorder %s172, 127
        %s174 = scalar_select %p173, %s172, 127
        %s175 = smul.addr %s174, 8
        %s176 = scalar_lea.vmem %s0, %s175
        %p177 = pneg %p39
        %p178 = pneg %p36
        %p179 = pneg %p60
        %p180 = pneg %p57
        %p181 = pneg %p81
        %p182 = pneg %p78
        %p183 = pneg %p102
        %p184 = pneg %p99
        %p185 = pneg %p128
        %p186 = pneg %p125
        %s187 = sand.u32 %s115, 1
        %s188 = scalar_lea.sflag [#allocation3], %s187
        %s189 = sand.u32 %s115, 1
        %s190 = smul.addr %s189, 1024
        %s191 = scalar_lea.vmem [#allocation2], %s190
        %s192 = smul.u32 64, %s18
        %p193 = scmp.lt.s32.totalorder %s192, 127
        %s194 = scalar_select %p193, %s192, 127
        %s195 = smul.addr %s194, 8
        %s196 = scalar_lea.vmem %s0, %s195
        %s197 = smul.u32 64, %s18
        %s198 = smul.u32 64, %s18
        %v200 = vld [vmem:[%s196] sm:$0xff]
        %v201 = vld [vmem:[%s196 + $0x8] sm:$0xff]
        %v202 = vld [vmem:[%s196 + $0x10] sm:$0xff]
        %v203 = vld [vmem:[%s196 + $0x18] sm:$0xff]
        %v204 = vld [vmem:[%s196 + $0x20] sm:$0xff]
        %v205 = vld [vmem:[%s196 + $0x28] sm:$0xff]
        %v206 = vld [vmem:[%s196 + $0x30] sm:$0xff]
        %v207 = vld [vmem:[%s196 + $0x38] sm:$0xff]
        %v208 = vld [vmem:[%s196 + $0x40] sm:$0xff]
        %v209 = vld [vmem:[%s196 + $0x48] sm:$0xff]
        %v210 = vld [vmem:[%s196 + $0x50] sm:$0xff]
        %v211 = vld [vmem:[%s196 + $0x58] sm:$0xff]
        %v212 = vld [vmem:[%s196 + $0x60] sm:$0xff]
        %v213 = vld [vmem:[%s196 + $0x68] sm:$0xff]
        %v214 = vld [vmem:[%s196 + $0x70] sm:$0xff]
        %v215 = vld [vmem:[%s196 + $0x78] sm:$0xff]
        %v216 = vld [vmem:[%s196 + $0x80] sm:$0xff]
        %v217 = vld [vmem:[%s196 + $0x88] sm:$0xff]
        %v218 = vld [vmem:[%s196 + $0x90] sm:$0xff]
        %v219 = vld [vmem:[%s196 + $0x98] sm:$0xff]
        %v220 = vld [vmem:[%s196 + $0xa0] sm:$0xff]
        %v221 = vld [vmem:[%s196 + $0xa8] sm:$0xff]
        %v222 = vld [vmem:[%s196 + $0xb0] sm:$0xff]
        %v223 = vld [vmem:[%s196 + $0xb8] sm:$0xff]
        %v224 = vld [vmem:[%s196 + $0xc0] sm:$0xff]
        %v225 = vld [vmem:[%s196 + $0xc8] sm:$0xff]
        %v226 = vld [vmem:[%s196 + $0xd0] sm:$0xff]
        %v227 = vld [vmem:[%s196 + $0xd8] sm:$0xff]
        %v228 = vld [vmem:[%s196 + $0xe0] sm:$0xff]
        %v229 = vld [vmem:[%s196 + $0xe8] sm:$0xff]
        %v230 = vld [vmem:[%s196 + $0xf0] sm:$0xff]
        %v231 = vld [vmem:[%s196 + $0xf8] sm:$0xff]
        %v232 = vld [vmem:[%s196 + $0x100] sm:$0xff]
        %v233 = vld [vmem:[%s196 + $0x108] sm:$0xff]
        %v234 = vld [vmem:[%s196 + $0x110] sm:$0xff]
        %v235 = vld [vmem:[%s196 + $0x118] sm:$0xff]
        %v236 = vld [vmem:[%s196 + $0x120] sm:$0xff]
        %v237 = vld [vmem:[%s196 + $0x128] sm:$0xff]
        %v238 = vld [vmem:[%s196 + $0x130] sm:$0xff]
        %v239 = vld [vmem:[%s196 + $0x138] sm:$0xff]
        %v240 = vld [vmem:[%s196 + $0x140] sm:$0xff]
        %v241 = vld [vmem:[%s196 + $0x148] sm:$0xff]
        %v242 = vld [vmem:[%s196 + $0x150] sm:$0xff]
        %v243 = vld [vmem:[%s196 + $0x158] sm:$0xff]
        %v244 = vld [vmem:[%s196 + $0x160] sm:$0xff]
        %v245 = vld [vmem:[%s196 + $0x168] sm:$0xff]
        %v246 = vld [vmem:[%s196 + $0x170] sm:$0xff]
        %v247 = vld [vmem:[%s196 + $0x178] sm:$0xff]
        %v248 = vld [vmem:[%s196 + $0x180] sm:$0xff]
        %v249 = vld [vmem:[%s196 + $0x188] sm:$0xff]
        %v250 = vld [vmem:[%s196 + $0x190] sm:$0xff]
        %v251 = vld [vmem:[%s196 + $0x198] sm:$0xff]
        %v252 = vld [vmem:[%s196 + $0x1a0] sm:$0xff]
        %v253 = vld [vmem:[%s196 + $0x1a8] sm:$0xff]
        %v254 = vld [vmem:[%s196 + $0x1b0] sm:$0xff]
        %v255 = vld [vmem:[%s196 + $0x1b8] sm:$0xff]
        %v256 = vld [vmem:[%s196 + $0x1c0] sm:$0xff]
        %v257 = vld [vmem:[%s196 + $0x1c8] sm:$0xff]
        %v258 = vld [vmem:[%s196 + $0x1d0] sm:$0xff]
        %v259 = vld [vmem:[%s196 + $0x1d8] sm:$0xff]
        %v260 = vld [vmem:[%s196 + $0x1e0] sm:$0xff]
        %v261 = vld [vmem:[%s196 + $0x1e8] sm:$0xff]
        %v262 = vld [vmem:[%s196 + $0x1f0] sm:$0xff]
        %v263 = vld [vmem:[%s196 + $0x1f8] sm:$0xff]
        %v264 = vlaneseq
        %v265 = vand.u32 %v264, 127
        %v266 = vadd.s32 %v265, 128
        %v267 = vadd.s32 %v265, 256
        %v268 = vadd.s32 %v265, 384
        %269 = vset.pattern.permute.xlu0 0
        %270 = vperm.xlu0 %269, %v200
        %v271 = vpop.permute.xlu0 %270
        %272 = vset.pattern.permute.xlu0 0
        %273 = vperm.xlu0 %272, %v201
        %v274 = vpop.permute.xlu0 %273
        %275 = vset.pattern.permute.xlu0 0
        %276 = vperm.xlu0 %275, %v202
        %v277 = vpop.permute.xlu0 %276
        %278 = vset.pattern.permute.xlu0 0
        %279 = vperm.xlu0 %278, %v203
        %v280 = vpop.permute.xlu0 %279
        %281 = vset.pattern.permute.xlu0 0
        %282 = vperm.xlu0 %281, %v204
        %v283 = vpop.permute.xlu0 %282
        %284 = vset.pattern.permute.xlu0 0
        %285 = vperm.xlu0 %284, %v205
        %v286 = vpop.permute.xlu0 %285
        %287 = vset.pattern.permute.xlu0 0
        %288 = vperm.xlu0 %287, %v206
        %v289 = vpop.permute.xlu0 %288
        %290 = vset.pattern.permute.xlu0 0
        %291 = vperm.xlu0 %290, %v207
        %v292 = vpop.permute.xlu0 %291
        %293 = vset.pattern.permute.xlu0 0
        %294 = vperm.xlu0 %293, %v208
        %v295 = vpop.permute.xlu0 %294
        %296 = vset.pattern.permute.xlu0 0
        %297 = vperm.xlu0 %296, %v209
        %v298 = vpop.permute.xlu0 %297
        %299 = vset.pattern.permute.xlu0 0
        %300 = vperm.xlu0 %299, %v210
        %v301 = vpop.permute.xlu0 %300
        %302 = vset.pattern.permute.xlu0 0
        %303 = vperm.xlu0 %302, %v211
        %v304 = vpop.permute.xlu0 %303
        %305 = vset.pattern.permute.xlu0 0
        %306 = vperm.xlu0 %305, %v212
        %v307 = vpop.permute.xlu0 %306
        %308 = vset.pattern.permute.xlu0 0
        %309 = vperm.xlu0 %308, %v213
        %v310 = vpop.permute.xlu0 %309
        %311 = vset.pattern.permute.xlu0 0
        %312 = vperm.xlu0 %311, %v214
        %v313 = vpop.permute.xlu0 %312
        %314 = vset.pattern.permute.xlu0 0
        %315 = vperm.xlu0 %314, %v215
        %v316 = vpop.permute.xlu0 %315
        %317 = vset.pattern.permute.xlu0 0
        %318 = vperm.xlu0 %317, %v216
        %v319 = vpop.permute.xlu0 %318
        %320 = vset.pattern.permute.xlu0 0
        %321 = vperm.xlu0 %320, %v217
        %v322 = vpop.permute.xlu0 %321
        %323 = vset.pattern.permute.xlu0 0
        %324 = vperm.xlu0 %323, %v218
        %v325 = vpop.permute.xlu0 %324
        %326 = vset.pattern.permute.xlu0 0
        %327 = vperm.xlu0 %326, %v219
        %v328 = vpop.permute.xlu0 %327
        %329 = vset.pattern.permute.xlu0 0
        %330 = vperm.xlu0 %329, %v220
        %v331 = vpop.permute.xlu0 %330
        %332 = vset.pattern.permute.xlu0 0
        %333 = vperm.xlu0 %332, %v221
        %v334 = vpop.permute.xlu0 %333
        %335 = vset.pattern.permute.xlu0 0
        %336 = vperm.xlu0 %335, %v222
        %v337 = vpop.permute.xlu0 %336
        %338 = vset.pattern.permute.xlu0 0
        %339 = vperm.xlu0 %338, %v223
        %v340 = vpop.permute.xlu0 %339
        %341 = vset.pattern.permute.xlu0 0
        %342 = vperm.xlu0 %341, %v224
        %v343 = vpop.permute.xlu0 %342
        %344 = vset.pattern.permute.xlu0 0
        %345 = vperm.xlu0 %344, %v225
        %v346 = vpop.permute.xlu0 %345
        %347 = vset.pattern.permute.xlu0 0
        %348 = vperm.xlu0 %347, %v226
        %v349 = vpop.permute.xlu0 %348
        %350 = vset.pattern.permute.xlu0 0
        %351 = vperm.xlu0 %350, %v227
        %v352 = vpop.permute.xlu0 %351
        %353 = vset.pattern.permute.xlu0 0
        %354 = vperm.xlu0 %353, %v228
        %v355 = vpop.permute.xlu0 %354
        %356 = vset.pattern.permute.xlu0 0
        %357 = vperm.xlu0 %356, %v229
        %v358 = vpop.permute.xlu0 %357
        %359 = vset.pattern.permute.xlu0 0
        %360 = vperm.xlu0 %359, %v230
        %v361 = vpop.permute.xlu0 %360
        %362 = vset.pattern.permute.xlu0 0
        %363 = vperm.xlu0 %362, %v231
        %v364 = vpop.permute.xlu0 %363
        %365 = vset.pattern.permute.xlu0 0
        %366 = vperm.xlu0 %365, %v232
        %v367 = vpop.permute.xlu0 %366
        %368 = vset.pattern.permute.xlu0 0
        %369 = vperm.xlu0 %368, %v233
        %v370 = vpop.permute.xlu0 %369
        %371 = vset.pattern.permute.xlu0 0
        %372 = vperm.xlu0 %371, %v234
        %v373 = vpop.permute.xlu0 %372
        %374 = vset.pattern.permute.xlu0 0
        %375 = vperm.xlu0 %374, %v235
        %v376 = vpop.permute.xlu0 %375
        %377 = vset.pattern.permute.xlu0 0
        %378 = vperm.xlu0 %377, %v236
        %v379 = vpop.permute.xlu0 %378
        %380 = vset.pattern.permute.xlu0 0
        %381 = vperm.xlu0 %380, %v237
        %v382 = vpop.permute.xlu0 %381
        %383 = vset.pattern.permute.xlu0 0
        %384 = vperm.xlu0 %383, %v238
        %v385 = vpop.permute.xlu0 %384
        %386 = vset.pattern.permute.xlu0 0
        %387 = vperm.xlu0 %386, %v239
        %v388 = vpop.permute.xlu0 %387
        %389 = vset.pattern.permute.xlu0 0
        %390 = vperm.xlu0 %389, %v240
        %v391 = vpop.permute.xlu0 %390
        %392 = vset.pattern.permute.xlu0 0
        %393 = vperm.xlu0 %392, %v241
        %v394 = vpop.permute.xlu0 %393
        %395 = vset.pattern.permute.xlu0 0
        %396 = vperm.xlu0 %395, %v242
        %v397 = vpop.permute.xlu0 %396
        %398 = vset.pattern.permute.xlu0 0
        %399 = vperm.xlu0 %398, %v243
        %v400 = vpop.permute.xlu0 %399
        %401 = vset.pattern.permute.xlu0 0
        %402 = vperm.xlu0 %401, %v244
        %v403 = vpop.permute.xlu0 %402
        %404 = vset.pattern.permute.xlu0 0
        %405 = vperm.xlu0 %404, %v245
        %v406 = vpop.permute.xlu0 %405
        %407 = vset.pattern.permute.xlu0 0
        %408 = vperm.xlu0 %407, %v246
        %v409 = vpop.permute.xlu0 %408
        %410 = vset.pattern.permute.xlu0 0
        %411 = vperm.xlu0 %410, %v247
        %v412 = vpop.permute.xlu0 %411
        %413 = vset.pattern.permute.xlu0 0
        %414 = vperm.xlu0 %413, %v248
        %v415 = vpop.permute.xlu0 %414
        %416 = vset.pattern.permute.xlu0 0
        %417 = vperm.xlu0 %416, %v249
        %v418 = vpop.permute.xlu0 %417
        %419 = vset.pattern.permute.xlu0 0
        %420 = vperm.xlu0 %419, %v250
        %v421 = vpop.permute.xlu0 %420
        %422 = vset.pattern.permute.xlu0 0
        %423 = vperm.xlu0 %422, %v251
        %v424 = vpop.permute.xlu0 %423
        %425 = vset.pattern.permute.xlu0 0
        %426 = vperm.xlu0 %425, %v252
        %v427 = vpop.permute.xlu0 %426
        %428 = vset.pattern.permute.xlu0 0
        %429 = vperm.xlu0 %428, %v253
        %v430 = vpop.permute.xlu0 %429
        %431 = vset.pattern.permute.xlu0 0
        %432 = vperm.xlu0 %431, %v254
        %v433 = vpop.permute.xlu0 %432
        %434 = vset.pattern.permute.xlu0 0
        %435 = vperm.xlu0 %434, %v255
        %v436 = vpop.permute.xlu0 %435
        %437 = vset.pattern.permute.xlu0 0
        %438 = vperm.xlu0 %437, %v256
        %v439 = vpop.permute.xlu0 %438
        %440 = vset.pattern.permute.xlu0 0
        %441 = vperm.xlu0 %440, %v257
        %v442 = vpop.permute.xlu0 %441
        %443 = vset.pattern.permute.xlu0 0
        %444 = vperm.xlu0 %443, %v258
        %v445 = vpop.permute.xlu0 %444
        %446 = vset.pattern.permute.xlu0 0
        %447 = vperm.xlu0 %446, %v259
        %v448 = vpop.permute.xlu0 %447
        %449 = vset.pattern.permute.xlu0 0
        %450 = vperm.xlu0 %449, %v260
        %v451 = vpop.permute.xlu0 %450
        %452 = vset.pattern.permute.xlu0 0
        %453 = vperm.xlu0 %452, %v261
        %v454 = vpop.permute.xlu0 %453
        %455 = vset.pattern.permute.xlu0 0
        %456 = vperm.xlu0 %455, %v262
        %v457 = vpop.permute.xlu0 %456
        %458 = vset.pattern.permute.xlu0 0
        %459 = vperm.xlu0 %458, %v263
        %v460 = vpop.permute.xlu0 %459
        %vm461 = vcmp.eq.s32.totalorder %v271, %v265
        %vm462 = vcmp.eq.s32.totalorder %v271, %v266
        %vm463 = vcmp.eq.s32.totalorder %v271, %v267
        %vm464 = vcmp.eq.s32.totalorder %v271, %v268
        %vm465 = vcmp.eq.s32.totalorder %v274, %v265
        %vm466 = vcmp.eq.s32.totalorder %v274, %v266
        %vm467 = vcmp.eq.s32.totalorder %v274, %v267
        %vm468 = vcmp.eq.s32.totalorder %v274, %v268
        %vm469 = vcmp.eq.s32.totalorder %v277, %v265
        %vm470 = vcmp.eq.s32.totalorder %v277, %v266
        %vm471 = vcmp.eq.s32.totalorder %v277, %v267
        %vm472 = vcmp.eq.s32.totalorder %v277, %v268
        %vm473 = vcmp.eq.s32.totalorder %v280, %v265
        %vm474 = vcmp.eq.s32.totalorder %v280, %v266
        %vm475 = vcmp.eq.s32.totalorder %v280, %v267
        %vm476 = vcmp.eq.s32.totalorder %v280, %v268
        %vm477 = vcmp.eq.s32.totalorder %v283, %v265
        %vm478 = vcmp.eq.s32.totalorder %v283, %v266
        %vm479 = vcmp.eq.s32.totalorder %v283, %v267
        %vm480 = vcmp.eq.s32.totalorder %v283, %v268
        %vm481 = vcmp.eq.s32.totalorder %v286, %v265
        %vm482 = vcmp.eq.s32.totalorder %v286, %v266
        %vm483 = vcmp.eq.s32.totalorder %v286, %v267
        %vm484 = vcmp.eq.s32.totalorder %v286, %v268
        %vm485 = vcmp.eq.s32.totalorder %v289, %v265
        %vm486 = vcmp.eq.s32.totalorder %v289, %v266
        %vm487 = vcmp.eq.s32.totalorder %v289, %v267
        %vm488 = vcmp.eq.s32.totalorder %v289, %v268
        %vm489 = vcmp.eq.s32.totalorder %v292, %v265
        %vm490 = vcmp.eq.s32.totalorder %v292, %v266
        %vm491 = vcmp.eq.s32.totalorder %v292, %v267
        %vm492 = vcmp.eq.s32.totalorder %v292, %v268
        %vm493 = vcmp.eq.s32.totalorder %v295, %v265
        %vm494 = vcmp.eq.s32.totalorder %v295, %v266
        %vm495 = vcmp.eq.s32.totalorder %v295, %v267
        %vm496 = vcmp.eq.s32.totalorder %v295, %v268
        %vm497 = vcmp.eq.s32.totalorder %v298, %v265
        %vm498 = vcmp.eq.s32.totalorder %v298, %v266
        %vm499 = vcmp.eq.s32.totalorder %v298, %v267
        %vm500 = vcmp.eq.s32.totalorder %v298, %v268
        %vm501 = vcmp.eq.s32.totalorder %v301, %v265
        %vm502 = vcmp.eq.s32.totalorder %v301, %v266
        %vm503 = vcmp.eq.s32.totalorder %v301, %v267
        %vm504 = vcmp.eq.s32.totalorder %v301, %v268
        %vm505 = vcmp.eq.s32.totalorder %v304, %v265
        %vm506 = vcmp.eq.s32.totalorder %v304, %v266
        %vm507 = vcmp.eq.s32.totalorder %v304, %v267
        %vm508 = vcmp.eq.s32.totalorder %v304, %v268
        %vm509 = vcmp.eq.s32.totalorder %v307, %v265
        %vm510 = vcmp.eq.s32.totalorder %v307, %v266
        %vm511 = vcmp.eq.s32.totalorder %v307, %v267
        %vm512 = vcmp.eq.s32.totalorder %v307, %v268
        %vm513 = vcmp.eq.s32.totalorder %v310, %v265
        %vm514 = vcmp.eq.s32.totalorder %v310, %v266
        %vm515 = vcmp.eq.s32.totalorder %v310, %v267
        %vm516 = vcmp.eq.s32.totalorder %v310, %v268
        %vm517 = vcmp.eq.s32.totalorder %v313, %v265
        %vm518 = vcmp.eq.s32.totalorder %v313, %v266
        %vm519 = vcmp.eq.s32.totalorder %v313, %v267
        %vm520 = vcmp.eq.s32.totalorder %v313, %v268
        %vm521 = vcmp.eq.s32.totalorder %v316, %v265
        %vm522 = vcmp.eq.s32.totalorder %v316, %v266
        %vm523 = vcmp.eq.s32.totalorder %v316, %v267
        %vm524 = vcmp.eq.s32.totalorder %v316, %v268
        %vm525 = vcmp.eq.s32.totalorder %v319, %v265
        %vm526 = vcmp.eq.s32.totalorder %v319, %v266
        %vm527 = vcmp.eq.s32.totalorder %v319, %v267
        %vm528 = vcmp.eq.s32.totalorder %v319, %v268
        %vm529 = vcmp.eq.s32.totalorder %v322, %v265
        %vm530 = vcmp.eq.s32.totalorder %v322, %v266
        %vm531 = vcmp.eq.s32.totalorder %v322, %v267
        %vm532 = vcmp.eq.s32.totalorder %v322, %v268
        %vm533 = vcmp.eq.s32.totalorder %v325, %v265
        %vm534 = vcmp.eq.s32.totalorder %v325, %v266
        %vm535 = vcmp.eq.s32.totalorder %v325, %v267
        %vm536 = vcmp.eq.s32.totalorder %v325, %v268
        %vm537 = vcmp.eq.s32.totalorder %v328, %v265
        %vm538 = vcmp.eq.s32.totalorder %v328, %v266
        %vm539 = vcmp.eq.s32.totalorder %v328, %v267
        %vm540 = vcmp.eq.s32.totalorder %v328, %v268
        %vm541 = vcmp.eq.s32.totalorder %v331, %v265
        %vm542 = vcmp.eq.s32.totalorder %v331, %v266
        %vm543 = vcmp.eq.s32.totalorder %v331, %v267
        %vm544 = vcmp.eq.s32.totalorder %v331, %v268
        %vm545 = vcmp.eq.s32.totalorder %v334, %v265
        %vm546 = vcmp.eq.s32.totalorder %v334, %v266
        %vm547 = vcmp.eq.s32.totalorder %v334, %v267
        %vm548 = vcmp.eq.s32.totalorder %v334, %v268
        %vm549 = vcmp.eq.s32.totalorder %v337, %v265
        %vm550 = vcmp.eq.s32.totalorder %v337, %v266
        %vm551 = vcmp.eq.s32.totalorder %v337, %v267
        %vm552 = vcmp.eq.s32.totalorder %v337, %v268
        %vm553 = vcmp.eq.s32.totalorder %v340, %v265
        %vm554 = vcmp.eq.s32.totalorder %v340, %v266
        %vm555 = vcmp.eq.s32.totalorder %v340, %v267
        %vm556 = vcmp.eq.s32.totalorder %v340, %v268
        %vm557 = vcmp.eq.s32.totalorder %v343, %v265
        %vm558 = vcmp.eq.s32.totalorder %v343, %v266
        %vm559 = vcmp.eq.s32.totalorder %v343, %v267
        %vm560 = vcmp.eq.s32.totalorder %v343, %v268
        %vm561 = vcmp.eq.s32.totalorder %v346, %v265
        %vm562 = vcmp.eq.s32.totalorder %v346, %v266
        %vm563 = vcmp.eq.s32.totalorder %v346, %v267
        %vm564 = vcmp.eq.s32.totalorder %v346, %v268
        %vm565 = vcmp.eq.s32.totalorder %v349, %v265
        %vm566 = vcmp.eq.s32.totalorder %v349, %v266
        %vm567 = vcmp.eq.s32.totalorder %v349, %v267
        %vm568 = vcmp.eq.s32.totalorder %v349, %v268
        %vm569 = vcmp.eq.s32.totalorder %v352, %v265
        %vm570 = vcmp.eq.s32.totalorder %v352, %v266
        %vm571 = vcmp.eq.s32.totalorder %v352, %v267
        %vm572 = vcmp.eq.s32.totalorder %v352, %v268
        %vm573 = vcmp.eq.s32.totalorder %v355, %v265
        %vm574 = vcmp.eq.s32.totalorder %v355, %v266
        %vm575 = vcmp.eq.s32.totalorder %v355, %v267
        %vm576 = vcmp.eq.s32.totalorder %v355, %v268
        %vm577 = vcmp.eq.s32.totalorder %v358, %v265
        %vm578 = vcmp.eq.s32.totalorder %v358, %v266
        %vm579 = vcmp.eq.s32.totalorder %v358, %v267
        %vm580 = vcmp.eq.s32.totalorder %v358, %v268
        %vm581 = vcmp.eq.s32.totalorder %v361, %v265
        %vm582 = vcmp.eq.s32.totalorder %v361, %v266
        %vm583 = vcmp.eq.s32.totalorder %v361, %v267
        %vm584 = vcmp.eq.s32.totalorder %v361, %v268
        %vm585 = vcmp.eq.s32.totalorder %v364, %v265
        %vm586 = vcmp.eq.s32.totalorder %v364, %v266
        %vm587 = vcmp.eq.s32.totalorder %v364, %v267
        %vm588 = vcmp.eq.s32.totalorder %v364, %v268
        %vm589 = vcmp.eq.s32.totalorder %v367, %v265
        %vm590 = vcmp.eq.s32.totalorder %v367, %v266
        %vm591 = vcmp.eq.s32.totalorder %v367, %v267
        %vm592 = vcmp.eq.s32.totalorder %v367, %v268
        %vm593 = vcmp.eq.s32.totalorder %v370, %v265
        %vm594 = vcmp.eq.s32.totalorder %v370, %v266
        %vm595 = vcmp.eq.s32.totalorder %v370, %v267
        %vm596 = vcmp.eq.s32.totalorder %v370, %v268
        %vm597 = vcmp.eq.s32.totalorder %v373, %v265
        %vm598 = vcmp.eq.s32.totalorder %v373, %v266
        %vm599 = vcmp.eq.s32.totalorder %v373, %v267
        %vm600 = vcmp.eq.s32.totalorder %v373, %v268
        %vm601 = vcmp.eq.s32.totalorder %v376, %v265
        %vm602 = vcmp.eq.s32.totalorder %v376, %v266
        %vm603 = vcmp.eq.s32.totalorder %v376, %v267
        %vm604 = vcmp.eq.s32.totalorder %v376, %v268
        %vm605 = vcmp.eq.s32.totalorder %v379, %v265
        %vm606 = vcmp.eq.s32.totalorder %v379, %v266
        %vm607 = vcmp.eq.s32.totalorder %v379, %v267
        %vm608 = vcmp.eq.s32.totalorder %v379, %v268
        %vm609 = vcmp.eq.s32.totalorder %v382, %v265
        %vm610 = vcmp.eq.s32.totalorder %v382, %v266
        %vm611 = vcmp.eq.s32.totalorder %v382, %v267
        %vm612 = vcmp.eq.s32.totalorder %v382, %v268
        %vm613 = vcmp.eq.s32.totalorder %v385, %v265
        %vm614 = vcmp.eq.s32.totalorder %v385, %v266
        %vm615 = vcmp.eq.s32.totalorder %v385, %v267
        %vm616 = vcmp.eq.s32.totalorder %v385, %v268
        %vm617 = vcmp.eq.s32.totalorder %v388, %v265
        %vm618 = vcmp.eq.s32.totalorder %v388, %v266
        %vm619 = vcmp.eq.s32.totalorder %v388, %v267
        %vm620 = vcmp.eq.s32.totalorder %v388, %v268
        %vm621 = vcmp.eq.s32.totalorder %v391, %v265
        %vm622 = vcmp.eq.s32.totalorder %v391, %v266
        %vm623 = vcmp.eq.s32.totalorder %v391, %v267
        %vm624 = vcmp.eq.s32.totalorder %v391, %v268
        %vm625 = vcmp.eq.s32.totalorder %v394, %v265
        %vm626 = vcmp.eq.s32.totalorder %v394, %v266
        %vm627 = vcmp.eq.s32.totalorder %v394, %v267
        %vm628 = vcmp.eq.s32.totalorder %v394, %v268
        %vm629 = vcmp.eq.s32.totalorder %v397, %v265
        %vm630 = vcmp.eq.s32.totalorder %v397, %v266
        %vm631 = vcmp.eq.s32.totalorder %v397, %v267
        %vm632 = vcmp.eq.s32.totalorder %v397, %v268
        %vm633 = vcmp.eq.s32.totalorder %v400, %v265
        %vm634 = vcmp.eq.s32.totalorder %v400, %v266
        %vm635 = vcmp.eq.s32.totalorder %v400, %v267
        %vm636 = vcmp.eq.s32.totalorder %v400, %v268
        %vm637 = vcmp.eq.s32.totalorder %v403, %v265
        %vm638 = vcmp.eq.s32.totalorder %v403, %v266
        %vm639 = vcmp.eq.s32.totalorder %v403, %v267
        %vm640 = vcmp.eq.s32.totalorder %v403, %v268
        %vm641 = vcmp.eq.s32.totalorder %v406, %v265
        %vm642 = vcmp.eq.s32.totalorder %v406, %v266
        %vm643 = vcmp.eq.s32.totalorder %v406, %v267
        %vm644 = vcmp.eq.s32.totalorder %v406, %v268
        %vm645 = vcmp.eq.s32.totalorder %v409, %v265
        %vm646 = vcmp.eq.s32.totalorder %v409, %v266
        %vm647 = vcmp.eq.s32.totalorder %v409, %v267
        %vm648 = vcmp.eq.s32.totalorder %v409, %v268
        %vm649 = vcmp.eq.s32.totalorder %v412, %v265
        %vm650 = vcmp.eq.s32.totalorder %v412, %v266
        %vm651 = vcmp.eq.s32.totalorder %v412, %v267
        %vm652 = vcmp.eq.s32.totalorder %v412, %v268
        %vm653 = vcmp.eq.s32.totalorder %v415, %v265
        %vm654 = vcmp.eq.s32.totalorder %v415, %v266
        %vm655 = vcmp.eq.s32.totalorder %v415, %v267
        %vm656 = vcmp.eq.s32.totalorder %v415, %v268
        %vm657 = vcmp.eq.s32.totalorder %v418, %v265
        %vm658 = vcmp.eq.s32.totalorder %v418, %v266
        %vm659 = vcmp.eq.s32.totalorder %v418, %v267
        %vm660 = vcmp.eq.s32.totalorder %v418, %v268
        %vm661 = vcmp.eq.s32.totalorder %v421, %v265
        %vm662 = vcmp.eq.s32.totalorder %v421, %v266
        %vm663 = vcmp.eq.s32.totalorder %v421, %v267
        %vm664 = vcmp.eq.s32.totalorder %v421, %v268
        %vm665 = vcmp.eq.s32.totalorder %v424, %v265
        %vm666 = vcmp.eq.s32.totalorder %v424, %v266
        %vm667 = vcmp.eq.s32.totalorder %v424, %v267
        %vm668 = vcmp.eq.s32.totalorder %v424, %v268
        %vm669 = vcmp.eq.s32.totalorder %v427, %v265
        %vm670 = vcmp.eq.s32.totalorder %v427, %v266
        %vm671 = vcmp.eq.s32.totalorder %v427, %v267
        %vm672 = vcmp.eq.s32.totalorder %v427, %v268
        %vm673 = vcmp.eq.s32.totalorder %v430, %v265
        %vm674 = vcmp.eq.s32.totalorder %v430, %v266
        %vm675 = vcmp.eq.s32.totalorder %v430, %v267
        %vm676 = vcmp.eq.s32.totalorder %v430, %v268
        %vm677 = vcmp.eq.s32.totalorder %v433, %v265
        %vm678 = vcmp.eq.s32.totalorder %v433, %v266
        %vm679 = vcmp.eq.s32.totalorder %v433, %v267
        %vm680 = vcmp.eq.s32.totalorder %v433, %v268
        %vm681 = vcmp.eq.s32.totalorder %v436, %v265
        %vm682 = vcmp.eq.s32.totalorder %v436, %v266
        %vm683 = vcmp.eq.s32.totalorder %v436, %v267
        %vm684 = vcmp.eq.s32.totalorder %v436, %v268
        %vm685 = vcmp.eq.s32.totalorder %v439, %v265
        %vm686 = vcmp.eq.s32.totalorder %v439, %v266
        %vm687 = vcmp.eq.s32.totalorder %v439, %v267
        %vm688 = vcmp.eq.s32.totalorder %v439, %v268
        %vm689 = vcmp.eq.s32.totalorder %v442, %v265
        %vm690 = vcmp.eq.s32.totalorder %v442, %v266
        %vm691 = vcmp.eq.s32.totalorder %v442, %v267
        %vm692 = vcmp.eq.s32.totalorder %v442, %v268
        %vm693 = vcmp.eq.s32.totalorder %v445, %v265
        %vm694 = vcmp.eq.s32.totalorder %v445, %v266
        %vm695 = vcmp.eq.s32.totalorder %v445, %v267
        %vm696 = vcmp.eq.s32.totalorder %v445, %v268
        %vm697 = vcmp.eq.s32.totalorder %v448, %v265
        %vm698 = vcmp.eq.s32.totalorder %v448, %v266
        %vm699 = vcmp.eq.s32.totalorder %v448, %v267
        %vm700 = vcmp.eq.s32.totalorder %v448, %v268
        %vm701 = vcmp.eq.s32.totalorder %v451, %v265
        %vm702 = vcmp.eq.s32.totalorder %v451, %v266
        %vm703 = vcmp.eq.s32.totalorder %v451, %v267
        %vm704 = vcmp.eq.s32.totalorder %v451, %v268
        %vm705 = vcmp.eq.s32.totalorder %v454, %v265
        %vm706 = vcmp.eq.s32.totalorder %v454, %v266
        %vm707 = vcmp.eq.s32.totalorder %v454, %v267
        %vm708 = vcmp.eq.s32.totalorder %v454, %v268
        %vm709 = vcmp.eq.s32.totalorder %v457, %v265
        %vm710 = vcmp.eq.s32.totalorder %v457, %v266
        %vm711 = vcmp.eq.s32.totalorder %v457, %v267
        %vm712 = vcmp.eq.s32.totalorder %v457, %v268
        %vm713 = vcmp.eq.s32.totalorder %v460, %v265
        %vm714 = vcmp.eq.s32.totalorder %v460, %v266
        %vm715 = vcmp.eq.s32.totalorder %v460, %v267
        %vm716 = vcmp.eq.s32.totalorder %v460, %v268
        %v717 = vsel %vm461, 1, 0
        %v718 = vsel %vm462, 1, 0
        %v719 = vsel %vm463, 1, 0
        %v720 = vsel %vm464, 1, 0
        %v721 = vsel %vm465, 1, 0
        %v722 = vsel %vm466, 1, 0
        %v723 = vsel %vm467, 1, 0
        %v724 = vsel %vm468, 1, 0
        %v725 = vsel %vm469, 1, 0
        %v726 = vsel %vm470, 1, 0
        %v727 = vsel %vm471, 1, 0
        %v728 = vsel %vm472, 1, 0
        %v729 = vsel %vm473, 1, 0
        %v730 = vsel %vm474, 1, 0
        %v731 = vsel %vm475, 1, 0
        %v732 = vsel %vm476, 1, 0
        %v733 = vsel %vm477, 1, 0
        %v734 = vsel %vm478, 1, 0
        %v735 = vsel %vm479, 1, 0
        %v736 = vsel %vm480, 1, 0
        %v737 = vsel %vm481, 1, 0
        %v738 = vsel %vm482, 1, 0
        %v739 = vsel %vm483, 1, 0
        %v740 = vsel %vm484, 1, 0
        %v741 = vsel %vm485, 1, 0
        %v742 = vsel %vm486, 1, 0
        %v743 = vsel %vm487, 1, 0
        %v744 = vsel %vm488, 1, 0
        %v745 = vsel %vm489, 1, 0
        %v746 = vsel %vm490, 1, 0
        %v747 = vsel %vm491, 1, 0
        %v748 = vsel %vm492, 1, 0
        %v749 = vsel %vm493, 1, 0
        %v750 = vsel %vm494, 1, 0
        %v751 = vsel %vm495, 1, 0
        %v752 = vsel %vm496, 1, 0
        %v753 = vsel %vm497, 1, 0
        %v754 = vsel %vm498, 1, 0
        %v755 = vsel %vm499, 1, 0
        %v756 = vsel %vm500, 1, 0
        %v757 = vsel %vm501, 1, 0
        %v758 = vsel %vm502, 1, 0
        %v759 = vsel %vm503, 1, 0
        %v760 = vsel %vm504, 1, 0
        %v761 = vsel %vm505, 1, 0
        %v762 = vsel %vm506, 1, 0
        %v763 = vsel %vm507, 1, 0
        %v764 = vsel %vm508, 1, 0
        %v765 = vsel %vm509, 1, 0
        %v766 = vsel %vm510, 1, 0
        %v767 = vsel %vm511, 1, 0
        %v768 = vsel %vm512, 1, 0
        %v769 = vsel %vm513, 1, 0
        %v770 = vsel %vm514, 1, 0
        %v771 = vsel %vm515, 1, 0
        %v772 = vsel %vm516, 1, 0
        %v773 = vsel %vm517, 1, 0
        %v774 = vsel %vm518, 1, 0
        %v775 = vsel %vm519, 1, 0
        %v776 = vsel %vm520, 1, 0
        %v777 = vsel %vm521, 1, 0
        %v778 = vsel %vm522, 1, 0
        %v779 = vsel %vm523, 1, 0
        %v780 = vsel %vm524, 1, 0
        %v781 = vsel %vm525, 1, 0
        %v782 = vsel %vm526, 1, 0
        %v783 = vsel %vm527, 1, 0
        %v784 = vsel %vm528, 1, 0
        %v785 = vsel %vm529, 1, 0
        %v786 = vsel %vm530, 1, 0
        %v787 = vsel %vm531, 1, 0
        %v788 = vsel %vm532, 1, 0
        %v789 = vsel %vm533, 1, 0
        %v790 = vsel %vm534, 1, 0
        %v791 = vsel %vm535, 1, 0
        %v792 = vsel %vm536, 1, 0
        %v793 = vsel %vm537, 1, 0
        %v794 = vsel %vm538, 1, 0
        %v795 = vsel %vm539, 1, 0
        %v796 = vsel %vm540, 1, 0
        %v797 = vsel %vm541, 1, 0
        %v798 = vsel %vm542, 1, 0
        %v799 = vsel %vm543, 1, 0
        %v800 = vsel %vm544, 1, 0
        %v801 = vsel %vm545, 1, 0
        %v802 = vsel %vm546, 1, 0
        %v803 = vsel %vm547, 1, 0
        %v804 = vsel %vm548, 1, 0
        %v805 = vsel %vm549, 1, 0
        %v806 = vsel %vm550, 1, 0
        %v807 = vsel %vm551, 1, 0
        %v808 = vsel %vm552, 1, 0
        %v809 = vsel %vm553, 1, 0
        %v810 = vsel %vm554, 1, 0
        %v811 = vsel %vm555, 1, 0
        %v812 = vsel %vm556, 1, 0
        %v813 = vsel %vm557, 1, 0
        %v814 = vsel %vm558, 1, 0
        %v815 = vsel %vm559, 1, 0
        %v816 = vsel %vm560, 1, 0
        %v817 = vsel %vm561, 1, 0
        %v818 = vsel %vm562, 1, 0
        %v819 = vsel %vm563, 1, 0
        %v820 = vsel %vm564, 1, 0
        %v821 = vsel %vm565, 1, 0
        %v822 = vsel %vm566, 1, 0
        %v823 = vsel %vm567, 1, 0
        %v824 = vsel %vm568, 1, 0
        %v825 = vsel %vm569, 1, 0
        %v826 = vsel %vm570, 1, 0
        %v827 = vsel %vm571, 1, 0
        %v828 = vsel %vm572, 1, 0
        %v829 = vsel %vm573, 1, 0
        %v830 = vsel %vm574, 1, 0
        %v831 = vsel %vm575, 1, 0
        %v832 = vsel %vm576, 1, 0
        %v833 = vsel %vm577, 1, 0
        %v834 = vsel %vm578, 1, 0
        %v835 = vsel %vm579, 1, 0
        %v836 = vsel %vm580, 1, 0
        %v837 = vsel %vm581, 1, 0
        %v838 = vsel %vm582, 1, 0
        %v839 = vsel %vm583, 1, 0
        %v840 = vsel %vm584, 1, 0
        %v841 = vsel %vm585, 1, 0
        %v842 = vsel %vm586, 1, 0
        %v843 = vsel %vm587, 1, 0
        %v844 = vsel %vm588, 1, 0
        %v845 = vsel %vm589, 1, 0
        %v846 = vsel %vm590, 1, 0
        %v847 = vsel %vm591, 1, 0
        %v848 = vsel %vm592, 1, 0
        %v849 = vsel %vm593, 1, 0
        %v850 = vsel %vm594, 1, 0
        %v851 = vsel %vm595, 1, 0
        %v852 = vsel %vm596, 1, 0
        %v853 = vsel %vm597, 1, 0
        %v854 = vsel %vm598, 1, 0
        %v855 = vsel %vm599, 1, 0
        %v856 = vsel %vm600, 1, 0
        %v857 = vsel %vm601, 1, 0
        %v858 = vsel %vm602, 1, 0
        %v859 = vsel %vm603, 1, 0
        %v860 = vsel %vm604, 1, 0
        %v861 = vsel %vm605, 1, 0
        %v862 = vsel %vm606, 1, 0
        %v863 = vsel %vm607, 1, 0
        %v864 = vsel %vm608, 1, 0
        %v865 = vsel %vm609, 1, 0
        %v866 = vsel %vm610, 1, 0
        %v867 = vsel %vm611, 1, 0
        %v868 = vsel %vm612, 1, 0
        %v869 = vsel %vm613, 1, 0
        %v870 = vsel %vm614, 1, 0
        %v871 = vsel %vm615, 1, 0
        %v872 = vsel %vm616, 1, 0
        %v873 = vsel %vm617, 1, 0
        %v874 = vsel %vm618, 1, 0
        %v875 = vsel %vm619, 1, 0
        %v876 = vsel %vm620, 1, 0
        %v877 = vsel %vm621, 1, 0
        %v878 = vsel %vm622, 1, 0
        %v879 = vsel %vm623, 1, 0
        %v880 = vsel %vm624, 1, 0
        %v881 = vsel %vm625, 1, 0
        %v882 = vsel %vm626, 1, 0
        %v883 = vsel %vm627, 1, 0
        %v884 = vsel %vm628, 1, 0
        %v885 = vsel %vm629, 1, 0
        %v886 = vsel %vm630, 1, 0
        %v887 = vsel %vm631, 1, 0
        %v888 = vsel %vm632, 1, 0
        %v889 = vsel %vm633, 1, 0
        %v890 = vsel %vm634, 1, 0
        %v891 = vsel %vm635, 1, 0
        %v892 = vsel %vm636, 1, 0
        %v893 = vsel %vm637, 1, 0
        %v894 = vsel %vm638, 1, 0
        %v895 = vsel %vm639, 1, 0
        %v896 = vsel %vm640, 1, 0
        %v897 = vsel %vm641, 1, 0
        %v898 = vsel %vm642, 1, 0
        %v899 = vsel %vm643, 1, 0
        %v900 = vsel %vm644, 1, 0
        %v901 = vsel %vm645, 1, 0
        %v902 = vsel %vm646, 1, 0
        %v903 = vsel %vm647, 1, 0
        %v904 = vsel %vm648, 1, 0
        %v905 = vsel %vm649, 1, 0
        %v906 = vsel %vm650, 1, 0
        %v907 = vsel %vm651, 1, 0
        %v908 = vsel %vm652, 1, 0
        %v909 = vsel %vm653, 1, 0
        %v910 = vsel %vm654, 1, 0
        %v911 = vsel %vm655, 1, 0
        %v912 = vsel %vm656, 1, 0
        %v913 = vsel %vm657, 1, 0
        %v914 = vsel %vm658, 1, 0
        %v915 = vsel %vm659, 1, 0
        %v916 = vsel %vm660, 1, 0
        %v917 = vsel %vm661, 1, 0
        %v918 = vsel %vm662, 1, 0
        %v919 = vsel %vm663, 1, 0
        %v920 = vsel %vm664, 1, 0
        %v921 = vsel %vm665, 1, 0
        %v922 = vsel %vm666, 1, 0
        %v923 = vsel %vm667, 1, 0
        %v924 = vsel %vm668, 1, 0
        %v925 = vsel %vm669, 1, 0
        %v926 = vsel %vm670, 1, 0
        %v927 = vsel %vm671, 1, 0
        %v928 = vsel %vm672, 1, 0
        %v929 = vsel %vm673, 1, 0
        %v930 = vsel %vm674, 1, 0
        %v931 = vsel %vm675, 1, 0
        %v932 = vsel %vm676, 1, 0
        %v933 = vsel %vm677, 1, 0
        %v934 = vsel %vm678, 1, 0
        %v935 = vsel %vm679, 1, 0
        %v936 = vsel %vm680, 1, 0
        %v937 = vsel %vm681, 1, 0
        %v938 = vsel %vm682, 1, 0
        %v939 = vsel %vm683, 1, 0
        %v940 = vsel %vm684, 1, 0
        %v941 = vsel %vm685, 1, 0
        %v942 = vsel %vm686, 1, 0
        %v943 = vsel %vm687, 1, 0
        %v944 = vsel %vm688, 1, 0
        %v945 = vsel %vm689, 1, 0
        %v946 = vsel %vm690, 1, 0
        %v947 = vsel %vm691, 1, 0
        %v948 = vsel %vm692, 1, 0
        %v949 = vsel %vm693, 1, 0
        %v950 = vsel %vm694, 1, 0
        %v951 = vsel %vm695, 1, 0
        %v952 = vsel %vm696, 1, 0
        %v953 = vsel %vm697, 1, 0
        %v954 = vsel %vm698, 1, 0
        %v955 = vsel %vm699, 1, 0
        %v956 = vsel %vm700, 1, 0
        %v957 = vsel %vm701, 1, 0
        %v958 = vsel %vm702, 1, 0
        %v959 = vsel %vm703, 1, 0
        %v960 = vsel %vm704, 1, 0
        %v961 = vsel %vm705, 1, 0
        %v962 = vsel %vm706, 1, 0
        %v963 = vsel %vm707, 1, 0
        %v964 = vsel %vm708, 1, 0
        %v965 = vsel %vm709, 1, 0
        %v966 = vsel %vm710, 1, 0
        %v967 = vsel %vm711, 1, 0
        %v968 = vsel %vm712, 1, 0
        %v969 = vsel %vm713, 1, 0
        %v970 = vsel %vm714, 1, 0
        %v971 = vsel %vm715, 1, 0
        %v972 = vsel %vm716, 1, 0
        %973 = vset.pattern.permute.xlu0 1
        %974 = vperm.xlu0 %973, %v200
        %v975 = vpop.permute.xlu0 %974
        %976 = vset.pattern.permute.xlu0 1
        %977 = vperm.xlu0 %976, %v201
        %v978 = vpop.permute.xlu0 %977
        %979 = vset.pattern.permute.xlu0 1
        %980 = vperm.xlu0 %979, %v202
        %v981 = vpop.permute.xlu0 %980
        %982 = vset.pattern.permute.xlu0 1
        %983 = vperm.xlu0 %982, %v203
        %v984 = vpop.permute.xlu0 %983
        %985 = vset.pattern.permute.xlu0 1
        %986 = vperm.xlu0 %985, %v204
        %v987 = vpop.permute.xlu0 %986
        %988 = vset.pattern.permute.xlu0 1
        %989 = vperm.xlu0 %988, %v205
        %v990 = vpop.permute.xlu0 %989
        %991 = vset.pattern.permute.xlu0 1
        %992 = vperm.xlu0 %991, %v206
        %v993 = vpop.permute.xlu0 %992
        %994 = vset.pattern.permute.xlu0 1
        %995 = vperm.xlu0 %994, %v207
        %v996 = vpop.permute.xlu0 %995
        %997 = vset.pattern.permute.xlu0 1
        %998 = vperm.xlu0 %997, %v208
        %v999 = vpop.permute.xlu0 %998
        %1000 = vset.pattern.permute.xlu0 1
        %1001 = vperm.xlu0 %1000, %v209
        %v1002 = vpop.permute.xlu0 %1001
        %1003 = vset.pattern.permute.xlu0 1
        %1004 = vperm.xlu0 %1003, %v210
        %v1005 = vpop.permute.xlu0 %1004
        %1006 = vset.pattern.permute.xlu0 1
        %1007 = vperm.xlu0 %1006, %v211
        %v1008 = vpop.permute.xlu0 %1007
        %1009 = vset.pattern.permute.xlu0 1
        %1010 = vperm.xlu0 %1009, %v212
        %v1011 = vpop.permute.xlu0 %1010
        %1012 = vset.pattern.permute.xlu0 1
        %1013 = vperm.xlu0 %1012, %v213
        %v1014 = vpop.permute.xlu0 %1013
        %1015 = vset.pattern.permute.xlu0 1
        %1016 = vperm.xlu0 %1015, %v214
        %v1017 = vpop.permute.xlu0 %1016
        %1018 = vset.pattern.permute.xlu0 1
        %1019 = vperm.xlu0 %1018, %v215
        %v1020 = vpop.permute.xlu0 %1019
        %1021 = vset.pattern.permute.xlu0 1
        %1022 = vperm.xlu0 %1021, %v216
        %v1023 = vpop.permute.xlu0 %1022
        %1024 = vset.pattern.permute.xlu0 1
        %1025 = vperm.xlu0 %1024, %v217
        %v1026 = vpop.permute.xlu0 %1025
        %1027 = vset.pattern.permute.xlu0 1
        %1028 = vperm.xlu0 %1027, %v218
        %v1029 = vpop.permute.xlu0 %1028
        %1030 = vset.pattern.permute.xlu0 1
        %1031 = vperm.xlu0 %1030, %v219
        %v1032 = vpop.permute.xlu0 %1031
        %1033 = vset.pattern.permute.xlu0 1
        %1034 = vperm.xlu0 %1033, %v220
        %v1035 = vpop.permute.xlu0 %1034
        %1036 = vset.pattern.permute.xlu0 1
        %1037 = vperm.xlu0 %1036, %v221
        %v1038 = vpop.permute.xlu0 %1037
        %1039 = vset.pattern.permute.xlu0 1
        %1040 = vperm.xlu0 %1039, %v222
        %v1041 = vpop.permute.xlu0 %1040
        %1042 = vset.pattern.permute.xlu0 1
        %1043 = vperm.xlu0 %1042, %v223
        %v1044 = vpop.permute.xlu0 %1043
        %1045 = vset.pattern.permute.xlu0 1
        %1046 = vperm.xlu0 %1045, %v224
        %v1047 = vpop.permute.xlu0 %1046
        %1048 = vset.pattern.permute.xlu0 1
        %1049 = vperm.xlu0 %1048, %v225
        %v1050 = vpop.permute.xlu0 %1049
        %1051 = vset.pattern.permute.xlu0 1
        %1052 = vperm.xlu0 %1051, %v226
        %v1053 = vpop.permute.xlu0 %1052
        %1054 = vset.pattern.permute.xlu0 1
        %1055 = vperm.xlu0 %1054, %v227
        %v1056 = vpop.permute.xlu0 %1055
        %1057 = vset.pattern.permute.xlu0 1
        %1058 = vperm.xlu0 %1057, %v228
        %v1059 = vpop.permute.xlu0 %1058
        %1060 = vset.pattern.permute.xlu0 1
        %1061 = vperm.xlu0 %1060, %v229
        %v1062 = vpop.permute.xlu0 %1061
        %1063 = vset.pattern.permute.xlu0 1
        %1064 = vperm.xlu0 %1063, %v230
        %v1065 = vpop.permute.xlu0 %1064
        %1066 = vset.pattern.permute.xlu0 1
        %1067 = vperm.xlu0 %1066, %v231
        %v1068 = vpop.permute.xlu0 %1067
        %1069 = vset.pattern.permute.xlu0 1
        %1070 = vperm.xlu0 %1069, %v232
        %v1071 = vpop.permute.xlu0 %1070
        %1072 = vset.pattern.permute.xlu0 1
        %1073 = vperm.xlu0 %1072, %v233
        %v1074 = vpop.permute.xlu0 %1073
        %1075 = vset.pattern.permute.xlu0 1
        %1076 = vperm.xlu0 %1075, %v234
        %v1077 = vpop.permute.xlu0 %1076
        %1078 = vset.pattern.permute.xlu0 1
        %1079 = vperm.xlu0 %1078, %v235
        %v1080 = vpop.permute.xlu0 %1079
        %1081 = vset.pattern.permute.xlu0 1
        %1082 = vperm.xlu0 %1081, %v236
        %v1083 = vpop.permute.xlu0 %1082
        %1084 = vset.pattern.permute.xlu0 1
        %1085 = vperm.xlu0 %1084, %v237
        %v1086 = vpop.permute.xlu0 %1085
        %1087 = vset.pattern.permute.xlu0 1
        %1088 = vperm.xlu0 %1087, %v238
        %v1089 = vpop.permute.xlu0 %1088
        %1090 = vset.pattern.permute.xlu0 1
        %1091 = vperm.xlu0 %1090, %v239
        %v1092 = vpop.permute.xlu0 %1091
        %1093 = vset.pattern.permute.xlu0 1
        %1094 = vperm.xlu0 %1093, %v240
        %v1095 = vpop.permute.xlu0 %1094
        %1096 = vset.pattern.permute.xlu0 1
        %1097 = vperm.xlu0 %1096, %v241
        %v1098 = vpop.permute.xlu0 %1097
        %1099 = vset.pattern.permute.xlu0 1
        %1100 = vperm.xlu0 %1099, %v242
        %v1101 = vpop.permute.xlu0 %1100
        %1102 = vset.pattern.permute.xlu0 1
        %1103 = vperm.xlu0 %1102, %v243
        %v1104 = vpop.permute.xlu0 %1103
        %1105 = vset.pattern.permute.xlu0 1
        %1106 = vperm.xlu0 %1105, %v244
        %v1107 = vpop.permute.xlu0 %1106
        %1108 = vset.pattern.permute.xlu0 1
        %1109 = vperm.xlu0 %1108, %v245
        %v1110 = vpop.permute.xlu0 %1109
        %1111 = vset.pattern.permute.xlu0 1
        %1112 = vperm.xlu0 %1111, %v246
        %v1113 = vpop.permute.xlu0 %1112
        %1114 = vset.pattern.permute.xlu0 1
        %1115 = vperm.xlu0 %1114, %v247
        %v1116 = vpop.permute.xlu0 %1115
        %1117 = vset.pattern.permute.xlu0 1
        %1118 = vperm.xlu0 %1117, %v248
        %v1119 = vpop.permute.xlu0 %1118
        %1120 = vset.pattern.permute.xlu0 1
        %1121 = vperm.xlu0 %1120, %v249
        %v1122 = vpop.permute.xlu0 %1121
        %1123 = vset.pattern.permute.xlu0 1
        %1124 = vperm.xlu0 %1123, %v250
        %v1125 = vpop.permute.xlu0 %1124
        %1126 = vset.pattern.permute.xlu0 1
        %1127 = vperm.xlu0 %1126, %v251
        %v1128 = vpop.permute.xlu0 %1127
        %1129 = vset.pattern.permute.xlu0 1
        %1130 = vperm.xlu0 %1129, %v252
        %v1131 = vpop.permute.xlu0 %1130
        %1132 = vset.pattern.permute.xlu0 1
        %1133 = vperm.xlu0 %1132, %v253
        %v1134 = vpop.permute.xlu0 %1133
        %1135 = vset.pattern.permute.xlu0 1
        %1136 = vperm.xlu0 %1135, %v254
        %v1137 = vpop.permute.xlu0 %1136
        %1138 = vset.pattern.permute.xlu0 1
        %1139 = vperm.xlu0 %1138, %v255
        %v1140 = vpop.permute.xlu0 %1139
        %1141 = vset.pattern.permute.xlu0 1
        %1142 = vperm.xlu0 %1141, %v256
        %v1143 = vpop.permute.xlu0 %1142
        %1144 = vset.pattern.permute.xlu0 1
        %1145 = vperm.xlu0 %1144, %v257
        %v1146 = vpop.permute.xlu0 %1145
        %1147 = vset.pattern.permute.xlu0 1
        %1148 = vperm.xlu0 %1147, %v258
        %v1149 = vpop.permute.xlu0 %1148
        %1150 = vset.pattern.permute.xlu0 1
        %1151 = vperm.xlu0 %1150, %v259
        %v1152 = vpop.permute.xlu0 %1151
        %1153 = vset.pattern.permute.xlu0 1
        %1154 = vperm.xlu0 %1153, %v260
        %v1155 = vpop.permute.xlu0 %1154
        %1156 = vset.pattern.permute.xlu0 1
        %1157 = vperm.xlu0 %1156, %v261
        %v1158 = vpop.permute.xlu0 %1157
        %1159 = vset.pattern.permute.xlu0 1
        %1160 = vperm.xlu0 %1159, %v262
        %v1161 = vpop.permute.xlu0 %1160
        %1162 = vset.pattern.permute.xlu0 1
        %1163 = vperm.xlu0 %1162, %v263
        %v1164 = vpop.permute.xlu0 %1163
        %vm1165 = vcmp.eq.s32.totalorder %v975, %v265
        %vm1166 = vcmp.eq.s32.totalorder %v975, %v266
        %vm1167 = vcmp.eq.s32.totalorder %v975, %v267
        %vm1168 = vcmp.eq.s32.totalorder %v975, %v268
        %vm1169 = vcmp.eq.s32.totalorder %v978, %v265
        %vm1170 = vcmp.eq.s32.totalorder %v978, %v266
        %vm1171 = vcmp.eq.s32.totalorder %v978, %v267
        %vm1172 = vcmp.eq.s32.totalorder %v978, %v268
        %vm1173 = vcmp.eq.s32.totalorder %v981, %v265
        %vm1174 = vcmp.eq.s32.totalorder %v981, %v266
        %vm1175 = vcmp.eq.s32.totalorder %v981, %v267
        %vm1176 = vcmp.eq.s32.totalorder %v981, %v268
        %vm1177 = vcmp.eq.s32.totalorder %v984, %v265
        %vm1178 = vcmp.eq.s32.totalorder %v984, %v266
        %vm1179 = vcmp.eq.s32.totalorder %v984, %v267
        %vm1180 = vcmp.eq.s32.totalorder %v984, %v268
        %vm1181 = vcmp.eq.s32.totalorder %v987, %v265
        %vm1182 = vcmp.eq.s32.totalorder %v987, %v266
        %vm1183 = vcmp.eq.s32.totalorder %v987, %v267
        %vm1184 = vcmp.eq.s32.totalorder %v987, %v268
        %vm1185 = vcmp.eq.s32.totalorder %v990, %v265
        %vm1186 = vcmp.eq.s32.totalorder %v990, %v266
        %vm1187 = vcmp.eq.s32.totalorder %v990, %v267
        %vm1188 = vcmp.eq.s32.totalorder %v990, %v268
        %vm1189 = vcmp.eq.s32.totalorder %v993, %v265
        %vm1190 = vcmp.eq.s32.totalorder %v993, %v266
        %vm1191 = vcmp.eq.s32.totalorder %v993, %v267
        %vm1192 = vcmp.eq.s32.totalorder %v993, %v268
        %vm1193 = vcmp.eq.s32.totalorder %v996, %v265
        %vm1194 = vcmp.eq.s32.totalorder %v996, %v266
        %vm1195 = vcmp.eq.s32.totalorder %v996, %v267
        %vm1196 = vcmp.eq.s32.totalorder %v996, %v268
        %vm1197 = vcmp.eq.s32.totalorder %v999, %v265
        %vm1198 = vcmp.eq.s32.totalorder %v999, %v266
        %vm1199 = vcmp.eq.s32.totalorder %v999, %v267
        %vm1200 = vcmp.eq.s32.totalorder %v999, %v268
        %vm1201 = vcmp.eq.s32.totalorder %v1002, %v265
        %vm1202 = vcmp.eq.s32.totalorder %v1002, %v266
        %vm1203 = vcmp.eq.s32.totalorder %v1002, %v267
        %vm1204 = vcmp.eq.s32.totalorder %v1002, %v268
        %vm1205 = vcmp.eq.s32.totalorder %v1005, %v265
        %vm1206 = vcmp.eq.s32.totalorder %v1005, %v266
        %vm1207 = vcmp.eq.s32.totalorder %v1005, %v267
        %vm1208 = vcmp.eq.s32.totalorder %v1005, %v268
        %vm1209 = vcmp.eq.s32.totalorder %v1008, %v265
        %vm1210 = vcmp.eq.s32.totalorder %v1008, %v266
        %vm1211 = vcmp.eq.s32.totalorder %v1008, %v267
        %vm1212 = vcmp.eq.s32.totalorder %v1008, %v268
        %vm1213 = vcmp.eq.s32.totalorder %v1011, %v265
        %vm1214 = vcmp.eq.s32.totalorder %v1011, %v266
        %vm1215 = vcmp.eq.s32.totalorder %v1011, %v267
        %vm1216 = vcmp.eq.s32.totalorder %v1011, %v268
        %vm1217 = vcmp.eq.s32.totalorder %v1014, %v265
        %vm1218 = vcmp.eq.s32.totalorder %v1014, %v266
        %vm1219 = vcmp.eq.s32.totalorder %v1014, %v267
        %vm1220 = vcmp.eq.s32.totalorder %v1014, %v268
        %vm1221 = vcmp.eq.s32.totalorder %v1017, %v265
        %vm1222 = vcmp.eq.s32.totalorder %v1017, %v266
        %vm1223 = vcmp.eq.s32.totalorder %v1017, %v267
        %vm1224 = vcmp.eq.s32.totalorder %v1017, %v268
        %vm1225 = vcmp.eq.s32.totalorder %v1020, %v265
        %vm1226 = vcmp.eq.s32.totalorder %v1020, %v266
        %vm1227 = vcmp.eq.s32.totalorder %v1020, %v267
        %vm1228 = vcmp.eq.s32.totalorder %v1020, %v268
        %vm1229 = vcmp.eq.s32.totalorder %v1023, %v265
        %vm1230 = vcmp.eq.s32.totalorder %v1023, %v266
        %vm1231 = vcmp.eq.s32.totalorder %v1023, %v267
        %vm1232 = vcmp.eq.s32.totalorder %v1023, %v268
        %vm1233 = vcmp.eq.s32.totalorder %v1026, %v265
        %vm1234 = vcmp.eq.s32.totalorder %v1026, %v266
        %vm1235 = vcmp.eq.s32.totalorder %v1026, %v267
        %vm1236 = vcmp.eq.s32.totalorder %v1026, %v268
        %vm1237 = vcmp.eq.s32.totalorder %v1029, %v265
        %vm1238 = vcmp.eq.s32.totalorder %v1029, %v266
        %vm1239 = vcmp.eq.s32.totalorder %v1029, %v267
        %vm1240 = vcmp.eq.s32.totalorder %v1029, %v268
        %vm1241 = vcmp.eq.s32.totalorder %v1032, %v265
        %vm1242 = vcmp.eq.s32.totalorder %v1032, %v266
        %vm1243 = vcmp.eq.s32.totalorder %v1032, %v267
        %vm1244 = vcmp.eq.s32.totalorder %v1032, %v268
        %vm1245 = vcmp.eq.s32.totalorder %v1035, %v265
        %vm1246 = vcmp.eq.s32.totalorder %v1035, %v266
        %vm1247 = vcmp.eq.s32.totalorder %v1035, %v267
        %vm1248 = vcmp.eq.s32.totalorder %v1035, %v268
        %vm1249 = vcmp.eq.s32.totalorder %v1038, %v265
        %vm1250 = vcmp.eq.s32.totalorder %v1038, %v266
        %vm1251 = vcmp.eq.s32.totalorder %v1038, %v267
        %vm1252 = vcmp.eq.s32.totalorder %v1038, %v268
        %vm1253 = vcmp.eq.s32.totalorder %v1041, %v265
        %vm1254 = vcmp.eq.s32.totalorder %v1041, %v266
        %vm1255 = vcmp.eq.s32.totalorder %v1041, %v267
        %vm1256 = vcmp.eq.s32.totalorder %v1041, %v268
        %vm1257 = vcmp.eq.s32.totalorder %v1044, %v265
        %vm1258 = vcmp.eq.s32.totalorder %v1044, %v266
        %vm1259 = vcmp.eq.s32.totalorder %v1044, %v267
        %vm1260 = vcmp.eq.s32.totalorder %v1044, %v268
        %vm1261 = vcmp.eq.s32.totalorder %v1047, %v265
        %vm1262 = vcmp.eq.s32.totalorder %v1047, %v266
        %vm1263 = vcmp.eq.s32.totalorder %v1047, %v267
        %vm1264 = vcmp.eq.s32.totalorder %v1047, %v268
        %vm1265 = vcmp.eq.s32.totalorder %v1050, %v265
        %vm1266 = vcmp.eq.s32.totalorder %v1050, %v266
        %vm1267 = vcmp.eq.s32.totalorder %v1050, %v267
        %vm1268 = vcmp.eq.s32.totalorder %v1050, %v268
        %vm1269 = vcmp.eq.s32.totalorder %v1053, %v265
        %vm1270 = vcmp.eq.s32.totalorder %v1053, %v266
        %vm1271 = vcmp.eq.s32.totalorder %v1053, %v267
        %vm1272 = vcmp.eq.s32.totalorder %v1053, %v268
        %vm1273 = vcmp.eq.s32.totalorder %v1056, %v265
        %vm1274 = vcmp.eq.s32.totalorder %v1056, %v266
        %vm1275 = vcmp.eq.s32.totalorder %v1056, %v267
        %vm1276 = vcmp.eq.s32.totalorder %v1056, %v268
        %vm1277 = vcmp.eq.s32.totalorder %v1059, %v265
        %vm1278 = vcmp.eq.s32.totalorder %v1059, %v266
        %vm1279 = vcmp.eq.s32.totalorder %v1059, %v267
        %vm1280 = vcmp.eq.s32.totalorder %v1059, %v268
        %vm1281 = vcmp.eq.s32.totalorder %v1062, %v265
        %vm1282 = vcmp.eq.s32.totalorder %v1062, %v266
        %vm1283 = vcmp.eq.s32.totalorder %v1062, %v267
        %vm1284 = vcmp.eq.s32.totalorder %v1062, %v268
        %vm1285 = vcmp.eq.s32.totalorder %v1065, %v265
        %vm1286 = vcmp.eq.s32.totalorder %v1065, %v266
        %vm1287 = vcmp.eq.s32.totalorder %v1065, %v267
        %vm1288 = vcmp.eq.s32.totalorder %v1065, %v268
        %vm1289 = vcmp.eq.s32.totalorder %v1068, %v265
        %vm1290 = vcmp.eq.s32.totalorder %v1068, %v266
        %vm1291 = vcmp.eq.s32.totalorder %v1068, %v267
        %vm1292 = vcmp.eq.s32.totalorder %v1068, %v268
        %vm1293 = vcmp.eq.s32.totalorder %v1071, %v265
        %vm1294 = vcmp.eq.s32.totalorder %v1071, %v266
        %vm1295 = vcmp.eq.s32.totalorder %v1071, %v267
        %vm1296 = vcmp.eq.s32.totalorder %v1071, %v268
        %vm1297 = vcmp.eq.s32.totalorder %v1074, %v265
        %vm1298 = vcmp.eq.s32.totalorder %v1074, %v266
        %vm1299 = vcmp.eq.s32.totalorder %v1074, %v267
        %vm1300 = vcmp.eq.s32.totalorder %v1074, %v268
        %vm1301 = vcmp.eq.s32.totalorder %v1077, %v265
        %vm1302 = vcmp.eq.s32.totalorder %v1077, %v266
        %vm1303 = vcmp.eq.s32.totalorder %v1077, %v267
        %vm1304 = vcmp.eq.s32.totalorder %v1077, %v268
        %vm1305 = vcmp.eq.s32.totalorder %v1080, %v265
        %vm1306 = vcmp.eq.s32.totalorder %v1080, %v266
        %vm1307 = vcmp.eq.s32.totalorder %v1080, %v267
        %vm1308 = vcmp.eq.s32.totalorder %v1080, %v268
        %vm1309 = vcmp.eq.s32.totalorder %v1083, %v265
        %vm1310 = vcmp.eq.s32.totalorder %v1083, %v266
        %vm1311 = vcmp.eq.s32.totalorder %v1083, %v267
        %vm1312 = vcmp.eq.s32.totalorder %v1083, %v268
        %vm1313 = vcmp.eq.s32.totalorder %v1086, %v265
        %vm1314 = vcmp.eq.s32.totalorder %v1086, %v266
        %vm1315 = vcmp.eq.s32.totalorder %v1086, %v267
        %vm1316 = vcmp.eq.s32.totalorder %v1086, %v268
        %vm1317 = vcmp.eq.s32.totalorder %v1089, %v265
        %vm1318 = vcmp.eq.s32.totalorder %v1089, %v266
        %vm1319 = vcmp.eq.s32.totalorder %v1089, %v267
        %vm1320 = vcmp.eq.s32.totalorder %v1089, %v268
        %vm1321 = vcmp.eq.s32.totalorder %v1092, %v265
        %vm1322 = vcmp.eq.s32.totalorder %v1092, %v266
        %vm1323 = vcmp.eq.s32.totalorder %v1092, %v267
        %vm1324 = vcmp.eq.s32.totalorder %v1092, %v268
        %vm1325 = vcmp.eq.s32.totalorder %v1095, %v265
        %vm1326 = vcmp.eq.s32.totalorder %v1095, %v266
        %vm1327 = vcmp.eq.s32.totalorder %v1095, %v267
        %vm1328 = vcmp.eq.s32.totalorder %v1095, %v268
        %vm1329 = vcmp.eq.s32.totalorder %v1098, %v265
        %vm1330 = vcmp.eq.s32.totalorder %v1098, %v266
        %vm1331 = vcmp.eq.s32.totalorder %v1098, %v267
        %vm1332 = vcmp.eq.s32.totalorder %v1098, %v268
        %vm1333 = vcmp.eq.s32.totalorder %v1101, %v265
        %vm1334 = vcmp.eq.s32.totalorder %v1101, %v266
        %vm1335 = vcmp.eq.s32.totalorder %v1101, %v267
        %vm1336 = vcmp.eq.s32.totalorder %v1101, %v268
        %vm1337 = vcmp.eq.s32.totalorder %v1104, %v265
        %vm1338 = vcmp.eq.s32.totalorder %v1104, %v266
        %vm1339 = vcmp.eq.s32.totalorder %v1104, %v267
        %vm1340 = vcmp.eq.s32.totalorder %v1104, %v268
        %vm1341 = vcmp.eq.s32.totalorder %v1107, %v265
        %vm1342 = vcmp.eq.s32.totalorder %v1107, %v266
        %vm1343 = vcmp.eq.s32.totalorder %v1107, %v267
        %vm1344 = vcmp.eq.s32.totalorder %v1107, %v268
        %vm1345 = vcmp.eq.s32.totalorder %v1110, %v265
        %vm1346 = vcmp.eq.s32.totalorder %v1110, %v266
        %vm1347 = vcmp.eq.s32.totalorder %v1110, %v267
        %vm1348 = vcmp.eq.s32.totalorder %v1110, %v268
        %vm1349 = vcmp.eq.s32.totalorder %v1113, %v265
        %vm1350 = vcmp.eq.s32.totalorder %v1113, %v266
        %vm1351 = vcmp.eq.s32.totalorder %v1113, %v267
        %vm1352 = vcmp.eq.s32.totalorder %v1113, %v268
        %vm1353 = vcmp.eq.s32.totalorder %v1116, %v265
        %vm1354 = vcmp.eq.s32.totalorder %v1116, %v266
        %vm1355 = vcmp.eq.s32.totalorder %v1116, %v267
        %vm1356 = vcmp.eq.s32.totalorder %v1116, %v268
        %vm1357 = vcmp.eq.s32.totalorder %v1119, %v265
        %vm1358 = vcmp.eq.s32.totalorder %v1119, %v266
        %vm1359 = vcmp.eq.s32.totalorder %v1119, %v267
        %vm1360 = vcmp.eq.s32.totalorder %v1119, %v268
        %vm1361 = vcmp.eq.s32.totalorder %v1122, %v265
        %vm1362 = vcmp.eq.s32.totalorder %v1122, %v266
        %vm1363 = vcmp.eq.s32.totalorder %v1122, %v267
        %vm1364 = vcmp.eq.s32.totalorder %v1122, %v268
        %vm1365 = vcmp.eq.s32.totalorder %v1125, %v265
        %vm1366 = vcmp.eq.s32.totalorder %v1125, %v266
        %vm1367 = vcmp.eq.s32.totalorder %v1125, %v267
        %vm1368 = vcmp.eq.s32.totalorder %v1125, %v268
        %vm1369 = vcmp.eq.s32.totalorder %v1128, %v265
        %vm1370 = vcmp.eq.s32.totalorder %v1128, %v266
        %vm1371 = vcmp.eq.s32.totalorder %v1128, %v267
        %vm1372 = vcmp.eq.s32.totalorder %v1128, %v268
        %vm1373 = vcmp.eq.s32.totalorder %v1131, %v265
        %vm1374 = vcmp.eq.s32.totalorder %v1131, %v266
        %vm1375 = vcmp.eq.s32.totalorder %v1131, %v267
        %vm1376 = vcmp.eq.s32.totalorder %v1131, %v268
        %vm1377 = vcmp.eq.s32.totalorder %v1134, %v265
        %vm1378 = vcmp.eq.s32.totalorder %v1134, %v266
        %vm1379 = vcmp.eq.s32.totalorder %v1134, %v267
        %vm1380 = vcmp.eq.s32.totalorder %v1134, %v268
        %vm1381 = vcmp.eq.s32.totalorder %v1137, %v265
        %vm1382 = vcmp.eq.s32.totalorder %v1137, %v266
        %vm1383 = vcmp.eq.s32.totalorder %v1137, %v267
        %vm1384 = vcmp.eq.s32.totalorder %v1137, %v268
        %vm1385 = vcmp.eq.s32.totalorder %v1140, %v265
        %vm1386 = vcmp.eq.s32.totalorder %v1140, %v266
        %vm1387 = vcmp.eq.s32.totalorder %v1140, %v267
        %vm1388 = vcmp.eq.s32.totalorder %v1140, %v268
        %vm1389 = vcmp.eq.s32.totalorder %v1143, %v265
        %vm1390 = vcmp.eq.s32.totalorder %v1143, %v266
        %vm1391 = vcmp.eq.s32.totalorder %v1143, %v267
        %vm1392 = vcmp.eq.s32.totalorder %v1143, %v268
        %vm1393 = vcmp.eq.s32.totalorder %v1146, %v265
        %vm1394 = vcmp.eq.s32.totalorder %v1146, %v266
        %vm1395 = vcmp.eq.s32.totalorder %v1146, %v267
        %vm1396 = vcmp.eq.s32.totalorder %v1146, %v268
        %vm1397 = vcmp.eq.s32.totalorder %v1149, %v265
        %vm1398 = vcmp.eq.s32.totalorder %v1149, %v266
        %vm1399 = vcmp.eq.s32.totalorder %v1149, %v267
        %vm1400 = vcmp.eq.s32.totalorder %v1149, %v268
        %vm1401 = vcmp.eq.s32.totalorder %v1152, %v265
        %vm1402 = vcmp.eq.s32.totalorder %v1152, %v266
        %vm1403 = vcmp.eq.s32.totalorder %v1152, %v267
        %vm1404 = vcmp.eq.s32.totalorder %v1152, %v268
        %vm1405 = vcmp.eq.s32.totalorder %v1155, %v265
        %vm1406 = vcmp.eq.s32.totalorder %v1155, %v266
        %vm1407 = vcmp.eq.s32.totalorder %v1155, %v267
        %vm1408 = vcmp.eq.s32.totalorder %v1155, %v268
        %vm1409 = vcmp.eq.s32.totalorder %v1158, %v265
        %vm1410 = vcmp.eq.s32.totalorder %v1158, %v266
        %vm1411 = vcmp.eq.s32.totalorder %v1158, %v267
        %vm1412 = vcmp.eq.s32.totalorder %v1158, %v268
        %vm1413 = vcmp.eq.s32.totalorder %v1161, %v265
        %vm1414 = vcmp.eq.s32.totalorder %v1161, %v266
        %vm1415 = vcmp.eq.s32.totalorder %v1161, %v267
        %vm1416 = vcmp.eq.s32.totalorder %v1161, %v268
        %vm1417 = vcmp.eq.s32.totalorder %v1164, %v265
        %vm1418 = vcmp.eq.s32.totalorder %v1164, %v266
        %vm1419 = vcmp.eq.s32.totalorder %v1164, %v267
        %vm1420 = vcmp.eq.s32.totalorder %v1164, %v268
        %v1421 = vsel %vm1165, 1, 0
        %v1422 = vsel %vm1166, 1, 0
        %v1423 = vsel %vm1167, 1, 0
        %v1424 = vsel %vm1168, 1, 0
        %v1425 = vsel %vm1169, 1, 0
        %v1426 = vsel %vm1170, 1, 0
        %v1427 = vsel %vm1171, 1, 0
        %v1428 = vsel %vm1172, 1, 0
        %v1429 = vsel %vm1173, 1, 0
        %v1430 = vsel %vm1174, 1, 0
        %v1431 = vsel %vm1175, 1, 0
        %v1432 = vsel %vm1176, 1, 0
        %v1433 = vsel %vm1177, 1, 0
        %v1434 = vsel %vm1178, 1, 0
        %v1435 = vsel %vm1179, 1, 0
        %v1436 = vsel %vm1180, 1, 0
        %v1437 = vsel %vm1181, 1, 0
        %v1438 = vsel %vm1182, 1, 0
        %v1439 = vsel %vm1183, 1, 0
        %v1440 = vsel %vm1184, 1, 0
        %v1441 = vsel %vm1185, 1, 0
        %v1442 = vsel %vm1186, 1, 0
        %v1443 = vsel %vm1187, 1, 0
        %v1444 = vsel %vm1188, 1, 0
        %v1445 = vsel %vm1189, 1, 0
        %v1446 = vsel %vm1190, 1, 0
        %v1447 = vsel %vm1191, 1, 0
        %v1448 = vsel %vm1192, 1, 0
        %v1449 = vsel %vm1193, 1, 0
        %v1450 = vsel %vm1194, 1, 0
        %v1451 = vsel %vm1195, 1, 0
        %v1452 = vsel %vm1196, 1, 0
        %v1453 = vsel %vm1197, 1, 0
        %v1454 = vsel %vm1198, 1, 0
        %v1455 = vsel %vm1199, 1, 0
        %v1456 = vsel %vm1200, 1, 0
        %v1457 = vsel %vm1201, 1, 0
        %v1458 = vsel %vm1202, 1, 0
        %v1459 = vsel %vm1203, 1, 0
        %v1460 = vsel %vm1204, 1, 0
        %v1461 = vsel %vm1205, 1, 0
        %v1462 = vsel %vm1206, 1, 0
        %v1463 = vsel %vm1207, 1, 0
        %v1464 = vsel %vm1208, 1, 0
        %v1465 = vsel %vm1209, 1, 0
        %v1466 = vsel %vm1210, 1, 0
        %v1467 = vsel %vm1211, 1, 0
        %v1468 = vsel %vm1212, 1, 0
        %v1469 = vsel %vm1213, 1, 0
        %v1470 = vsel %vm1214, 1, 0
        %v1471 = vsel %vm1215, 1, 0
        %v1472 = vsel %vm1216, 1, 0
        %v1473 = vsel %vm1217, 1, 0
        %v1474 = vsel %vm1218, 1, 0
        %v1475 = vsel %vm1219, 1, 0
        %v1476 = vsel %vm1220, 1, 0
        %v1477 = vsel %vm1221, 1, 0
        %v1478 = vsel %vm1222, 1, 0
        %v1479 = vsel %vm1223, 1, 0
        %v1480 = vsel %vm1224, 1, 0
        %v1481 = vsel %vm1225, 1, 0
        %v1482 = vsel %vm1226, 1, 0
        %v1483 = vsel %vm1227, 1, 0
        %v1484 = vsel %vm1228, 1, 0
        %v1485 = vsel %vm1229, 1, 0
        %v1486 = vsel %vm1230, 1, 0
        %v1487 = vsel %vm1231, 1, 0
        %v1488 = vsel %vm1232, 1, 0
        %v1489 = vsel %vm1233, 1, 0
        %v1490 = vsel %vm1234, 1, 0
        %v1491 = vsel %vm1235, 1, 0
        %v1492 = vsel %vm1236, 1, 0
        %v1493 = vsel %vm1237, 1, 0
        %v1494 = vsel %vm1238, 1, 0
        %v1495 = vsel %vm1239, 1, 0
        %v1496 = vsel %vm1240, 1, 0
        %v1497 = vsel %vm1241, 1, 0
        %v1498 = vsel %vm1242, 1, 0
        %v1499 = vsel %vm1243, 1, 0
        %v1500 = vsel %vm1244, 1, 0
        %v1501 = vsel %vm1245, 1, 0
        %v1502 = vsel %vm1246, 1, 0
        %v1503 = vsel %vm1247, 1, 0
        %v1504 = vsel %vm1248, 1, 0
        %v1505 = vsel %vm1249, 1, 0
        %v1506 = vsel %vm1250, 1, 0
        %v1507 = vsel %vm1251, 1, 0
        %v1508 = vsel %vm1252, 1, 0
        %v1509 = vsel %vm1253, 1, 0
        %v1510 = vsel %vm1254, 1, 0
        %v1511 = vsel %vm1255, 1, 0
        %v1512 = vsel %vm1256, 1, 0
        %v1513 = vsel %vm1257, 1, 0
        %v1514 = vsel %vm1258, 1, 0
        %v1515 = vsel %vm1259, 1, 0
        %v1516 = vsel %vm1260, 1, 0
        %v1517 = vsel %vm1261, 1, 0
        %v1518 = vsel %vm1262, 1, 0
        %v1519 = vsel %vm1263, 1, 0
        %v1520 = vsel %vm1264, 1, 0
        %v1521 = vsel %vm1265, 1, 0
        %v1522 = vsel %vm1266, 1, 0
        %v1523 = vsel %vm1267, 1, 0
        %v1524 = vsel %vm1268, 1, 0
        %v1525 = vsel %vm1269, 1, 0
        %v1526 = vsel %vm1270, 1, 0
        %v1527 = vsel %vm1271, 1, 0
        %v1528 = vsel %vm1272, 1, 0
        %v1529 = vsel %vm1273, 1, 0
        %v1530 = vsel %vm1274, 1, 0
        %v1531 = vsel %vm1275, 1, 0
        %v1532 = vsel %vm1276, 1, 0
        %v1533 = vsel %vm1277, 1, 0
        %v1534 = vsel %vm1278, 1, 0
        %v1535 = vsel %vm1279, 1, 0
        %v1536 = vsel %vm1280, 1, 0
        %v1537 = vsel %vm1281, 1, 0
        %v1538 = vsel %vm1282, 1, 0
        %v1539 = vsel %vm1283, 1, 0
        %v1540 = vsel %vm1284, 1, 0
        %v1541 = vsel %vm1285, 1, 0
        %v1542 = vsel %vm1286, 1, 0
        %v1543 = vsel %vm1287, 1, 0
        %v1544 = vsel %vm1288, 1, 0
        %v1545 = vsel %vm1289, 1, 0
        %v1546 = vsel %vm1290, 1, 0
        %v1547 = vsel %vm1291, 1, 0
        %v1548 = vsel %vm1292, 1, 0
        %v1549 = vsel %vm1293, 1, 0
        %v1550 = vsel %vm1294, 1, 0
        %v1551 = vsel %vm1295, 1, 0
        %v1552 = vsel %vm1296, 1, 0
        %v1553 = vsel %vm1297, 1, 0
        %v1554 = vsel %vm1298, 1, 0
        %v1555 = vsel %vm1299, 1, 0
        %v1556 = vsel %vm1300, 1, 0
        %v1557 = vsel %vm1301, 1, 0
        %v1558 = vsel %vm1302, 1, 0
        %v1559 = vsel %vm1303, 1, 0
        %v1560 = vsel %vm1304, 1, 0
        %v1561 = vsel %vm1305, 1, 0
        %v1562 = vsel %vm1306, 1, 0
        %v1563 = vsel %vm1307, 1, 0
        %v1564 = vsel %vm1308, 1, 0
        %v1565 = vsel %vm1309, 1, 0
        %v1566 = vsel %vm1310, 1, 0
        %v1567 = vsel %vm1311, 1, 0
        %v1568 = vsel %vm1312, 1, 0
        %v1569 = vsel %vm1313, 1, 0
        %v1570 = vsel %vm1314, 1, 0
        %v1571 = vsel %vm1315, 1, 0
        %v1572 = vsel %vm1316, 1, 0
        %v1573 = vsel %vm1317, 1, 0
        %v1574 = vsel %vm1318, 1, 0
        %v1575 = vsel %vm1319, 1, 0
        %v1576 = vsel %vm1320, 1, 0
        %v1577 = vsel %vm1321, 1, 0
        %v1578 = vsel %vm1322, 1, 0
        %v1579 = vsel %vm1323, 1, 0
        %v1580 = vsel %vm1324, 1, 0
        %v1581 = vsel %vm1325, 1, 0
        %v1582 = vsel %vm1326, 1, 0
        %v1583 = vsel %vm1327, 1, 0
        %v1584 = vsel %vm1328, 1, 0
        %v1585 = vsel %vm1329, 1, 0
        %v1586 = vsel %vm1330, 1, 0
        %v1587 = vsel %vm1331, 1, 0
        %v1588 = vsel %vm1332, 1, 0
        %v1589 = vsel %vm1333, 1, 0
        %v1590 = vsel %vm1334, 1, 0
        %v1591 = vsel %vm1335, 1, 0
        %v1592 = vsel %vm1336, 1, 0
        %v1593 = vsel %vm1337, 1, 0
        %v1594 = vsel %vm1338, 1, 0
        %v1595 = vsel %vm1339, 1, 0
        %v1596 = vsel %vm1340, 1, 0
        %v1597 = vsel %vm1341, 1, 0
        %v1598 = vsel %vm1342, 1, 0
        %v1599 = vsel %vm1343, 1, 0
        %v1600 = vsel %vm1344, 1, 0
        %v1601 = vsel %vm1345, 1, 0
        %v1602 = vsel %vm1346, 1, 0
        %v1603 = vsel %vm1347, 1, 0
        %v1604 = vsel %vm1348, 1, 0
        %v1605 = vsel %vm1349, 1, 0
        %v1606 = vsel %vm1350, 1, 0
        %v1607 = vsel %vm1351, 1, 0
        %v1608 = vsel %vm1352, 1, 0
        %v1609 = vsel %vm1353, 1, 0
        %v1610 = vsel %vm1354, 1, 0
        %v1611 = vsel %vm1355, 1, 0
        %v1612 = vsel %vm1356, 1, 0
        %v1613 = vsel %vm1357, 1, 0
        %v1614 = vsel %vm1358, 1, 0
        %v1615 = vsel %vm1359, 1, 0
        %v1616 = vsel %vm1360, 1, 0
        %v1617 = vsel %vm1361, 1, 0
        %v1618 = vsel %vm1362, 1, 0
        %v1619 = vsel %vm1363, 1, 0
        %v1620 = vsel %vm1364, 1, 0
        %v1621 = vsel %vm1365, 1, 0
        %v1622 = vsel %vm1366, 1, 0
        %v1623 = vsel %vm1367, 1, 0
        %v1624 = vsel %vm1368, 1, 0
        %v1625 = vsel %vm1369, 1, 0
        %v1626 = vsel %vm1370, 1, 0
        %v1627 = vsel %vm1371, 1, 0
        %v1628 = vsel %vm1372, 1, 0
        %v1629 = vsel %vm1373, 1, 0
        %v1630 = vsel %vm1374, 1, 0
        %v1631 = vsel %vm1375, 1, 0
        %v1632 = vsel %vm1376, 1, 0
        %v1633 = vsel %vm1377, 1, 0
        %v1634 = vsel %vm1378, 1, 0
        %v1635 = vsel %vm1379, 1, 0
        %v1636 = vsel %vm1380, 1, 0
        %v1637 = vsel %vm1381, 1, 0
        %v1638 = vsel %vm1382, 1, 0
        %v1639 = vsel %vm1383, 1, 0
        %v1640 = vsel %vm1384, 1, 0
        %v1641 = vsel %vm1385, 1, 0
        %v1642 = vsel %vm1386, 1, 0
        %v1643 = vsel %vm1387, 1, 0
        %v1644 = vsel %vm1388, 1, 0
        %v1645 = vsel %vm1389, 1, 0
        %v1646 = vsel %vm1390, 1, 0
        %v1647 = vsel %vm1391, 1, 0
        %v1648 = vsel %vm1392, 1, 0
        %v1649 = vsel %vm1393, 1, 0
        %v1650 = vsel %vm1394, 1, 0
        %v1651 = vsel %vm1395, 1, 0
        %v1652 = vsel %vm1396, 1, 0
        %v1653 = vsel %vm1397, 1, 0
        %v1654 = vsel %vm1398, 1, 0
        %v1655 = vsel %vm1399, 1, 0
        %v1656 = vsel %vm1400, 1, 0
        %v1657 = vsel %vm1401, 1, 0
        %v1658 = vsel %vm1402, 1, 0
        %v1659 = vsel %vm1403, 1, 0
        %v1660 = vsel %vm1404, 1, 0
        %v1661 = vsel %vm1405, 1, 0
        %v1662 = vsel %vm1406, 1, 0
        %v1663 = vsel %vm1407, 1, 0
        %v1664 = vsel %vm1408, 1, 0
        %v1665 = vsel %vm1409, 1, 0
        %v1666 = vsel %vm1410, 1, 0
        %v1667 = vsel %vm1411, 1, 0
        %v1668 = vsel %vm1412, 1, 0
        %v1669 = vsel %vm1413, 1, 0
        %v1670 = vsel %vm1414, 1, 0
        %v1671 = vsel %vm1415, 1, 0
        %v1672 = vsel %vm1416, 1, 0
        %v1673 = vsel %vm1417, 1, 0
        %v1674 = vsel %vm1418, 1, 0
        %v1675 = vsel %vm1419, 1, 0
        %v1676 = vsel %vm1420, 1, 0
        %v1677 = vadd.s32 %v717, %v1421
        %v1678 = vadd.s32 %v718, %v1422
        %v1679 = vadd.s32 %v719, %v1423
        %v1680 = vadd.s32 %v720, %v1424
        %v1681 = vadd.s32 %v721, %v1425
        %v1682 = vadd.s32 %v722, %v1426
        %v1683 = vadd.s32 %v723, %v1427
        %v1684 = vadd.s32 %v724, %v1428
        %v1685 = vadd.s32 %v725, %v1429
        %v1686 = vadd.s32 %v726, %v1430
        %v1687 = vadd.s32 %v727, %v1431
        %v1688 = vadd.s32 %v728, %v1432
        %v1689 = vadd.s32 %v729, %v1433
        %v1690 = vadd.s32 %v730, %v1434
        %v1691 = vadd.s32 %v731, %v1435
        %v1692 = vadd.s32 %v732, %v1436
        %v1693 = vadd.s32 %v733, %v1437
        %v1694 = vadd.s32 %v734, %v1438
        %v1695 = vadd.s32 %v735, %v1439
        %v1696 = vadd.s32 %v736, %v1440
        %v1697 = vadd.s32 %v737, %v1441
        %v1698 = vadd.s32 %v738, %v1442
        %v1699 = vadd.s32 %v739, %v1443
        %v1700 = vadd.s32 %v740, %v1444
        %v1701 = vadd.s32 %v741, %v1445
        %v1702 = vadd.s32 %v742, %v1446
        %v1703 = vadd.s32 %v743, %v1447
        %v1704 = vadd.s32 %v744, %v1448
        %v1705 = vadd.s32 %v745, %v1449
        %v1706 = vadd.s32 %v746, %v1450
        %v1707 = vadd.s32 %v747, %v1451
        %v1708 = vadd.s32 %v748, %v1452
        %v1709 = vadd.s32 %v749, %v1453
        %v1710 = vadd.s32 %v750, %v1454
        %v1711 = vadd.s32 %v751, %v1455
        %v1712 = vadd.s32 %v752, %v1456
        %v1713 = vadd.s32 %v753, %v1457
        %v1714 = vadd.s32 %v754, %v1458
        %v1715 = vadd.s32 %v755, %v1459
        %v1716 = vadd.s32 %v756, %v1460
        %v1717 = vadd.s32 %v757, %v1461
        %v1718 = vadd.s32 %v758, %v1462
        %v1719 = vadd.s32 %v759, %v1463
        %v1720 = vadd.s32 %v760, %v1464
        %v1721 = vadd.s32 %v761, %v1465
        %v1722 = vadd.s32 %v762, %v1466
        %v1723 = vadd.s32 %v763, %v1467
        %v1724 = vadd.s32 %v764, %v1468
        %v1725 = vadd.s32 %v765, %v1469
        %v1726 = vadd.s32 %v766, %v1470
        %v1727 = vadd.s32 %v767, %v1471
        %v1728 = vadd.s32 %v768, %v1472
        %v1729 = vadd.s32 %v769, %v1473
        %v1730 = vadd.s32 %v770, %v1474
        %v1731 = vadd.s32 %v771, %v1475
        %v1732 = vadd.s32 %v772, %v1476
        %v1733 = vadd.s32 %v773, %v1477
        %v1734 = vadd.s32 %v774, %v1478
        %v1735 = vadd.s32 %v775, %v1479
        %v1736 = vadd.s32 %v776, %v1480
        %v1737 = vadd.s32 %v777, %v1481
        %v1738 = vadd.s32 %v778, %v1482
        %v1739 = vadd.s32 %v779, %v1483
        %v1740 = vadd.s32 %v780, %v1484
        %v1741 = vadd.s32 %v781, %v1485
        %v1742 = vadd.s32 %v782, %v1486
        %v1743 = vadd.s32 %v783, %v1487
        %v1744 = vadd.s32 %v784, %v1488
        %v1745 = vadd.s32 %v785, %v1489
        %v1746 = vadd.s32 %v786, %v1490
        %v1747 = vadd.s32 %v787, %v1491
        %v1748 = vadd.s32 %v788, %v1492
        %v1749 = vadd.s32 %v789, %v1493
        %v1750 = vadd.s32 %v790, %v1494
        %v1751 = vadd.s32 %v791, %v1495
        %v1752 = vadd.s32 %v792, %v1496
        %v1753 = vadd.s32 %v793, %v1497
        %v1754 = vadd.s32 %v794, %v1498
        %v1755 = vadd.s32 %v795, %v1499
        %v1756 = vadd.s32 %v796, %v1500
        %v1757 = vadd.s32 %v797, %v1501
        %v1758 = vadd.s32 %v798, %v1502
        %v1759 = vadd.s32 %v799, %v1503
        %v1760 = vadd.s32 %v800, %v1504
        %v1761 = vadd.s32 %v801, %v1505
        %v1762 = vadd.s32 %v802, %v1506
        %v1763 = vadd.s32 %v803, %v1507
        %v1764 = vadd.s32 %v804, %v1508
        %v1765 = vadd.s32 %v805, %v1509
        %v1766 = vadd.s32 %v806, %v1510
        %v1767 = vadd.s32 %v807, %v1511
        %v1768 = vadd.s32 %v808, %v1512
        %v1769 = vadd.s32 %v809, %v1513
        %v1770 = vadd.s32 %v810, %v1514
        %v1771 = vadd.s32 %v811, %v1515
        %v1772 = vadd.s32 %v812, %v1516
        %v1773 = vadd.s32 %v813, %v1517
        %v1774 = vadd.s32 %v814, %v1518
        %v1775 = vadd.s32 %v815, %v1519
        %v1776 = vadd.s32 %v816, %v1520
        %v1777 = vadd.s32 %v817, %v1521
        %v1778 = vadd.s32 %v818, %v1522
        %v1779 = vadd.s32 %v819, %v1523
        %v1780 = vadd.s32 %v820, %v1524
        %v1781 = vadd.s32 %v821, %v1525
        %v1782 = vadd.s32 %v822, %v1526
        %v1783 = vadd.s32 %v823, %v1527
        %v1784 = vadd.s32 %v824, %v1528
        %v1785 = vadd.s32 %v825, %v1529
        %v1786 = vadd.s32 %v826, %v1530
        %v1787 = vadd.s32 %v827, %v1531
        %v1788 = vadd.s32 %v828, %v1532
        %v1789 = vadd.s32 %v829, %v1533
        %v1790 = vadd.s32 %v830, %v1534
        %v1791 = vadd.s32 %v831, %v1535
        %v1792 = vadd.s32 %v832, %v1536
        %v1793 = vadd.s32 %v833, %v1537
        %v1794 = vadd.s32 %v834, %v1538
        %v1795 = vadd.s32 %v835, %v1539
        %v1796 = vadd.s32 %v836, %v1540
        %v1797 = vadd.s32 %v837, %v1541
        %v1798 = vadd.s32 %v838, %v1542
        %v1799 = vadd.s32 %v839, %v1543
        %v1800 = vadd.s32 %v840, %v1544
        %v1801 = vadd.s32 %v841, %v1545
        %v1802 = vadd.s32 %v842, %v1546
        %v1803 = vadd.s32 %v843, %v1547
        %v1804 = vadd.s32 %v844, %v1548
        %v1805 = vadd.s32 %v845, %v1549
        %v1806 = vadd.s32 %v846, %v1550
        %v1807 = vadd.s32 %v847, %v1551
        %v1808 = vadd.s32 %v848, %v1552
        %v1809 = vadd.s32 %v849, %v1553
        %v1810 = vadd.s32 %v850, %v1554
        %v1811 = vadd.s32 %v851, %v1555
        %v1812 = vadd.s32 %v852, %v1556
        %v1813 = vadd.s32 %v853, %v1557
        %v1814 = vadd.s32 %v854, %v1558
        %v1815 = vadd.s32 %v855, %v1559
        %v1816 = vadd.s32 %v856, %v1560
        %v1817 = vadd.s32 %v857, %v1561
        %v1818 = vadd.s32 %v858, %v1562
        %v1819 = vadd.s32 %v859, %v1563
        %v1820 = vadd.s32 %v860, %v1564
        %v1821 = vadd.s32 %v861, %v1565
        %v1822 = vadd.s32 %v862, %v1566
        %v1823 = vadd.s32 %v863, %v1567
        %v1824 = vadd.s32 %v864, %v1568
        %v1825 = vadd.s32 %v865, %v1569
        %v1826 = vadd.s32 %v866, %v1570
        %v1827 = vadd.s32 %v867, %v1571
        %v1828 = vadd.s32 %v868, %v1572
        %v1829 = vadd.s32 %v869, %v1573
        %v1830 = vadd.s32 %v870, %v1574
        %v1831 = vadd.s32 %v871, %v1575
        %v1832 = vadd.s32 %v872, %v1576
        %v1833 = vadd.s32 %v873, %v1577
        %v1834 = vadd.s32 %v874, %v1578
        %v1835 = vadd.s32 %v875, %v1579
        %v1836 = vadd.s32 %v876, %v1580
        %v1837 = vadd.s32 %v877, %v1581
        %v1838 = vadd.s32 %v878, %v1582
        %v1839 = vadd.s32 %v879, %v1583
        %v1840 = vadd.s32 %v880, %v1584
        %v1841 = vadd.s32 %v881, %v1585
        %v1842 = vadd.s32 %v882, %v1586
        %v1843 = vadd.s32 %v883, %v1587
        %v1844 = vadd.s32 %v884, %v1588
        %v1845 = vadd.s32 %v885, %v1589
        %v1846 = vadd.s32 %v886, %v1590
        %v1847 = vadd.s32 %v887, %v1591
        %v1848 = vadd.s32 %v888, %v1592
        %v1849 = vadd.s32 %v889, %v1593
        %v1850 = vadd.s32 %v890, %v1594
        %v1851 = vadd.s32 %v891, %v1595
        %v1852 = vadd.s32 %v892, %v1596
        %v1853 = vadd.s32 %v893, %v1597
        %v1854 = vadd.s32 %v894, %v1598
        %v1855 = vadd.s32 %v895, %v1599
        %v1856 = vadd.s32 %v896, %v1600
        %v1857 = vadd.s32 %v897, %v1601
        %v1858 = vadd.s32 %v898, %v1602
        %v1859 = vadd.s32 %v899, %v1603
        %v1860 = vadd.s32 %v900, %v1604
        %v1861 = vadd.s32 %v901, %v1605
        %v1862 = vadd.s32 %v902, %v1606
        %v1863 = vadd.s32 %v903, %v1607
        %v1864 = vadd.s32 %v904, %v1608
        %v1865 = vadd.s32 %v905, %v1609
        %v1866 = vadd.s32 %v906, %v1610
        %v1867 = vadd.s32 %v907, %v1611
        %v1868 = vadd.s32 %v908, %v1612
        %v1869 = vadd.s32 %v909, %v1613
        %v1870 = vadd.s32 %v910, %v1614
        %v1871 = vadd.s32 %v911, %v1615
        %v1872 = vadd.s32 %v912, %v1616
        %v1873 = vadd.s32 %v913, %v1617
        %v1874 = vadd.s32 %v914, %v1618
        %v1875 = vadd.s32 %v915, %v1619
        %v1876 = vadd.s32 %v916, %v1620
        %v1877 = vadd.s32 %v917, %v1621
        %v1878 = vadd.s32 %v918, %v1622
        %v1879 = vadd.s32 %v919, %v1623
        %v1880 = vadd.s32 %v920, %v1624
        %v1881 = vadd.s32 %v921, %v1625
        %v1882 = vadd.s32 %v922, %v1626
        %v1883 = vadd.s32 %v923, %v1627
        %v1884 = vadd.s32 %v924, %v1628
        %v1885 = vadd.s32 %v925, %v1629
        %v1886 = vadd.s32 %v926, %v1630
        %v1887 = vadd.s32 %v927, %v1631
        %v1888 = vadd.s32 %v928, %v1632
        %v1889 = vadd.s32 %v929, %v1633
        %v1890 = vadd.s32 %v930, %v1634
        %v1891 = vadd.s32 %v931, %v1635
        %v1892 = vadd.s32 %v932, %v1636
        %v1893 = vadd.s32 %v933, %v1637
        %v1894 = vadd.s32 %v934, %v1638
        %v1895 = vadd.s32 %v935, %v1639
        %v1896 = vadd.s32 %v936, %v1640
        %v1897 = vadd.s32 %v937, %v1641
        %v1898 = vadd.s32 %v938, %v1642
        %v1899 = vadd.s32 %v939, %v1643
        %v1900 = vadd.s32 %v940, %v1644
        %v1901 = vadd.s32 %v941, %v1645
        %v1902 = vadd.s32 %v942, %v1646
        %v1903 = vadd.s32 %v943, %v1647
        %v1904 = vadd.s32 %v944, %v1648
        %v1905 = vadd.s32 %v945, %v1649
        %v1906 = vadd.s32 %v946, %v1650
        %v1907 = vadd.s32 %v947, %v1651
        %v1908 = vadd.s32 %v948, %v1652
        %v1909 = vadd.s32 %v949, %v1653
        %v1910 = vadd.s32 %v950, %v1654
        %v1911 = vadd.s32 %v951, %v1655
        %v1912 = vadd.s32 %v952, %v1656
        %v1913 = vadd.s32 %v953, %v1657
        %v1914 = vadd.s32 %v954, %v1658
        %v1915 = vadd.s32 %v955, %v1659
        %v1916 = vadd.s32 %v956, %v1660
        %v1917 = vadd.s32 %v957, %v1661
        %v1918 = vadd.s32 %v958, %v1662
        %v1919 = vadd.s32 %v959, %v1663
        %v1920 = vadd.s32 %v960, %v1664
        %v1921 = vadd.s32 %v961, %v1665
        %v1922 = vadd.s32 %v962, %v1666
        %v1923 = vadd.s32 %v963, %v1667
        %v1924 = vadd.s32 %v964, %v1668
        %v1925 = vadd.s32 %v965, %v1669
        %v1926 = vadd.s32 %v966, %v1670
        %v1927 = vadd.s32 %v967, %v1671
        %v1928 = vadd.s32 %v968, %v1672
        %v1929 = vadd.s32 %v969, %v1673
        %v1930 = vadd.s32 %v970, %v1674
        %v1931 = vadd.s32 %v971, %v1675
        %v1932 = vadd.s32 %v972, %v1676
        %1933 = vset.pattern.permute.xlu0 2
        %1934 = vperm.xlu0 %1933, %v200
        %v1935 = vpop.permute.xlu0 %1934
        %1936 = vset.pattern.permute.xlu0 2
        %1937 = vperm.xlu0 %1936, %v201
        %v1938 = vpop.permute.xlu0 %1937
        %1939 = vset.pattern.permute.xlu0 2
        %1940 = vperm.xlu0 %1939, %v202
        %v1941 = vpop.permute.xlu0 %1940
        %1942 = vset.pattern.permute.xlu0 2
        %1943 = vperm.xlu0 %1942, %v203
        %v1944 = vpop.permute.xlu0 %1943
        %1945 = vset.pattern.permute.xlu0 2
        %1946 = vperm.xlu0 %1945, %v204
        %v1947 = vpop.permute.xlu0 %1946
        %1948 = vset.pattern.permute.xlu0 2
        %1949 = vperm.xlu0 %1948, %v205
        %v1950 = vpop.permute.xlu0 %1949
        %1951 = vset.pattern.permute.xlu0 2
        %1952 = vperm.xlu0 %1951, %v206
        %v1953 = vpop.permute.xlu0 %1952
        %1954 = vset.pattern.permute.xlu0 2
        %1955 = vperm.xlu0 %1954, %v207
        %v1956 = vpop.permute.xlu0 %1955
        %1957 = vset.pattern.permute.xlu0 2
        %1958 = vperm.xlu0 %1957, %v208
        %v1959 = vpop.permute.xlu0 %1958
        %1960 = vset.pattern.permute.xlu0 2
        %1961 = vperm.xlu0 %1960, %v209
        %v1962 = vpop.permute.xlu0 %1961
        %1963 = vset.pattern.permute.xlu0 2
        %1964 = vperm.xlu0 %1963, %v210
        %v1965 = vpop.permute.xlu0 %1964
        %1966 = vset.pattern.permute.xlu0 2
        %1967 = vperm.xlu0 %1966, %v211
        %v1968 = vpop.permute.xlu0 %1967
        %1969 = vset.pattern.permute.xlu0 2
        %1970 = vperm.xlu0 %1969, %v212
        %v1971 = vpop.permute.xlu0 %1970
        %1972 = vset.pattern.permute.xlu0 2
        %1973 = vperm.xlu0 %1972, %v213
        %v1974 = vpop.permute.xlu0 %1973
        %1975 = vset.pattern.permute.xlu0 2
        %1976 = vperm.xlu0 %1975, %v214
        %v1977 = vpop.permute.xlu0 %1976
        %1978 = vset.pattern.permute.xlu0 2
        %1979 = vperm.xlu0 %1978, %v215
        %v1980 = vpop.permute.xlu0 %1979
        %1981 = vset.pattern.permute.xlu0 2
        %1982 = vperm.xlu0 %1981, %v216
        %v1983 = vpop.permute.xlu0 %1982
        %1984 = vset.pattern.permute.xlu0 2
        %1985 = vperm.xlu0 %1984, %v217
        %v1986 = vpop.permute.xlu0 %1985
        %1987 = vset.pattern.permute.xlu0 2
        %1988 = vperm.xlu0 %1987, %v218
        %v1989 = vpop.permute.xlu0 %1988
        %1990 = vset.pattern.permute.xlu0 2
        %1991 = vperm.xlu0 %1990, %v219
        %v1992 = vpop.permute.xlu0 %1991
        %1993 = vset.pattern.permute.xlu0 2
        %1994 = vperm.xlu0 %1993, %v220
        %v1995 = vpop.permute.xlu0 %1994
        %1996 = vset.pattern.permute.xlu0 2
        %1997 = vperm.xlu0 %1996, %v221
        %v1998 = vpop.permute.xlu0 %1997
        %1999 = vset.pattern.permute.xlu0 2
        %2000 = vperm.xlu0 %1999, %v222
        %v2001 = vpop.permute.xlu0 %2000
        %2002 = vset.pattern.permute.xlu0 2
        %2003 = vperm.xlu0 %2002, %v223
        %v2004 = vpop.permute.xlu0 %2003
        %2005 = vset.pattern.permute.xlu0 2
        %2006 = vperm.xlu0 %2005, %v224
        %v2007 = vpop.permute.xlu0 %2006
        %2008 = vset.pattern.permute.xlu0 2
        %2009 = vperm.xlu0 %2008, %v225
        %v2010 = vpop.permute.xlu0 %2009
        %2011 = vset.pattern.permute.xlu0 2
        %2012 = vperm.xlu0 %2011, %v226
        %v2013 = vpop.permute.xlu0 %2012
        %2014 = vset.pattern.permute.xlu0 2
        %2015 = vperm.xlu0 %2014, %v227
        %v2016 = vpop.permute.xlu0 %2015
        %2017 = vset.pattern.permute.xlu0 2
        %2018 = vperm.xlu0 %2017, %v228
        %v2019 = vpop.permute.xlu0 %2018
        %2020 = vset.pattern.permute.xlu0 2
        %2021 = vperm.xlu0 %2020, %v229
        %v2022 = vpop.permute.xlu0 %2021
        %2023 = vset.pattern.permute.xlu0 2
        %2024 = vperm.xlu0 %2023, %v230
        %v2025 = vpop.permute.xlu0 %2024
        %2026 = vset.pattern.permute.xlu0 2
        %2027 = vperm.xlu0 %2026, %v231
        %v2028 = vpop.permute.xlu0 %2027
        %2029 = vset.pattern.permute.xlu0 2
        %2030 = vperm.xlu0 %2029, %v232
        %v2031 = vpop.permute.xlu0 %2030
        %2032 = vset.pattern.permute.xlu0 2
        %2033 = vperm.xlu0 %2032, %v233
        %v2034 = vpop.permute.xlu0 %2033
        %2035 = vset.pattern.permute.xlu0 2
        %2036 = vperm.xlu0 %2035, %v234
        %v2037 = vpop.permute.xlu0 %2036
        %2038 = vset.pattern.permute.xlu0 2
        %2039 = vperm.xlu0 %2038, %v235
        %v2040 = vpop.permute.xlu0 %2039
        %2041 = vset.pattern.permute.xlu0 2
        %2042 = vperm.xlu0 %2041, %v236
        %v2043 = vpop.permute.xlu0 %2042
        %2044 = vset.pattern.permute.xlu0 2
        %2045 = vperm.xlu0 %2044, %v237
        %v2046 = vpop.permute.xlu0 %2045
        %2047 = vset.pattern.permute.xlu0 2
        %2048 = vperm.xlu0 %2047, %v238
        %v2049 = vpop.permute.xlu0 %2048
        %2050 = vset.pattern.permute.xlu0 2
        %2051 = vperm.xlu0 %2050, %v239
        %v2052 = vpop.permute.xlu0 %2051
        %2053 = vset.pattern.permute.xlu0 2
        %2054 = vperm.xlu0 %2053, %v240
        %v2055 = vpop.permute.xlu0 %2054
        %2056 = vset.pattern.permute.xlu0 2
        %2057 = vperm.xlu0 %2056, %v241
        %v2058 = vpop.permute.xlu0 %2057
        %2059 = vset.pattern.permute.xlu0 2
        %2060 = vperm.xlu0 %2059, %v242
        %v2061 = vpop.permute.xlu0 %2060
        %2062 = vset.pattern.permute.xlu0 2
        %2063 = vperm.xlu0 %2062, %v243
        %v2064 = vpop.permute.xlu0 %2063
        %2065 = vset.pattern.permute.xlu0 2
        %2066 = vperm.xlu0 %2065, %v244
        %v2067 = vpop.permute.xlu0 %2066
        %2068 = vset.pattern.permute.xlu0 2
        %2069 = vperm.xlu0 %2068, %v245
        %v2070 = vpop.permute.xlu0 %2069
        %2071 = vset.pattern.permute.xlu0 2
        %2072 = vperm.xlu0 %2071, %v246
        %v2073 = vpop.permute.xlu0 %2072
        %2074 = vset.pattern.permute.xlu0 2
        %2075 = vperm.xlu0 %2074, %v247
        %v2076 = vpop.permute.xlu0 %2075
        %2077 = vset.pattern.permute.xlu0 2
        %2078 = vperm.xlu0 %2077, %v248
        %v2079 = vpop.permute.xlu0 %2078
        %2080 = vset.pattern.permute.xlu0 2
        %2081 = vperm.xlu0 %2080, %v249
        %v2082 = vpop.permute.xlu0 %2081
        %2083 = vset.pattern.permute.xlu0 2
        %2084 = vperm.xlu0 %2083, %v250
        %v2085 = vpop.permute.xlu0 %2084
        %2086 = vset.pattern.permute.xlu0 2
        %2087 = vperm.xlu0 %2086, %v251
        %v2088 = vpop.permute.xlu0 %2087
        %2089 = vset.pattern.permute.xlu0 2
        %2090 = vperm.xlu0 %2089, %v252
        %v2091 = vpop.permute.xlu0 %2090
        %2092 = vset.pattern.permute.xlu0 2
        %2093 = vperm.xlu0 %2092, %v253
        %v2094 = vpop.permute.xlu0 %2093
        %2095 = vset.pattern.permute.xlu0 2
        %2096 = vperm.xlu0 %2095, %v254
        %v2097 = vpop.permute.xlu0 %2096
        %2098 = vset.pattern.permute.xlu0 2
        %2099 = vperm.xlu0 %2098, %v255
        %v2100 = vpop.permute.xlu0 %2099
        %2101 = vset.pattern.permute.xlu0 2
        %2102 = vperm.xlu0 %2101, %v256
        %v2103 = vpop.permute.xlu0 %2102
        %2104 = vset.pattern.permute.xlu0 2
        %2105 = vperm.xlu0 %2104, %v257
        %v2106 = vpop.permute.xlu0 %2105
        %2107 = vset.pattern.permute.xlu0 2
        %2108 = vperm.xlu0 %2107, %v258
        %v2109 = vpop.permute.xlu0 %2108
        %2110 = vset.pattern.permute.xlu0 2
        %2111 = vperm.xlu0 %2110, %v259
        %v2112 = vpop.permute.xlu0 %2111
        %2113 = vset.pattern.permute.xlu0 2
        %2114 = vperm.xlu0 %2113, %v260
        %v2115 = vpop.permute.xlu0 %2114
        %2116 = vset.pattern.permute.xlu0 2
        %2117 = vperm.xlu0 %2116, %v261
        %v2118 = vpop.permute.xlu0 %2117
        %2119 = vset.pattern.permute.xlu0 2
        %2120 = vperm.xlu0 %2119, %v262
        %v2121 = vpop.permute.xlu0 %2120
        %2122 = vset.pattern.permute.xlu0 2
        %2123 = vperm.xlu0 %2122, %v263
        %v2124 = vpop.permute.xlu0 %2123
        %vm2125 = vcmp.eq.s32.totalorder %v1935, %v265
        %vm2126 = vcmp.eq.s32.totalorder %v1935, %v266
        %vm2127 = vcmp.eq.s32.totalorder %v1935, %v267
        %vm2128 = vcmp.eq.s32.totalorder %v1935, %v268
        %vm2129 = vcmp.eq.s32.totalorder %v1938, %v265
        %vm2130 = vcmp.eq.s32.totalorder %v1938, %v266
        %vm2131 = vcmp.eq.s32.totalorder %v1938, %v267
        %vm2132 = vcmp.eq.s32.totalorder %v1938, %v268
        %vm2133 = vcmp.eq.s32.totalorder %v1941, %v265
        %vm2134 = vcmp.eq.s32.totalorder %v1941, %v266
        %vm2135 = vcmp.eq.s32.totalorder %v1941, %v267
        %vm2136 = vcmp.eq.s32.totalorder %v1941, %v268
        %vm2137 = vcmp.eq.s32.totalorder %v1944, %v265
        %vm2138 = vcmp.eq.s32.totalorder %v1944, %v266
        %vm2139 = vcmp.eq.s32.totalorder %v1944, %v267
        %vm2140 = vcmp.eq.s32.totalorder %v1944, %v268
        %vm2141 = vcmp.eq.s32.totalorder %v1947, %v265
        %vm2142 = vcmp.eq.s32.totalorder %v1947, %v266
        %vm2143 = vcmp.eq.s32.totalorder %v1947, %v267
        %vm2144 = vcmp.eq.s32.totalorder %v1947, %v268
        %vm2145 = vcmp.eq.s32.totalorder %v1950, %v265
        %vm2146 = vcmp.eq.s32.totalorder %v1950, %v266
        %vm2147 = vcmp.eq.s32.totalorder %v1950, %v267
        %vm2148 = vcmp.eq.s32.totalorder %v1950, %v268
        %vm2149 = vcmp.eq.s32.totalorder %v1953, %v265
        %vm2150 = vcmp.eq.s32.totalorder %v1953, %v266
        %vm2151 = vcmp.eq.s32.totalorder %v1953, %v267
        %vm2152 = vcmp.eq.s32.totalorder %v1953, %v268
        %vm2153 = vcmp.eq.s32.totalorder %v1956, %v265
        %vm2154 = vcmp.eq.s32.totalorder %v1956, %v266
        %vm2155 = vcmp.eq.s32.totalorder %v1956, %v267
        %vm2156 = vcmp.eq.s32.totalorder %v1956, %v268
        %vm2157 = vcmp.eq.s32.totalorder %v1959, %v265
        %vm2158 = vcmp.eq.s32.totalorder %v1959, %v266
        %vm2159 = vcmp.eq.s32.totalorder %v1959, %v267
        %vm2160 = vcmp.eq.s32.totalorder %v1959, %v268
        %vm2161 = vcmp.eq.s32.totalorder %v1962, %v265
        %vm2162 = vcmp.eq.s32.totalorder %v1962, %v266
        %vm2163 = vcmp.eq.s32.totalorder %v1962, %v267
        %vm2164 = vcmp.eq.s32.totalorder %v1962, %v268
        %vm2165 = vcmp.eq.s32.totalorder %v1965, %v265
        %vm2166 = vcmp.eq.s32.totalorder %v1965, %v266
        %vm2167 = vcmp.eq.s32.totalorder %v1965, %v267
        %vm2168 = vcmp.eq.s32.totalorder %v1965, %v268
        %vm2169 = vcmp.eq.s32.totalorder %v1968, %v265
        %vm2170 = vcmp.eq.s32.totalorder %v1968, %v266
        %vm2171 = vcmp.eq.s32.totalorder %v1968, %v267
        %vm2172 = vcmp.eq.s32.totalorder %v1968, %v268
        %vm2173 = vcmp.eq.s32.totalorder %v1971, %v265
        %vm2174 = vcmp.eq.s32.totalorder %v1971, %v266
        %vm2175 = vcmp.eq.s32.totalorder %v1971, %v267
        %vm2176 = vcmp.eq.s32.totalorder %v1971, %v268
        %vm2177 = vcmp.eq.s32.totalorder %v1974, %v265
        %vm2178 = vcmp.eq.s32.totalorder %v1974, %v266
        %vm2179 = vcmp.eq.s32.totalorder %v1974, %v267
        %vm2180 = vcmp.eq.s32.totalorder %v1974, %v268
        %vm2181 = vcmp.eq.s32.totalorder %v1977, %v265
        %vm2182 = vcmp.eq.s32.totalorder %v1977, %v266
        %vm2183 = vcmp.eq.s32.totalorder %v1977, %v267
        %vm2184 = vcmp.eq.s32.totalorder %v1977, %v268
        %vm2185 = vcmp.eq.s32.totalorder %v1980, %v265
        %vm2186 = vcmp.eq.s32.totalorder %v1980, %v266
        %vm2187 = vcmp.eq.s32.totalorder %v1980, %v267
        %vm2188 = vcmp.eq.s32.totalorder %v1980, %v268
        %vm2189 = vcmp.eq.s32.totalorder %v1983, %v265
        %vm2190 = vcmp.eq.s32.totalorder %v1983, %v266
        %vm2191 = vcmp.eq.s32.totalorder %v1983, %v267
        %vm2192 = vcmp.eq.s32.totalorder %v1983, %v268
        %vm2193 = vcmp.eq.s32.totalorder %v1986, %v265
        %vm2194 = vcmp.eq.s32.totalorder %v1986, %v266
        %vm2195 = vcmp.eq.s32.totalorder %v1986, %v267
        %vm2196 = vcmp.eq.s32.totalorder %v1986, %v268
        %vm2197 = vcmp.eq.s32.totalorder %v1989, %v265
        %vm2198 = vcmp.eq.s32.totalorder %v1989, %v266
        %vm2199 = vcmp.eq.s32.totalorder %v1989, %v267
        %vm2200 = vcmp.eq.s32.totalorder %v1989, %v268
        %vm2201 = vcmp.eq.s32.totalorder %v1992, %v265
        %vm2202 = vcmp.eq.s32.totalorder %v1992, %v266
        %vm2203 = vcmp.eq.s32.totalorder %v1992, %v267
        %vm2204 = vcmp.eq.s32.totalorder %v1992, %v268
        %vm2205 = vcmp.eq.s32.totalorder %v1995, %v265
        %vm2206 = vcmp.eq.s32.totalorder %v1995, %v266
        %vm2207 = vcmp.eq.s32.totalorder %v1995, %v267
        %vm2208 = vcmp.eq.s32.totalorder %v1995, %v268
        %vm2209 = vcmp.eq.s32.totalorder %v1998, %v265
        %vm2210 = vcmp.eq.s32.totalorder %v1998, %v266
        %vm2211 = vcmp.eq.s32.totalorder %v1998, %v267
        %vm2212 = vcmp.eq.s32.totalorder %v1998, %v268
        %vm2213 = vcmp.eq.s32.totalorder %v2001, %v265
        %vm2214 = vcmp.eq.s32.totalorder %v2001, %v266
        %vm2215 = vcmp.eq.s32.totalorder %v2001, %v267
        %vm2216 = vcmp.eq.s32.totalorder %v2001, %v268
        %vm2217 = vcmp.eq.s32.totalorder %v2004, %v265
        %vm2218 = vcmp.eq.s32.totalorder %v2004, %v266
        %vm2219 = vcmp.eq.s32.totalorder %v2004, %v267
        %vm2220 = vcmp.eq.s32.totalorder %v2004, %v268
        %vm2221 = vcmp.eq.s32.totalorder %v2007, %v265
        %vm2222 = vcmp.eq.s32.totalorder %v2007, %v266
        %vm2223 = vcmp.eq.s32.totalorder %v2007, %v267
        %vm2224 = vcmp.eq.s32.totalorder %v2007, %v268
        %vm2225 = vcmp.eq.s32.totalorder %v2010, %v265
        %vm2226 = vcmp.eq.s32.totalorder %v2010, %v266
        %vm2227 = vcmp.eq.s32.totalorder %v2010, %v267
        %vm2228 = vcmp.eq.s32.totalorder %v2010, %v268
        %vm2229 = vcmp.eq.s32.totalorder %v2013, %v265
        %vm2230 = vcmp.eq.s32.totalorder %v2013, %v266
        %vm2231 = vcmp.eq.s32.totalorder %v2013, %v267
        %vm2232 = vcmp.eq.s32.totalorder %v2013, %v268
        %vm2233 = vcmp.eq.s32.totalorder %v2016, %v265
        %vm2234 = vcmp.eq.s32.totalorder %v2016, %v266
        %vm2235 = vcmp.eq.s32.totalorder %v2016, %v267
        %vm2236 = vcmp.eq.s32.totalorder %v2016, %v268
        %vm2237 = vcmp.eq.s32.totalorder %v2019, %v265
        %vm2238 = vcmp.eq.s32.totalorder %v2019, %v266
        %vm2239 = vcmp.eq.s32.totalorder %v2019, %v267
        %vm2240 = vcmp.eq.s32.totalorder %v2019, %v268
        %vm2241 = vcmp.eq.s32.totalorder %v2022, %v265
        %vm2242 = vcmp.eq.s32.totalorder %v2022, %v266
        %vm2243 = vcmp.eq.s32.totalorder %v2022, %v267
        %vm2244 = vcmp.eq.s32.totalorder %v2022, %v268
        %vm2245 = vcmp.eq.s32.totalorder %v2025, %v265
        %vm2246 = vcmp.eq.s32.totalorder %v2025, %v266
        %vm2247 = vcmp.eq.s32.totalorder %v2025, %v267
        %vm2248 = vcmp.eq.s32.totalorder %v2025, %v268
        %vm2249 = vcmp.eq.s32.totalorder %v2028, %v265
        %vm2250 = vcmp.eq.s32.totalorder %v2028, %v266
        %vm2251 = vcmp.eq.s32.totalorder %v2028, %v267
        %vm2252 = vcmp.eq.s32.totalorder %v2028, %v268
        %vm2253 = vcmp.eq.s32.totalorder %v2031, %v265
        %vm2254 = vcmp.eq.s32.totalorder %v2031, %v266
        %vm2255 = vcmp.eq.s32.totalorder %v2031, %v267
        %vm2256 = vcmp.eq.s32.totalorder %v2031, %v268
        %vm2257 = vcmp.eq.s32.totalorder %v2034, %v265
        %vm2258 = vcmp.eq.s32.totalorder %v2034, %v266
        %vm2259 = vcmp.eq.s32.totalorder %v2034, %v267
        %vm2260 = vcmp.eq.s32.totalorder %v2034, %v268
        %vm2261 = vcmp.eq.s32.totalorder %v2037, %v265
        %vm2262 = vcmp.eq.s32.totalorder %v2037, %v266
        %vm2263 = vcmp.eq.s32.totalorder %v2037, %v267
        %vm2264 = vcmp.eq.s32.totalorder %v2037, %v268
        %vm2265 = vcmp.eq.s32.totalorder %v2040, %v265
        %vm2266 = vcmp.eq.s32.totalorder %v2040, %v266
        %vm2267 = vcmp.eq.s32.totalorder %v2040, %v267
        %vm2268 = vcmp.eq.s32.totalorder %v2040, %v268
        %vm2269 = vcmp.eq.s32.totalorder %v2043, %v265
        %vm2270 = vcmp.eq.s32.totalorder %v2043, %v266
        %vm2271 = vcmp.eq.s32.totalorder %v2043, %v267
        %vm2272 = vcmp.eq.s32.totalorder %v2043, %v268
        %vm2273 = vcmp.eq.s32.totalorder %v2046, %v265
        %vm2274 = vcmp.eq.s32.totalorder %v2046, %v266
        %vm2275 = vcmp.eq.s32.totalorder %v2046, %v267
        %vm2276 = vcmp.eq.s32.totalorder %v2046, %v268
        %vm2277 = vcmp.eq.s32.totalorder %v2049, %v265
        %vm2278 = vcmp.eq.s32.totalorder %v2049, %v266
        %vm2279 = vcmp.eq.s32.totalorder %v2049, %v267
        %vm2280 = vcmp.eq.s32.totalorder %v2049, %v268
        %vm2281 = vcmp.eq.s32.totalorder %v2052, %v265
        %vm2282 = vcmp.eq.s32.totalorder %v2052, %v266
        %vm2283 = vcmp.eq.s32.totalorder %v2052, %v267
        %vm2284 = vcmp.eq.s32.totalorder %v2052, %v268
        %vm2285 = vcmp.eq.s32.totalorder %v2055, %v265
        %vm2286 = vcmp.eq.s32.totalorder %v2055, %v266
        %vm2287 = vcmp.eq.s32.totalorder %v2055, %v267
        %vm2288 = vcmp.eq.s32.totalorder %v2055, %v268
        %vm2289 = vcmp.eq.s32.totalorder %v2058, %v265
        %vm2290 = vcmp.eq.s32.totalorder %v2058, %v266
        %vm2291 = vcmp.eq.s32.totalorder %v2058, %v267
        %vm2292 = vcmp.eq.s32.totalorder %v2058, %v268
        %vm2293 = vcmp.eq.s32.totalorder %v2061, %v265
        %vm2294 = vcmp.eq.s32.totalorder %v2061, %v266
        %vm2295 = vcmp.eq.s32.totalorder %v2061, %v267
        %vm2296 = vcmp.eq.s32.totalorder %v2061, %v268
        %vm2297 = vcmp.eq.s32.totalorder %v2064, %v265
        %vm2298 = vcmp.eq.s32.totalorder %v2064, %v266
        %vm2299 = vcmp.eq.s32.totalorder %v2064, %v267
        %vm2300 = vcmp.eq.s32.totalorder %v2064, %v268
        %vm2301 = vcmp.eq.s32.totalorder %v2067, %v265
        %vm2302 = vcmp.eq.s32.totalorder %v2067, %v266
        %vm2303 = vcmp.eq.s32.totalorder %v2067, %v267
        %vm2304 = vcmp.eq.s32.totalorder %v2067, %v268
        %vm2305 = vcmp.eq.s32.totalorder %v2070, %v265
        %vm2306 = vcmp.eq.s32.totalorder %v2070, %v266
        %vm2307 = vcmp.eq.s32.totalorder %v2070, %v267
        %vm2308 = vcmp.eq.s32.totalorder %v2070, %v268
        %vm2309 = vcmp.eq.s32.totalorder %v2073, %v265
        %vm2310 = vcmp.eq.s32.totalorder %v2073, %v266
        %vm2311 = vcmp.eq.s32.totalorder %v2073, %v267
        %vm2312 = vcmp.eq.s32.totalorder %v2073, %v268
        %vm2313 = vcmp.eq.s32.totalorder %v2076, %v265
        %vm2314 = vcmp.eq.s32.totalorder %v2076, %v266
        %vm2315 = vcmp.eq.s32.totalorder %v2076, %v267
        %vm2316 = vcmp.eq.s32.totalorder %v2076, %v268
        %vm2317 = vcmp.eq.s32.totalorder %v2079, %v265
        %vm2318 = vcmp.eq.s32.totalorder %v2079, %v266
        %vm2319 = vcmp.eq.s32.totalorder %v2079, %v267
        %vm2320 = vcmp.eq.s32.totalorder %v2079, %v268
        %vm2321 = vcmp.eq.s32.totalorder %v2082, %v265
        %vm2322 = vcmp.eq.s32.totalorder %v2082, %v266
        %vm2323 = vcmp.eq.s32.totalorder %v2082, %v267
        %vm2324 = vcmp.eq.s32.totalorder %v2082, %v268
        %vm2325 = vcmp.eq.s32.totalorder %v2085, %v265
        %vm2326 = vcmp.eq.s32.totalorder %v2085, %v266
        %vm2327 = vcmp.eq.s32.totalorder %v2085, %v267
        %vm2328 = vcmp.eq.s32.totalorder %v2085, %v268
        %vm2329 = vcmp.eq.s32.totalorder %v2088, %v265
        %vm2330 = vcmp.eq.s32.totalorder %v2088, %v266
        %vm2331 = vcmp.eq.s32.totalorder %v2088, %v267
        %vm2332 = vcmp.eq.s32.totalorder %v2088, %v268
        %vm2333 = vcmp.eq.s32.totalorder %v2091, %v265
        %vm2334 = vcmp.eq.s32.totalorder %v2091, %v266
        %vm2335 = vcmp.eq.s32.totalorder %v2091, %v267
        %vm2336 = vcmp.eq.s32.totalorder %v2091, %v268
        %vm2337 = vcmp.eq.s32.totalorder %v2094, %v265
        %vm2338 = vcmp.eq.s32.totalorder %v2094, %v266
        %vm2339 = vcmp.eq.s32.totalorder %v2094, %v267
        %vm2340 = vcmp.eq.s32.totalorder %v2094, %v268
        %vm2341 = vcmp.eq.s32.totalorder %v2097, %v265
        %vm2342 = vcmp.eq.s32.totalorder %v2097, %v266
        %vm2343 = vcmp.eq.s32.totalorder %v2097, %v267
        %vm2344 = vcmp.eq.s32.totalorder %v2097, %v268
        %vm2345 = vcmp.eq.s32.totalorder %v2100, %v265
        %vm2346 = vcmp.eq.s32.totalorder %v2100, %v266
        %vm2347 = vcmp.eq.s32.totalorder %v2100, %v267
        %vm2348 = vcmp.eq.s32.totalorder %v2100, %v268
        %vm2349 = vcmp.eq.s32.totalorder %v2103, %v265
        %vm2350 = vcmp.eq.s32.totalorder %v2103, %v266
        %vm2351 = vcmp.eq.s32.totalorder %v2103, %v267
        %vm2352 = vcmp.eq.s32.totalorder %v2103, %v268
        %vm2353 = vcmp.eq.s32.totalorder %v2106, %v265
        %vm2354 = vcmp.eq.s32.totalorder %v2106, %v266
        %vm2355 = vcmp.eq.s32.totalorder %v2106, %v267
        %vm2356 = vcmp.eq.s32.totalorder %v2106, %v268
        %vm2357 = vcmp.eq.s32.totalorder %v2109, %v265
        %vm2358 = vcmp.eq.s32.totalorder %v2109, %v266
        %vm2359 = vcmp.eq.s32.totalorder %v2109, %v267
        %vm2360 = vcmp.eq.s32.totalorder %v2109, %v268
        %vm2361 = vcmp.eq.s32.totalorder %v2112, %v265
        %vm2362 = vcmp.eq.s32.totalorder %v2112, %v266
        %vm2363 = vcmp.eq.s32.totalorder %v2112, %v267
        %vm2364 = vcmp.eq.s32.totalorder %v2112, %v268
        %vm2365 = vcmp.eq.s32.totalorder %v2115, %v265
        %vm2366 = vcmp.eq.s32.totalorder %v2115, %v266
        %vm2367 = vcmp.eq.s32.totalorder %v2115, %v267
        %vm2368 = vcmp.eq.s32.totalorder %v2115, %v268
        %vm2369 = vcmp.eq.s32.totalorder %v2118, %v265
        %vm2370 = vcmp.eq.s32.totalorder %v2118, %v266
        %vm2371 = vcmp.eq.s32.totalorder %v2118, %v267
        %vm2372 = vcmp.eq.s32.totalorder %v2118, %v268
        %vm2373 = vcmp.eq.s32.totalorder %v2121, %v265
        %vm2374 = vcmp.eq.s32.totalorder %v2121, %v266
        %vm2375 = vcmp.eq.s32.totalorder %v2121, %v267
        %vm2376 = vcmp.eq.s32.totalorder %v2121, %v268
        %vm2377 = vcmp.eq.s32.totalorder %v2124, %v265
        %vm2378 = vcmp.eq.s32.totalorder %v2124, %v266
        %vm2379 = vcmp.eq.s32.totalorder %v2124, %v267
        %vm2380 = vcmp.eq.s32.totalorder %v2124, %v268
        %v2381 = vsel %vm2125, 1, 0
        %v2382 = vsel %vm2126, 1, 0
        %v2383 = vsel %vm2127, 1, 0
        %v2384 = vsel %vm2128, 1, 0
        %v2385 = vsel %vm2129, 1, 0
        %v2386 = vsel %vm2130, 1, 0
        %v2387 = vsel %vm2131, 1, 0
        %v2388 = vsel %vm2132, 1, 0
        %v2389 = vsel %vm2133, 1, 0
        %v2390 = vsel %vm2134, 1, 0
        %v2391 = vsel %vm2135, 1, 0
        %v2392 = vsel %vm2136, 1, 0
        %v2393 = vsel %vm2137, 1, 0
        %v2394 = vsel %vm2138, 1, 0
        %v2395 = vsel %vm2139, 1, 0
        %v2396 = vsel %vm2140, 1, 0
        %v2397 = vsel %vm2141, 1, 0
        %v2398 = vsel %vm2142, 1, 0
        %v2399 = vsel %vm2143, 1, 0
        %v2400 = vsel %vm2144, 1, 0
        %v2401 = vsel %vm2145, 1, 0
        %v2402 = vsel %vm2146, 1, 0
        %v2403 = vsel %vm2147, 1, 0
        %v2404 = vsel %vm2148, 1, 0
        %v2405 = vsel %vm2149, 1, 0
        %v2406 = vsel %vm2150, 1, 0
        %v2407 = vsel %vm2151, 1, 0
        %v2408 = vsel %vm2152, 1, 0
        %v2409 = vsel %vm2153, 1, 0
        %v2410 = vsel %vm2154, 1, 0
        %v2411 = vsel %vm2155, 1, 0
        %v2412 = vsel %vm2156, 1, 0
        %v2413 = vsel %vm2157, 1, 0
        %v2414 = vsel %vm2158, 1, 0
        %v2415 = vsel %vm2159, 1, 0
        %v2416 = vsel %vm2160, 1, 0
        %v2417 = vsel %vm2161, 1, 0
        %v2418 = vsel %vm2162, 1, 0
        %v2419 = vsel %vm2163, 1, 0
        %v2420 = vsel %vm2164, 1, 0
        %v2421 = vsel %vm2165, 1, 0
        %v2422 = vsel %vm2166, 1, 0
        %v2423 = vsel %vm2167, 1, 0
        %v2424 = vsel %vm2168, 1, 0
        %v2425 = vsel %vm2169, 1, 0
        %v2426 = vsel %vm2170, 1, 0
        %v2427 = vsel %vm2171, 1, 0
        %v2428 = vsel %vm2172, 1, 0
        %v2429 = vsel %vm2173, 1, 0
        %v2430 = vsel %vm2174, 1, 0
        %v2431 = vsel %vm2175, 1, 0
        %v2432 = vsel %vm2176, 1, 0
        %v2433 = vsel %vm2177, 1, 0
        %v2434 = vsel %vm2178, 1, 0
        %v2435 = vsel %vm2179, 1, 0
        %v2436 = vsel %vm2180, 1, 0
        %v2437 = vsel %vm2181, 1, 0
        %v2438 = vsel %vm2182, 1, 0
        %v2439 = vsel %vm2183, 1, 0
        %v2440 = vsel %vm2184, 1, 0
        %v2441 = vsel %vm2185, 1, 0
        %v2442 = vsel %vm2186, 1, 0
        %v2443 = vsel %vm2187, 1, 0
        %v2444 = vsel %vm2188, 1, 0
        %v2445 = vsel %vm2189, 1, 0
        %v2446 = vsel %vm2190, 1, 0
        %v2447 = vsel %vm2191, 1, 0
        %v2448 = vsel %vm2192, 1, 0
        %v2449 = vsel %vm2193, 1, 0
        %v2450 = vsel %vm2194, 1, 0
        %v2451 = vsel %vm2195, 1, 0
        %v2452 = vsel %vm2196, 1, 0
        %v2453 = vsel %vm2197, 1, 0
        %v2454 = vsel %vm2198, 1, 0
        %v2455 = vsel %vm2199, 1, 0
        %v2456 = vsel %vm2200, 1, 0
        %v2457 = vsel %vm2201, 1, 0
        %v2458 = vsel %vm2202, 1, 0
        %v2459 = vsel %vm2203, 1, 0
        %v2460 = vsel %vm2204, 1, 0
        %v2461 = vsel %vm2205, 1, 0
        %v2462 = vsel %vm2206, 1, 0
        %v2463 = vsel %vm2207, 1, 0
        %v2464 = vsel %vm2208, 1, 0
        %v2465 = vsel %vm2209, 1, 0
        %v2466 = vsel %vm2210, 1, 0
        %v2467 = vsel %vm2211, 1, 0
        %v2468 = vsel %vm2212, 1, 0
        %v2469 = vsel %vm2213, 1, 0
        %v2470 = vsel %vm2214, 1, 0
        %v2471 = vsel %vm2215, 1, 0
        %v2472 = vsel %vm2216, 1, 0
        %v2473 = vsel %vm2217, 1, 0
        %v2474 = vsel %vm2218, 1, 0
        %v2475 = vsel %vm2219, 1, 0
        %v2476 = vsel %vm2220, 1, 0
        %v2477 = vsel %vm2221, 1, 0
        %v2478 = vsel %vm2222, 1, 0
        %v2479 = vsel %vm2223, 1, 0
        %v2480 = vsel %vm2224, 1, 0
        %v2481 = vsel %vm2225, 1, 0
        %v2482 = vsel %vm2226, 1, 0
        %v2483 = vsel %vm2227, 1, 0
        %v2484 = vsel %vm2228, 1, 0
        %v2485 = vsel %vm2229, 1, 0
        %v2486 = vsel %vm2230, 1, 0
        %v2487 = vsel %vm2231, 1, 0
        %v2488 = vsel %vm2232, 1, 0
        %v2489 = vsel %vm2233, 1, 0
        %v2490 = vsel %vm2234, 1, 0
        %v2491 = vsel %vm2235, 1, 0
        %v2492 = vsel %vm2236, 1, 0
        %v2493 = vsel %vm2237, 1, 0
        %v2494 = vsel %vm2238, 1, 0
        %v2495 = vsel %vm2239, 1, 0
        %v2496 = vsel %vm2240, 1, 0
        %v2497 = vsel %vm2241, 1, 0
        %v2498 = vsel %vm2242, 1, 0
        %v2499 = vsel %vm2243, 1, 0
        %v2500 = vsel %vm2244, 1, 0
        %v2501 = vsel %vm2245, 1, 0
        %v2502 = vsel %vm2246, 1, 0
        %v2503 = vsel %vm2247, 1, 0
        %v2504 = vsel %vm2248, 1, 0
        %v2505 = vsel %vm2249, 1, 0
        %v2506 = vsel %vm2250, 1, 0
        %v2507 = vsel %vm2251, 1, 0
        %v2508 = vsel %vm2252, 1, 0
        %v2509 = vsel %vm2253, 1, 0
        %v2510 = vsel %vm2254, 1, 0
        %v2511 = vsel %vm2255, 1, 0
        %v2512 = vsel %vm2256, 1, 0
        %v2513 = vsel %vm2257, 1, 0
        %v2514 = vsel %vm2258, 1, 0
        %v2515 = vsel %vm2259, 1, 0
        %v2516 = vsel %vm2260, 1, 0
        %v2517 = vsel %vm2261, 1, 0
        %v2518 = vsel %vm2262, 1, 0
        %v2519 = vsel %vm2263, 1, 0
        %v2520 = vsel %vm2264, 1, 0
        %v2521 = vsel %vm2265, 1, 0
        %v2522 = vsel %vm2266, 1, 0
        %v2523 = vsel %vm2267, 1, 0
        %v2524 = vsel %vm2268, 1, 0
        %v2525 = vsel %vm2269, 1, 0
        %v2526 = vsel %vm2270, 1, 0
        %v2527 = vsel %vm2271, 1, 0
        %v2528 = vsel %vm2272, 1, 0
        %v2529 = vsel %vm2273, 1, 0
        %v2530 = vsel %vm2274, 1, 0
        %v2531 = vsel %vm2275, 1, 0
        %v2532 = vsel %vm2276, 1, 0
        %v2533 = vsel %vm2277, 1, 0
        %v2534 = vsel %vm2278, 1, 0
        %v2535 = vsel %vm2279, 1, 0
        %v2536 = vsel %vm2280, 1, 0
        %v2537 = vsel %vm2281, 1, 0
        %v2538 = vsel %vm2282, 1, 0
        %v2539 = vsel %vm2283, 1, 0
        %v2540 = vsel %vm2284, 1, 0
        %v2541 = vsel %vm2285, 1, 0
        %v2542 = vsel %vm2286, 1, 0
        %v2543 = vsel %vm2287, 1, 0
        %v2544 = vsel %vm2288, 1, 0
        %v2545 = vsel %vm2289, 1, 0
        %v2546 = vsel %vm2290, 1, 0
        %v2547 = vsel %vm2291, 1, 0
        %v2548 = vsel %vm2292, 1, 0
        %v2549 = vsel %vm2293, 1, 0
        %v2550 = vsel %vm2294, 1, 0
        %v2551 = vsel %vm2295, 1, 0
        %v2552 = vsel %vm2296, 1, 0
        %v2553 = vsel %vm2297, 1, 0
        %v2554 = vsel %vm2298, 1, 0
        %v2555 = vsel %vm2299, 1, 0
        %v2556 = vsel %vm2300, 1, 0
        %v2557 = vsel %vm2301, 1, 0
        %v2558 = vsel %vm2302, 1, 0
        %v2559 = vsel %vm2303, 1, 0
        %v2560 = vsel %vm2304, 1, 0
        %v2561 = vsel %vm2305, 1, 0
        %v2562 = vsel %vm2306, 1, 0
        %v2563 = vsel %vm2307, 1, 0
        %v2564 = vsel %vm2308, 1, 0
        %v2565 = vsel %vm2309, 1, 0
        %v2566 = vsel %vm2310, 1, 0
        %v2567 = vsel %vm2311, 1, 0
        %v2568 = vsel %vm2312, 1, 0
        %v2569 = vsel %vm2313, 1, 0
        %v2570 = vsel %vm2314, 1, 0
        %v2571 = vsel %vm2315, 1, 0
        %v2572 = vsel %vm2316, 1, 0
        %v2573 = vsel %vm2317, 1, 0
        %v2574 = vsel %vm2318, 1, 0
        %v2575 = vsel %vm2319, 1, 0
        %v2576 = vsel %vm2320, 1, 0
        %v2577 = vsel %vm2321, 1, 0
        %v2578 = vsel %vm2322, 1, 0
        %v2579 = vsel %vm2323, 1, 0
        %v2580 = vsel %vm2324, 1, 0
        %v2581 = vsel %vm2325, 1, 0
        %v2582 = vsel %vm2326, 1, 0
        %v2583 = vsel %vm2327, 1, 0
        %v2584 = vsel %vm2328, 1, 0
        %v2585 = vsel %vm2329, 1, 0
        %v2586 = vsel %vm2330, 1, 0
        %v2587 = vsel %vm2331, 1, 0
        %v2588 = vsel %vm2332, 1, 0
        %v2589 = vsel %vm2333, 1, 0
        %v2590 = vsel %vm2334, 1, 0
        %v2591 = vsel %vm2335, 1, 0
        %v2592 = vsel %vm2336, 1, 0
        %v2593 = vsel %vm2337, 1, 0
        %v2594 = vsel %vm2338, 1, 0
        %v2595 = vsel %vm2339, 1, 0
        %v2596 = vsel %vm2340, 1, 0
        %v2597 = vsel %vm2341, 1, 0
        %v2598 = vsel %vm2342, 1, 0
        %v2599 = vsel %vm2343, 1, 0
        %v2600 = vsel %vm2344, 1, 0
        %v2601 = vsel %vm2345, 1, 0
        %v2602 = vsel %vm2346, 1, 0
        %v2603 = vsel %vm2347, 1, 0
        %v2604 = vsel %vm2348, 1, 0
        %v2605 = vsel %vm2349, 1, 0
        %v2606 = vsel %vm2350, 1, 0
        %v2607 = vsel %vm2351, 1, 0
        %v2608 = vsel %vm2352, 1, 0
        %v2609 = vsel %vm2353, 1, 0
        %v2610 = vsel %vm2354, 1, 0
        %v2611 = vsel %vm2355, 1, 0
        %v2612 = vsel %vm2356, 1, 0
        %v2613 = vsel %vm2357, 1, 0
        %v2614 = vsel %vm2358, 1, 0
        %v2615 = vsel %vm2359, 1, 0
        %v2616 = vsel %vm2360, 1, 0
        %v2617 = vsel %vm2361, 1, 0
        %v2618 = vsel %vm2362, 1, 0
        %v2619 = vsel %vm2363, 1, 0
        %v2620 = vsel %vm2364, 1, 0
        %v2621 = vsel %vm2365, 1, 0
        %v2622 = vsel %vm2366, 1, 0
        %v2623 = vsel %vm2367, 1, 0
        %v2624 = vsel %vm2368, 1, 0
        %v2625 = vsel %vm2369, 1, 0
        %v2626 = vsel %vm2370, 1, 0
        %v2627 = vsel %vm2371, 1, 0
        %v2628 = vsel %vm2372, 1, 0
        %v2629 = vsel %vm2373, 1, 0
        %v2630 = vsel %vm2374, 1, 0
        %v2631 = vsel %vm2375, 1, 0
        %v2632 = vsel %vm2376, 1, 0
        %v2633 = vsel %vm2377, 1, 0
        %v2634 = vsel %vm2378, 1, 0
        %v2635 = vsel %vm2379, 1, 0
        %v2636 = vsel %vm2380, 1, 0
        %v2637 = vadd.s32 %v1677, %v2381
        %v2638 = vadd.s32 %v1678, %v2382
        %v2639 = vadd.s32 %v1679, %v2383
        %v2640 = vadd.s32 %v1680, %v2384
        %v2641 = vadd.s32 %v1681, %v2385
        %v2642 = vadd.s32 %v1682, %v2386
        %v2643 = vadd.s32 %v1683, %v2387
        %v2644 = vadd.s32 %v1684, %v2388
        %v2645 = vadd.s32 %v1685, %v2389
        %v2646 = vadd.s32 %v1686, %v2390
        %v2647 = vadd.s32 %v1687, %v2391
        %v2648 = vadd.s32 %v1688, %v2392
        %v2649 = vadd.s32 %v1689, %v2393
        %v2650 = vadd.s32 %v1690, %v2394
        %v2651 = vadd.s32 %v1691, %v2395
        %v2652 = vadd.s32 %v1692, %v2396
        %v2653 = vadd.s32 %v1693, %v2397
        %v2654 = vadd.s32 %v1694, %v2398
        %v2655 = vadd.s32 %v1695, %v2399
        %v2656 = vadd.s32 %v1696, %v2400
        %v2657 = vadd.s32 %v1697, %v2401
        %v2658 = vadd.s32 %v1698, %v2402
        %v2659 = vadd.s32 %v1699, %v2403
        %v2660 = vadd.s32 %v1700, %v2404
        %v2661 = vadd.s32 %v1701, %v2405
        %v2662 = vadd.s32 %v1702, %v2406
        %v2663 = vadd.s32 %v1703, %v2407
        %v2664 = vadd.s32 %v1704, %v2408
        %v2665 = vadd.s32 %v1705, %v2409
        %v2666 = vadd.s32 %v1706, %v2410
        %v2667 = vadd.s32 %v1707, %v2411
        %v2668 = vadd.s32 %v1708, %v2412
        %v2669 = vadd.s32 %v1709, %v2413
        %v2670 = vadd.s32 %v1710, %v2414
        %v2671 = vadd.s32 %v1711, %v2415
        %v2672 = vadd.s32 %v1712, %v2416
        %v2673 = vadd.s32 %v1713, %v2417
        %v2674 = vadd.s32 %v1714, %v2418
        %v2675 = vadd.s32 %v1715, %v2419
        %v2676 = vadd.s32 %v1716, %v2420
        %v2677 = vadd.s32 %v1717, %v2421
        %v2678 = vadd.s32 %v1718, %v2422
        %v2679 = vadd.s32 %v1719, %v2423
        %v2680 = vadd.s32 %v1720, %v2424
        %v2681 = vadd.s32 %v1721, %v2425
        %v2682 = vadd.s32 %v1722, %v2426
        %v2683 = vadd.s32 %v1723, %v2427
        %v2684 = vadd.s32 %v1724, %v2428
        %v2685 = vadd.s32 %v1725, %v2429
        %v2686 = vadd.s32 %v1726, %v2430
        %v2687 = vadd.s32 %v1727, %v2431
        %v2688 = vadd.s32 %v1728, %v2432
        %v2689 = vadd.s32 %v1729, %v2433
        %v2690 = vadd.s32 %v1730, %v2434
        %v2691 = vadd.s32 %v1731, %v2435
        %v2692 = vadd.s32 %v1732, %v2436
        %v2693 = vadd.s32 %v1733, %v2437
        %v2694 = vadd.s32 %v1734, %v2438
        %v2695 = vadd.s32 %v1735, %v2439
        %v2696 = vadd.s32 %v1736, %v2440
        %v2697 = vadd.s32 %v1737, %v2441
        %v2698 = vadd.s32 %v1738, %v2442
        %v2699 = vadd.s32 %v1739, %v2443
        %v2700 = vadd.s32 %v1740, %v2444
        %v2701 = vadd.s32 %v1741, %v2445
        %v2702 = vadd.s32 %v1742, %v2446
        %v2703 = vadd.s32 %v1743, %v2447
        %v2704 = vadd.s32 %v1744, %v2448
        %v2705 = vadd.s32 %v1745, %v2449
        %v2706 = vadd.s32 %v1746, %v2450
        %v2707 = vadd.s32 %v1747, %v2451
        %v2708 = vadd.s32 %v1748, %v2452
        %v2709 = vadd.s32 %v1749, %v2453
        %v2710 = vadd.s32 %v1750, %v2454
        %v2711 = vadd.s32 %v1751, %v2455
        %v2712 = vadd.s32 %v1752, %v2456
        %v2713 = vadd.s32 %v1753, %v2457
        %v2714 = vadd.s32 %v1754, %v2458
        %v2715 = vadd.s32 %v1755, %v2459
        %v2716 = vadd.s32 %v1756, %v2460
        %v2717 = vadd.s32 %v1757, %v2461
        %v2718 = vadd.s32 %v1758, %v2462
        %v2719 = vadd.s32 %v1759, %v2463
        %v2720 = vadd.s32 %v1760, %v2464
        %v2721 = vadd.s32 %v1761, %v2465
        %v2722 = vadd.s32 %v1762, %v2466
        %v2723 = vadd.s32 %v1763, %v2467
        %v2724 = vadd.s32 %v1764, %v2468
        %v2725 = vadd.s32 %v1765, %v2469
        %v2726 = vadd.s32 %v1766, %v2470
        %v2727 = vadd.s32 %v1767, %v2471
        %v2728 = vadd.s32 %v1768, %v2472
        %v2729 = vadd.s32 %v1769, %v2473
        %v2730 = vadd.s32 %v1770, %v2474
        %v2731 = vadd.s32 %v1771, %v2475
        %v2732 = vadd.s32 %v1772, %v2476
        %v2733 = vadd.s32 %v1773, %v2477
        %v2734 = vadd.s32 %v1774, %v2478
        %v2735 = vadd.s32 %v1775, %v2479
        %v2736 = vadd.s32 %v1776, %v2480
        %v2737 = vadd.s32 %v1777, %v2481
        %v2738 = vadd.s32 %v1778, %v2482
        %v2739 = vadd.s32 %v1779, %v2483
        %v2740 = vadd.s32 %v1780, %v2484
        %v2741 = vadd.s32 %v1781, %v2485
        %v2742 = vadd.s32 %v1782, %v2486
        %v2743 = vadd.s32 %v1783, %v2487
        %v2744 = vadd.s32 %v1784, %v2488
        %v2745 = vadd.s32 %v1785, %v2489
        %v2746 = vadd.s32 %v1786, %v2490
        %v2747 = vadd.s32 %v1787, %v2491
        %v2748 = vadd.s32 %v1788, %v2492
        %v2749 = vadd.s32 %v1789, %v2493
        %v2750 = vadd.s32 %v1790, %v2494
        %v2751 = vadd.s32 %v1791, %v2495
        %v2752 = vadd.s32 %v1792, %v2496
        %v2753 = vadd.s32 %v1793, %v2497
        %v2754 = vadd.s32 %v1794, %v2498
        %v2755 = vadd.s32 %v1795, %v2499
        %v2756 = vadd.s32 %v1796, %v2500
        %v2757 = vadd.s32 %v1797, %v2501
        %v2758 = vadd.s32 %v1798, %v2502
        %v2759 = vadd.s32 %v1799, %v2503
        %v2760 = vadd.s32 %v1800, %v2504
        %v2761 = vadd.s32 %v1801, %v2505
        %v2762 = vadd.s32 %v1802, %v2506
        %v2763 = vadd.s32 %v1803, %v2507
        %v2764 = vadd.s32 %v1804, %v2508
        %v2765 = vadd.s32 %v1805, %v2509
        %v2766 = vadd.s32 %v1806, %v2510
        %v2767 = vadd.s32 %v1807, %v2511
        %v2768 = vadd.s32 %v1808, %v2512
        %v2769 = vadd.s32 %v1809, %v2513
        %v2770 = vadd.s32 %v1810, %v2514
        %v2771 = vadd.s32 %v1811, %v2515
        %v2772 = vadd.s32 %v1812, %v2516
        %v2773 = vadd.s32 %v1813, %v2517
        %v2774 = vadd.s32 %v1814, %v2518
        %v2775 = vadd.s32 %v1815, %v2519
        %v2776 = vadd.s32 %v1816, %v2520
        %v2777 = vadd.s32 %v1817, %v2521
        %v2778 = vadd.s32 %v1818, %v2522
        %v2779 = vadd.s32 %v1819, %v2523
        %v2780 = vadd.s32 %v1820, %v2524
        %v2781 = vadd.s32 %v1821, %v2525
        %v2782 = vadd.s32 %v1822, %v2526
        %v2783 = vadd.s32 %v1823, %v2527
        %v2784 = vadd.s32 %v1824, %v2528
        %v2785 = vadd.s32 %v1825, %v2529
        %v2786 = vadd.s32 %v1826, %v2530
        %v2787 = vadd.s32 %v1827, %v2531
        %v2788 = vadd.s32 %v1828, %v2532
        %v2789 = vadd.s32 %v1829, %v2533
        %v2790 = vadd.s32 %v1830, %v2534
        %v2791 = vadd.s32 %v1831, %v2535
        %v2792 = vadd.s32 %v1832, %v2536
        %v2793 = vadd.s32 %v1833, %v2537
        %v2794 = vadd.s32 %v1834, %v2538
        %v2795 = vadd.s32 %v1835, %v2539
        %v2796 = vadd.s32 %v1836, %v2540
        %v2797 = vadd.s32 %v1837, %v2541
        %v2798 = vadd.s32 %v1838, %v2542
        %v2799 = vadd.s32 %v1839, %v2543
        %v2800 = vadd.s32 %v1840, %v2544
        %v2801 = vadd.s32 %v1841, %v2545
        %v2802 = vadd.s32 %v1842, %v2546
        %v2803 = vadd.s32 %v1843, %v2547
        %v2804 = vadd.s32 %v1844, %v2548
        %v2805 = vadd.s32 %v1845, %v2549
        %v2806 = vadd.s32 %v1846, %v2550
        %v2807 = vadd.s32 %v1847, %v2551
        %v2808 = vadd.s32 %v1848, %v2552
        %v2809 = vadd.s32 %v1849, %v2553
        %v2810 = vadd.s32 %v1850, %v2554
        %v2811 = vadd.s32 %v1851, %v2555
        %v2812 = vadd.s32 %v1852, %v2556
        %v2813 = vadd.s32 %v1853, %v2557
        %v2814 = vadd.s32 %v1854, %v2558
        %v2815 = vadd.s32 %v1855, %v2559
        %v2816 = vadd.s32 %v1856, %v2560
        %v2817 = vadd.s32 %v1857, %v2561
        %v2818 = vadd.s32 %v1858, %v2562
        %v2819 = vadd.s32 %v1859, %v2563
        %v2820 = vadd.s32 %v1860, %v2564
        %v2821 = vadd.s32 %v1861, %v2565
        %v2822 = vadd.s32 %v1862, %v2566
        %v2823 = vadd.s32 %v1863, %v2567
        %v2824 = vadd.s32 %v1864, %v2568
        %v2825 = vadd.s32 %v1865, %v2569
        %v2826 = vadd.s32 %v1866, %v2570
        %v2827 = vadd.s32 %v1867, %v2571
        %v2828 = vadd.s32 %v1868, %v2572
        %v2829 = vadd.s32 %v1869, %v2573
        %v2830 = vadd.s32 %v1870, %v2574
        %v2831 = vadd.s32 %v1871, %v2575
        %v2832 = vadd.s32 %v1872, %v2576
        %v2833 = vadd.s32 %v1873, %v2577
        %v2834 = vadd.s32 %v1874, %v2578
        %v2835 = vadd.s32 %v1875, %v2579
        %v2836 = vadd.s32 %v1876, %v2580
        %v2837 = vadd.s32 %v1877, %v2581
        %v2838 = vadd.s32 %v1878, %v2582
        %v2839 = vadd.s32 %v1879, %v2583
        %v2840 = vadd.s32 %v1880, %v2584
        %v2841 = vadd.s32 %v1881, %v2585
        %v2842 = vadd.s32 %v1882, %v2586
        %v2843 = vadd.s32 %v1883, %v2587
        %v2844 = vadd.s32 %v1884, %v2588
        %v2845 = vadd.s32 %v1885, %v2589
        %v2846 = vadd.s32 %v1886, %v2590
        %v2847 = vadd.s32 %v1887, %v2591
        %v2848 = vadd.s32 %v1888, %v2592
        %v2849 = vadd.s32 %v1889, %v2593
        %v2850 = vadd.s32 %v1890, %v2594
        %v2851 = vadd.s32 %v1891, %v2595
        %v2852 = vadd.s32 %v1892, %v2596
        %v2853 = vadd.s32 %v1893, %v2597
        %v2854 = vadd.s32 %v1894, %v2598
        %v2855 = vadd.s32 %v1895, %v2599
        %v2856 = vadd.s32 %v1896, %v2600
        %v2857 = vadd.s32 %v1897, %v2601
        %v2858 = vadd.s32 %v1898, %v2602
        %v2859 = vadd.s32 %v1899, %v2603
        %v2860 = vadd.s32 %v1900, %v2604
        %v2861 = vadd.s32 %v1901, %v2605
        %v2862 = vadd.s32 %v1902, %v2606
        %v2863 = vadd.s32 %v1903, %v2607
        %v2864 = vadd.s32 %v1904, %v2608
        %v2865 = vadd.s32 %v1905, %v2609
        %v2866 = vadd.s32 %v1906, %v2610
        %v2867 = vadd.s32 %v1907, %v2611
        %v2868 = vadd.s32 %v1908, %v2612
        %v2869 = vadd.s32 %v1909, %v2613
        %v2870 = vadd.s32 %v1910, %v2614
        %v2871 = vadd.s32 %v1911, %v2615
        %v2872 = vadd.s32 %v1912, %v2616
        %v2873 = vadd.s32 %v1913, %v2617
        %v2874 = vadd.s32 %v1914, %v2618
        %v2875 = vadd.s32 %v1915, %v2619
        %v2876 = vadd.s32 %v1916, %v2620
        %v2877 = vadd.s32 %v1917, %v2621
        %v2878 = vadd.s32 %v1918, %v2622
        %v2879 = vadd.s32 %v1919, %v2623
        %v2880 = vadd.s32 %v1920, %v2624
        %v2881 = vadd.s32 %v1921, %v2625
        %v2882 = vadd.s32 %v1922, %v2626
        %v2883 = vadd.s32 %v1923, %v2627
        %v2884 = vadd.s32 %v1924, %v2628
        %v2885 = vadd.s32 %v1925, %v2629
        %v2886 = vadd.s32 %v1926, %v2630
        %v2887 = vadd.s32 %v1927, %v2631
        %v2888 = vadd.s32 %v1928, %v2632
        %v2889 = vadd.s32 %v1929, %v2633
        %v2890 = vadd.s32 %v1930, %v2634
        %v2891 = vadd.s32 %v1931, %v2635
        %v2892 = vadd.s32 %v1932, %v2636
        %2893 = vset.pattern.permute.xlu0 3
        %2894 = vperm.xlu0 %2893, %v200
        %v2895 = vpop.permute.xlu0 %2894
        %2896 = vset.pattern.permute.xlu0 3
        %2897 = vperm.xlu0 %2896, %v201
        %v2898 = vpop.permute.xlu0 %2897
        %2899 = vset.pattern.permute.xlu0 3
        %2900 = vperm.xlu0 %2899, %v202
        %v2901 = vpop.permute.xlu0 %2900
        %2902 = vset.pattern.permute.xlu0 3
        %2903 = vperm.xlu0 %2902, %v203
        %v2904 = vpop.permute.xlu0 %2903
        %2905 = vset.pattern.permute.xlu0 3
        %2906 = vperm.xlu0 %2905, %v204
        %v2907 = vpop.permute.xlu0 %2906
        %2908 = vset.pattern.permute.xlu0 3
        %2909 = vperm.xlu0 %2908, %v205
        %v2910 = vpop.permute.xlu0 %2909
        %2911 = vset.pattern.permute.xlu0 3
        %2912 = vperm.xlu0 %2911, %v206
        %v2913 = vpop.permute.xlu0 %2912
        %2914 = vset.pattern.permute.xlu0 3
        %2915 = vperm.xlu0 %2914, %v207
        %v2916 = vpop.permute.xlu0 %2915
        %2917 = vset.pattern.permute.xlu0 3
        %2918 = vperm.xlu0 %2917, %v208
        %v2919 = vpop.permute.xlu0 %2918
        %2920 = vset.pattern.permute.xlu0 3
        %2921 = vperm.xlu0 %2920, %v209
        %v2922 = vpop.permute.xlu0 %2921
        %2923 = vset.pattern.permute.xlu0 3
        %2924 = vperm.xlu0 %2923, %v210
        %v2925 = vpop.permute.xlu0 %2924
        %2926 = vset.pattern.permute.xlu0 3
        %2927 = vperm.xlu0 %2926, %v211
        %v2928 = vpop.permute.xlu0 %2927
        %2929 = vset.pattern.permute.xlu0 3
        %2930 = vperm.xlu0 %2929, %v212
        %v2931 = vpop.permute.xlu0 %2930
        %2932 = vset.pattern.permute.xlu0 3
        %2933 = vperm.xlu0 %2932, %v213
        %v2934 = vpop.permute.xlu0 %2933
        %2935 = vset.pattern.permute.xlu0 3
        %2936 = vperm.xlu0 %2935, %v214
        %v2937 = vpop.permute.xlu0 %2936
        %2938 = vset.pattern.permute.xlu0 3
        %2939 = vperm.xlu0 %2938, %v215
        %v2940 = vpop.permute.xlu0 %2939
        %2941 = vset.pattern.permute.xlu0 3
        %2942 = vperm.xlu0 %2941, %v216
        %v2943 = vpop.permute.xlu0 %2942
        %2944 = vset.pattern.permute.xlu0 3
        %2945 = vperm.xlu0 %2944, %v217
        %v2946 = vpop.permute.xlu0 %2945
        %2947 = vset.pattern.permute.xlu0 3
        %2948 = vperm.xlu0 %2947, %v218
        %v2949 = vpop.permute.xlu0 %2948
        %2950 = vset.pattern.permute.xlu0 3
        %2951 = vperm.xlu0 %2950, %v219
        %v2952 = vpop.permute.xlu0 %2951
        %2953 = vset.pattern.permute.xlu0 3
        %2954 = vperm.xlu0 %2953, %v220
        %v2955 = vpop.permute.xlu0 %2954
        %2956 = vset.pattern.permute.xlu0 3
        %2957 = vperm.xlu0 %2956, %v221
        %v2958 = vpop.permute.xlu0 %2957
        %2959 = vset.pattern.permute.xlu0 3
        %2960 = vperm.xlu0 %2959, %v222
        %v2961 = vpop.permute.xlu0 %2960
        %2962 = vset.pattern.permute.xlu0 3
        %2963 = vperm.xlu0 %2962, %v223
        %v2964 = vpop.permute.xlu0 %2963
        %2965 = vset.pattern.permute.xlu0 3
        %2966 = vperm.xlu0 %2965, %v224
        %v2967 = vpop.permute.xlu0 %2966
        %2968 = vset.pattern.permute.xlu0 3
        %2969 = vperm.xlu0 %2968, %v225
        %v2970 = vpop.permute.xlu0 %2969
        %2971 = vset.pattern.permute.xlu0 3
        %2972 = vperm.xlu0 %2971, %v226
        %v2973 = vpop.permute.xlu0 %2972
        %2974 = vset.pattern.permute.xlu0 3
        %2975 = vperm.xlu0 %2974, %v227
        %v2976 = vpop.permute.xlu0 %2975
        %2977 = vset.pattern.permute.xlu0 3
        %2978 = vperm.xlu0 %2977, %v228
        %v2979 = vpop.permute.xlu0 %2978
        %2980 = vset.pattern.permute.xlu0 3
        %2981 = vperm.xlu0 %2980, %v229
        %v2982 = vpop.permute.xlu0 %2981
        %2983 = vset.pattern.permute.xlu0 3
        %2984 = vperm.xlu0 %2983, %v230
        %v2985 = vpop.permute.xlu0 %2984
        %2986 = vset.pattern.permute.xlu0 3
        %2987 = vperm.xlu0 %2986, %v231
        %v2988 = vpop.permute.xlu0 %2987
        %2989 = vset.pattern.permute.xlu0 3
        %2990 = vperm.xlu0 %2989, %v232
        %v2991 = vpop.permute.xlu0 %2990
        %2992 = vset.pattern.permute.xlu0 3
        %2993 = vperm.xlu0 %2992, %v233
        %v2994 = vpop.permute.xlu0 %2993
        %2995 = vset.pattern.permute.xlu0 3
        %2996 = vperm.xlu0 %2995, %v234
        %v2997 = vpop.permute.xlu0 %2996
        %2998 = vset.pattern.permute.xlu0 3
        %2999 = vperm.xlu0 %2998, %v235
        %v3000 = vpop.permute.xlu0 %2999
        %3001 = vset.pattern.permute.xlu0 3
        %3002 = vperm.xlu0 %3001, %v236
        %v3003 = vpop.permute.xlu0 %3002
        %3004 = vset.pattern.permute.xlu0 3
        %3005 = vperm.xlu0 %3004, %v237
        %v3006 = vpop.permute.xlu0 %3005
        %3007 = vset.pattern.permute.xlu0 3
        %3008 = vperm.xlu0 %3007, %v238
        %v3009 = vpop.permute.xlu0 %3008
        %3010 = vset.pattern.permute.xlu0 3
        %3011 = vperm.xlu0 %3010, %v239
        %v3012 = vpop.permute.xlu0 %3011
        %3013 = vset.pattern.permute.xlu0 3
        %3014 = vperm.xlu0 %3013, %v240
        %v3015 = vpop.permute.xlu0 %3014
        %3016 = vset.pattern.permute.xlu0 3
        %3017 = vperm.xlu0 %3016, %v241
        %v3018 = vpop.permute.xlu0 %3017
        %3019 = vset.pattern.permute.xlu0 3
        %3020 = vperm.xlu0 %3019, %v242
        %v3021 = vpop.permute.xlu0 %3020
        %3022 = vset.pattern.permute.xlu0 3
        %3023 = vperm.xlu0 %3022, %v243
        %v3024 = vpop.permute.xlu0 %3023
        %3025 = vset.pattern.permute.xlu0 3
        %3026 = vperm.xlu0 %3025, %v244
        %v3027 = vpop.permute.xlu0 %3026
        %3028 = vset.pattern.permute.xlu0 3
        %3029 = vperm.xlu0 %3028, %v245
        %v3030 = vpop.permute.xlu0 %3029
        %3031 = vset.pattern.permute.xlu0 3
        %3032 = vperm.xlu0 %3031, %v246
        %v3033 = vpop.permute.xlu0 %3032
        %3034 = vset.pattern.permute.xlu0 3
        %3035 = vperm.xlu0 %3034, %v247
        %v3036 = vpop.permute.xlu0 %3035
        %3037 = vset.pattern.permute.xlu0 3
        %3038 = vperm.xlu0 %3037, %v248
        %v3039 = vpop.permute.xlu0 %3038
        %3040 = vset.pattern.permute.xlu0 3
        %3041 = vperm.xlu0 %3040, %v249
        %v3042 = vpop.permute.xlu0 %3041
        %3043 = vset.pattern.permute.xlu0 3
        %3044 = vperm.xlu0 %3043, %v250
        %v3045 = vpop.permute.xlu0 %3044
        %3046 = vset.pattern.permute.xlu0 3
        %3047 = vperm.xlu0 %3046, %v251
        %v3048 = vpop.permute.xlu0 %3047
        %3049 = vset.pattern.permute.xlu0 3
        %3050 = vperm.xlu0 %3049, %v252
        %v3051 = vpop.permute.xlu0 %3050
        %3052 = vset.pattern.permute.xlu0 3
        %3053 = vperm.xlu0 %3052, %v253
        %v3054 = vpop.permute.xlu0 %3053
        %3055 = vset.pattern.permute.xlu0 3
        %3056 = vperm.xlu0 %3055, %v254
        %v3057 = vpop.permute.xlu0 %3056
        %3058 = vset.pattern.permute.xlu0 3
        %3059 = vperm.xlu0 %3058, %v255
        %v3060 = vpop.permute.xlu0 %3059
        %3061 = vset.pattern.permute.xlu0 3
        %3062 = vperm.xlu0 %3061, %v256
        %v3063 = vpop.permute.xlu0 %3062
        %3064 = vset.pattern.permute.xlu0 3
        %3065 = vperm.xlu0 %3064, %v257
        %v3066 = vpop.permute.xlu0 %3065
        %3067 = vset.pattern.permute.xlu0 3
        %3068 = vperm.xlu0 %3067, %v258
        %v3069 = vpop.permute.xlu0 %3068
        %3070 = vset.pattern.permute.xlu0 3
        %3071 = vperm.xlu0 %3070, %v259
        %v3072 = vpop.permute.xlu0 %3071
        %3073 = vset.pattern.permute.xlu0 3
        %3074 = vperm.xlu0 %3073, %v260
        %v3075 = vpop.permute.xlu0 %3074
        %3076 = vset.pattern.permute.xlu0 3
        %3077 = vperm.xlu0 %3076, %v261
        %v3078 = vpop.permute.xlu0 %3077
        %3079 = vset.pattern.permute.xlu0 3
        %3080 = vperm.xlu0 %3079, %v262
        %v3081 = vpop.permute.xlu0 %3080
        %3082 = vset.pattern.permute.xlu0 3
        %3083 = vperm.xlu0 %3082, %v263
        %v3084 = vpop.permute.xlu0 %3083
        %vm3085 = vcmp.eq.s32.totalorder %v2895, %v265
        %vm3086 = vcmp.eq.s32.totalorder %v2895, %v266
        %vm3087 = vcmp.eq.s32.totalorder %v2895, %v267
        %vm3088 = vcmp.eq.s32.totalorder %v2895, %v268
        %vm3089 = vcmp.eq.s32.totalorder %v2898, %v265
        %vm3090 = vcmp.eq.s32.totalorder %v2898, %v266
        %vm3091 = vcmp.eq.s32.totalorder %v2898, %v267
        %vm3092 = vcmp.eq.s32.totalorder %v2898, %v268
        %vm3093 = vcmp.eq.s32.totalorder %v2901, %v265
        %vm3094 = vcmp.eq.s32.totalorder %v2901, %v266
        %vm3095 = vcmp.eq.s32.totalorder %v2901, %v267
        %vm3096 = vcmp.eq.s32.totalorder %v2901, %v268
        %vm3097 = vcmp.eq.s32.totalorder %v2904, %v265
        %vm3098 = vcmp.eq.s32.totalorder %v2904, %v266
        %vm3099 = vcmp.eq.s32.totalorder %v2904, %v267
        %vm3100 = vcmp.eq.s32.totalorder %v2904, %v268
        %vm3101 = vcmp.eq.s32.totalorder %v2907, %v265
        %vm3102 = vcmp.eq.s32.totalorder %v2907, %v266
        %vm3103 = vcmp.eq.s32.totalorder %v2907, %v267
        %vm3104 = vcmp.eq.s32.totalorder %v2907, %v268
        %vm3105 = vcmp.eq.s32.totalorder %v2910, %v265
        %vm3106 = vcmp.eq.s32.totalorder %v2910, %v266
        %vm3107 = vcmp.eq.s32.totalorder %v2910, %v267
        %vm3108 = vcmp.eq.s32.totalorder %v2910, %v268
        %vm3109 = vcmp.eq.s32.totalorder %v2913, %v265
        %vm3110 = vcmp.eq.s32.totalorder %v2913, %v266
        %vm3111 = vcmp.eq.s32.totalorder %v2913, %v267
        %vm3112 = vcmp.eq.s32.totalorder %v2913, %v268
        %vm3113 = vcmp.eq.s32.totalorder %v2916, %v265
        %vm3114 = vcmp.eq.s32.totalorder %v2916, %v266
        %vm3115 = vcmp.eq.s32.totalorder %v2916, %v267
        %vm3116 = vcmp.eq.s32.totalorder %v2916, %v268
        %vm3117 = vcmp.eq.s32.totalorder %v2919, %v265
        %vm3118 = vcmp.eq.s32.totalorder %v2919, %v266
        %vm3119 = vcmp.eq.s32.totalorder %v2919, %v267
        %vm3120 = vcmp.eq.s32.totalorder %v2919, %v268
        %vm3121 = vcmp.eq.s32.totalorder %v2922, %v265
        %vm3122 = vcmp.eq.s32.totalorder %v2922, %v266
        %vm3123 = vcmp.eq.s32.totalorder %v2922, %v267
        %vm3124 = vcmp.eq.s32.totalorder %v2922, %v268
        %vm3125 = vcmp.eq.s32.totalorder %v2925, %v265
        %vm3126 = vcmp.eq.s32.totalorder %v2925, %v266
        %vm3127 = vcmp.eq.s32.totalorder %v2925, %v267
        %vm3128 = vcmp.eq.s32.totalorder %v2925, %v268
        %vm3129 = vcmp.eq.s32.totalorder %v2928, %v265
        %vm3130 = vcmp.eq.s32.totalorder %v2928, %v266
        %vm3131 = vcmp.eq.s32.totalorder %v2928, %v267
        %vm3132 = vcmp.eq.s32.totalorder %v2928, %v268
        %vm3133 = vcmp.eq.s32.totalorder %v2931, %v265
        %vm3134 = vcmp.eq.s32.totalorder %v2931, %v266
        %vm3135 = vcmp.eq.s32.totalorder %v2931, %v267
        %vm3136 = vcmp.eq.s32.totalorder %v2931, %v268
        %vm3137 = vcmp.eq.s32.totalorder %v2934, %v265
        %vm3138 = vcmp.eq.s32.totalorder %v2934, %v266
        %vm3139 = vcmp.eq.s32.totalorder %v2934, %v267
        %vm3140 = vcmp.eq.s32.totalorder %v2934, %v268
        %vm3141 = vcmp.eq.s32.totalorder %v2937, %v265
        %vm3142 = vcmp.eq.s32.totalorder %v2937, %v266
        %vm3143 = vcmp.eq.s32.totalorder %v2937, %v267
        %vm3144 = vcmp.eq.s32.totalorder %v2937, %v268
        %vm3145 = vcmp.eq.s32.totalorder %v2940, %v265
        %vm3146 = vcmp.eq.s32.totalorder %v2940, %v266
        %vm3147 = vcmp.eq.s32.totalorder %v2940, %v267
        %vm3148 = vcmp.eq.s32.totalorder %v2940, %v268
        %vm3149 = vcmp.eq.s32.totalorder %v2943, %v265
        %vm3150 = vcmp.eq.s32.totalorder %v2943, %v266
        %vm3151 = vcmp.eq.s32.totalorder %v2943, %v267
        %vm3152 = vcmp.eq.s32.totalorder %v2943, %v268
        %vm3153 = vcmp.eq.s32.totalorder %v2946, %v265
        %vm3154 = vcmp.eq.s32.totalorder %v2946, %v266
        %vm3155 = vcmp.eq.s32.totalorder %v2946, %v267
        %vm3156 = vcmp.eq.s32.totalorder %v2946, %v268
        %vm3157 = vcmp.eq.s32.totalorder %v2949, %v265
        %vm3158 = vcmp.eq.s32.totalorder %v2949, %v266
        %vm3159 = vcmp.eq.s32.totalorder %v2949, %v267
        %vm3160 = vcmp.eq.s32.totalorder %v2949, %v268
        %vm3161 = vcmp.eq.s32.totalorder %v2952, %v265
        %vm3162 = vcmp.eq.s32.totalorder %v2952, %v266
        %vm3163 = vcmp.eq.s32.totalorder %v2952, %v267
        %vm3164 = vcmp.eq.s32.totalorder %v2952, %v268
        %vm3165 = vcmp.eq.s32.totalorder %v2955, %v265
        %vm3166 = vcmp.eq.s32.totalorder %v2955, %v266
        %vm3167 = vcmp.eq.s32.totalorder %v2955, %v267
        %vm3168 = vcmp.eq.s32.totalorder %v2955, %v268
        %vm3169 = vcmp.eq.s32.totalorder %v2958, %v265
        %vm3170 = vcmp.eq.s32.totalorder %v2958, %v266
        %vm3171 = vcmp.eq.s32.totalorder %v2958, %v267
        %vm3172 = vcmp.eq.s32.totalorder %v2958, %v268
        %vm3173 = vcmp.eq.s32.totalorder %v2961, %v265
        %vm3174 = vcmp.eq.s32.totalorder %v2961, %v266
        %vm3175 = vcmp.eq.s32.totalorder %v2961, %v267
        %vm3176 = vcmp.eq.s32.totalorder %v2961, %v268
        %vm3177 = vcmp.eq.s32.totalorder %v2964, %v265
        %vm3178 = vcmp.eq.s32.totalorder %v2964, %v266
        %vm3179 = vcmp.eq.s32.totalorder %v2964, %v267
        %vm3180 = vcmp.eq.s32.totalorder %v2964, %v268
        %vm3181 = vcmp.eq.s32.totalorder %v2967, %v265
        %vm3182 = vcmp.eq.s32.totalorder %v2967, %v266
        %vm3183 = vcmp.eq.s32.totalorder %v2967, %v267
        %vm3184 = vcmp.eq.s32.totalorder %v2967, %v268
        %vm3185 = vcmp.eq.s32.totalorder %v2970, %v265
        %vm3186 = vcmp.eq.s32.totalorder %v2970, %v266
        %vm3187 = vcmp.eq.s32.totalorder %v2970, %v267
        %vm3188 = vcmp.eq.s32.totalorder %v2970, %v268
        %vm3189 = vcmp.eq.s32.totalorder %v2973, %v265
        %vm3190 = vcmp.eq.s32.totalorder %v2973, %v266
        %vm3191 = vcmp.eq.s32.totalorder %v2973, %v267
        %vm3192 = vcmp.eq.s32.totalorder %v2973, %v268
        %vm3193 = vcmp.eq.s32.totalorder %v2976, %v265
        %vm3194 = vcmp.eq.s32.totalorder %v2976, %v266
        %vm3195 = vcmp.eq.s32.totalorder %v2976, %v267
        %vm3196 = vcmp.eq.s32.totalorder %v2976, %v268
        %vm3197 = vcmp.eq.s32.totalorder %v2979, %v265
        %vm3198 = vcmp.eq.s32.totalorder %v2979, %v266
        %vm3199 = vcmp.eq.s32.totalorder %v2979, %v267
        %vm3200 = vcmp.eq.s32.totalorder %v2979, %v268
        %vm3201 = vcmp.eq.s32.totalorder %v2982, %v265
        %vm3202 = vcmp.eq.s32.totalorder %v2982, %v266
        %vm3203 = vcmp.eq.s32.totalorder %v2982, %v267
        %vm3204 = vcmp.eq.s32.totalorder %v2982, %v268
        %vm3205 = vcmp.eq.s32.totalorder %v2985, %v265
        %vm3206 = vcmp.eq.s32.totalorder %v2985, %v266
        %vm3207 = vcmp.eq.s32.totalorder %v2985, %v267
        %vm3208 = vcmp.eq.s32.totalorder %v2985, %v268
        %vm3209 = vcmp.eq.s32.totalorder %v2988, %v265
        %vm3210 = vcmp.eq.s32.totalorder %v2988, %v266
        %vm3211 = vcmp.eq.s32.totalorder %v2988, %v267
        %vm3212 = vcmp.eq.s32.totalorder %v2988, %v268
        %vm3213 = vcmp.eq.s32.totalorder %v2991, %v265
        %vm3214 = vcmp.eq.s32.totalorder %v2991, %v266
        %vm3215 = vcmp.eq.s32.totalorder %v2991, %v267
        %vm3216 = vcmp.eq.s32.totalorder %v2991, %v268
        %vm3217 = vcmp.eq.s32.totalorder %v2994, %v265
        %vm3218 = vcmp.eq.s32.totalorder %v2994, %v266
        %vm3219 = vcmp.eq.s32.totalorder %v2994, %v267
        %vm3220 = vcmp.eq.s32.totalorder %v2994, %v268
        %vm3221 = vcmp.eq.s32.totalorder %v2997, %v265
        %vm3222 = vcmp.eq.s32.totalorder %v2997, %v266
        %vm3223 = vcmp.eq.s32.totalorder %v2997, %v267
        %vm3224 = vcmp.eq.s32.totalorder %v2997, %v268
        %vm3225 = vcmp.eq.s32.totalorder %v3000, %v265
        %vm3226 = vcmp.eq.s32.totalorder %v3000, %v266
        %vm3227 = vcmp.eq.s32.totalorder %v3000, %v267
        %vm3228 = vcmp.eq.s32.totalorder %v3000, %v268
        %vm3229 = vcmp.eq.s32.totalorder %v3003, %v265
        %vm3230 = vcmp.eq.s32.totalorder %v3003, %v266
        %vm3231 = vcmp.eq.s32.totalorder %v3003, %v267
        %vm3232 = vcmp.eq.s32.totalorder %v3003, %v268
        %vm3233 = vcmp.eq.s32.totalorder %v3006, %v265
        %vm3234 = vcmp.eq.s32.totalorder %v3006, %v266
        %vm3235 = vcmp.eq.s32.totalorder %v3006, %v267
        %vm3236 = vcmp.eq.s32.totalorder %v3006, %v268
        %vm3237 = vcmp.eq.s32.totalorder %v3009, %v265
        %vm3238 = vcmp.eq.s32.totalorder %v3009, %v266
        %vm3239 = vcmp.eq.s32.totalorder %v3009, %v267
        %vm3240 = vcmp.eq.s32.totalorder %v3009, %v268
        %vm3241 = vcmp.eq.s32.totalorder %v3012, %v265
        %vm3242 = vcmp.eq.s32.totalorder %v3012, %v266
        %vm3243 = vcmp.eq.s32.totalorder %v3012, %v267
        %vm3244 = vcmp.eq.s32.totalorder %v3012, %v268
        %vm3245 = vcmp.eq.s32.totalorder %v3015, %v265
        %vm3246 = vcmp.eq.s32.totalorder %v3015, %v266
        %vm3247 = vcmp.eq.s32.totalorder %v3015, %v267
        %vm3248 = vcmp.eq.s32.totalorder %v3015, %v268
        %vm3249 = vcmp.eq.s32.totalorder %v3018, %v265
        %vm3250 = vcmp.eq.s32.totalorder %v3018, %v266
        %vm3251 = vcmp.eq.s32.totalorder %v3018, %v267
        %vm3252 = vcmp.eq.s32.totalorder %v3018, %v268
        %vm3253 = vcmp.eq.s32.totalorder %v3021, %v265
        %vm3254 = vcmp.eq.s32.totalorder %v3021, %v266
        %vm3255 = vcmp.eq.s32.totalorder %v3021, %v267
        %vm3256 = vcmp.eq.s32.totalorder %v3021, %v268
        %vm3257 = vcmp.eq.s32.totalorder %v3024, %v265
        %vm3258 = vcmp.eq.s32.totalorder %v3024, %v266
        %vm3259 = vcmp.eq.s32.totalorder %v3024, %v267
        %vm3260 = vcmp.eq.s32.totalorder %v3024, %v268
        %vm3261 = vcmp.eq.s32.totalorder %v3027, %v265
        %vm3262 = vcmp.eq.s32.totalorder %v3027, %v266
        %vm3263 = vcmp.eq.s32.totalorder %v3027, %v267
        %vm3264 = vcmp.eq.s32.totalorder %v3027, %v268
        %vm3265 = vcmp.eq.s32.totalorder %v3030, %v265
        %vm3266 = vcmp.eq.s32.totalorder %v3030, %v266
        %vm3267 = vcmp.eq.s32.totalorder %v3030, %v267
        %vm3268 = vcmp.eq.s32.totalorder %v3030, %v268
        %vm3269 = vcmp.eq.s32.totalorder %v3033, %v265
        %vm3270 = vcmp.eq.s32.totalorder %v3033, %v266
        %vm3271 = vcmp.eq.s32.totalorder %v3033, %v267
        %vm3272 = vcmp.eq.s32.totalorder %v3033, %v268
        %vm3273 = vcmp.eq.s32.totalorder %v3036, %v265
        %vm3274 = vcmp.eq.s32.totalorder %v3036, %v266
        %vm3275 = vcmp.eq.s32.totalorder %v3036, %v267
        %vm3276 = vcmp.eq.s32.totalorder %v3036, %v268
        %vm3277 = vcmp.eq.s32.totalorder %v3039, %v265
        %vm3278 = vcmp.eq.s32.totalorder %v3039, %v266
        %vm3279 = vcmp.eq.s32.totalorder %v3039, %v267
        %vm3280 = vcmp.eq.s32.totalorder %v3039, %v268
        %vm3281 = vcmp.eq.s32.totalorder %v3042, %v265
        %vm3282 = vcmp.eq.s32.totalorder %v3042, %v266
        %vm3283 = vcmp.eq.s32.totalorder %v3042, %v267
        %vm3284 = vcmp.eq.s32.totalorder %v3042, %v268
        %vm3285 = vcmp.eq.s32.totalorder %v3045, %v265
        %vm3286 = vcmp.eq.s32.totalorder %v3045, %v266
        %vm3287 = vcmp.eq.s32.totalorder %v3045, %v267
        %vm3288 = vcmp.eq.s32.totalorder %v3045, %v268
        %vm3289 = vcmp.eq.s32.totalorder %v3048, %v265
        %vm3290 = vcmp.eq.s32.totalorder %v3048, %v266
        %vm3291 = vcmp.eq.s32.totalorder %v3048, %v267
        %vm3292 = vcmp.eq.s32.totalorder %v3048, %v268
        %vm3293 = vcmp.eq.s32.totalorder %v3051, %v265
        %vm3294 = vcmp.eq.s32.totalorder %v3051, %v266
        %vm3295 = vcmp.eq.s32.totalorder %v3051, %v267
        %vm3296 = vcmp.eq.s32.totalorder %v3051, %v268
        %vm3297 = vcmp.eq.s32.totalorder %v3054, %v265
        %vm3298 = vcmp.eq.s32.totalorder %v3054, %v266
        %vm3299 = vcmp.eq.s32.totalorder %v3054, %v267
        %vm3300 = vcmp.eq.s32.totalorder %v3054, %v268
        %vm3301 = vcmp.eq.s32.totalorder %v3057, %v265
        %vm3302 = vcmp.eq.s32.totalorder %v3057, %v266
        %vm3303 = vcmp.eq.s32.totalorder %v3057, %v267
        %vm3304 = vcmp.eq.s32.totalorder %v3057, %v268
        %vm3305 = vcmp.eq.s32.totalorder %v3060, %v265
        %vm3306 = vcmp.eq.s32.totalorder %v3060, %v266
        %vm3307 = vcmp.eq.s32.totalorder %v3060, %v267
        %vm3308 = vcmp.eq.s32.totalorder %v3060, %v268
        %vm3309 = vcmp.eq.s32.totalorder %v3063, %v265
        %vm3310 = vcmp.eq.s32.totalorder %v3063, %v266
        %vm3311 = vcmp.eq.s32.totalorder %v3063, %v267
        %vm3312 = vcmp.eq.s32.totalorder %v3063, %v268
        %vm3313 = vcmp.eq.s32.totalorder %v3066, %v265
        %vm3314 = vcmp.eq.s32.totalorder %v3066, %v266
        %vm3315 = vcmp.eq.s32.totalorder %v3066, %v267
        %vm3316 = vcmp.eq.s32.totalorder %v3066, %v268
        %vm3317 = vcmp.eq.s32.totalorder %v3069, %v265
        %vm3318 = vcmp.eq.s32.totalorder %v3069, %v266
        %vm3319 = vcmp.eq.s32.totalorder %v3069, %v267
        %vm3320 = vcmp.eq.s32.totalorder %v3069, %v268
        %vm3321 = vcmp.eq.s32.totalorder %v3072, %v265
        %vm3322 = vcmp.eq.s32.totalorder %v3072, %v266
        %vm3323 = vcmp.eq.s32.totalorder %v3072, %v267
        %vm3324 = vcmp.eq.s32.totalorder %v3072, %v268
        %vm3325 = vcmp.eq.s32.totalorder %v3075, %v265
        %vm3326 = vcmp.eq.s32.totalorder %v3075, %v266
        %vm3327 = vcmp.eq.s32.totalorder %v3075, %v267
        %vm3328 = vcmp.eq.s32.totalorder %v3075, %v268
        %vm3329 = vcmp.eq.s32.totalorder %v3078, %v265
        %vm3330 = vcmp.eq.s32.totalorder %v3078, %v266
        %vm3331 = vcmp.eq.s32.totalorder %v3078, %v267
        %vm3332 = vcmp.eq.s32.totalorder %v3078, %v268
        %vm3333 = vcmp.eq.s32.totalorder %v3081, %v265
        %vm3334 = vcmp.eq.s32.totalorder %v3081, %v266
        %vm3335 = vcmp.eq.s32.totalorder %v3081, %v267
        %vm3336 = vcmp.eq.s32.totalorder %v3081, %v268
        %vm3337 = vcmp.eq.s32.totalorder %v3084, %v265
        %vm3338 = vcmp.eq.s32.totalorder %v3084, %v266
        %vm3339 = vcmp.eq.s32.totalorder %v3084, %v267
        %vm3340 = vcmp.eq.s32.totalorder %v3084, %v268
        %v3341 = vsel %vm3085, 1, 0
        %v3342 = vsel %vm3086, 1, 0
        %v3343 = vsel %vm3087, 1, 0
        %v3344 = vsel %vm3088, 1, 0
        %v3345 = vsel %vm3089, 1, 0
        %v3346 = vsel %vm3090, 1, 0
        %v3347 = vsel %vm3091, 1, 0
        %v3348 = vsel %vm3092, 1, 0
        %v3349 = vsel %vm3093, 1, 0
        %v3350 = vsel %vm3094, 1, 0
        %v3351 = vsel %vm3095, 1, 0
        %v3352 = vsel %vm3096, 1, 0
        %v3353 = vsel %vm3097, 1, 0
        %v3354 = vsel %vm3098, 1, 0
        %v3355 = vsel %vm3099, 1, 0
        %v3356 = vsel %vm3100, 1, 0
        %v3357 = vsel %vm3101, 1, 0
        %v3358 = vsel %vm3102, 1, 0
        %v3359 = vsel %vm3103, 1, 0
        %v3360 = vsel %vm3104, 1, 0
        %v3361 = vsel %vm3105, 1, 0
        %v3362 = vsel %vm3106, 1, 0
        %v3363 = vsel %vm3107, 1, 0
        %v3364 = vsel %vm3108, 1, 0
        %v3365 = vsel %vm3109, 1, 0
        %v3366 = vsel %vm3110, 1, 0
        %v3367 = vsel %vm3111, 1, 0
        %v3368 = vsel %vm3112, 1, 0
        %v3369 = vsel %vm3113, 1, 0
        %v3370 = vsel %vm3114, 1, 0
        %v3371 = vsel %vm3115, 1, 0
        %v3372 = vsel %vm3116, 1, 0
        %v3373 = vsel %vm3117, 1, 0
        %v3374 = vsel %vm3118, 1, 0
        %v3375 = vsel %vm3119, 1, 0
        %v3376 = vsel %vm3120, 1, 0
        %v3377 = vsel %vm3121, 1, 0
        %v3378 = vsel %vm3122, 1, 0
        %v3379 = vsel %vm3123, 1, 0
        %v3380 = vsel %vm3124, 1, 0
        %v3381 = vsel %vm3125, 1, 0
        %v3382 = vsel %vm3126, 1, 0
        %v3383 = vsel %vm3127, 1, 0
        %v3384 = vsel %vm3128, 1, 0
        %v3385 = vsel %vm3129, 1, 0
        %v3386 = vsel %vm3130, 1, 0
        %v3387 = vsel %vm3131, 1, 0
        %v3388 = vsel %vm3132, 1, 0
        %v3389 = vsel %vm3133, 1, 0
        %v3390 = vsel %vm3134, 1, 0
        %v3391 = vsel %vm3135, 1, 0
        %v3392 = vsel %vm3136, 1, 0
        %v3393 = vsel %vm3137, 1, 0
        %v3394 = vsel %vm3138, 1, 0
        %v3395 = vsel %vm3139, 1, 0
        %v3396 = vsel %vm3140, 1, 0
        %v3397 = vsel %vm3141, 1, 0
        %v3398 = vsel %vm3142, 1, 0
        %v3399 = vsel %vm3143, 1, 0
        %v3400 = vsel %vm3144, 1, 0
        %v3401 = vsel %vm3145, 1, 0
        %v3402 = vsel %vm3146, 1, 0
        %v3403 = vsel %vm3147, 1, 0
        %v3404 = vsel %vm3148, 1, 0
        %v3405 = vsel %vm3149, 1, 0
        %v3406 = vsel %vm3150, 1, 0
        %v3407 = vsel %vm3151, 1, 0
        %v3408 = vsel %vm3152, 1, 0
        %v3409 = vsel %vm3153, 1, 0
        %v3410 = vsel %vm3154, 1, 0
        %v3411 = vsel %vm3155, 1, 0
        %v3412 = vsel %vm3156, 1, 0
        %v3413 = vsel %vm3157, 1, 0
        %v3414 = vsel %vm3158, 1, 0
        %v3415 = vsel %vm3159, 1, 0
        %v3416 = vsel %vm3160, 1, 0
        %v3417 = vsel %vm3161, 1, 0
        %v3418 = vsel %vm3162, 1, 0
        %v3419 = vsel %vm3163, 1, 0
        %v3420 = vsel %vm3164, 1, 0
        %v3421 = vsel %vm3165, 1, 0
        %v3422 = vsel %vm3166, 1, 0
        %v3423 = vsel %vm3167, 1, 0
        %v3424 = vsel %vm3168, 1, 0
        %v3425 = vsel %vm3169, 1, 0
        %v3426 = vsel %vm3170, 1, 0
        %v3427 = vsel %vm3171, 1, 0
        %v3428 = vsel %vm3172, 1, 0
        %v3429 = vsel %vm3173, 1, 0
        %v3430 = vsel %vm3174, 1, 0
        %v3431 = vsel %vm3175, 1, 0
        %v3432 = vsel %vm3176, 1, 0
        %v3433 = vsel %vm3177, 1, 0
        %v3434 = vsel %vm3178, 1, 0
        %v3435 = vsel %vm3179, 1, 0
        %v3436 = vsel %vm3180, 1, 0
        %v3437 = vsel %vm3181, 1, 0
        %v3438 = vsel %vm3182, 1, 0
        %v3439 = vsel %vm3183, 1, 0
        %v3440 = vsel %vm3184, 1, 0
        %v3441 = vsel %vm3185, 1, 0
        %v3442 = vsel %vm3186, 1, 0
        %v3443 = vsel %vm3187, 1, 0
        %v3444 = vsel %vm3188, 1, 0
        %v3445 = vsel %vm3189, 1, 0
        %v3446 = vsel %vm3190, 1, 0
        %v3447 = vsel %vm3191, 1, 0
        %v3448 = vsel %vm3192, 1, 0
        %v3449 = vsel %vm3193, 1, 0
        %v3450 = vsel %vm3194, 1, 0
        %v3451 = vsel %vm3195, 1, 0
        %v3452 = vsel %vm3196, 1, 0
        %v3453 = vsel %vm3197, 1, 0
        %v3454 = vsel %vm3198, 1, 0
        %v3455 = vsel %vm3199, 1, 0
        %v3456 = vsel %vm3200, 1, 0
        %v3457 = vsel %vm3201, 1, 0
        %v3458 = vsel %vm3202, 1, 0
        %v3459 = vsel %vm3203, 1, 0
        %v3460 = vsel %vm3204, 1, 0
        %v3461 = vsel %vm3205, 1, 0
        %v3462 = vsel %vm3206, 1, 0
        %v3463 = vsel %vm3207, 1, 0
        %v3464 = vsel %vm3208, 1, 0
        %v3465 = vsel %vm3209, 1, 0
        %v3466 = vsel %vm3210, 1, 0
        %v3467 = vsel %vm3211, 1, 0
        %v3468 = vsel %vm3212, 1, 0
        %v3469 = vsel %vm3213, 1, 0
        %v3470 = vsel %vm3214, 1, 0
        %v3471 = vsel %vm3215, 1, 0
        %v3472 = vsel %vm3216, 1, 0
        %v3473 = vsel %vm3217, 1, 0
        %v3474 = vsel %vm3218, 1, 0
        %v3475 = vsel %vm3219, 1, 0
        %v3476 = vsel %vm3220, 1, 0
        %v3477 = vsel %vm3221, 1, 0
        %v3478 = vsel %vm3222, 1, 0
        %v3479 = vsel %vm3223, 1, 0
        %v3480 = vsel %vm3224, 1, 0
        %v3481 = vsel %vm3225, 1, 0
        %v3482 = vsel %vm3226, 1, 0
        %v3483 = vsel %vm3227, 1, 0
        %v3484 = vsel %vm3228, 1, 0
        %v3485 = vsel %vm3229, 1, 0
        %v3486 = vsel %vm3230, 1, 0
        %v3487 = vsel %vm3231, 1, 0
        %v3488 = vsel %vm3232, 1, 0
        %v3489 = vsel %vm3233, 1, 0
        %v3490 = vsel %vm3234, 1, 0
        %v3491 = vsel %vm3235, 1, 0
        %v3492 = vsel %vm3236, 1, 0
        %v3493 = vsel %vm3237, 1, 0
        %v3494 = vsel %vm3238, 1, 0
        %v3495 = vsel %vm3239, 1, 0
        %v3496 = vsel %vm3240, 1, 0
        %v3497 = vsel %vm3241, 1, 0
        %v3498 = vsel %vm3242, 1, 0
        %v3499 = vsel %vm3243, 1, 0
        %v3500 = vsel %vm3244, 1, 0
        %v3501 = vsel %vm3245, 1, 0
        %v3502 = vsel %vm3246, 1, 0
        %v3503 = vsel %vm3247, 1, 0
        %v3504 = vsel %vm3248, 1, 0
        %v3505 = vsel %vm3249, 1, 0
        %v3506 = vsel %vm3250, 1, 0
        %v3507 = vsel %vm3251, 1, 0
        %v3508 = vsel %vm3252, 1, 0
        %v3509 = vsel %vm3253, 1, 0
        %v3510 = vsel %vm3254, 1, 0
        %v3511 = vsel %vm3255, 1, 0
        %v3512 = vsel %vm3256, 1, 0
        %v3513 = vsel %vm3257, 1, 0
        %v3514 = vsel %vm3258, 1, 0
        %v3515 = vsel %vm3259, 1, 0
        %v3516 = vsel %vm3260, 1, 0
        %v3517 = vsel %vm3261, 1, 0
        %v3518 = vsel %vm3262, 1, 0
        %v3519 = vsel %vm3263, 1, 0
        %v3520 = vsel %vm3264, 1, 0
        %v3521 = vsel %vm3265, 1, 0
        %v3522 = vsel %vm3266, 1, 0
        %v3523 = vsel %vm3267, 1, 0
        %v3524 = vsel %vm3268, 1, 0
        %v3525 = vsel %vm3269, 1, 0
        %v3526 = vsel %vm3270, 1, 0
        %v3527 = vsel %vm3271, 1, 0
        %v3528 = vsel %vm3272, 1, 0
        %v3529 = vsel %vm3273, 1, 0
        %v3530 = vsel %vm3274, 1, 0
        %v3531 = vsel %vm3275, 1, 0
        %v3532 = vsel %vm3276, 1, 0
        %v3533 = vsel %vm3277, 1, 0
        %v3534 = vsel %vm3278, 1, 0
        %v3535 = vsel %vm3279, 1, 0
        %v3536 = vsel %vm3280, 1, 0
        %v3537 = vsel %vm3281, 1, 0
        %v3538 = vsel %vm3282, 1, 0
        %v3539 = vsel %vm3283, 1, 0
        %v3540 = vsel %vm3284, 1, 0
        %v3541 = vsel %vm3285, 1, 0
        %v3542 = vsel %vm3286, 1, 0
        %v3543 = vsel %vm3287, 1, 0
        %v3544 = vsel %vm3288, 1, 0
        %v3545 = vsel %vm3289, 1, 0
        %v3546 = vsel %vm3290, 1, 0
        %v3547 = vsel %vm3291, 1, 0
        %v3548 = vsel %vm3292, 1, 0
        %v3549 = vsel %vm3293, 1, 0
        %v3550 = vsel %vm3294, 1, 0
        %v3551 = vsel %vm3295, 1, 0
        %v3552 = vsel %vm3296, 1, 0
        %v3553 = vsel %vm3297, 1, 0
        %v3554 = vsel %vm3298, 1, 0
        %v3555 = vsel %vm3299, 1, 0
        %v3556 = vsel %vm3300, 1, 0
        %v3557 = vsel %vm3301, 1, 0
        %v3558 = vsel %vm3302, 1, 0
        %v3559 = vsel %vm3303, 1, 0
        %v3560 = vsel %vm3304, 1, 0
        %v3561 = vsel %vm3305, 1, 0
        %v3562 = vsel %vm3306, 1, 0
        %v3563 = vsel %vm3307, 1, 0
        %v3564 = vsel %vm3308, 1, 0
        %v3565 = vsel %vm3309, 1, 0
        %v3566 = vsel %vm3310, 1, 0
        %v3567 = vsel %vm3311, 1, 0
        %v3568 = vsel %vm3312, 1, 0
        %v3569 = vsel %vm3313, 1, 0
        %v3570 = vsel %vm3314, 1, 0
        %v3571 = vsel %vm3315, 1, 0
        %v3572 = vsel %vm3316, 1, 0
        %v3573 = vsel %vm3317, 1, 0
        %v3574 = vsel %vm3318, 1, 0
        %v3575 = vsel %vm3319, 1, 0
        %v3576 = vsel %vm3320, 1, 0
        %v3577 = vsel %vm3321, 1, 0
        %v3578 = vsel %vm3322, 1, 0
        %v3579 = vsel %vm3323, 1, 0
        %v3580 = vsel %vm3324, 1, 0
        %v3581 = vsel %vm3325, 1, 0
        %v3582 = vsel %vm3326, 1, 0
        %v3583 = vsel %vm3327, 1, 0
        %v3584 = vsel %vm3328, 1, 0
        %v3585 = vsel %vm3329, 1, 0
        %v3586 = vsel %vm3330, 1, 0
        %v3587 = vsel %vm3331, 1, 0
        %v3588 = vsel %vm3332, 1, 0
        %v3589 = vsel %vm3333, 1, 0
        %v3590 = vsel %vm3334, 1, 0
        %v3591 = vsel %vm3335, 1, 0
        %v3592 = vsel %vm3336, 1, 0
        %v3593 = vsel %vm3337, 1, 0
        %v3594 = vsel %vm3338, 1, 0
        %v3595 = vsel %vm3339, 1, 0
        %v3596 = vsel %vm3340, 1, 0
        %v3597 = vadd.s32 %v2637, %v3341
        %v3598 = vadd.s32 %v2638, %v3342
        %v3599 = vadd.s32 %v2639, %v3343
        %v3600 = vadd.s32 %v2640, %v3344
        %v3601 = vadd.s32 %v2641, %v3345
        %v3602 = vadd.s32 %v2642, %v3346
        %v3603 = vadd.s32 %v2643, %v3347
        %v3604 = vadd.s32 %v2644, %v3348
        %v3605 = vadd.s32 %v2645, %v3349
        %v3606 = vadd.s32 %v2646, %v3350
        %v3607 = vadd.s32 %v2647, %v3351
        %v3608 = vadd.s32 %v2648, %v3352
        %v3609 = vadd.s32 %v2649, %v3353
        %v3610 = vadd.s32 %v2650, %v3354
        %v3611 = vadd.s32 %v2651, %v3355
        %v3612 = vadd.s32 %v2652, %v3356
        %v3613 = vadd.s32 %v2653, %v3357
        %v3614 = vadd.s32 %v2654, %v3358
        %v3615 = vadd.s32 %v2655, %v3359
        %v3616 = vadd.s32 %v2656, %v3360
        %v3617 = vadd.s32 %v2657, %v3361
        %v3618 = vadd.s32 %v2658, %v3362
        %v3619 = vadd.s32 %v2659, %v3363
        %v3620 = vadd.s32 %v2660, %v3364
        %v3621 = vadd.s32 %v2661, %v3365
        %v3622 = vadd.s32 %v2662, %v3366
        %v3623 = vadd.s32 %v2663, %v3367
        %v3624 = vadd.s32 %v2664, %v3368
        %v3625 = vadd.s32 %v2665, %v3369
        %v3626 = vadd.s32 %v2666, %v3370
        %v3627 = vadd.s32 %v2667, %v3371
        %v3628 = vadd.s32 %v2668, %v3372
        %v3629 = vadd.s32 %v2669, %v3373
        %v3630 = vadd.s32 %v2670, %v3374
        %v3631 = vadd.s32 %v2671, %v3375
        %v3632 = vadd.s32 %v2672, %v3376
        %v3633 = vadd.s32 %v2673, %v3377
        %v3634 = vadd.s32 %v2674, %v3378
        %v3635 = vadd.s32 %v2675, %v3379
        %v3636 = vadd.s32 %v2676, %v3380
        %v3637 = vadd.s32 %v2677, %v3381
        %v3638 = vadd.s32 %v2678, %v3382
        %v3639 = vadd.s32 %v2679, %v3383
        %v3640 = vadd.s32 %v2680, %v3384
        %v3641 = vadd.s32 %v2681, %v3385
        %v3642 = vadd.s32 %v2682, %v3386
        %v3643 = vadd.s32 %v2683, %v3387
        %v3644 = vadd.s32 %v2684, %v3388
        %v3645 = vadd.s32 %v2685, %v3389
        %v3646 = vadd.s32 %v2686, %v3390
        %v3647 = vadd.s32 %v2687, %v3391
        %v3648 = vadd.s32 %v2688, %v3392
        %v3649 = vadd.s32 %v2689, %v3393
        %v3650 = vadd.s32 %v2690, %v3394
        %v3651 = vadd.s32 %v2691, %v3395
        %v3652 = vadd.s32 %v2692, %v3396
        %v3653 = vadd.s32 %v2693, %v3397
        %v3654 = vadd.s32 %v2694, %v3398
        %v3655 = vadd.s32 %v2695, %v3399
        %v3656 = vadd.s32 %v2696, %v3400
        %v3657 = vadd.s32 %v2697, %v3401
        %v3658 = vadd.s32 %v2698, %v3402
        %v3659 = vadd.s32 %v2699, %v3403
        %v3660 = vadd.s32 %v2700, %v3404
        %v3661 = vadd.s32 %v2701, %v3405
        %v3662 = vadd.s32 %v2702, %v3406
        %v3663 = vadd.s32 %v2703, %v3407
        %v3664 = vadd.s32 %v2704, %v3408
        %v3665 = vadd.s32 %v2705, %v3409
        %v3666 = vadd.s32 %v2706, %v3410
        %v3667 = vadd.s32 %v2707, %v3411
        %v3668 = vadd.s32 %v2708, %v3412
        %v3669 = vadd.s32 %v2709, %v3413
        %v3670 = vadd.s32 %v2710, %v3414
        %v3671 = vadd.s32 %v2711, %v3415
        %v3672 = vadd.s32 %v2712, %v3416
        %v3673 = vadd.s32 %v2713, %v3417
        %v3674 = vadd.s32 %v2714, %v3418
        %v3675 = vadd.s32 %v2715, %v3419
        %v3676 = vadd.s32 %v2716, %v3420
        %v3677 = vadd.s32 %v2717, %v3421
        %v3678 = vadd.s32 %v2718, %v3422
        %v3679 = vadd.s32 %v2719, %v3423
        %v3680 = vadd.s32 %v2720, %v3424
        %v3681 = vadd.s32 %v2721, %v3425
        %v3682 = vadd.s32 %v2722, %v3426
        %v3683 = vadd.s32 %v2723, %v3427
        %v3684 = vadd.s32 %v2724, %v3428
        %v3685 = vadd.s32 %v2725, %v3429
        %v3686 = vadd.s32 %v2726, %v3430
        %v3687 = vadd.s32 %v2727, %v3431
        %v3688 = vadd.s32 %v2728, %v3432
        %v3689 = vadd.s32 %v2729, %v3433
        %v3690 = vadd.s32 %v2730, %v3434
        %v3691 = vadd.s32 %v2731, %v3435
        %v3692 = vadd.s32 %v2732, %v3436
        %v3693 = vadd.s32 %v2733, %v3437
        %v3694 = vadd.s32 %v2734, %v3438
        %v3695 = vadd.s32 %v2735, %v3439
        %v3696 = vadd.s32 %v2736, %v3440
        %v3697 = vadd.s32 %v2737, %v3441
        %v3698 = vadd.s32 %v2738, %v3442
        %v3699 = vadd.s32 %v2739, %v3443
        %v3700 = vadd.s32 %v2740, %v3444
        %v3701 = vadd.s32 %v2741, %v3445
        %v3702 = vadd.s32 %v2742, %v3446
        %v3703 = vadd.s32 %v2743, %v3447
        %v3704 = vadd.s32 %v2744, %v3448
        %v3705 = vadd.s32 %v2745, %v3449
        %v3706 = vadd.s32 %v2746, %v3450
        %v3707 = vadd.s32 %v2747, %v3451
        %v3708 = vadd.s32 %v2748, %v3452
        %v3709 = vadd.s32 %v2749, %v3453
        %v3710 = vadd.s32 %v2750, %v3454
        %v3711 = vadd.s32 %v2751, %v3455
        %v3712 = vadd.s32 %v2752, %v3456
        %v3713 = vadd.s32 %v2753, %v3457
        %v3714 = vadd.s32 %v2754, %v3458
        %v3715 = vadd.s32 %v2755, %v3459
        %v3716 = vadd.s32 %v2756, %v3460
        %v3717 = vadd.s32 %v2757, %v3461
        %v3718 = vadd.s32 %v2758, %v3462
        %v3719 = vadd.s32 %v2759, %v3463
        %v3720 = vadd.s32 %v2760, %v3464
        %v3721 = vadd.s32 %v2761, %v3465
        %v3722 = vadd.s32 %v2762, %v3466
        %v3723 = vadd.s32 %v2763, %v3467
        %v3724 = vadd.s32 %v2764, %v3468
        %v3725 = vadd.s32 %v2765, %v3469
        %v3726 = vadd.s32 %v2766, %v3470
        %v3727 = vadd.s32 %v2767, %v3471
        %v3728 = vadd.s32 %v2768, %v3472
        %v3729 = vadd.s32 %v2769, %v3473
        %v3730 = vadd.s32 %v2770, %v3474
        %v3731 = vadd.s32 %v2771, %v3475
        %v3732 = vadd.s32 %v2772, %v3476
        %v3733 = vadd.s32 %v2773, %v3477
        %v3734 = vadd.s32 %v2774, %v3478
        %v3735 = vadd.s32 %v2775, %v3479
        %v3736 = vadd.s32 %v2776, %v3480
        %v3737 = vadd.s32 %v2777, %v3481
        %v3738 = vadd.s32 %v2778, %v3482
        %v3739 = vadd.s32 %v2779, %v3483
        %v3740 = vadd.s32 %v2780, %v3484
        %v3741 = vadd.s32 %v2781, %v3485
        %v3742 = vadd.s32 %v2782, %v3486
        %v3743 = vadd.s32 %v2783, %v3487
        %v3744 = vadd.s32 %v2784, %v3488
        %v3745 = vadd.s32 %v2785, %v3489
        %v3746 = vadd.s32 %v2786, %v3490
        %v3747 = vadd.s32 %v2787, %v3491
        %v3748 = vadd.s32 %v2788, %v3492
        %v3749 = vadd.s32 %v2789, %v3493
        %v3750 = vadd.s32 %v2790, %v3494
        %v3751 = vadd.s32 %v2791, %v3495
        %v3752 = vadd.s32 %v2792, %v3496
        %v3753 = vadd.s32 %v2793, %v3497
        %v3754 = vadd.s32 %v2794, %v3498
        %v3755 = vadd.s32 %v2795, %v3499
        %v3756 = vadd.s32 %v2796, %v3500
        %v3757 = vadd.s32 %v2797, %v3501
        %v3758 = vadd.s32 %v2798, %v3502
        %v3759 = vadd.s32 %v2799, %v3503
        %v3760 = vadd.s32 %v2800, %v3504
        %v3761 = vadd.s32 %v2801, %v3505
        %v3762 = vadd.s32 %v2802, %v3506
        %v3763 = vadd.s32 %v2803, %v3507
        %v3764 = vadd.s32 %v2804, %v3508
        %v3765 = vadd.s32 %v2805, %v3509
        %v3766 = vadd.s32 %v2806, %v3510
        %v3767 = vadd.s32 %v2807, %v3511
        %v3768 = vadd.s32 %v2808, %v3512
        %v3769 = vadd.s32 %v2809, %v3513
        %v3770 = vadd.s32 %v2810, %v3514
        %v3771 = vadd.s32 %v2811, %v3515
        %v3772 = vadd.s32 %v2812, %v3516
        %v3773 = vadd.s32 %v2813, %v3517
        %v3774 = vadd.s32 %v2814, %v3518
        %v3775 = vadd.s32 %v2815, %v3519
        %v3776 = vadd.s32 %v2816, %v3520
        %v3777 = vadd.s32 %v2817, %v3521
        %v3778 = vadd.s32 %v2818, %v3522
        %v3779 = vadd.s32 %v2819, %v3523
        %v3780 = vadd.s32 %v2820, %v3524
        %v3781 = vadd.s32 %v2821, %v3525
        %v3782 = vadd.s32 %v2822, %v3526
        %v3783 = vadd.s32 %v2823, %v3527
        %v3784 = vadd.s32 %v2824, %v3528
        %v3785 = vadd.s32 %v2825, %v3529
        %v3786 = vadd.s32 %v2826, %v3530
        %v3787 = vadd.s32 %v2827, %v3531
        %v3788 = vadd.s32 %v2828, %v3532
        %v3789 = vadd.s32 %v2829, %v3533
        %v3790 = vadd.s32 %v2830, %v3534
        %v3791 = vadd.s32 %v2831, %v3535
        %v3792 = vadd.s32 %v2832, %v3536
        %v3793 = vadd.s32 %v2833, %v3537
        %v3794 = vadd.s32 %v2834, %v3538
        %v3795 = vadd.s32 %v2835, %v3539
        %v3796 = vadd.s32 %v2836, %v3540
        %v3797 = vadd.s32 %v2837, %v3541
        %v3798 = vadd.s32 %v2838, %v3542
        %v3799 = vadd.s32 %v2839, %v3543
        %v3800 = vadd.s32 %v2840, %v3544
        %v3801 = vadd.s32 %v2841, %v3545
        %v3802 = vadd.s32 %v2842, %v3546
        %v3803 = vadd.s32 %v2843, %v3547
        %v3804 = vadd.s32 %v2844, %v3548
        %v3805 = vadd.s32 %v2845, %v3549
        %v3806 = vadd.s32 %v2846, %v3550
        %v3807 = vadd.s32 %v2847, %v3551
        %v3808 = vadd.s32 %v2848, %v3552
        %v3809 = vadd.s32 %v2849, %v3553
        %v3810 = vadd.s32 %v2850, %v3554
        %v3811 = vadd.s32 %v2851, %v3555
        %v3812 = vadd.s32 %v2852, %v3556
        %v3813 = vadd.s32 %v2853, %v3557
        %v3814 = vadd.s32 %v2854, %v3558
        %v3815 = vadd.s32 %v2855, %v3559
        %v3816 = vadd.s32 %v2856, %v3560
        %v3817 = vadd.s32 %v2857, %v3561
        %v3818 = vadd.s32 %v2858, %v3562
        %v3819 = vadd.s32 %v2859, %v3563
        %v3820 = vadd.s32 %v2860, %v3564
        %v3821 = vadd.s32 %v2861, %v3565
        %v3822 = vadd.s32 %v2862, %v3566
        %v3823 = vadd.s32 %v2863, %v3567
        %v3824 = vadd.s32 %v2864, %v3568
        %v3825 = vadd.s32 %v2865, %v3569
        %v3826 = vadd.s32 %v2866, %v3570
        %v3827 = vadd.s32 %v2867, %v3571
        %v3828 = vadd.s32 %v2868, %v3572
        %v3829 = vadd.s32 %v2869, %v3573
        %v3830 = vadd.s32 %v2870, %v3574
        %v3831 = vadd.s32 %v2871, %v3575
        %v3832 = vadd.s32 %v2872, %v3576
        %v3833 = vadd.s32 %v2873, %v3577
        %v3834 = vadd.s32 %v2874, %v3578
        %v3835 = vadd.s32 %v2875, %v3579
        %v3836 = vadd.s32 %v2876, %v3580
        %v3837 = vadd.s32 %v2877, %v3581
        %v3838 = vadd.s32 %v2878, %v3582
        %v3839 = vadd.s32 %v2879, %v3583
        %v3840 = vadd.s32 %v2880, %v3584
        %v3841 = vadd.s32 %v2881, %v3585
        %v3842 = vadd.s32 %v2882, %v3586
        %v3843 = vadd.s32 %v2883, %v3587
        %v3844 = vadd.s32 %v2884, %v3588
        %v3845 = vadd.s32 %v2885, %v3589
        %v3846 = vadd.s32 %v2886, %v3590
        %v3847 = vadd.s32 %v2887, %v3591
        %v3848 = vadd.s32 %v2888, %v3592
        %v3849 = vadd.s32 %v2889, %v3593
        %v3850 = vadd.s32 %v2890, %v3594
        %v3851 = vadd.s32 %v2891, %v3595
        %v3852 = vadd.s32 %v2892, %v3596
        %v3853 = vcvt.s32.f32 %v3597
        %v3854 = vcvt.s32.f32 %v3598
        %v3855 = vcvt.s32.f32 %v3599
        %v3856 = vcvt.s32.f32 %v3600
        %v3857 = vcvt.s32.f32 %v3601
        %v3858 = vcvt.s32.f32 %v3602
        %v3859 = vcvt.s32.f32 %v3603
        %v3860 = vcvt.s32.f32 %v3604
        %v3861 = vcvt.s32.f32 %v3605
        %v3862 = vcvt.s32.f32 %v3606
        %v3863 = vcvt.s32.f32 %v3607
        %v3864 = vcvt.s32.f32 %v3608
        %v3865 = vcvt.s32.f32 %v3609
        %v3866 = vcvt.s32.f32 %v3610
        %v3867 = vcvt.s32.f32 %v3611
        %v3868 = vcvt.s32.f32 %v3612
        %v3869 = vcvt.s32.f32 %v3613
        %v3870 = vcvt.s32.f32 %v3614
        %v3871 = vcvt.s32.f32 %v3615
        %v3872 = vcvt.s32.f32 %v3616
        %v3873 = vcvt.s32.f32 %v3617
        %v3874 = vcvt.s32.f32 %v3618
        %v3875 = vcvt.s32.f32 %v3619
        %v3876 = vcvt.s32.f32 %v3620
        %v3877 = vcvt.s32.f32 %v3621
        %v3878 = vcvt.s32.f32 %v3622
        %v3879 = vcvt.s32.f32 %v3623
        %v3880 = vcvt.s32.f32 %v3624
        %v3881 = vcvt.s32.f32 %v3625
        %v3882 = vcvt.s32.f32 %v3626
        %v3883 = vcvt.s32.f32 %v3627
        %v3884 = vcvt.s32.f32 %v3628
        %v3885 = vcvt.s32.f32 %v3629
        %v3886 = vcvt.s32.f32 %v3630
        %v3887 = vcvt.s32.f32 %v3631
        %v3888 = vcvt.s32.f32 %v3632
        %v3889 = vcvt.s32.f32 %v3633
        %v3890 = vcvt.s32.f32 %v3634
        %v3891 = vcvt.s32.f32 %v3635
        %v3892 = vcvt.s32.f32 %v3636
        %v3893 = vcvt.s32.f32 %v3637
        %v3894 = vcvt.s32.f32 %v3638
        %v3895 = vcvt.s32.f32 %v3639
        %v3896 = vcvt.s32.f32 %v3640
        %v3897 = vcvt.s32.f32 %v3641
        %v3898 = vcvt.s32.f32 %v3642
        %v3899 = vcvt.s32.f32 %v3643
        %v3900 = vcvt.s32.f32 %v3644
        %v3901 = vcvt.s32.f32 %v3645
        %v3902 = vcvt.s32.f32 %v3646
        %v3903 = vcvt.s32.f32 %v3647
        %v3904 = vcvt.s32.f32 %v3648
        %v3905 = vcvt.s32.f32 %v3649
        %v3906 = vcvt.s32.f32 %v3650
        %v3907 = vcvt.s32.f32 %v3651
        %v3908 = vcvt.s32.f32 %v3652
        %v3909 = vcvt.s32.f32 %v3653
        %v3910 = vcvt.s32.f32 %v3654
        %v3911 = vcvt.s32.f32 %v3655
        %v3912 = vcvt.s32.f32 %v3656
        %v3913 = vcvt.s32.f32 %v3657
        %v3914 = vcvt.s32.f32 %v3658
        %v3915 = vcvt.s32.f32 %v3659
        %v3916 = vcvt.s32.f32 %v3660
        %v3917 = vcvt.s32.f32 %v3661
        %v3918 = vcvt.s32.f32 %v3662
        %v3919 = vcvt.s32.f32 %v3663
        %v3920 = vcvt.s32.f32 %v3664
        %v3921 = vcvt.s32.f32 %v3665
        %v3922 = vcvt.s32.f32 %v3666
        %v3923 = vcvt.s32.f32 %v3667
        %v3924 = vcvt.s32.f32 %v3668
        %v3925 = vcvt.s32.f32 %v3669
        %v3926 = vcvt.s32.f32 %v3670
        %v3927 = vcvt.s32.f32 %v3671
        %v3928 = vcvt.s32.f32 %v3672
        %v3929 = vcvt.s32.f32 %v3673
        %v3930 = vcvt.s32.f32 %v3674
        %v3931 = vcvt.s32.f32 %v3675
        %v3932 = vcvt.s32.f32 %v3676
        %v3933 = vcvt.s32.f32 %v3677
        %v3934 = vcvt.s32.f32 %v3678
        %v3935 = vcvt.s32.f32 %v3679
        %v3936 = vcvt.s32.f32 %v3680
        %v3937 = vcvt.s32.f32 %v3681
        %v3938 = vcvt.s32.f32 %v3682
        %v3939 = vcvt.s32.f32 %v3683
        %v3940 = vcvt.s32.f32 %v3684
        %v3941 = vcvt.s32.f32 %v3685
        %v3942 = vcvt.s32.f32 %v3686
        %v3943 = vcvt.s32.f32 %v3687
        %v3944 = vcvt.s32.f32 %v3688
        %v3945 = vcvt.s32.f32 %v3689
        %v3946 = vcvt.s32.f32 %v3690
        %v3947 = vcvt.s32.f32 %v3691
        %v3948 = vcvt.s32.f32 %v3692
        %v3949 = vcvt.s32.f32 %v3693
        %v3950 = vcvt.s32.f32 %v3694
        %v3951 = vcvt.s32.f32 %v3695
        %v3952 = vcvt.s32.f32 %v3696
        %v3953 = vcvt.s32.f32 %v3697
        %v3954 = vcvt.s32.f32 %v3698
        %v3955 = vcvt.s32.f32 %v3699
        %v3956 = vcvt.s32.f32 %v3700
        %v3957 = vcvt.s32.f32 %v3701
        %v3958 = vcvt.s32.f32 %v3702
        %v3959 = vcvt.s32.f32 %v3703
        %v3960 = vcvt.s32.f32 %v3704
        %v3961 = vcvt.s32.f32 %v3705
        %v3962 = vcvt.s32.f32 %v3706
        %v3963 = vcvt.s32.f32 %v3707
        %v3964 = vcvt.s32.f32 %v3708
        %v3965 = vcvt.s32.f32 %v3709
        %v3966 = vcvt.s32.f32 %v3710
        %v3967 = vcvt.s32.f32 %v3711
        %v3968 = vcvt.s32.f32 %v3712
        %v3969 = vcvt.s32.f32 %v3713
        %v3970 = vcvt.s32.f32 %v3714
        %v3971 = vcvt.s32.f32 %v3715
        %v3972 = vcvt.s32.f32 %v3716
        %v3973 = vcvt.s32.f32 %v3717
        %v3974 = vcvt.s32.f32 %v3718
        %v3975 = vcvt.s32.f32 %v3719
        %v3976 = vcvt.s32.f32 %v3720
        %v3977 = vcvt.s32.f32 %v3721
        %v3978 = vcvt.s32.f32 %v3722
        %v3979 = vcvt.s32.f32 %v3723
        %v3980 = vcvt.s32.f32 %v3724
        %v3981 = vcvt.s32.f32 %v3725
        %v3982 = vcvt.s32.f32 %v3726
        %v3983 = vcvt.s32.f32 %v3727
        %v3984 = vcvt.s32.f32 %v3728
        %v3985 = vcvt.s32.f32 %v3729
        %v3986 = vcvt.s32.f32 %v3730
        %v3987 = vcvt.s32.f32 %v3731
        %v3988 = vcvt.s32.f32 %v3732
        %v3989 = vcvt.s32.f32 %v3733
        %v3990 = vcvt.s32.f32 %v3734
        %v3991 = vcvt.s32.f32 %v3735
        %v3992 = vcvt.s32.f32 %v3736
        %v3993 = vcvt.s32.f32 %v3737
        %v3994 = vcvt.s32.f32 %v3738
        %v3995 = vcvt.s32.f32 %v3739
        %v3996 = vcvt.s32.f32 %v3740
        %v3997 = vcvt.s32.f32 %v3741
        %v3998 = vcvt.s32.f32 %v3742
        %v3999 = vcvt.s32.f32 %v3743
        %v4000 = vcvt.s32.f32 %v3744
        %v4001 = vcvt.s32.f32 %v3745
        %v4002 = vcvt.s32.f32 %v3746
        %v4003 = vcvt.s32.f32 %v3747
        %v4004 = vcvt.s32.f32 %v3748
        %v4005 = vcvt.s32.f32 %v3749
        %v4006 = vcvt.s32.f32 %v3750
        %v4007 = vcvt.s32.f32 %v3751
        %v4008 = vcvt.s32.f32 %v3752
        %v4009 = vcvt.s32.f32 %v3753
        %v4010 = vcvt.s32.f32 %v3754
        %v4011 = vcvt.s32.f32 %v3755
        %v4012 = vcvt.s32.f32 %v3756
        %v4013 = vcvt.s32.f32 %v3757
        %v4014 = vcvt.s32.f32 %v3758
        %v4015 = vcvt.s32.f32 %v3759
        %v4016 = vcvt.s32.f32 %v3760
        %v4017 = vcvt.s32.f32 %v3761
        %v4018 = vcvt.s32.f32 %v3762
        %v4019 = vcvt.s32.f32 %v3763
        %v4020 = vcvt.s32.f32 %v3764
        %v4021 = vcvt.s32.f32 %v3765
        %v4022 = vcvt.s32.f32 %v3766
        %v4023 = vcvt.s32.f32 %v3767
        %v4024 = vcvt.s32.f32 %v3768
        %v4025 = vcvt.s32.f32 %v3769
        %v4026 = vcvt.s32.f32 %v3770
        %v4027 = vcvt.s32.f32 %v3771
        %v4028 = vcvt.s32.f32 %v3772
        %v4029 = vcvt.s32.f32 %v3773
        %v4030 = vcvt.s32.f32 %v3774
        %v4031 = vcvt.s32.f32 %v3775
        %v4032 = vcvt.s32.f32 %v3776
        %v4033 = vcvt.s32.f32 %v3777
        %v4034 = vcvt.s32.f32 %v3778
        %v4035 = vcvt.s32.f32 %v3779
        %v4036 = vcvt.s32.f32 %v3780
        %v4037 = vcvt.s32.f32 %v3781
        %v4038 = vcvt.s32.f32 %v3782
        %v4039 = vcvt.s32.f32 %v3783
        %v4040 = vcvt.s32.f32 %v3784
        %v4041 = vcvt.s32.f32 %v3785
        %v4042 = vcvt.s32.f32 %v3786
        %v4043 = vcvt.s32.f32 %v3787
        %v4044 = vcvt.s32.f32 %v3788
        %v4045 = vcvt.s32.f32 %v3789
        %v4046 = vcvt.s32.f32 %v3790
        %v4047 = vcvt.s32.f32 %v3791
        %v4048 = vcvt.s32.f32 %v3792
        %v4049 = vcvt.s32.f32 %v3793
        %v4050 = vcvt.s32.f32 %v3794
        %v4051 = vcvt.s32.f32 %v3795
        %v4052 = vcvt.s32.f32 %v3796
        %v4053 = vcvt.s32.f32 %v3797
        %v4054 = vcvt.s32.f32 %v3798
        %v4055 = vcvt.s32.f32 %v3799
        %v4056 = vcvt.s32.f32 %v3800
        %v4057 = vcvt.s32.f32 %v3801
        %v4058 = vcvt.s32.f32 %v3802
        %v4059 = vcvt.s32.f32 %v3803
        %v4060 = vcvt.s32.f32 %v3804
        %v4061 = vcvt.s32.f32 %v3805
        %v4062 = vcvt.s32.f32 %v3806
        %v4063 = vcvt.s32.f32 %v3807
        %v4064 = vcvt.s32.f32 %v3808
        %v4065 = vcvt.s32.f32 %v3809
        %v4066 = vcvt.s32.f32 %v3810
        %v4067 = vcvt.s32.f32 %v3811
        %v4068 = vcvt.s32.f32 %v3812
        %v4069 = vcvt.s32.f32 %v3813
        %v4070 = vcvt.s32.f32 %v3814
        %v4071 = vcvt.s32.f32 %v3815
        %v4072 = vcvt.s32.f32 %v3816
        %v4073 = vcvt.s32.f32 %v3817
        %v4074 = vcvt.s32.f32 %v3818
        %v4075 = vcvt.s32.f32 %v3819
        %v4076 = vcvt.s32.f32 %v3820
        %v4077 = vcvt.s32.f32 %v3821
        %v4078 = vcvt.s32.f32 %v3822
        %v4079 = vcvt.s32.f32 %v3823
        %v4080 = vcvt.s32.f32 %v3824
        %v4081 = vcvt.s32.f32 %v3825
        %v4082 = vcvt.s32.f32 %v3826
        %v4083 = vcvt.s32.f32 %v3827
        %v4084 = vcvt.s32.f32 %v3828
        %v4085 = vcvt.s32.f32 %v3829
        %v4086 = vcvt.s32.f32 %v3830
        %v4087 = vcvt.s32.f32 %v3831
        %v4088 = vcvt.s32.f32 %v3832
        %v4089 = vcvt.s32.f32 %v3833
        %v4090 = vcvt.s32.f32 %v3834
        %v4091 = vcvt.s32.f32 %v3835
        %v4092 = vcvt.s32.f32 %v3836
        %v4093 = vcvt.s32.f32 %v3837
        %v4094 = vcvt.s32.f32 %v3838
        %v4095 = vcvt.s32.f32 %v3839
        %v4096 = vcvt.s32.f32 %v3840
        %v4097 = vcvt.s32.f32 %v3841
        %v4098 = vcvt.s32.f32 %v3842
        %v4099 = vcvt.s32.f32 %v3843
        %v4100 = vcvt.s32.f32 %v3844
        %v4101 = vcvt.s32.f32 %v3845
        %v4102 = vcvt.s32.f32 %v3846
        %v4103 = vcvt.s32.f32 %v3847
        %v4104 = vcvt.s32.f32 %v3848
        %v4105 = vcvt.s32.f32 %v3849
        %v4106 = vcvt.s32.f32 %v3850
        %v4107 = vcvt.s32.f32 %v3851
        %v4108 = vcvt.s32.f32 %v3852
        %v4109 = vpack.c.bf16 %v3857, %v3853
        %v4110 = vpack.c.bf16 %v3858, %v3854
        %v4111 = vpack.c.bf16 %v3859, %v3855
        %v4112 = vpack.c.bf16 %v3860, %v3856
        %v4113 = vpack.c.bf16 %v3865, %v3861
        %v4114 = vpack.c.bf16 %v3866, %v3862
        %v4115 = vpack.c.bf16 %v3867, %v3863
        %v4116 = vpack.c.bf16 %v3868, %v3864
        %v4117 = vpack.c.bf16 %v3873, %v3869
        %v4118 = vpack.c.bf16 %v3874, %v3870
        %v4119 = vpack.c.bf16 %v3875, %v3871
        %v4120 = vpack.c.bf16 %v3876, %v3872
        %v4121 = vpack.c.bf16 %v3881, %v3877
        %v4122 = vpack.c.bf16 %v3882, %v3878
        %v4123 = vpack.c.bf16 %v3883, %v3879
        %v4124 = vpack.c.bf16 %v3884, %v3880
        %v4125 = vpack.c.bf16 %v3889, %v3885
        %v4126 = vpack.c.bf16 %v3890, %v3886
        %v4127 = vpack.c.bf16 %v3891, %v3887
        %v4128 = vpack.c.bf16 %v3892, %v3888
        %v4129 = vpack.c.bf16 %v3897, %v3893
        %v4130 = vpack.c.bf16 %v3898, %v3894
        %v4131 = vpack.c.bf16 %v3899, %v3895
        %v4132 = vpack.c.bf16 %v3900, %v3896
        %v4133 = vpack.c.bf16 %v3905, %v3901
        %v4134 = vpack.c.bf16 %v3906, %v3902
        %v4135 = vpack.c.bf16 %v3907, %v3903
        %v4136 = vpack.c.bf16 %v3908, %v3904
        %v4137 = vpack.c.bf16 %v3913, %v3909
        %v4138 = vpack.c.bf16 %v3914, %v3910
        %v4139 = vpack.c.bf16 %v3915, %v3911
        %v4140 = vpack.c.bf16 %v3916, %v3912
        %v4141 = vpack.c.bf16 %v3921, %v3917
        %v4142 = vpack.c.bf16 %v3922, %v3918
        %v4143 = vpack.c.bf16 %v3923, %v3919
        %v4144 = vpack.c.bf16 %v3924, %v3920
        %v4145 = vpack.c.bf16 %v3929, %v3925
        %v4146 = vpack.c.bf16 %v3930, %v3926
        %v4147 = vpack.c.bf16 %v3931, %v3927
        %v4148 = vpack.c.bf16 %v3932, %v3928
        %v4149 = vpack.c.bf16 %v3937, %v3933
        %v4150 = vpack.c.bf16 %v3938, %v3934
        %v4151 = vpack.c.bf16 %v3939, %v3935
        %v4152 = vpack.c.bf16 %v3940, %v3936
        %v4153 = vpack.c.bf16 %v3945, %v3941
        %v4154 = vpack.c.bf16 %v3946, %v3942
        %v4155 = vpack.c.bf16 %v3947, %v3943
        %v4156 = vpack.c.bf16 %v3948, %v3944
        %v4157 = vpack.c.bf16 %v3953, %v3949
        %v4158 = vpack.c.bf16 %v3954, %v3950
        %v4159 = vpack.c.bf16 %v3955, %v3951
        %v4160 = vpack.c.bf16 %v3956, %v3952
        %v4161 = vpack.c.bf16 %v3961, %v3957
        %v4162 = vpack.c.bf16 %v3962, %v3958
        %v4163 = vpack.c.bf16 %v3963, %v3959
        %v4164 = vpack.c.bf16 %v3964, %v3960
        %v4165 = vpack.c.bf16 %v3969, %v3965
        %v4166 = vpack.c.bf16 %v3970, %v3966
        %v4167 = vpack.c.bf16 %v3971, %v3967
        %v4168 = vpack.c.bf16 %v3972, %v3968
        %v4169 = vpack.c.bf16 %v3977, %v3973
        %v4170 = vpack.c.bf16 %v3978, %v3974
        %v4171 = vpack.c.bf16 %v3979, %v3975
        %v4172 = vpack.c.bf16 %v3980, %v3976
        %v4173 = vpack.c.bf16 %v3985, %v3981
        %v4174 = vpack.c.bf16 %v3986, %v3982
        %v4175 = vpack.c.bf16 %v3987, %v3983
        %v4176 = vpack.c.bf16 %v3988, %v3984
        %v4177 = vpack.c.bf16 %v3993, %v3989
        %v4178 = vpack.c.bf16 %v3994, %v3990
        %v4179 = vpack.c.bf16 %v3995, %v3991
        %v4180 = vpack.c.bf16 %v3996, %v3992
        %v4181 = vpack.c.bf16 %v4001, %v3997
        %v4182 = vpack.c.bf16 %v4002, %v3998
        %v4183 = vpack.c.bf16 %v4003, %v3999
        %v4184 = vpack.c.bf16 %v4004, %v4000
        %v4185 = vpack.c.bf16 %v4009, %v4005
        %v4186 = vpack.c.bf16 %v4010, %v4006
        %v4187 = vpack.c.bf16 %v4011, %v4007
        %v4188 = vpack.c.bf16 %v4012, %v4008
        %v4189 = vpack.c.bf16 %v4017, %v4013
        %v4190 = vpack.c.bf16 %v4018, %v4014
        %v4191 = vpack.c.bf16 %v4019, %v4015
        %v4192 = vpack.c.bf16 %v4020, %v4016
        %v4193 = vpack.c.bf16 %v4025, %v4021
        %v4194 = vpack.c.bf16 %v4026, %v4022
        %v4195 = vpack.c.bf16 %v4027, %v4023
        %v4196 = vpack.c.bf16 %v4028, %v4024
        %v4197 = vpack.c.bf16 %v4033, %v4029
        %v4198 = vpack.c.bf16 %v4034, %v4030
        %v4199 = vpack.c.bf16 %v4035, %v4031
        %v4200 = vpack.c.bf16 %v4036, %v4032
        %v4201 = vpack.c.bf16 %v4041, %v4037
        %v4202 = vpack.c.bf16 %v4042, %v4038
        %v4203 = vpack.c.bf16 %v4043, %v4039
        %v4204 = vpack.c.bf16 %v4044, %v4040
        %v4205 = vpack.c.bf16 %v4049, %v4045
        %v4206 = vpack.c.bf16 %v4050, %v4046
        %v4207 = vpack.c.bf16 %v4051, %v4047
        %v4208 = vpack.c.bf16 %v4052, %v4048
        %v4209 = vpack.c.bf16 %v4057, %v4053
        %v4210 = vpack.c.bf16 %v4058, %v4054
        %v4211 = vpack.c.bf16 %v4059, %v4055
        %v4212 = vpack.c.bf16 %v4060, %v4056
        %v4213 = vpack.c.bf16 %v4065, %v4061
        %v4214 = vpack.c.bf16 %v4066, %v4062
        %v4215 = vpack.c.bf16 %v4067, %v4063
        %v4216 = vpack.c.bf16 %v4068, %v4064
        %v4217 = vpack.c.bf16 %v4073, %v4069
        %v4218 = vpack.c.bf16 %v4074, %v4070
        %v4219 = vpack.c.bf16 %v4075, %v4071
        %v4220 = vpack.c.bf16 %v4076, %v4072
        %v4221 = vpack.c.bf16 %v4081, %v4077
        %v4222 = vpack.c.bf16 %v4082, %v4078
        %v4223 = vpack.c.bf16 %v4083, %v4079
        %v4224 = vpack.c.bf16 %v4084, %v4080
        %v4225 = vpack.c.bf16 %v4089, %v4085
        %v4226 = vpack.c.bf16 %v4090, %v4086
        %v4227 = vpack.c.bf16 %v4091, %v4087
        %v4228 = vpack.c.bf16 %v4092, %v4088
        %v4229 = vpack.c.bf16 %v4097, %v4093
        %v4230 = vpack.c.bf16 %v4098, %v4094
        %v4231 = vpack.c.bf16 %v4099, %v4095
        %v4232 = vpack.c.bf16 %v4100, %v4096
        %v4233 = vpack.c.bf16 %v4105, %v4101
        %v4234 = vpack.c.bf16 %v4106, %v4102
        %v4235 = vpack.c.bf16 %v4107, %v4103
        %v4236 = vpack.c.bf16 %v4108, %v4104
        %v4237 = vld [vmem:[%s1] sm:$0xf]
        %v4238 = vld [vmem:[%s1 + $0x4] sm:$0xf]
        %v4239 = vld [vmem:[%s1 + $0x8] sm:$0xf]
        %v4240 = vld [vmem:[%s1 + $0xc] sm:$0xf]
        %v4241 = vld [vmem:[%s1 + $0x10] sm:$0xf]
        %v4242 = vld [vmem:[%s1 + $0x14] sm:$0xf]
        %v4243 = vld [vmem:[%s1 + $0x18] sm:$0xf]
        %v4244 = vld [vmem:[%s1 + $0x1c] sm:$0xf]
        %v4245 = vld [vmem:[%s1 + $0x20] sm:$0xf]
        %v4246 = vld [vmem:[%s1 + $0x24] sm:$0xf]
        %v4247 = vld [vmem:[%s1 + $0x28] sm:$0xf]
        %v4248 = vld [vmem:[%s1 + $0x2c] sm:$0xf]
        %v4249 = vld [vmem:[%s1 + $0x30] sm:$0xf]
        %v4250 = vld [vmem:[%s1 + $0x34] sm:$0xf]
        %v4251 = vld [vmem:[%s1 + $0x38] sm:$0xf]
        %v4252 = vld [vmem:[%s1 + $0x3c] sm:$0xf]
        %v4253 = vld [vmem:[%s1 + $0x40] sm:$0xf]
        %v4254 = vld [vmem:[%s1 + $0x44] sm:$0xf]
        %v4255 = vld [vmem:[%s1 + $0x48] sm:$0xf]
        %v4256 = vld [vmem:[%s1 + $0x4c] sm:$0xf]
        %v4257 = vld [vmem:[%s1 + $0x50] sm:$0xf]
        %v4258 = vld [vmem:[%s1 + $0x54] sm:$0xf]
        %v4259 = vld [vmem:[%s1 + $0x58] sm:$0xf]
        %v4260 = vld [vmem:[%s1 + $0x5c] sm:$0xf]
        %v4261 = vld [vmem:[%s1 + $0x60] sm:$0xf]
        %v4262 = vld [vmem:[%s1 + $0x64] sm:$0xf]
        %v4263 = vld [vmem:[%s1 + $0x68] sm:$0xf]
        %v4264 = vld [vmem:[%s1 + $0x6c] sm:$0xf]
        %v4265 = vld [vmem:[%s1 + $0x70] sm:$0xf]
        %v4266 = vld [vmem:[%s1 + $0x74] sm:$0xf]
        %v4267 = vld [vmem:[%s1 + $0x78] sm:$0xf]
        %v4268 = vld [vmem:[%s1 + $0x7c] sm:$0xf]
        %v4269 = vld [vmem:[%s1 + $0x80] sm:$0xf]
        %v4270 = vld [vmem:[%s1 + $0x84] sm:$0xf]
        %v4271 = vld [vmem:[%s1 + $0x88] sm:$0xf]
        %v4272 = vld [vmem:[%s1 + $0x8c] sm:$0xf]
        %v4273 = vld [vmem:[%s1 + $0x90] sm:$0xf]
        %v4274 = vld [vmem:[%s1 + $0x94] sm:$0xf]
        %v4275 = vld [vmem:[%s1 + $0x98] sm:$0xf]
        %v4276 = vld [vmem:[%s1 + $0x9c] sm:$0xf]
        %v4277 = vld [vmem:[%s1 + $0xa0] sm:$0xf]
        %v4278 = vld [vmem:[%s1 + $0xa4] sm:$0xf]
        %v4279 = vld [vmem:[%s1 + $0xa8] sm:$0xf]
        %v4280 = vld [vmem:[%s1 + $0xac] sm:$0xf]
        %v4281 = vld [vmem:[%s1 + $0xb0] sm:$0xf]
        %v4282 = vld [vmem:[%s1 + $0xb4] sm:$0xf]
        %v4283 = vld [vmem:[%s1 + $0xb8] sm:$0xf]
        %v4284 = vld [vmem:[%s1 + $0xbc] sm:$0xf]
        %v4285 = vld [vmem:[%s1 + $0xc0] sm:$0xf]
        %v4286 = vld [vmem:[%s1 + $0xc4] sm:$0xf]
        %v4287 = vld [vmem:[%s1 + $0xc8] sm:$0xf]
        %v4288 = vld [vmem:[%s1 + $0xcc] sm:$0xf]
        %v4289 = vld [vmem:[%s1 + $0xd0] sm:$0xf]
        %v4290 = vld [vmem:[%s1 + $0xd4] sm:$0xf]
        %v4291 = vld [vmem:[%s1 + $0xd8] sm:$0xf]
        %v4292 = vld [vmem:[%s1 + $0xdc] sm:$0xf]
        %v4293 = vld [vmem:[%s1 + $0xe0] sm:$0xf]
        %v4294 = vld [vmem:[%s1 + $0xe4] sm:$0xf]
        %v4295 = vld [vmem:[%s1 + $0xe8] sm:$0xf]
        %v4296 = vld [vmem:[%s1 + $0xec] sm:$0xf]
        %v4297 = vld [vmem:[%s1 + $0xf0] sm:$0xf]
        %v4298 = vld [vmem:[%s1 + $0xf4] sm:$0xf]
        %v4299 = vld [vmem:[%s1 + $0xf8] sm:$0xf]
        %v4300 = vld [vmem:[%s1 + $0xfc] sm:$0xf]
        %v4365 = vunpack.c.l.b16 %v4237
        %v4366 = vunpack.c.l.b16 %v4238
        %v4367 = vunpack.c.l.b16 %v4239
        %v4368 = vunpack.c.l.b16 %v4240
        %v4369 = vunpack.c.l.b16 %v4241
        %v4370 = vunpack.c.l.b16 %v4242
        %v4371 = vunpack.c.l.b16 %v4243
        %v4372 = vunpack.c.l.b16 %v4244
        %v4373 = vunpack.c.l.b16 %v4245
        %v4374 = vunpack.c.l.b16 %v4246
        %v4375 = vunpack.c.l.b16 %v4247
        %v4376 = vunpack.c.l.b16 %v4248
        %v4377 = vunpack.c.l.b16 %v4249
        %v4378 = vunpack.c.l.b16 %v4250
        %v4379 = vunpack.c.l.b16 %v4251
        %v4380 = vunpack.c.l.b16 %v4252
        %v4381 = vunpack.c.l.b16 %v4253
        %v4382 = vunpack.c.l.b16 %v4254
        %v4383 = vunpack.c.l.b16 %v4255
        %v4384 = vunpack.c.l.b16 %v4256
        %v4385 = vunpack.c.l.b16 %v4257
        %v4386 = vunpack.c.l.b16 %v4258
        %v4387 = vunpack.c.l.b16 %v4259
        %v4388 = vunpack.c.l.b16 %v4260
        %v4389 = vunpack.c.l.b16 %v4261
        %v4390 = vunpack.c.l.b16 %v4262
        %v4391 = vunpack.c.l.b16 %v4263
        %v4392 = vunpack.c.l.b16 %v4264
        %v4393 = vunpack.c.l.b16 %v4265
        %v4394 = vunpack.c.l.b16 %v4266
        %v4395 = vunpack.c.l.b16 %v4267
        %v4396 = vunpack.c.l.b16 %v4268
        %v4397 = vunpack.c.l.b16 %v4269
        %v4398 = vunpack.c.l.b16 %v4270
        %v4399 = vunpack.c.l.b16 %v4271
        %v4400 = vunpack.c.l.b16 %v4272
        %v4401 = vunpack.c.l.b16 %v4273
        %v4402 = vunpack.c.l.b16 %v4274
        %v4403 = vunpack.c.l.b16 %v4275
        %v4404 = vunpack.c.l.b16 %v4276
        %v4405 = vunpack.c.l.b16 %v4277
        %v4406 = vunpack.c.l.b16 %v4278
        %v4407 = vunpack.c.l.b16 %v4279
        %v4408 = vunpack.c.l.b16 %v4280
        %v4409 = vunpack.c.l.b16 %v4281
        %v4410 = vunpack.c.l.b16 %v4282
        %v4411 = vunpack.c.l.b16 %v4283
        %v4412 = vunpack.c.l.b16 %v4284
        %v4413 = vunpack.c.l.b16 %v4285
        %v4414 = vunpack.c.l.b16 %v4286
        %v4415 = vunpack.c.l.b16 %v4287
        %v4416 = vunpack.c.l.b16 %v4288
        %v4417 = vunpack.c.l.b16 %v4289
        %v4418 = vunpack.c.l.b16 %v4290
        %v4419 = vunpack.c.l.b16 %v4291
        %v4420 = vunpack.c.l.b16 %v4292
        %v4421 = vunpack.c.l.b16 %v4293
        %v4422 = vunpack.c.l.b16 %v4294
        %v4423 = vunpack.c.l.b16 %v4295
        %v4424 = vunpack.c.l.b16 %v4296
        %v4425 = vunpack.c.l.b16 %v4297
        %v4426 = vunpack.c.l.b16 %v4298
        %v4427 = vunpack.c.l.b16 %v4299
        %v4428 = vunpack.c.l.b16 %v4300
        %v4429 = vpack.c.b16 %v4366, %v4365
        %v4430 = vpack.c.b16 %v4368, %v4367
        %v4431 = vpack.c.b16 %v4370, %v4369
        %v4432 = vpack.c.b16 %v4372, %v4371
        %v4433 = vpack.c.b16 %v4374, %v4373
        %v4434 = vpack.c.b16 %v4376, %v4375
        %v4435 = vpack.c.b16 %v4378, %v4377
        %v4436 = vpack.c.b16 %v4380, %v4379
        %v4437 = vpack.c.b16 %v4382, %v4381
        %v4438 = vpack.c.b16 %v4384, %v4383
        %v4439 = vpack.c.b16 %v4386, %v4385
        %v4440 = vpack.c.b16 %v4388, %v4387
        %v4441 = vpack.c.b16 %v4390, %v4389
        %v4442 = vpack.c.b16 %v4392, %v4391
        %v4443 = vpack.c.b16 %v4394, %v4393
        %v4444 = vpack.c.b16 %v4396, %v4395
        %v4445 = vpack.c.b16 %v4398, %v4397
        %v4446 = vpack.c.b16 %v4400, %v4399
        %v4447 = vpack.c.b16 %v4402, %v4401
        %v4448 = vpack.c.b16 %v4404, %v4403
        %v4449 = vpack.c.b16 %v4406, %v4405
        %v4450 = vpack.c.b16 %v4408, %v4407
        %v4451 = vpack.c.b16 %v4410, %v4409
        %v4452 = vpack.c.b16 %v4412, %v4411
        %v4453 = vpack.c.b16 %v4414, %v4413
        %v4454 = vpack.c.b16 %v4416, %v4415
        %v4455 = vpack.c.b16 %v4418, %v4417
        %v4456 = vpack.c.b16 %v4420, %v4419
        %v4457 = vpack.c.b16 %v4422, %v4421
        %v4458 = vpack.c.b16 %v4424, %v4423
        %v4459 = vpack.c.b16 %v4426, %v4425
        %v4460 = vpack.c.b16 %v4428, %v4427
        %4493 = vmatprep.subr.bf16.mxu0 0
        %4494 = vmatpush1.bf16.msra.mxu0 %v4436
        %4495 = vmatprep.subr.bf16.mxu0 0
        %4496 = vmatpush1.bf16.msra.mxu0 %v4435
        %4497 = vmatprep.subr.bf16.mxu0 0
        %4498 = vmatpush1.bf16.msra.mxu0 %v4434
        %4499 = vmatprep.subr.bf16.mxu0 0
        %4500 = vmatpush1.bf16.msra.mxu0 %v4433
        %4501 = vmatprep.subr.bf16.mxu0 0
        %4502 = vmatpush1.bf16.msra.mxu0 %v4432
        %4503 = vmatprep.subr.bf16.mxu0 0
        %4504 = vmatpush1.bf16.msra.mxu0 %v4431
        %4505 = vmatprep.subr.bf16.mxu0 0
        %4506 = vmatpush1.bf16.msra.mxu0 %v4430
        %4507 = vmatprep.subr.bf16.mxu0 0
        %4508 = vmatpush1.bf16.msra.mxu0 %v4429
        %4509 = vmatprep.subr.bf16.mxu0 0
        %4510 = vmatpush2.bf16.msra.mxu0 %v4444
        %4511 = vmatprep.subr.bf16.mxu0 0
        %4512 = vmatpush2.bf16.msra.mxu0 %v4443
        %4513 = vmatprep.subr.bf16.mxu0 0
        %4514 = vmatpush2.bf16.msra.mxu0 %v4442
        %4515 = vmatprep.subr.bf16.mxu0 0
        %4516 = vmatpush2.bf16.msra.mxu0 %v4441
        %4517 = vmatprep.subr.bf16.mxu0 0
        %4518 = vmatpush2.bf16.msra.mxu0 %v4440
        %4519 = vmatprep.subr.bf16.mxu0 0
        %4520 = vmatpush2.bf16.msra.mxu0 %v4439
        %4521 = vmatprep.subr.bf16.mxu0 0
        %4522 = vmatpush2.bf16.msra.mxu0 %v4438
        %4523 = vmatprep.subr.bf16.mxu0 0
        %4524 = vmatpush2.bf16.msra.mxu0 %v4437
        %4525 = vmatprep.mubr.bf16.mxu0 %v4110
        %4526 = vmatmul.mubr.bf16.gmra.mxu0 %v4109
        %v4527 = vpop.f32.mrf.mxu0
        %v4528 = vadd.f32 0.0, %v4527
        %v4529 = vpop.f32.mrf.mxu0
        %v4530 = vpop.f32.mrf.mxu0
        %v4531 = vadd.f32 0.0, %v4530
        %v4532 = vpop.f32.mrf.mxu0
        %4533 = vmatprep.mubr.bf16.mxu0 %v4114
        %4534 = vmatmul.mubr.bf16.gmra.mxu0 %v4113
        %v4535 = vpop.f32.mrf.mxu0
        %v4536 = vadd.f32 0.0, %v4535
        %v4537 = vpop.f32.mrf.mxu0
        %v4538 = vpop.f32.mrf.mxu0
        %v4539 = vadd.f32 0.0, %v4538
        %v4540 = vpop.f32.mrf.mxu0
        %4541 = vmatprep.mubr.bf16.mxu0 %v4118
        %4542 = vmatmul.mubr.bf16.gmra.mxu0 %v4117
        %v4543 = vpop.f32.mrf.mxu0
        %v4544 = vadd.f32 0.0, %v4543
        %v4545 = vpop.f32.mrf.mxu0
        %v4546 = vpop.f32.mrf.mxu0
        %v4547 = vadd.f32 0.0, %v4546
        %v4548 = vpop.f32.mrf.mxu0
        %4549 = vmatprep.mubr.bf16.mxu0 %v4122
        %4550 = vmatmul.mubr.bf16.gmra.mxu0 %v4121
        %v4551 = vpop.f32.mrf.mxu0
        %v4552 = vadd.f32 0.0, %v4551
        %v4553 = vpop.f32.mrf.mxu0
        %v4554 = vpop.f32.mrf.mxu0
        %v4555 = vadd.f32 0.0, %v4554
        %v4556 = vpop.f32.mrf.mxu0
        %4557 = vmatprep.mubr.bf16.mxu0 %v4126
        %4558 = vmatmul.mubr.bf16.gmra.mxu0 %v4125
        %v4559 = vpop.f32.mrf.mxu0
        %v4560 = vadd.f32 0.0, %v4559
        %v4561 = vpop.f32.mrf.mxu0
        %v4562 = vpop.f32.mrf.mxu0
        %v4563 = vadd.f32 0.0, %v4562
        %v4564 = vpop.f32.mrf.mxu0
        %4565 = vmatprep.mubr.bf16.mxu0 %v4130
        %4566 = vmatmul.mubr.bf16.gmra.mxu0 %v4129
        %v4567 = vpop.f32.mrf.mxu0
        %v4568 = vadd.f32 0.0, %v4567
        %v4569 = vpop.f32.mrf.mxu0
        %v4570 = vpop.f32.mrf.mxu0
        %v4571 = vadd.f32 0.0, %v4570
        %v4572 = vpop.f32.mrf.mxu0
        %4573 = vmatprep.mubr.bf16.mxu0 %v4134
        %4574 = vmatmul.mubr.bf16.gmra.mxu0 %v4133
        %v4575 = vpop.f32.mrf.mxu0
        %v4576 = vadd.f32 0.0, %v4575
        %v4577 = vpop.f32.mrf.mxu0
        %v4578 = vpop.f32.mrf.mxu0
        %v4579 = vadd.f32 0.0, %v4578
        %v4580 = vpop.f32.mrf.mxu0
        %4581 = vmatprep.mubr.bf16.mxu0 %v4138
        %4582 = vmatmul.mubr.bf16.gmra.mxu0 %v4137
        %v4583 = vpop.f32.mrf.mxu0
        %v4584 = vadd.f32 0.0, %v4583
        %v4585 = vpop.f32.mrf.mxu0
        %v4586 = vpop.f32.mrf.mxu0
        %v4587 = vadd.f32 0.0, %v4586
        %v4588 = vpop.f32.mrf.mxu0
        %4589 = vmatprep.mubr.bf16.mxu0 %v4142
        %4590 = vmatmul.mubr.bf16.gmra.mxu0 %v4141
        %v4591 = vpop.f32.mrf.mxu0
        %v4592 = vadd.f32 0.0, %v4591
        %v4593 = vpop.f32.mrf.mxu0
        %v4594 = vpop.f32.mrf.mxu0
        %v4595 = vadd.f32 0.0, %v4594
        %v4596 = vpop.f32.mrf.mxu0
        %4597 = vmatprep.mubr.bf16.mxu0 %v4146
        %4598 = vmatmul.mubr.bf16.gmra.mxu0 %v4145
        %v4599 = vpop.f32.mrf.mxu0
        %v4600 = vadd.f32 0.0, %v4599
        %v4601 = vpop.f32.mrf.mxu0
        %v4602 = vpop.f32.mrf.mxu0
        %v4603 = vadd.f32 0.0, %v4602
        %v4604 = vpop.f32.mrf.mxu0
        %4605 = vmatprep.mubr.bf16.mxu0 %v4150
        %4606 = vmatmul.mubr.bf16.gmra.mxu0 %v4149
        %v4607 = vpop.f32.mrf.mxu0
        %v4608 = vadd.f32 0.0, %v4607
        %v4609 = vpop.f32.mrf.mxu0
        %v4610 = vpop.f32.mrf.mxu0
        %v4611 = vadd.f32 0.0, %v4610
        %v4612 = vpop.f32.mrf.mxu0
        %4613 = vmatprep.mubr.bf16.mxu0 %v4154
        %4614 = vmatmul.mubr.bf16.gmra.mxu0 %v4153
        %v4615 = vpop.f32.mrf.mxu0
        %v4616 = vadd.f32 0.0, %v4615
        %v4617 = vpop.f32.mrf.mxu0
        %v4618 = vpop.f32.mrf.mxu0
        %v4619 = vadd.f32 0.0, %v4618
        %v4620 = vpop.f32.mrf.mxu0
        %4621 = vmatprep.mubr.bf16.mxu0 %v4158
        %4622 = vmatmul.mubr.bf16.gmra.mxu0 %v4157
        %v4623 = vpop.f32.mrf.mxu0
        %v4624 = vadd.f32 0.0, %v4623
        %v4625 = vpop.f32.mrf.mxu0
        %v4626 = vpop.f32.mrf.mxu0
        %v4627 = vadd.f32 0.0, %v4626
        %v4628 = vpop.f32.mrf.mxu0
        %4629 = vmatprep.mubr.bf16.mxu0 %v4162
        %4630 = vmatmul.mubr.bf16.gmra.mxu0 %v4161
        %v4631 = vpop.f32.mrf.mxu0
        %v4632 = vadd.f32 0.0, %v4631
        %v4633 = vpop.f32.mrf.mxu0
        %v4634 = vpop.f32.mrf.mxu0
        %v4635 = vadd.f32 0.0, %v4634
        %v4636 = vpop.f32.mrf.mxu0
        %4637 = vmatprep.mubr.bf16.mxu0 %v4166
        %4638 = vmatmul.mubr.bf16.gmra.mxu0 %v4165
        %v4639 = vpop.f32.mrf.mxu0
        %v4640 = vadd.f32 0.0, %v4639
        %v4641 = vpop.f32.mrf.mxu0
        %v4642 = vpop.f32.mrf.mxu0
        %v4643 = vadd.f32 0.0, %v4642
        %v4644 = vpop.f32.mrf.mxu0
        %4645 = vmatprep.mubr.bf16.mxu0 %v4170
        %4646 = vmatmul.mubr.bf16.gmra.mxu0 %v4169
        %v4647 = vpop.f32.mrf.mxu0
        %v4648 = vadd.f32 0.0, %v4647
        %v4649 = vpop.f32.mrf.mxu0
        %v4650 = vpop.f32.mrf.mxu0
        %v4651 = vadd.f32 0.0, %v4650
        %v4652 = vpop.f32.mrf.mxu0
        %4653 = vmatprep.mubr.bf16.mxu0 %v4174
        %4654 = vmatmul.mubr.bf16.gmra.mxu0 %v4173
        %v4655 = vpop.f32.mrf.mxu0
        %v4656 = vadd.f32 0.0, %v4655
        %v4657 = vpop.f32.mrf.mxu0
        %v4658 = vpop.f32.mrf.mxu0
        %v4659 = vadd.f32 0.0, %v4658
        %v4660 = vpop.f32.mrf.mxu0
        %4661 = vmatprep.mubr.bf16.mxu0 %v4178
        %4662 = vmatmul.mubr.bf16.gmra.mxu0 %v4177
        %v4663 = vpop.f32.mrf.mxu0
        %v4664 = vadd.f32 0.0, %v4663
        %v4665 = vpop.f32.mrf.mxu0
        %v4666 = vpop.f32.mrf.mxu0
        %v4667 = vadd.f32 0.0, %v4666
        %v4668 = vpop.f32.mrf.mxu0
        %4669 = vmatprep.mubr.bf16.mxu0 %v4182
        %4670 = vmatmul.mubr.bf16.gmra.mxu0 %v4181
        %v4671 = vpop.f32.mrf.mxu0
        %v4672 = vadd.f32 0.0, %v4671
        %v4673 = vpop.f32.mrf.mxu0
        %v4674 = vpop.f32.mrf.mxu0
        %v4675 = vadd.f32 0.0, %v4674
        %v4676 = vpop.f32.mrf.mxu0
        %4677 = vmatprep.mubr.bf16.mxu0 %v4186
        %4678 = vmatmul.mubr.bf16.gmra.mxu0 %v4185
        %v4679 = vpop.f32.mrf.mxu0
        %v4680 = vadd.f32 0.0, %v4679
        %v4681 = vpop.f32.mrf.mxu0
        %v4682 = vpop.f32.mrf.mxu0
        %v4683 = vadd.f32 0.0, %v4682
        %v4684 = vpop.f32.mrf.mxu0
        %4685 = vmatprep.mubr.bf16.mxu0 %v4190
        %4686 = vmatmul.mubr.bf16.gmra.mxu0 %v4189
        %v4687 = vpop.f32.mrf.mxu0
        %v4688 = vadd.f32 0.0, %v4687
        %v4689 = vpop.f32.mrf.mxu0
        %v4690 = vpop.f32.mrf.mxu0
        %v4691 = vadd.f32 0.0, %v4690
        %v4692 = vpop.f32.mrf.mxu0
        %4693 = vmatprep.mubr.bf16.mxu0 %v4194
        %4694 = vmatmul.mubr.bf16.gmra.mxu0 %v4193
        %v4695 = vpop.f32.mrf.mxu0
        %v4696 = vadd.f32 0.0, %v4695
        %v4697 = vpop.f32.mrf.mxu0
        %v4698 = vpop.f32.mrf.mxu0
        %v4699 = vadd.f32 0.0, %v4698
        %v4700 = vpop.f32.mrf.mxu0
        %4701 = vmatprep.mubr.bf16.mxu0 %v4198
        %4702 = vmatmul.mubr.bf16.gmra.mxu0 %v4197
        %v4703 = vpop.f32.mrf.mxu0
        %v4704 = vadd.f32 0.0, %v4703
        %v4705 = vpop.f32.mrf.mxu0
        %v4706 = vpop.f32.mrf.mxu0
        %v4707 = vadd.f32 0.0, %v4706
        %v4708 = vpop.f32.mrf.mxu0
        %4709 = vmatprep.mubr.bf16.mxu0 %v4202
        %4710 = vmatmul.mubr.bf16.gmra.mxu0 %v4201
        %v4711 = vpop.f32.mrf.mxu0
        %v4712 = vadd.f32 0.0, %v4711
        %v4713 = vpop.f32.mrf.mxu0
        %v4714 = vpop.f32.mrf.mxu0
        %v4715 = vadd.f32 0.0, %v4714
        %v4716 = vpop.f32.mrf.mxu0
        %4717 = vmatprep.mubr.bf16.mxu0 %v4206
        %4718 = vmatmul.mubr.bf16.gmra.mxu0 %v4205
        %v4719 = vpop.f32.mrf.mxu0
        %v4720 = vadd.f32 0.0, %v4719
        %v4721 = vpop.f32.mrf.mxu0
        %v4722 = vpop.f32.mrf.mxu0
        %v4723 = vadd.f32 0.0, %v4722
        %v4724 = vpop.f32.mrf.mxu0
        %4725 = vmatprep.mubr.bf16.mxu0 %v4210
        %4726 = vmatmul.mubr.bf16.gmra.mxu0 %v4209
        %v4727 = vpop.f32.mrf.mxu0
        %v4728 = vadd.f32 0.0, %v4727
        %v4729 = vpop.f32.mrf.mxu0
        %v4730 = vpop.f32.mrf.mxu0
        %v4731 = vadd.f32 0.0, %v4730
        %v4732 = vpop.f32.mrf.mxu0
        %4733 = vmatprep.mubr.bf16.mxu0 %v4214
        %4734 = vmatmul.mubr.bf16.gmra.mxu0 %v4213
        %v4735 = vpop.f32.mrf.mxu0
        %v4736 = vadd.f32 0.0, %v4735
        %v4737 = vpop.f32.mrf.mxu0
        %v4738 = vpop.f32.mrf.mxu0
        %v4739 = vadd.f32 0.0, %v4738
        %v4740 = vpop.f32.mrf.mxu0
        %4741 = vmatprep.mubr.bf16.mxu0 %v4218
        %4742 = vmatmul.mubr.bf16.gmra.mxu0 %v4217
        %v4743 = vpop.f32.mrf.mxu0
        %v4744 = vadd.f32 0.0, %v4743
        %v4745 = vpop.f32.mrf.mxu0
        %v4746 = vpop.f32.mrf.mxu0
        %v4747 = vadd.f32 0.0, %v4746
        %v4748 = vpop.f32.mrf.mxu0
        %4749 = vmatprep.mubr.bf16.mxu0 %v4222
        %4750 = vmatmul.mubr.bf16.gmra.mxu0 %v4221
        %v4751 = vpop.f32.mrf.mxu0
        %v4752 = vadd.f32 0.0, %v4751
        %v4753 = vpop.f32.mrf.mxu0
        %v4754 = vpop.f32.mrf.mxu0
        %v4755 = vadd.f32 0.0, %v4754
        %v4756 = vpop.f32.mrf.mxu0
        %4757 = vmatprep.mubr.bf16.mxu0 %v4226
        %4758 = vmatmul.mubr.bf16.gmra.mxu0 %v4225
        %v4759 = vpop.f32.mrf.mxu0
        %v4760 = vadd.f32 0.0, %v4759
        %v4761 = vpop.f32.mrf.mxu0
        %v4762 = vpop.f32.mrf.mxu0
        %v4763 = vadd.f32 0.0, %v4762
        %v4764 = vpop.f32.mrf.mxu0
        %4765 = vmatprep.mubr.bf16.mxu0 %v4230
        %4766 = vmatmul.mubr.bf16.gmra.mxu0 %v4229
        %v4767 = vpop.f32.mrf.mxu0
        %v4768 = vadd.f32 0.0, %v4767
        %v4769 = vpop.f32.mrf.mxu0
        %v4770 = vpop.f32.mrf.mxu0
        %v4771 = vadd.f32 0.0, %v4770
        %v4772 = vpop.f32.mrf.mxu0
        %4773 = vmatprep.mubr.bf16.mxu0 %v4234
        %4774 = vmatmul.mubr.bf16.gmra.mxu0 %v4233
        %v4775 = vpop.f32.mrf.mxu0
        %v4776 = vadd.f32 0.0, %v4775
        %v4777 = vpop.f32.mrf.mxu0
        %v4778 = vpop.f32.mrf.mxu0
        %v4779 = vadd.f32 0.0, %v4778
        %v4780 = vpop.f32.mrf.mxu0
        %4781 = vdwg.mxu0
        %4782 = vmatprep.subr.bf16.mxu0 0
        %4783 = vmatpush1.bf16.msra.mxu0 %v4452
        %4784 = vmatprep.subr.bf16.mxu0 0
        %4785 = vmatpush1.bf16.msra.mxu0 %v4451
        %4786 = vmatprep.subr.bf16.mxu0 0
        %4787 = vmatpush1.bf16.msra.mxu0 %v4450
        %4788 = vmatprep.subr.bf16.mxu0 0
        %4789 = vmatpush1.bf16.msra.mxu0 %v4449
        %4790 = vmatprep.subr.bf16.mxu0 0
        %4791 = vmatpush1.bf16.msra.mxu0 %v4448
        %4792 = vmatprep.subr.bf16.mxu0 0
        %4793 = vmatpush1.bf16.msra.mxu0 %v4447
        %4794 = vmatprep.subr.bf16.mxu0 0
        %4795 = vmatpush1.bf16.msra.mxu0 %v4446
        %4796 = vmatprep.subr.bf16.mxu0 0
        %4797 = vmatpush1.bf16.msra.mxu0 %v4445
        %4798 = vmatprep.subr.bf16.mxu0 0
        %4799 = vmatpush2.bf16.msra.mxu0 %v4460
        %4800 = vmatprep.subr.bf16.mxu0 0
        %4801 = vmatpush2.bf16.msra.mxu0 %v4459
        %4802 = vmatprep.subr.bf16.mxu0 0
        %4803 = vmatpush2.bf16.msra.mxu0 %v4458
        %4804 = vmatprep.subr.bf16.mxu0 0
        %4805 = vmatpush2.bf16.msra.mxu0 %v4457
        %4806 = vmatprep.subr.bf16.mxu0 0
        %4807 = vmatpush2.bf16.msra.mxu0 %v4456
        %4808 = vmatprep.subr.bf16.mxu0 0
        %4809 = vmatpush2.bf16.msra.mxu0 %v4455
        %4810 = vmatprep.subr.bf16.mxu0 0
        %4811 = vmatpush2.bf16.msra.mxu0 %v4454
        %4812 = vmatprep.subr.bf16.mxu0 0
        %4813 = vmatpush2.bf16.msra.mxu0 %v4453
        %4814 = vmatprep.mubr.bf16.mxu0 %v4112
        %4815 = vmatmul.mubr.bf16.gmra.mxu0 %v4111
        %v4816 = vpop.f32.mrf.mxu0
        %v4817 = vadd.f32 %v4528, %v4816
        %v4818 = vpop.f32.mrf.mxu0
        %v4819 = vpop.f32.mrf.mxu0
        %v4820 = vadd.f32 %v4531, %v4819
        %v4821 = vpop.f32.mrf.mxu0
        %4822 = vmatprep.mubr.bf16.mxu0 %v4116
        %4823 = vmatmul.mubr.bf16.gmra.mxu0 %v4115
        %v4824 = vpop.f32.mrf.mxu0
        %v4825 = vadd.f32 %v4536, %v4824
        %v4826 = vpop.f32.mrf.mxu0
        %v4827 = vpop.f32.mrf.mxu0
        %v4828 = vadd.f32 %v4539, %v4827
        %v4829 = vpop.f32.mrf.mxu0
        %4830 = vmatprep.mubr.bf16.mxu0 %v4120
        %4831 = vmatmul.mubr.bf16.gmra.mxu0 %v4119
        %v4832 = vpop.f32.mrf.mxu0
        %v4833 = vadd.f32 %v4544, %v4832
        %v4834 = vpop.f32.mrf.mxu0
        %v4835 = vpop.f32.mrf.mxu0
        %v4836 = vadd.f32 %v4547, %v4835
        %v4837 = vpop.f32.mrf.mxu0
        %4838 = vmatprep.mubr.bf16.mxu0 %v4124
        %4839 = vmatmul.mubr.bf16.gmra.mxu0 %v4123
        %v4840 = vpop.f32.mrf.mxu0
        %v4841 = vadd.f32 %v4552, %v4840
        %v4842 = vpop.f32.mrf.mxu0
        %v4843 = vpop.f32.mrf.mxu0
        %v4844 = vadd.f32 %v4555, %v4843
        %v4845 = vpop.f32.mrf.mxu0
        %4846 = vmatprep.mubr.bf16.mxu0 %v4128
        %4847 = vmatmul.mubr.bf16.gmra.mxu0 %v4127
        %v4848 = vpop.f32.mrf.mxu0
        %v4849 = vadd.f32 %v4560, %v4848
        %v4850 = vpop.f32.mrf.mxu0
        %v4851 = vpop.f32.mrf.mxu0
        %v4852 = vadd.f32 %v4563, %v4851
        %v4853 = vpop.f32.mrf.mxu0
        %4854 = vmatprep.mubr.bf16.mxu0 %v4132
        %4855 = vmatmul.mubr.bf16.gmra.mxu0 %v4131
        %v4856 = vpop.f32.mrf.mxu0
        %v4857 = vadd.f32 %v4568, %v4856
        %v4858 = vpop.f32.mrf.mxu0
        %v4859 = vpop.f32.mrf.mxu0
        %v4860 = vadd.f32 %v4571, %v4859
        %v4861 = vpop.f32.mrf.mxu0
        %4862 = vmatprep.mubr.bf16.mxu0 %v4136
        %4863 = vmatmul.mubr.bf16.gmra.mxu0 %v4135
        %v4864 = vpop.f32.mrf.mxu0
        %v4865 = vadd.f32 %v4576, %v4864
        %v4866 = vpop.f32.mrf.mxu0
        %v4867 = vpop.f32.mrf.mxu0
        %v4868 = vadd.f32 %v4579, %v4867
        %v4869 = vpop.f32.mrf.mxu0
        %4870 = vmatprep.mubr.bf16.mxu0 %v4140
        %4871 = vmatmul.mubr.bf16.gmra.mxu0 %v4139
        %v4872 = vpop.f32.mrf.mxu0
        %v4873 = vadd.f32 %v4584, %v4872
        %v4874 = vpop.f32.mrf.mxu0
        %v4875 = vpop.f32.mrf.mxu0
        %v4876 = vadd.f32 %v4587, %v4875
        %v4877 = vpop.f32.mrf.mxu0
        %4878 = vmatprep.mubr.bf16.mxu0 %v4144
        %4879 = vmatmul.mubr.bf16.gmra.mxu0 %v4143
        %v4880 = vpop.f32.mrf.mxu0
        %v4881 = vadd.f32 %v4592, %v4880
        %v4882 = vpop.f32.mrf.mxu0
        %v4883 = vpop.f32.mrf.mxu0
        %v4884 = vadd.f32 %v4595, %v4883
        %v4885 = vpop.f32.mrf.mxu0
        %4886 = vmatprep.mubr.bf16.mxu0 %v4148
        %4887 = vmatmul.mubr.bf16.gmra.mxu0 %v4147
        %v4888 = vpop.f32.mrf.mxu0
        %v4889 = vadd.f32 %v4600, %v4888
        %v4890 = vpop.f32.mrf.mxu0
        %v4891 = vpop.f32.mrf.mxu0
        %v4892 = vadd.f32 %v4603, %v4891
        %v4893 = vpop.f32.mrf.mxu0
        %4894 = vmatprep.mubr.bf16.mxu0 %v4152
        %4895 = vmatmul.mubr.bf16.gmra.mxu0 %v4151
        %v4896 = vpop.f32.mrf.mxu0
        %v4897 = vadd.f32 %v4608, %v4896
        %v4898 = vpop.f32.mrf.mxu0
        %v4899 = vpop.f32.mrf.mxu0
        %v4900 = vadd.f32 %v4611, %v4899
        %v4901 = vpop.f32.mrf.mxu0
        %4902 = vmatprep.mubr.bf16.mxu0 %v4156
        %4903 = vmatmul.mubr.bf16.gmra.mxu0 %v4155
        %v4904 = vpop.f32.mrf.mxu0
        %v4905 = vadd.f32 %v4616, %v4904
        %v4906 = vpop.f32.mrf.mxu0
        %v4907 = vpop.f32.mrf.mxu0
        %v4908 = vadd.f32 %v4619, %v4907
        %v4909 = vpop.f32.mrf.mxu0
        %4910 = vmatprep.mubr.bf16.mxu0 %v4160
        %4911 = vmatmul.mubr.bf16.gmra.mxu0 %v4159
        %v4912 = vpop.f32.mrf.mxu0
        %v4913 = vadd.f32 %v4624, %v4912
        %v4914 = vpop.f32.mrf.mxu0
        %v4915 = vpop.f32.mrf.mxu0
        %v4916 = vadd.f32 %v4627, %v4915
        %v4917 = vpop.f32.mrf.mxu0
        %4918 = vmatprep.mubr.bf16.mxu0 %v4164
        %4919 = vmatmul.mubr.bf16.gmra.mxu0 %v4163
        %v4920 = vpop.f32.mrf.mxu0
        %v4921 = vadd.f32 %v4632, %v4920
        %v4922 = vpop.f32.mrf.mxu0
        %v4923 = vpop.f32.mrf.mxu0
        %v4924 = vadd.f32 %v4635, %v4923
        %v4925 = vpop.f32.mrf.mxu0
        %4926 = vmatprep.mubr.bf16.mxu0 %v4168
        %4927 = vmatmul.mubr.bf16.gmra.mxu0 %v4167
        %v4928 = vpop.f32.mrf.mxu0
        %v4929 = vadd.f32 %v4640, %v4928
        %v4930 = vpop.f32.mrf.mxu0
        %v4931 = vpop.f32.mrf.mxu0
        %v4932 = vadd.f32 %v4643, %v4931
        %v4933 = vpop.f32.mrf.mxu0
        %4934 = vmatprep.mubr.bf16.mxu0 %v4172
        %4935 = vmatmul.mubr.bf16.gmra.mxu0 %v4171
        %v4936 = vpop.f32.mrf.mxu0
        %v4937 = vadd.f32 %v4648, %v4936
        %v4938 = vpop.f32.mrf.mxu0
        %v4939 = vpop.f32.mrf.mxu0
        %v4940 = vadd.f32 %v4651, %v4939
        %v4941 = vpop.f32.mrf.mxu0
        %4942 = vmatprep.mubr.bf16.mxu0 %v4176
        %4943 = vmatmul.mubr.bf16.gmra.mxu0 %v4175
        %v4944 = vpop.f32.mrf.mxu0
        %v4945 = vadd.f32 %v4656, %v4944
        %v4946 = vpop.f32.mrf.mxu0
        %v4947 = vpop.f32.mrf.mxu0
        %v4948 = vadd.f32 %v4659, %v4947
        %v4949 = vpop.f32.mrf.mxu0
        %4950 = vmatprep.mubr.bf16.mxu0 %v4180
        %4951 = vmatmul.mubr.bf16.gmra.mxu0 %v4179
        %v4952 = vpop.f32.mrf.mxu0
        %v4953 = vadd.f32 %v4664, %v4952
        %v4954 = vpop.f32.mrf.mxu0
        %v4955 = vpop.f32.mrf.mxu0
        %v4956 = vadd.f32 %v4667, %v4955
        %v4957 = vpop.f32.mrf.mxu0
        %4958 = vmatprep.mubr.bf16.mxu0 %v4184
        %4959 = vmatmul.mubr.bf16.gmra.mxu0 %v4183
        %v4960 = vpop.f32.mrf.mxu0
        %v4961 = vadd.f32 %v4672, %v4960
        %v4962 = vpop.f32.mrf.mxu0
        %v4963 = vpop.f32.mrf.mxu0
        %v4964 = vadd.f32 %v4675, %v4963
        %v4965 = vpop.f32.mrf.mxu0
        %4966 = vmatprep.mubr.bf16.mxu0 %v4188
        %4967 = vmatmul.mubr.bf16.gmra.mxu0 %v4187
        %v4968 = vpop.f32.mrf.mxu0
        %v4969 = vadd.f32 %v4680, %v4968
        %v4970 = vpop.f32.mrf.mxu0
        %v4971 = vpop.f32.mrf.mxu0
        %v4972 = vadd.f32 %v4683, %v4971
        %v4973 = vpop.f32.mrf.mxu0
        %4974 = vmatprep.mubr.bf16.mxu0 %v4192
        %4975 = vmatmul.mubr.bf16.gmra.mxu0 %v4191
        %v4976 = vpop.f32.mrf.mxu0
        %v4977 = vadd.f32 %v4688, %v4976
        %v4978 = vpop.f32.mrf.mxu0
        %v4979 = vpop.f32.mrf.mxu0
        %v4980 = vadd.f32 %v4691, %v4979
        %v4981 = vpop.f32.mrf.mxu0
        %4982 = vmatprep.mubr.bf16.mxu0 %v4196
        %4983 = vmatmul.mubr.bf16.gmra.mxu0 %v4195
        %v4984 = vpop.f32.mrf.mxu0
        %v4985 = vadd.f32 %v4696, %v4984
        %v4986 = vpop.f32.mrf.mxu0
        %v4987 = vpop.f32.mrf.mxu0
        %v4988 = vadd.f32 %v4699, %v4987
        %v4989 = vpop.f32.mrf.mxu0
        %4990 = vmatprep.mubr.bf16.mxu0 %v4200
        %4991 = vmatmul.mubr.bf16.gmra.mxu0 %v4199
        %v4992 = vpop.f32.mrf.mxu0
        %v4993 = vadd.f32 %v4704, %v4992
        %v4994 = vpop.f32.mrf.mxu0
        %v4995 = vpop.f32.mrf.mxu0
        %v4996 = vadd.f32 %v4707, %v4995
        %v4997 = vpop.f32.mrf.mxu0
        %4998 = vmatprep.mubr.bf16.mxu0 %v4204
        %4999 = vmatmul.mubr.bf16.gmra.mxu0 %v4203
        %v5000 = vpop.f32.mrf.mxu0
        %v5001 = vadd.f32 %v4712, %v5000
        %v5002 = vpop.f32.mrf.mxu0
        %v5003 = vpop.f32.mrf.mxu0
        %v5004 = vadd.f32 %v4715, %v5003
        %v5005 = vpop.f32.mrf.mxu0
        %5006 = vmatprep.mubr.bf16.mxu0 %v4208
        %5007 = vmatmul.mubr.bf16.gmra.mxu0 %v4207
        %v5008 = vpop.f32.mrf.mxu0
        %v5009 = vadd.f32 %v4720, %v5008
        %v5010 = vpop.f32.mrf.mxu0
        %v5011 = vpop.f32.mrf.mxu0
        %v5012 = vadd.f32 %v4723, %v5011
        %v5013 = vpop.f32.mrf.mxu0
        %5014 = vmatprep.mubr.bf16.mxu0 %v4212
        %5015 = vmatmul.mubr.bf16.gmra.mxu0 %v4211
        %v5016 = vpop.f32.mrf.mxu0
        %v5017 = vadd.f32 %v4728, %v5016
        %v5018 = vpop.f32.mrf.mxu0
        %v5019 = vpop.f32.mrf.mxu0
        %v5020 = vadd.f32 %v4731, %v5019
        %v5021 = vpop.f32.mrf.mxu0
        %5022 = vmatprep.mubr.bf16.mxu0 %v4216
        %5023 = vmatmul.mubr.bf16.gmra.mxu0 %v4215
        %v5024 = vpop.f32.mrf.mxu0
        %v5025 = vadd.f32 %v4736, %v5024
        %v5026 = vpop.f32.mrf.mxu0
        %v5027 = vpop.f32.mrf.mxu0
        %v5028 = vadd.f32 %v4739, %v5027
        %v5029 = vpop.f32.mrf.mxu0
        %5030 = vmatprep.mubr.bf16.mxu0 %v4220
        %5031 = vmatmul.mubr.bf16.gmra.mxu0 %v4219
        %v5032 = vpop.f32.mrf.mxu0
        %v5033 = vadd.f32 %v4744, %v5032
        %v5034 = vpop.f32.mrf.mxu0
        %v5035 = vpop.f32.mrf.mxu0
        %v5036 = vadd.f32 %v4747, %v5035
        %v5037 = vpop.f32.mrf.mxu0
        %5038 = vmatprep.mubr.bf16.mxu0 %v4224
        %5039 = vmatmul.mubr.bf16.gmra.mxu0 %v4223
        %v5040 = vpop.f32.mrf.mxu0
        %v5041 = vadd.f32 %v4752, %v5040
        %v5042 = vpop.f32.mrf.mxu0
        %v5043 = vpop.f32.mrf.mxu0
        %v5044 = vadd.f32 %v4755, %v5043
        %v5045 = vpop.f32.mrf.mxu0
        %5046 = vmatprep.mubr.bf16.mxu0 %v4228
        %5047 = vmatmul.mubr.bf16.gmra.mxu0 %v4227
        %v5048 = vpop.f32.mrf.mxu0
        %v5049 = vadd.f32 %v4760, %v5048
        %v5050 = vpop.f32.mrf.mxu0
        %v5051 = vpop.f32.mrf.mxu0
        %v5052 = vadd.f32 %v4763, %v5051
        %v5053 = vpop.f32.mrf.mxu0
        %5054 = vmatprep.mubr.bf16.mxu0 %v4232
        %5055 = vmatmul.mubr.bf16.gmra.mxu0 %v4231
        %v5056 = vpop.f32.mrf.mxu0
        %v5057 = vadd.f32 %v4768, %v5056
        %v5058 = vpop.f32.mrf.mxu0
        %v5059 = vpop.f32.mrf.mxu0
        %v5060 = vadd.f32 %v4771, %v5059
        %v5061 = vpop.f32.mrf.mxu0
        %5062 = vmatprep.mubr.bf16.mxu0 %v4236
        %5063 = vmatmul.mubr.bf16.gmra.mxu0 %v4235
        %v5064 = vpop.f32.mrf.mxu0
        %v5065 = vadd.f32 %v4776, %v5064
        %v5066 = vpop.f32.mrf.mxu0
        %v5067 = vpop.f32.mrf.mxu0
        %v5068 = vadd.f32 %v4779, %v5067
        %v5069 = vpop.f32.mrf.mxu0
        %5070 = vdwg.mxu0
        %v5071 = vpack.c.bf16 %v4820, %v4817
        %v5072 = vpack.c.bf16 %v4828, %v4825
        %v5073 = vpack.c.bf16 %v4836, %v4833
        %v5074 = vpack.c.bf16 %v4844, %v4841
        %v5075 = vpack.c.bf16 %v4852, %v4849
        %v5076 = vpack.c.bf16 %v4860, %v4857
        %v5077 = vpack.c.bf16 %v4868, %v4865
        %v5078 = vpack.c.bf16 %v4876, %v4873
        %v5079 = vpack.c.bf16 %v4884, %v4881
        %v5080 = vpack.c.bf16 %v4892, %v4889
        %v5081 = vpack.c.bf16 %v4900, %v4897
        %v5082 = vpack.c.bf16 %v4908, %v4905
        %v5083 = vpack.c.bf16 %v4916, %v4913
        %v5084 = vpack.c.bf16 %v4924, %v4921
        %v5085 = vpack.c.bf16 %v4932, %v4929
        %v5086 = vpack.c.bf16 %v4940, %v4937
        %v5087 = vpack.c.bf16 %v4948, %v4945
        %v5088 = vpack.c.bf16 %v4956, %v4953
        %v5089 = vpack.c.bf16 %v4964, %v4961
        %v5090 = vpack.c.bf16 %v4972, %v4969
        %v5091 = vpack.c.bf16 %v4980, %v4977
        %v5092 = vpack.c.bf16 %v4988, %v4985
        %v5093 = vpack.c.bf16 %v4996, %v4993
        %v5094 = vpack.c.bf16 %v5004, %v5001
        %v5095 = vpack.c.bf16 %v5012, %v5009
        %v5096 = vpack.c.bf16 %v5020, %v5017
        %v5097 = vpack.c.bf16 %v5028, %v5025
        %v5098 = vpack.c.bf16 %v5036, %v5033
        %v5099 = vpack.c.bf16 %v5044, %v5041
        %v5100 = vpack.c.bf16 %v5052, %v5049
        %v5101 = vpack.c.bf16 %v5060, %v5057
        %v5102 = vpack.c.bf16 %v5068, %v5065
        %v5103 = vld [vmem:[%s2] sm:$0xff]
        %v5104 = vld [vmem:[%s2 + $0x8] sm:$0xff]
        %v5105 = vld [vmem:[%s2 + $0x10] sm:$0xff]
        %v5106 = vld [vmem:[%s2 + $0x18] sm:$0xff]
        %v5107 = vld [vmem:[%s2 + $0x20] sm:$0xff]
        %v5108 = vld [vmem:[%s2 + $0x28] sm:$0xff]
        %v5109 = vld [vmem:[%s2 + $0x30] sm:$0xff]
        %v5110 = vld [vmem:[%s2 + $0x38] sm:$0xff]
        %v5111 = vld [vmem:[%s2 + $0x40] sm:$0xff]
        %v5112 = vld [vmem:[%s2 + $0x48] sm:$0xff]
        %v5113 = vld [vmem:[%s2 + $0x50] sm:$0xff]
        %v5114 = vld [vmem:[%s2 + $0x58] sm:$0xff]
        %v5115 = vld [vmem:[%s2 + $0x60] sm:$0xff]
        %v5116 = vld [vmem:[%s2 + $0x68] sm:$0xff]
        %v5117 = vld [vmem:[%s2 + $0x70] sm:$0xff]
        %v5118 = vld [vmem:[%s2 + $0x78] sm:$0xff]
        %v5119 = vld [vmem:[%s2 + $0x80] sm:$0xff]
        %v5120 = vld [vmem:[%s2 + $0x88] sm:$0xff]
        %v5121 = vld [vmem:[%s2 + $0x90] sm:$0xff]
        %v5122 = vld [vmem:[%s2 + $0x98] sm:$0xff]
        %v5123 = vld [vmem:[%s2 + $0xa0] sm:$0xff]
        %v5124 = vld [vmem:[%s2 + $0xa8] sm:$0xff]
        %v5125 = vld [vmem:[%s2 + $0xb0] sm:$0xff]
        %v5126 = vld [vmem:[%s2 + $0xb8] sm:$0xff]
        %v5127 = vld [vmem:[%s2 + $0xc0] sm:$0xff]
        %v5128 = vld [vmem:[%s2 + $0xc8] sm:$0xff]
        %v5129 = vld [vmem:[%s2 + $0xd0] sm:$0xff]
        %v5130 = vld [vmem:[%s2 + $0xd8] sm:$0xff]
        %v5131 = vld [vmem:[%s2 + $0xe0] sm:$0xff]
        %v5132 = vld [vmem:[%s2 + $0xe8] sm:$0xff]
        %v5133 = vld [vmem:[%s2 + $0xf0] sm:$0xff]
        %v5134 = vld [vmem:[%s2 + $0xf8] sm:$0xff]
        %v5135 = vld [vmem:[%s3] sm:$0xf]
        %v5137 = vlaneseq
        %v5138 = vshrl.u32 %v5137, 7
        %v5139 = vsub.s32 0, %v5138
        %v5140 = vrot.slane %v5135, %v5139
        %v5141 = vlaneseq
        %v5142 = vshrl.u32 %v5141, 7
        %v5143 = vsub.s32 1, %v5142
        %v5144 = vrot.slane %v5135, %v5143
        %v5145 = vlaneseq
        %v5146 = vshrl.u32 %v5145, 7
        %v5147 = vsub.s32 2, %v5146
        %v5148 = vrot.slane %v5135, %v5147
        %v5149 = vlaneseq
        %v5150 = vshrl.u32 %v5149, 7
        %v5151 = vsub.s32 3, %v5150
        %v5152 = vrot.slane %v5135, %v5151
        %v5189 = vunpack.c.l.b16 %v5103
        %v5190 = vunpack.c.h.b16 %v5103
        %v5191 = vunpack.c.l.b16 %v5104
        %v5192 = vunpack.c.h.b16 %v5104
        %v5193 = vunpack.c.l.b16 %v5105
        %v5194 = vunpack.c.h.b16 %v5105
        %v5195 = vunpack.c.l.b16 %v5106
        %v5196 = vunpack.c.h.b16 %v5106
        %v5197 = vunpack.c.l.b16 %v5107
        %v5198 = vunpack.c.h.b16 %v5107
        %v5199 = vunpack.c.l.b16 %v5108
        %v5200 = vunpack.c.h.b16 %v5108
        %v5201 = vunpack.c.l.b16 %v5109
        %v5202 = vunpack.c.h.b16 %v5109
        %v5203 = vunpack.c.l.b16 %v5110
        %v5204 = vunpack.c.h.b16 %v5110
        %v5205 = vunpack.c.l.b16 %v5111
        %v5206 = vunpack.c.h.b16 %v5111
        %v5207 = vunpack.c.l.b16 %v5112
        %v5208 = vunpack.c.h.b16 %v5112
        %v5209 = vunpack.c.l.b16 %v5113
        %v5210 = vunpack.c.h.b16 %v5113
        %v5211 = vunpack.c.l.b16 %v5114
        %v5212 = vunpack.c.h.b16 %v5114
        %v5213 = vunpack.c.l.b16 %v5115
        %v5214 = vunpack.c.h.b16 %v5115
        %v5215 = vunpack.c.l.b16 %v5116
        %v5216 = vunpack.c.h.b16 %v5116
        %v5217 = vunpack.c.l.b16 %v5117
        %v5218 = vunpack.c.h.b16 %v5117
        %v5219 = vunpack.c.l.b16 %v5118
        %v5220 = vunpack.c.h.b16 %v5118
        %v5221 = vunpack.c.l.b16 %v5119
        %v5222 = vunpack.c.h.b16 %v5119
        %v5223 = vunpack.c.l.b16 %v5120
        %v5224 = vunpack.c.h.b16 %v5120
        %v5225 = vunpack.c.l.b16 %v5121
        %v5226 = vunpack.c.h.b16 %v5121
        %v5227 = vunpack.c.l.b16 %v5122
        %v5228 = vunpack.c.h.b16 %v5122
        %v5229 = vunpack.c.l.b16 %v5123
        %v5230 = vunpack.c.h.b16 %v5123
        %v5231 = vunpack.c.l.b16 %v5124
        %v5232 = vunpack.c.h.b16 %v5124
        %v5233 = vunpack.c.l.b16 %v5125
        %v5234 = vunpack.c.h.b16 %v5125
        %v5235 = vunpack.c.l.b16 %v5126
        %v5236 = vunpack.c.h.b16 %v5126
        %v5237 = vunpack.c.l.b16 %v5127
        %v5238 = vunpack.c.h.b16 %v5127
        %v5239 = vunpack.c.l.b16 %v5128
        %v5240 = vunpack.c.h.b16 %v5128
        %v5241 = vunpack.c.l.b16 %v5129
        %v5242 = vunpack.c.h.b16 %v5129
        %v5243 = vunpack.c.l.b16 %v5130
        %v5244 = vunpack.c.h.b16 %v5130
        %v5245 = vunpack.c.l.b16 %v5131
        %v5246 = vunpack.c.h.b16 %v5131
        %v5247 = vunpack.c.l.b16 %v5132
        %v5248 = vunpack.c.h.b16 %v5132
        %v5249 = vunpack.c.l.b16 %v5133
        %v5250 = vunpack.c.h.b16 %v5133
        %v5251 = vunpack.c.l.b16 %v5134
        %v5252 = vunpack.c.h.b16 %v5134
        %v5253 = vpack.c.b16 %v5193, %v5189
        %v5254 = vpack.c.b16 %v5194, %v5190
        %v5255 = vpack.c.b16 %v5195, %v5191
        %v5256 = vpack.c.b16 %v5196, %v5192
        %v5257 = vpack.c.b16 %v5201, %v5197
        %v5258 = vpack.c.b16 %v5202, %v5198
        %v5259 = vpack.c.b16 %v5203, %v5199
        %v5260 = vpack.c.b16 %v5204, %v5200
        %v5261 = vpack.c.b16 %v5209, %v5205
        %v5262 = vpack.c.b16 %v5210, %v5206
        %v5263 = vpack.c.b16 %v5211, %v5207
        %v5264 = vpack.c.b16 %v5212, %v5208
        %v5265 = vpack.c.b16 %v5217, %v5213
        %v5266 = vpack.c.b16 %v5218, %v5214
        %v5267 = vpack.c.b16 %v5219, %v5215
        %v5268 = vpack.c.b16 %v5220, %v5216
        %v5269 = vpack.c.b16 %v5225, %v5221
        %v5270 = vpack.c.b16 %v5226, %v5222
        %v5271 = vpack.c.b16 %v5227, %v5223
        %v5272 = vpack.c.b16 %v5228, %v5224
        %v5273 = vpack.c.b16 %v5233, %v5229
        %v5274 = vpack.c.b16 %v5234, %v5230
        %v5275 = vpack.c.b16 %v5235, %v5231
        %v5276 = vpack.c.b16 %v5236, %v5232
        %v5277 = vpack.c.b16 %v5241, %v5237
        %v5278 = vpack.c.b16 %v5242, %v5238
        %v5279 = vpack.c.b16 %v5243, %v5239
        %v5280 = vpack.c.b16 %v5244, %v5240
        %v5281 = vpack.c.b16 %v5249, %v5245
        %v5282 = vpack.c.b16 %v5250, %v5246
        %v5283 = vpack.c.b16 %v5251, %v5247
        %v5284 = vpack.c.b16 %v5252, %v5248
        %5317 = vmatprep.subr.bf16.mxu0 %v5282
        %5318 = vmatpush1.bf16.msra.mxu0 %v5281
        %5319 = vmatprep.subr.bf16.mxu0 %v5278
        %5320 = vmatpush1.bf16.msra.mxu0 %v5277
        %5321 = vmatprep.subr.bf16.mxu0 %v5274
        %5322 = vmatpush1.bf16.msra.mxu0 %v5273
        %5323 = vmatprep.subr.bf16.mxu0 %v5270
        %5324 = vmatpush1.bf16.msra.mxu0 %v5269
        %5325 = vmatprep.subr.bf16.mxu0 %v5266
        %5326 = vmatpush1.bf16.msra.mxu0 %v5265
        %5327 = vmatprep.subr.bf16.mxu0 %v5262
        %5328 = vmatpush1.bf16.msra.mxu0 %v5261
        %5329 = vmatprep.subr.bf16.mxu0 %v5258
        %5330 = vmatpush1.bf16.msra.mxu0 %v5257
        %5331 = vmatprep.subr.bf16.mxu0 %v5254
        %5332 = vmatpush1.bf16.msra.mxu0 %v5253
        %5333 = vmatprep.subr.bf16.mxu0 0
        %5334 = vmatpush2.bf16.msra.mxu0 0
        %5335 = vmatprep.subr.bf16.mxu0 0
        %5336 = vmatpush2.bf16.msra.mxu0 0
        %5337 = vmatprep.subr.bf16.mxu0 0
        %5338 = vmatpush2.bf16.msra.mxu0 0
        %5339 = vmatprep.subr.bf16.mxu0 0
        %5340 = vmatpush2.bf16.msra.mxu0 0
        %5341 = vmatprep.subr.bf16.mxu0 0
        %5342 = vmatpush2.bf16.msra.mxu0 0
        %5343 = vmatprep.subr.bf16.mxu0 0
        %5344 = vmatpush2.bf16.msra.mxu0 0
        %5345 = vmatprep.subr.bf16.mxu0 0
        %5346 = vmatpush2.bf16.msra.mxu0 0
        %5347 = vmatprep.subr.bf16.mxu0 0
        %5348 = vmatpush2.bf16.msra.mxu0 0
        %5349 = vmatprep.mubr.bf16.mxu0 0
        %5350 = vmatmul.mubr.bf16.gmra.mxu0 %v5071
        %v5351 = vpop.f32.mrf.mxu0
        %v5352 = vadd.f32 %v5140, %v5351
        %v5353 = vpop.f32.mrf.mxu0
        %v5354 = vadd.f32 %v5144, %v5353
        %v5355 = vpop.f32.mrf.mxu0
        %v5356 = vadd.f32 %v5140, %v5355
        %v5357 = vpop.f32.mrf.mxu0
        %v5358 = vadd.f32 %v5144, %v5357
        %5359 = vmatprep.mubr.bf16.mxu0 0
        %5360 = vmatmul.mubr.bf16.gmra.mxu0 %v5072
        %v5361 = vpop.f32.mrf.mxu0
        %v5362 = vadd.f32 %v5140, %v5361
        %v5363 = vpop.f32.mrf.mxu0
        %v5364 = vadd.f32 %v5144, %v5363
        %v5365 = vpop.f32.mrf.mxu0
        %v5366 = vadd.f32 %v5140, %v5365
        %v5367 = vpop.f32.mrf.mxu0
        %v5368 = vadd.f32 %v5144, %v5367
        %5369 = vmatprep.mubr.bf16.mxu0 0
        %5370 = vmatmul.mubr.bf16.gmra.mxu0 %v5073
        %v5371 = vpop.f32.mrf.mxu0
        %v5372 = vadd.f32 %v5140, %v5371
        %v5373 = vpop.f32.mrf.mxu0
        %v5374 = vadd.f32 %v5144, %v5373
        %v5375 = vpop.f32.mrf.mxu0
        %v5376 = vadd.f32 %v5140, %v5375
        %v5377 = vpop.f32.mrf.mxu0
        %v5378 = vadd.f32 %v5144, %v5377
        %5379 = vmatprep.mubr.bf16.mxu0 0
        %5380 = vmatmul.mubr.bf16.gmra.mxu0 %v5074
        %v5381 = vpop.f32.mrf.mxu0
        %v5382 = vadd.f32 %v5140, %v5381
        %v5383 = vpop.f32.mrf.mxu0
        %v5384 = vadd.f32 %v5144, %v5383
        %v5385 = vpop.f32.mrf.mxu0
        %v5386 = vadd.f32 %v5140, %v5385
        %v5387 = vpop.f32.mrf.mxu0
        %v5388 = vadd.f32 %v5144, %v5387
        %5389 = vmatprep.mubr.bf16.mxu0 0
        %5390 = vmatmul.mubr.bf16.gmra.mxu0 %v5075
        %v5391 = vpop.f32.mrf.mxu0
        %v5392 = vadd.f32 %v5140, %v5391
        %v5393 = vpop.f32.mrf.mxu0
        %v5394 = vadd.f32 %v5144, %v5393
        %v5395 = vpop.f32.mrf.mxu0
        %v5396 = vadd.f32 %v5140, %v5395
        %v5397 = vpop.f32.mrf.mxu0
        %v5398 = vadd.f32 %v5144, %v5397
        %5399 = vmatprep.mubr.bf16.mxu0 0
        %5400 = vmatmul.mubr.bf16.gmra.mxu0 %v5076
        %v5401 = vpop.f32.mrf.mxu0
        %v5402 = vadd.f32 %v5140, %v5401
        %v5403 = vpop.f32.mrf.mxu0
        %v5404 = vadd.f32 %v5144, %v5403
        %v5405 = vpop.f32.mrf.mxu0
        %v5406 = vadd.f32 %v5140, %v5405
        %v5407 = vpop.f32.mrf.mxu0
        %v5408 = vadd.f32 %v5144, %v5407
        %5409 = vmatprep.mubr.bf16.mxu0 0
        %5410 = vmatmul.mubr.bf16.gmra.mxu0 %v5077
        %v5411 = vpop.f32.mrf.mxu0
        %v5412 = vadd.f32 %v5140, %v5411
        %v5413 = vpop.f32.mrf.mxu0
        %v5414 = vadd.f32 %v5144, %v5413
        %v5415 = vpop.f32.mrf.mxu0
        %v5416 = vadd.f32 %v5140, %v5415
        %v5417 = vpop.f32.mrf.mxu0
        %v5418 = vadd.f32 %v5144, %v5417
        %5419 = vmatprep.mubr.bf16.mxu0 0
        %5420 = vmatmul.mubr.bf16.gmra.mxu0 %v5078
        %v5421 = vpop.f32.mrf.mxu0
        %v5422 = vadd.f32 %v5140, %v5421
        %v5423 = vpop.f32.mrf.mxu0
        %v5424 = vadd.f32 %v5144, %v5423
        %v5425 = vpop.f32.mrf.mxu0
        %v5426 = vadd.f32 %v5140, %v5425
        %v5427 = vpop.f32.mrf.mxu0
        %v5428 = vadd.f32 %v5144, %v5427
        %5429 = vmatprep.mubr.bf16.mxu0 0
        %5430 = vmatmul.mubr.bf16.gmra.mxu0 %v5079
        %v5431 = vpop.f32.mrf.mxu0
        %v5432 = vadd.f32 %v5140, %v5431
        %v5433 = vpop.f32.mrf.mxu0
        %v5434 = vadd.f32 %v5144, %v5433
        %v5435 = vpop.f32.mrf.mxu0
        %v5436 = vadd.f32 %v5140, %v5435
        %v5437 = vpop.f32.mrf.mxu0
        %v5438 = vadd.f32 %v5144, %v5437
        %5439 = vmatprep.mubr.bf16.mxu0 0
        %5440 = vmatmul.mubr.bf16.gmra.mxu0 %v5080
        %v5441 = vpop.f32.mrf.mxu0
        %v5442 = vadd.f32 %v5140, %v5441
        %v5443 = vpop.f32.mrf.mxu0
        %v5444 = vadd.f32 %v5144, %v5443
        %v5445 = vpop.f32.mrf.mxu0
        %v5446 = vadd.f32 %v5140, %v5445
        %v5447 = vpop.f32.mrf.mxu0
        %v5448 = vadd.f32 %v5144, %v5447
        %5449 = vmatprep.mubr.bf16.mxu0 0
        %5450 = vmatmul.mubr.bf16.gmra.mxu0 %v5081
        %v5451 = vpop.f32.mrf.mxu0
        %v5452 = vadd.f32 %v5140, %v5451
        %v5453 = vpop.f32.mrf.mxu0
        %v5454 = vadd.f32 %v5144, %v5453
        %v5455 = vpop.f32.mrf.mxu0
        %v5456 = vadd.f32 %v5140, %v5455
        %v5457 = vpop.f32.mrf.mxu0
        %v5458 = vadd.f32 %v5144, %v5457
        %5459 = vmatprep.mubr.bf16.mxu0 0
        %5460 = vmatmul.mubr.bf16.gmra.mxu0 %v5082
        %v5461 = vpop.f32.mrf.mxu0
        %v5462 = vadd.f32 %v5140, %v5461
        %v5463 = vpop.f32.mrf.mxu0
        %v5464 = vadd.f32 %v5144, %v5463
        %v5465 = vpop.f32.mrf.mxu0
        %v5466 = vadd.f32 %v5140, %v5465
        %v5467 = vpop.f32.mrf.mxu0
        %v5468 = vadd.f32 %v5144, %v5467
        %5469 = vmatprep.mubr.bf16.mxu0 0
        %5470 = vmatmul.mubr.bf16.gmra.mxu0 %v5083
        %v5471 = vpop.f32.mrf.mxu0
        %v5472 = vadd.f32 %v5140, %v5471
        %v5473 = vpop.f32.mrf.mxu0
        %v5474 = vadd.f32 %v5144, %v5473
        %v5475 = vpop.f32.mrf.mxu0
        %v5476 = vadd.f32 %v5140, %v5475
        %v5477 = vpop.f32.mrf.mxu0
        %v5478 = vadd.f32 %v5144, %v5477
        %5479 = vmatprep.mubr.bf16.mxu0 0
        %5480 = vmatmul.mubr.bf16.gmra.mxu0 %v5084
        %v5481 = vpop.f32.mrf.mxu0
        %v5482 = vadd.f32 %v5140, %v5481
        %v5483 = vpop.f32.mrf.mxu0
        %v5484 = vadd.f32 %v5144, %v5483
        %v5485 = vpop.f32.mrf.mxu0
        %v5486 = vadd.f32 %v5140, %v5485
        %v5487 = vpop.f32.mrf.mxu0
        %v5488 = vadd.f32 %v5144, %v5487
        %5489 = vmatprep.mubr.bf16.mxu0 0
        %5490 = vmatmul.mubr.bf16.gmra.mxu0 %v5085
        %v5491 = vpop.f32.mrf.mxu0
        %v5492 = vadd.f32 %v5140, %v5491
        %v5493 = vpop.f32.mrf.mxu0
        %v5494 = vadd.f32 %v5144, %v5493
        %v5495 = vpop.f32.mrf.mxu0
        %v5496 = vadd.f32 %v5140, %v5495
        %v5497 = vpop.f32.mrf.mxu0
        %v5498 = vadd.f32 %v5144, %v5497
        %5499 = vmatprep.mubr.bf16.mxu0 0
        %5500 = vmatmul.mubr.bf16.gmra.mxu0 %v5086
        %v5501 = vpop.f32.mrf.mxu0
        %v5502 = vadd.f32 %v5140, %v5501
        %v5503 = vpop.f32.mrf.mxu0
        %v5504 = vadd.f32 %v5144, %v5503
        %v5505 = vpop.f32.mrf.mxu0
        %v5506 = vadd.f32 %v5140, %v5505
        %v5507 = vpop.f32.mrf.mxu0
        %v5508 = vadd.f32 %v5144, %v5507
        %5509 = vmatprep.mubr.bf16.mxu0 0
        %5510 = vmatmul.mubr.bf16.gmra.mxu0 %v5087
        %v5511 = vpop.f32.mrf.mxu0
        %v5512 = vadd.f32 %v5140, %v5511
        %v5513 = vpop.f32.mrf.mxu0
        %v5514 = vadd.f32 %v5144, %v5513
        %v5515 = vpop.f32.mrf.mxu0
        %v5516 = vadd.f32 %v5140, %v5515
        %v5517 = vpop.f32.mrf.mxu0
        %v5518 = vadd.f32 %v5144, %v5517
        %5519 = vmatprep.mubr.bf16.mxu0 0
        %5520 = vmatmul.mubr.bf16.gmra.mxu0 %v5088
        %v5521 = vpop.f32.mrf.mxu0
        %v5522 = vadd.f32 %v5140, %v5521
        %v5523 = vpop.f32.mrf.mxu0
        %v5524 = vadd.f32 %v5144, %v5523
        %v5525 = vpop.f32.mrf.mxu0
        %v5526 = vadd.f32 %v5140, %v5525
        %v5527 = vpop.f32.mrf.mxu0
        %v5528 = vadd.f32 %v5144, %v5527
        %5529 = vmatprep.mubr.bf16.mxu0 0
        %5530 = vmatmul.mubr.bf16.gmra.mxu0 %v5089
        %v5531 = vpop.f32.mrf.mxu0
        %v5532 = vadd.f32 %v5140, %v5531
        %v5533 = vpop.f32.mrf.mxu0
        %v5534 = vadd.f32 %v5144, %v5533
        %v5535 = vpop.f32.mrf.mxu0
        %v5536 = vadd.f32 %v5140, %v5535
        %v5537 = vpop.f32.mrf.mxu0
        %v5538 = vadd.f32 %v5144, %v5537
        %5539 = vmatprep.mubr.bf16.mxu0 0
        %5540 = vmatmul.mubr.bf16.gmra.mxu0 %v5090
        %v5541 = vpop.f32.mrf.mxu0
        %v5542 = vadd.f32 %v5140, %v5541
        %v5543 = vpop.f32.mrf.mxu0
        %v5544 = vadd.f32 %v5144, %v5543
        %v5545 = vpop.f32.mrf.mxu0
        %v5546 = vadd.f32 %v5140, %v5545
        %v5547 = vpop.f32.mrf.mxu0
        %v5548 = vadd.f32 %v5144, %v5547
        %5549 = vmatprep.mubr.bf16.mxu0 0
        %5550 = vmatmul.mubr.bf16.gmra.mxu0 %v5091
        %v5551 = vpop.f32.mrf.mxu0
        %v5552 = vadd.f32 %v5140, %v5551
        %v5553 = vpop.f32.mrf.mxu0
        %v5554 = vadd.f32 %v5144, %v5553
        %v5555 = vpop.f32.mrf.mxu0
        %v5556 = vadd.f32 %v5140, %v5555
        %v5557 = vpop.f32.mrf.mxu0
        %v5558 = vadd.f32 %v5144, %v5557
        %5559 = vmatprep.mubr.bf16.mxu0 0
        %5560 = vmatmul.mubr.bf16.gmra.mxu0 %v5092
        %v5561 = vpop.f32.mrf.mxu0
        %v5562 = vadd.f32 %v5140, %v5561
        %v5563 = vpop.f32.mrf.mxu0
        %v5564 = vadd.f32 %v5144, %v5563
        %v5565 = vpop.f32.mrf.mxu0
        %v5566 = vadd.f32 %v5140, %v5565
        %v5567 = vpop.f32.mrf.mxu0
        %v5568 = vadd.f32 %v5144, %v5567
        %5569 = vmatprep.mubr.bf16.mxu0 0
        %5570 = vmatmul.mubr.bf16.gmra.mxu0 %v5093
        %v5571 = vpop.f32.mrf.mxu0
        %v5572 = vadd.f32 %v5140, %v5571
        %v5573 = vpop.f32.mrf.mxu0
        %v5574 = vadd.f32 %v5144, %v5573
        %v5575 = vpop.f32.mrf.mxu0
        %v5576 = vadd.f32 %v5140, %v5575
        %v5577 = vpop.f32.mrf.mxu0
        %v5578 = vadd.f32 %v5144, %v5577
        %5579 = vmatprep.mubr.bf16.mxu0 0
        %5580 = vmatmul.mubr.bf16.gmra.mxu0 %v5094
        %v5581 = vpop.f32.mrf.mxu0
        %v5582 = vadd.f32 %v5140, %v5581
        %v5583 = vpop.f32.mrf.mxu0
        %v5584 = vadd.f32 %v5144, %v5583
        %v5585 = vpop.f32.mrf.mxu0
        %v5586 = vadd.f32 %v5140, %v5585
        %v5587 = vpop.f32.mrf.mxu0
        %v5588 = vadd.f32 %v5144, %v5587
        %5589 = vmatprep.mubr.bf16.mxu0 0
        %5590 = vmatmul.mubr.bf16.gmra.mxu0 %v5095
        %v5591 = vpop.f32.mrf.mxu0
        %v5592 = vadd.f32 %v5140, %v5591
        %v5593 = vpop.f32.mrf.mxu0
        %v5594 = vadd.f32 %v5144, %v5593
        %v5595 = vpop.f32.mrf.mxu0
        %v5596 = vadd.f32 %v5140, %v5595
        %v5597 = vpop.f32.mrf.mxu0
        %v5598 = vadd.f32 %v5144, %v5597
        %5599 = vmatprep.mubr.bf16.mxu0 0
        %5600 = vmatmul.mubr.bf16.gmra.mxu0 %v5096
        %v5601 = vpop.f32.mrf.mxu0
        %v5602 = vadd.f32 %v5140, %v5601
        %v5603 = vpop.f32.mrf.mxu0
        %v5604 = vadd.f32 %v5144, %v5603
        %v5605 = vpop.f32.mrf.mxu0
        %v5606 = vadd.f32 %v5140, %v5605
        %v5607 = vpop.f32.mrf.mxu0
        %v5608 = vadd.f32 %v5144, %v5607
        %5609 = vmatprep.mubr.bf16.mxu0 0
        %5610 = vmatmul.mubr.bf16.gmra.mxu0 %v5097
        %v5611 = vpop.f32.mrf.mxu0
        %v5612 = vadd.f32 %v5140, %v5611
        %v5613 = vpop.f32.mrf.mxu0
        %v5614 = vadd.f32 %v5144, %v5613
        %v5615 = vpop.f32.mrf.mxu0
        %v5616 = vadd.f32 %v5140, %v5615
        %v5617 = vpop.f32.mrf.mxu0
        %v5618 = vadd.f32 %v5144, %v5617
        %5619 = vmatprep.mubr.bf16.mxu0 0
        %5620 = vmatmul.mubr.bf16.gmra.mxu0 %v5098
        %v5621 = vpop.f32.mrf.mxu0
        %v5622 = vadd.f32 %v5140, %v5621
        %v5623 = vpop.f32.mrf.mxu0
        %v5624 = vadd.f32 %v5144, %v5623
        %v5625 = vpop.f32.mrf.mxu0
        %v5626 = vadd.f32 %v5140, %v5625
        %v5627 = vpop.f32.mrf.mxu0
        %v5628 = vadd.f32 %v5144, %v5627
        %5629 = vmatprep.mubr.bf16.mxu0 0
        %5630 = vmatmul.mubr.bf16.gmra.mxu0 %v5099
        %v5631 = vpop.f32.mrf.mxu0
        %v5632 = vadd.f32 %v5140, %v5631
        %v5633 = vpop.f32.mrf.mxu0
        %v5634 = vadd.f32 %v5144, %v5633
        %v5635 = vpop.f32.mrf.mxu0
        %v5636 = vadd.f32 %v5140, %v5635
        %v5637 = vpop.f32.mrf.mxu0
        %v5638 = vadd.f32 %v5144, %v5637
        %5639 = vmatprep.mubr.bf16.mxu0 0
        %5640 = vmatmul.mubr.bf16.gmra.mxu0 %v5100
        %v5641 = vpop.f32.mrf.mxu0
        %v5642 = vadd.f32 %v5140, %v5641
        %v5643 = vpop.f32.mrf.mxu0
        %v5644 = vadd.f32 %v5144, %v5643
        %v5645 = vpop.f32.mrf.mxu0
        %v5646 = vadd.f32 %v5140, %v5645
        %v5647 = vpop.f32.mrf.mxu0
        %v5648 = vadd.f32 %v5144, %v5647
        %5649 = vmatprep.mubr.bf16.mxu0 0
        %5650 = vmatmul.mubr.bf16.gmra.mxu0 %v5101
        %v5651 = vpop.f32.mrf.mxu0
        %v5652 = vadd.f32 %v5140, %v5651
        %v5653 = vpop.f32.mrf.mxu0
        %v5654 = vadd.f32 %v5144, %v5653
        %v5655 = vpop.f32.mrf.mxu0
        %v5656 = vadd.f32 %v5140, %v5655
        %v5657 = vpop.f32.mrf.mxu0
        %v5658 = vadd.f32 %v5144, %v5657
        %5659 = vmatprep.mubr.bf16.mxu0 0
        %5660 = vmatmul.mubr.bf16.gmra.mxu0 %v5102
        %v5661 = vpop.f32.mrf.mxu0
        %v5662 = vadd.f32 %v5140, %v5661
        %v5663 = vpop.f32.mrf.mxu0
        %v5664 = vadd.f32 %v5144, %v5663
        %v5665 = vpop.f32.mrf.mxu0
        %v5666 = vadd.f32 %v5140, %v5665
        %v5667 = vpop.f32.mrf.mxu0
        %v5668 = vadd.f32 %v5144, %v5667
        %5669 = vdwg.mxu0
        %5670 = vmatprep.subr.bf16.mxu0 %v5284
        %5671 = vmatpush1.bf16.msra.mxu0 %v5283
        %5672 = vmatprep.subr.bf16.mxu0 %v5280
        %5673 = vmatpush1.bf16.msra.mxu0 %v5279
        %5674 = vmatprep.subr.bf16.mxu0 %v5276
        %5675 = vmatpush1.bf16.msra.mxu0 %v5275
        %5676 = vmatprep.subr.bf16.mxu0 %v5272
        %5677 = vmatpush1.bf16.msra.mxu0 %v5271
        %5678 = vmatprep.subr.bf16.mxu0 %v5268
        %5679 = vmatpush1.bf16.msra.mxu0 %v5267
        %5680 = vmatprep.subr.bf16.mxu0 %v5264
        %5681 = vmatpush1.bf16.msra.mxu0 %v5263
        %5682 = vmatprep.subr.bf16.mxu0 %v5260
        %5683 = vmatpush1.bf16.msra.mxu0 %v5259
        %5684 = vmatprep.subr.bf16.mxu0 %v5256
        %5685 = vmatpush1.bf16.msra.mxu0 %v5255
        %5686 = vmatprep.subr.bf16.mxu0 0
        %5687 = vmatpush2.bf16.msra.mxu0 0
        %5688 = vmatprep.subr.bf16.mxu0 0
        %5689 = vmatpush2.bf16.msra.mxu0 0
        %5690 = vmatprep.subr.bf16.mxu0 0
        %5691 = vmatpush2.bf16.msra.mxu0 0
        %5692 = vmatprep.subr.bf16.mxu0 0
        %5693 = vmatpush2.bf16.msra.mxu0 0
        %5694 = vmatprep.subr.bf16.mxu0 0
        %5695 = vmatpush2.bf16.msra.mxu0 0
        %5696 = vmatprep.subr.bf16.mxu0 0
        %5697 = vmatpush2.bf16.msra.mxu0 0
        %5698 = vmatprep.subr.bf16.mxu0 0
        %5699 = vmatpush2.bf16.msra.mxu0 0
        %5700 = vmatprep.subr.bf16.mxu0 0
        %5701 = vmatpush2.bf16.msra.mxu0 0
        %5702 = vmatprep.mubr.bf16.mxu0 0
        %5703 = vmatmul.mubr.bf16.gmra.mxu0 %v5071
        %v5704 = vpop.f32.mrf.mxu0
        %v5705 = vadd.f32 %v5148, %v5704
        %v5706 = vpop.f32.mrf.mxu0
        %v5707 = vadd.f32 %v5152, %v5706
        %v5708 = vpop.f32.mrf.mxu0
        %v5709 = vadd.f32 %v5148, %v5708
        %v5710 = vpop.f32.mrf.mxu0
        %v5711 = vadd.f32 %v5152, %v5710
        %5712 = vmatprep.mubr.bf16.mxu0 0
        %5713 = vmatmul.mubr.bf16.gmra.mxu0 %v5072
        %v5714 = vpop.f32.mrf.mxu0
        %v5715 = vadd.f32 %v5148, %v5714
        %v5716 = vpop.f32.mrf.mxu0
        %v5717 = vadd.f32 %v5152, %v5716
        %v5718 = vpop.f32.mrf.mxu0
        %v5719 = vadd.f32 %v5148, %v5718
        %v5720 = vpop.f32.mrf.mxu0
        %v5721 = vadd.f32 %v5152, %v5720
        %5722 = vmatprep.mubr.bf16.mxu0 0
        %5723 = vmatmul.mubr.bf16.gmra.mxu0 %v5073
        %v5724 = vpop.f32.mrf.mxu0
        %v5725 = vadd.f32 %v5148, %v5724
        %v5726 = vpop.f32.mrf.mxu0
        %v5727 = vadd.f32 %v5152, %v5726
        %v5728 = vpop.f32.mrf.mxu0
        %v5729 = vadd.f32 %v5148, %v5728
        %v5730 = vpop.f32.mrf.mxu0
        %v5731 = vadd.f32 %v5152, %v5730
        %5732 = vmatprep.mubr.bf16.mxu0 0
        %5733 = vmatmul.mubr.bf16.gmra.mxu0 %v5074
        %v5734 = vpop.f32.mrf.mxu0
        %v5735 = vadd.f32 %v5148, %v5734
        %v5736 = vpop.f32.mrf.mxu0
        %v5737 = vadd.f32 %v5152, %v5736
        %v5738 = vpop.f32.mrf.mxu0
        %v5739 = vadd.f32 %v5148, %v5738
        %v5740 = vpop.f32.mrf.mxu0
        %v5741 = vadd.f32 %v5152, %v5740
        %5742 = vmatprep.mubr.bf16.mxu0 0
        %5743 = vmatmul.mubr.bf16.gmra.mxu0 %v5075
        %v5744 = vpop.f32.mrf.mxu0
        %v5745 = vadd.f32 %v5148, %v5744
        %v5746 = vpop.f32.mrf.mxu0
        %v5747 = vadd.f32 %v5152, %v5746
        %v5748 = vpop.f32.mrf.mxu0
        %v5749 = vadd.f32 %v5148, %v5748
        %v5750 = vpop.f32.mrf.mxu0
        %v5751 = vadd.f32 %v5152, %v5750
        %5752 = vmatprep.mubr.bf16.mxu0 0
        %5753 = vmatmul.mubr.bf16.gmra.mxu0 %v5076
        %v5754 = vpop.f32.mrf.mxu0
        %v5755 = vadd.f32 %v5148, %v5754
        %v5756 = vpop.f32.mrf.mxu0
        %v5757 = vadd.f32 %v5152, %v5756
        %v5758 = vpop.f32.mrf.mxu0
        %v5759 = vadd.f32 %v5148, %v5758
        %v5760 = vpop.f32.mrf.mxu0
        %v5761 = vadd.f32 %v5152, %v5760
        %5762 = vmatprep.mubr.bf16.mxu0 0
        %5763 = vmatmul.mubr.bf16.gmra.mxu0 %v5077
        %v5764 = vpop.f32.mrf.mxu0
        %v5765 = vadd.f32 %v5148, %v5764
        %v5766 = vpop.f32.mrf.mxu0
        %v5767 = vadd.f32 %v5152, %v5766
        %v5768 = vpop.f32.mrf.mxu0
        %v5769 = vadd.f32 %v5148, %v5768
        %v5770 = vpop.f32.mrf.mxu0
        %v5771 = vadd.f32 %v5152, %v5770
        %5772 = vmatprep.mubr.bf16.mxu0 0
        %5773 = vmatmul.mubr.bf16.gmra.mxu0 %v5078
        %v5774 = vpop.f32.mrf.mxu0
        %v5775 = vadd.f32 %v5148, %v5774
        %v5776 = vpop.f32.mrf.mxu0
        %v5777 = vadd.f32 %v5152, %v5776
        %v5778 = vpop.f32.mrf.mxu0
        %v5779 = vadd.f32 %v5148, %v5778
        %v5780 = vpop.f32.mrf.mxu0
        %v5781 = vadd.f32 %v5152, %v5780
        %5782 = vmatprep.mubr.bf16.mxu0 0
        %5783 = vmatmul.mubr.bf16.gmra.mxu0 %v5079
        %v5784 = vpop.f32.mrf.mxu0
        %v5785 = vadd.f32 %v5148, %v5784
        %v5786 = vpop.f32.mrf.mxu0
        %v5787 = vadd.f32 %v5152, %v5786
        %v5788 = vpop.f32.mrf.mxu0
        %v5789 = vadd.f32 %v5148, %v5788
        %v5790 = vpop.f32.mrf.mxu0
        %v5791 = vadd.f32 %v5152, %v5790
        %5792 = vmatprep.mubr.bf16.mxu0 0
        %5793 = vmatmul.mubr.bf16.gmra.mxu0 %v5080
        %v5794 = vpop.f32.mrf.mxu0
        %v5795 = vadd.f32 %v5148, %v5794
        %v5796 = vpop.f32.mrf.mxu0
        %v5797 = vadd.f32 %v5152, %v5796
        %v5798 = vpop.f32.mrf.mxu0
        %v5799 = vadd.f32 %v5148, %v5798
        %v5800 = vpop.f32.mrf.mxu0
        %v5801 = vadd.f32 %v5152, %v5800
        %5802 = vmatprep.mubr.bf16.mxu0 0
        %5803 = vmatmul.mubr.bf16.gmra.mxu0 %v5081
        %v5804 = vpop.f32.mrf.mxu0
        %v5805 = vadd.f32 %v5148, %v5804
        %v5806 = vpop.f32.mrf.mxu0
        %v5807 = vadd.f32 %v5152, %v5806
        %v5808 = vpop.f32.mrf.mxu0
        %v5809 = vadd.f32 %v5148, %v5808
        %v5810 = vpop.f32.mrf.mxu0
        %v5811 = vadd.f32 %v5152, %v5810
        %5812 = vmatprep.mubr.bf16.mxu0 0
        %5813 = vmatmul.mubr.bf16.gmra.mxu0 %v5082
        %v5814 = vpop.f32.mrf.mxu0
        %v5815 = vadd.f32 %v5148, %v5814
        %v5816 = vpop.f32.mrf.mxu0
        %v5817 = vadd.f32 %v5152, %v5816
        %v5818 = vpop.f32.mrf.mxu0
        %v5819 = vadd.f32 %v5148, %v5818
        %v5820 = vpop.f32.mrf.mxu0
        %v5821 = vadd.f32 %v5152, %v5820
        %5822 = vmatprep.mubr.bf16.mxu0 0
        %5823 = vmatmul.mubr.bf16.gmra.mxu0 %v5083
        %v5824 = vpop.f32.mrf.mxu0
        %v5825 = vadd.f32 %v5148, %v5824
        %v5826 = vpop.f32.mrf.mxu0
        %v5827 = vadd.f32 %v5152, %v5826
        %v5828 = vpop.f32.mrf.mxu0
        %v5829 = vadd.f32 %v5148, %v5828
        %v5830 = vpop.f32.mrf.mxu0
        %v5831 = vadd.f32 %v5152, %v5830
        %5832 = vmatprep.mubr.bf16.mxu0 0
        %5833 = vmatmul.mubr.bf16.gmra.mxu0 %v5084
        %v5834 = vpop.f32.mrf.mxu0
        %v5835 = vadd.f32 %v5148, %v5834
        %v5836 = vpop.f32.mrf.mxu0
        %v5837 = vadd.f32 %v5152, %v5836
        %v5838 = vpop.f32.mrf.mxu0
        %v5839 = vadd.f32 %v5148, %v5838
        %v5840 = vpop.f32.mrf.mxu0
        %v5841 = vadd.f32 %v5152, %v5840
        %5842 = vmatprep.mubr.bf16.mxu0 0
        %5843 = vmatmul.mubr.bf16.gmra.mxu0 %v5085
        %v5844 = vpop.f32.mrf.mxu0
        %v5845 = vadd.f32 %v5148, %v5844
        %v5846 = vpop.f32.mrf.mxu0
        %v5847 = vadd.f32 %v5152, %v5846
        %v5848 = vpop.f32.mrf.mxu0
        %v5849 = vadd.f32 %v5148, %v5848
        %v5850 = vpop.f32.mrf.mxu0
        %v5851 = vadd.f32 %v5152, %v5850
        %5852 = vmatprep.mubr.bf16.mxu0 0
        %5853 = vmatmul.mubr.bf16.gmra.mxu0 %v5086
        %v5854 = vpop.f32.mrf.mxu0
        %v5855 = vadd.f32 %v5148, %v5854
        %v5856 = vpop.f32.mrf.mxu0
        %v5857 = vadd.f32 %v5152, %v5856
        %v5858 = vpop.f32.mrf.mxu0
        %v5859 = vadd.f32 %v5148, %v5858
        %v5860 = vpop.f32.mrf.mxu0
        %v5861 = vadd.f32 %v5152, %v5860
        %5862 = vmatprep.mubr.bf16.mxu0 0
        %5863 = vmatmul.mubr.bf16.gmra.mxu0 %v5087
        %v5864 = vpop.f32.mrf.mxu0
        %v5865 = vadd.f32 %v5148, %v5864
        %v5866 = vpop.f32.mrf.mxu0
        %v5867 = vadd.f32 %v5152, %v5866
        %v5868 = vpop.f32.mrf.mxu0
        %v5869 = vadd.f32 %v5148, %v5868
        %v5870 = vpop.f32.mrf.mxu0
        %v5871 = vadd.f32 %v5152, %v5870
        %5872 = vmatprep.mubr.bf16.mxu0 0
        %5873 = vmatmul.mubr.bf16.gmra.mxu0 %v5088
        %v5874 = vpop.f32.mrf.mxu0
        %v5875 = vadd.f32 %v5148, %v5874
        %v5876 = vpop.f32.mrf.mxu0
        %v5877 = vadd.f32 %v5152, %v5876
        %v5878 = vpop.f32.mrf.mxu0
        %v5879 = vadd.f32 %v5148, %v5878
        %v5880 = vpop.f32.mrf.mxu0
        %v5881 = vadd.f32 %v5152, %v5880
        %5882 = vmatprep.mubr.bf16.mxu0 0
        %5883 = vmatmul.mubr.bf16.gmra.mxu0 %v5089
        %v5884 = vpop.f32.mrf.mxu0
        %v5885 = vadd.f32 %v5148, %v5884
        %v5886 = vpop.f32.mrf.mxu0
        %v5887 = vadd.f32 %v5152, %v5886
        %v5888 = vpop.f32.mrf.mxu0
        %v5889 = vadd.f32 %v5148, %v5888
        %v5890 = vpop.f32.mrf.mxu0
        %v5891 = vadd.f32 %v5152, %v5890
        %5892 = vmatprep.mubr.bf16.mxu0 0
        %5893 = vmatmul.mubr.bf16.gmra.mxu0 %v5090
        %v5894 = vpop.f32.mrf.mxu0
        %v5895 = vadd.f32 %v5148, %v5894
        %v5896 = vpop.f32.mrf.mxu0
        %v5897 = vadd.f32 %v5152, %v5896
        %v5898 = vpop.f32.mrf.mxu0
        %v5899 = vadd.f32 %v5148, %v5898
        %v5900 = vpop.f32.mrf.mxu0
        %v5901 = vadd.f32 %v5152, %v5900
        %5902 = vmatprep.mubr.bf16.mxu0 0
        %5903 = vmatmul.mubr.bf16.gmra.mxu0 %v5091
        %v5904 = vpop.f32.mrf.mxu0
        %v5905 = vadd.f32 %v5148, %v5904
        %v5906 = vpop.f32.mrf.mxu0
        %v5907 = vadd.f32 %v5152, %v5906
        %v5908 = vpop.f32.mrf.mxu0
        %v5909 = vadd.f32 %v5148, %v5908
        %v5910 = vpop.f32.mrf.mxu0
        %v5911 = vadd.f32 %v5152, %v5910
        %5912 = vmatprep.mubr.bf16.mxu0 0
        %5913 = vmatmul.mubr.bf16.gmra.mxu0 %v5092
        %v5914 = vpop.f32.mrf.mxu0
        %v5915 = vadd.f32 %v5148, %v5914
        %v5916 = vpop.f32.mrf.mxu0
        %v5917 = vadd.f32 %v5152, %v5916
        %v5918 = vpop.f32.mrf.mxu0
        %v5919 = vadd.f32 %v5148, %v5918
        %v5920 = vpop.f32.mrf.mxu0
        %v5921 = vadd.f32 %v5152, %v5920
        %5922 = vmatprep.mubr.bf16.mxu0 0
        %5923 = vmatmul.mubr.bf16.gmra.mxu0 %v5093
        %v5924 = vpop.f32.mrf.mxu0
        %v5925 = vadd.f32 %v5148, %v5924
        %v5926 = vpop.f32.mrf.mxu0
        %v5927 = vadd.f32 %v5152, %v5926
        %v5928 = vpop.f32.mrf.mxu0
        %v5929 = vadd.f32 %v5148, %v5928
        %v5930 = vpop.f32.mrf.mxu0
        %v5931 = vadd.f32 %v5152, %v5930
        %5932 = vmatprep.mubr.bf16.mxu0 0
        %5933 = vmatmul.mubr.bf16.gmra.mxu0 %v5094
        %v5934 = vpop.f32.mrf.mxu0
        %v5935 = vadd.f32 %v5148, %v5934
        %v5936 = vpop.f32.mrf.mxu0
        %v5937 = vadd.f32 %v5152, %v5936
        %v5938 = vpop.f32.mrf.mxu0
        %v5939 = vadd.f32 %v5148, %v5938
        %v5940 = vpop.f32.mrf.mxu0
        %v5941 = vadd.f32 %v5152, %v5940
        %5942 = vmatprep.mubr.bf16.mxu0 0
        %5943 = vmatmul.mubr.bf16.gmra.mxu0 %v5095
        %v5944 = vpop.f32.mrf.mxu0
        %v5945 = vadd.f32 %v5148, %v5944
        %v5946 = vpop.f32.mrf.mxu0
        %v5947 = vadd.f32 %v5152, %v5946
        %v5948 = vpop.f32.mrf.mxu0
        %v5949 = vadd.f32 %v5148, %v5948
        %v5950 = vpop.f32.mrf.mxu0
        %v5951 = vadd.f32 %v5152, %v5950
        %5952 = vmatprep.mubr.bf16.mxu0 0
        %5953 = vmatmul.mubr.bf16.gmra.mxu0 %v5096
        %v5954 = vpop.f32.mrf.mxu0
        %v5955 = vadd.f32 %v5148, %v5954
        %v5956 = vpop.f32.mrf.mxu0
        %v5957 = vadd.f32 %v5152, %v5956
        %v5958 = vpop.f32.mrf.mxu0
        %v5959 = vadd.f32 %v5148, %v5958
        %v5960 = vpop.f32.mrf.mxu0
        %v5961 = vadd.f32 %v5152, %v5960
        %5962 = vmatprep.mubr.bf16.mxu0 0
        %5963 = vmatmul.mubr.bf16.gmra.mxu0 %v5097
        %v5964 = vpop.f32.mrf.mxu0
        %v5965 = vadd.f32 %v5148, %v5964
        %v5966 = vpop.f32.mrf.mxu0
        %v5967 = vadd.f32 %v5152, %v5966
        %v5968 = vpop.f32.mrf.mxu0
        %v5969 = vadd.f32 %v5148, %v5968
        %v5970 = vpop.f32.mrf.mxu0
        %v5971 = vadd.f32 %v5152, %v5970
        %5972 = vmatprep.mubr.bf16.mxu0 0
        %5973 = vmatmul.mubr.bf16.gmra.mxu0 %v5098
        %v5974 = vpop.f32.mrf.mxu0
        %v5975 = vadd.f32 %v5148, %v5974
        %v5976 = vpop.f32.mrf.mxu0
        %v5977 = vadd.f32 %v5152, %v5976
        %v5978 = vpop.f32.mrf.mxu0
        %v5979 = vadd.f32 %v5148, %v5978
        %v5980 = vpop.f32.mrf.mxu0
        %v5981 = vadd.f32 %v5152, %v5980
        %5982 = vmatprep.mubr.bf16.mxu0 0
        %5983 = vmatmul.mubr.bf16.gmra.mxu0 %v5099
        %v5984 = vpop.f32.mrf.mxu0
        %v5985 = vadd.f32 %v5148, %v5984
        %v5986 = vpop.f32.mrf.mxu0
        %v5987 = vadd.f32 %v5152, %v5986
        %v5988 = vpop.f32.mrf.mxu0
        %v5989 = vadd.f32 %v5148, %v5988
        %v5990 = vpop.f32.mrf.mxu0
        %v5991 = vadd.f32 %v5152, %v5990
        %5992 = vmatprep.mubr.bf16.mxu0 0
        %5993 = vmatmul.mubr.bf16.gmra.mxu0 %v5100
        %v5994 = vpop.f32.mrf.mxu0
        %v5995 = vadd.f32 %v5148, %v5994
        %v5996 = vpop.f32.mrf.mxu0
        %v5997 = vadd.f32 %v5152, %v5996
        %v5998 = vpop.f32.mrf.mxu0
        %v5999 = vadd.f32 %v5148, %v5998
        %v6000 = vpop.f32.mrf.mxu0
        %v6001 = vadd.f32 %v5152, %v6000
        %6002 = vmatprep.mubr.bf16.mxu0 0
        %6003 = vmatmul.mubr.bf16.gmra.mxu0 %v5101
        %v6004 = vpop.f32.mrf.mxu0
        %v6005 = vadd.f32 %v5148, %v6004
        %v6006 = vpop.f32.mrf.mxu0
        %v6007 = vadd.f32 %v5152, %v6006
        %v6008 = vpop.f32.mrf.mxu0
        %v6009 = vadd.f32 %v5148, %v6008
        %v6010 = vpop.f32.mrf.mxu0
        %v6011 = vadd.f32 %v5152, %v6010
        %6012 = vmatprep.mubr.bf16.mxu0 0
        %6013 = vmatmul.mubr.bf16.gmra.mxu0 %v5102
        %v6014 = vpop.f32.mrf.mxu0
        %v6015 = vadd.f32 %v5148, %v6014
        %v6016 = vpop.f32.mrf.mxu0
        %v6017 = vadd.f32 %v5152, %v6016
        %v6018 = vpop.f32.mrf.mxu0
        %v6019 = vadd.f32 %v5148, %v6018
        %v6020 = vpop.f32.mrf.mxu0
        %v6021 = vadd.f32 %v5152, %v6020
        %6022 = vdwg.mxu0
        %v6023 = vmax.f32 %v5352, %v5354
        %v6024 = vmax.f32 %v6023, %v5705
        %v6025 = vmax.f32 %v6024, %v5707
        %6026 = vmax.xlane.f32.xlu0 %v6025
        %v6027 = vpop.xlane.xlu0 %6026
        %v6028 = vmax.f32 %v5356, %v5358
        %v6029 = vmax.f32 %v6028, %v5709
        %v6030 = vmax.f32 %v6029, %v5711
        %6031 = vmax.xlane.f32.xlu0 %v6030
        %v6032 = vpop.xlane.xlu0 %6031
        %v6033 = vmax.f32 %v5362, %v5364
        %v6034 = vmax.f32 %v6033, %v5715
        %v6035 = vmax.f32 %v6034, %v5717
        %6036 = vmax.xlane.f32.xlu0 %v6035
        %v6037 = vpop.xlane.xlu0 %6036
        %v6038 = vmax.f32 %v5366, %v5368
        %v6039 = vmax.f32 %v6038, %v5719
        %v6040 = vmax.f32 %v6039, %v5721
        %6041 = vmax.xlane.f32.xlu0 %v6040
        %v6042 = vpop.xlane.xlu0 %6041
        %v6043 = vmax.f32 %v5372, %v5374
        %v6044 = vmax.f32 %v6043, %v5725
        %v6045 = vmax.f32 %v6044, %v5727
        %6046 = vmax.xlane.f32.xlu0 %v6045
        %v6047 = vpop.xlane.xlu0 %6046
        %v6048 = vmax.f32 %v5376, %v5378
        %v6049 = vmax.f32 %v6048, %v5729
        %v6050 = vmax.f32 %v6049, %v5731
        %6051 = vmax.xlane.f32.xlu0 %v6050
        %v6052 = vpop.xlane.xlu0 %6051
        %v6053 = vmax.f32 %v5382, %v5384
        %v6054 = vmax.f32 %v6053, %v5735
        %v6055 = vmax.f32 %v6054, %v5737
        %6056 = vmax.xlane.f32.xlu0 %v6055
        %v6057 = vpop.xlane.xlu0 %6056
        %v6058 = vmax.f32 %v5386, %v5388
        %v6059 = vmax.f32 %v6058, %v5739
        %v6060 = vmax.f32 %v6059, %v5741
        %6061 = vmax.xlane.f32.xlu0 %v6060
        %v6062 = vpop.xlane.xlu0 %6061
        %v6063 = vmax.f32 %v5392, %v5394
        %v6064 = vmax.f32 %v6063, %v5745
        %v6065 = vmax.f32 %v6064, %v5747
        %6066 = vmax.xlane.f32.xlu0 %v6065
        %v6067 = vpop.xlane.xlu0 %6066
        %v6068 = vmax.f32 %v5396, %v5398
        %v6069 = vmax.f32 %v6068, %v5749
        %v6070 = vmax.f32 %v6069, %v5751
        %6071 = vmax.xlane.f32.xlu0 %v6070
        %v6072 = vpop.xlane.xlu0 %6071
        %v6073 = vmax.f32 %v5402, %v5404
        %v6074 = vmax.f32 %v6073, %v5755
        %v6075 = vmax.f32 %v6074, %v5757
        %6076 = vmax.xlane.f32.xlu0 %v6075
        %v6077 = vpop.xlane.xlu0 %6076
        %v6078 = vmax.f32 %v5406, %v5408
        %v6079 = vmax.f32 %v6078, %v5759
        %v6080 = vmax.f32 %v6079, %v5761
        %6081 = vmax.xlane.f32.xlu0 %v6080
        %v6082 = vpop.xlane.xlu0 %6081
        %v6083 = vmax.f32 %v5412, %v5414
        %v6084 = vmax.f32 %v6083, %v5765
        %v6085 = vmax.f32 %v6084, %v5767
        %6086 = vmax.xlane.f32.xlu0 %v6085
        %v6087 = vpop.xlane.xlu0 %6086
        %v6088 = vmax.f32 %v5416, %v5418
        %v6089 = vmax.f32 %v6088, %v5769
        %v6090 = vmax.f32 %v6089, %v5771
        %6091 = vmax.xlane.f32.xlu0 %v6090
        %v6092 = vpop.xlane.xlu0 %6091
        %v6093 = vmax.f32 %v5422, %v5424
        %v6094 = vmax.f32 %v6093, %v5775
        %v6095 = vmax.f32 %v6094, %v5777
        %6096 = vmax.xlane.f32.xlu0 %v6095
        %v6097 = vpop.xlane.xlu0 %6096
        %v6098 = vmax.f32 %v5426, %v5428
        %v6099 = vmax.f32 %v6098, %v5779
        %v6100 = vmax.f32 %v6099, %v5781
        %6101 = vmax.xlane.f32.xlu0 %v6100
        %v6102 = vpop.xlane.xlu0 %6101
        %v6103 = vmax.f32 %v5432, %v5434
        %v6104 = vmax.f32 %v6103, %v5785
        %v6105 = vmax.f32 %v6104, %v5787
        %6106 = vmax.xlane.f32.xlu0 %v6105
        %v6107 = vpop.xlane.xlu0 %6106
        %v6108 = vmax.f32 %v5436, %v5438
        %v6109 = vmax.f32 %v6108, %v5789
        %v6110 = vmax.f32 %v6109, %v5791
        %6111 = vmax.xlane.f32.xlu0 %v6110
        %v6112 = vpop.xlane.xlu0 %6111
        %v6113 = vmax.f32 %v5442, %v5444
        %v6114 = vmax.f32 %v6113, %v5795
        %v6115 = vmax.f32 %v6114, %v5797
        %6116 = vmax.xlane.f32.xlu0 %v6115
        %v6117 = vpop.xlane.xlu0 %6116
        %v6118 = vmax.f32 %v5446, %v5448
        %v6119 = vmax.f32 %v6118, %v5799
        %v6120 = vmax.f32 %v6119, %v5801
        %6121 = vmax.xlane.f32.xlu0 %v6120
        %v6122 = vpop.xlane.xlu0 %6121
        %v6123 = vmax.f32 %v5452, %v5454
        %v6124 = vmax.f32 %v6123, %v5805
        %v6125 = vmax.f32 %v6124, %v5807
        %6126 = vmax.xlane.f32.xlu0 %v6125
        %v6127 = vpop.xlane.xlu0 %6126
        %v6128 = vmax.f32 %v5456, %v5458
        %v6129 = vmax.f32 %v6128, %v5809
        %v6130 = vmax.f32 %v6129, %v5811
        %6131 = vmax.xlane.f32.xlu0 %v6130
        %v6132 = vpop.xlane.xlu0 %6131
        %v6133 = vmax.f32 %v5462, %v5464
        %v6134 = vmax.f32 %v6133, %v5815
        %v6135 = vmax.f32 %v6134, %v5817
        %6136 = vmax.xlane.f32.xlu0 %v6135
        %v6137 = vpop.xlane.xlu0 %6136
        %v6138 = vmax.f32 %v5466, %v5468
        %v6139 = vmax.f32 %v6138, %v5819
        %v6140 = vmax.f32 %v6139, %v5821
        %6141 = vmax.xlane.f32.xlu0 %v6140
        %v6142 = vpop.xlane.xlu0 %6141
        %v6143 = vmax.f32 %v5472, %v5474
        %v6144 = vmax.f32 %v6143, %v5825
        %v6145 = vmax.f32 %v6144, %v5827
        %6146 = vmax.xlane.f32.xlu0 %v6145
        %v6147 = vpop.xlane.xlu0 %6146
        %v6148 = vmax.f32 %v5476, %v5478
        %v6149 = vmax.f32 %v6148, %v5829
        %v6150 = vmax.f32 %v6149, %v5831
        %6151 = vmax.xlane.f32.xlu0 %v6150
        %v6152 = vpop.xlane.xlu0 %6151
        %v6153 = vmax.f32 %v5482, %v5484
        %v6154 = vmax.f32 %v6153, %v5835
        %v6155 = vmax.f32 %v6154, %v5837
        %6156 = vmax.xlane.f32.xlu0 %v6155
        %v6157 = vpop.xlane.xlu0 %6156
        %v6158 = vmax.f32 %v5486, %v5488
        %v6159 = vmax.f32 %v6158, %v5839
        %v6160 = vmax.f32 %v6159, %v5841
        %6161 = vmax.xlane.f32.xlu0 %v6160
        %v6162 = vpop.xlane.xlu0 %6161
        %v6163 = vmax.f32 %v5492, %v5494
        %v6164 = vmax.f32 %v6163, %v5845
        %v6165 = vmax.f32 %v6164, %v5847
        %6166 = vmax.xlane.f32.xlu0 %v6165
        %v6167 = vpop.xlane.xlu0 %6166
        %v6168 = vmax.f32 %v5496, %v5498
        %v6169 = vmax.f32 %v6168, %v5849
        %v6170 = vmax.f32 %v6169, %v5851
        %6171 = vmax.xlane.f32.xlu0 %v6170
        %v6172 = vpop.xlane.xlu0 %6171
        %v6173 = vmax.f32 %v5502, %v5504
        %v6174 = vmax.f32 %v6173, %v5855
        %v6175 = vmax.f32 %v6174, %v5857
        %6176 = vmax.xlane.f32.xlu0 %v6175
        %v6177 = vpop.xlane.xlu0 %6176
        %v6178 = vmax.f32 %v5506, %v5508
        %v6179 = vmax.f32 %v6178, %v5859
        %v6180 = vmax.f32 %v6179, %v5861
        %6181 = vmax.xlane.f32.xlu0 %v6180
        %v6182 = vpop.xlane.xlu0 %6181
        %v6183 = vmax.f32 %v5512, %v5514
        %v6184 = vmax.f32 %v6183, %v5865
        %v6185 = vmax.f32 %v6184, %v5867
        %6186 = vmax.xlane.f32.xlu0 %v6185
        %v6187 = vpop.xlane.xlu0 %6186
        %v6188 = vmax.f32 %v5516, %v5518
        %v6189 = vmax.f32 %v6188, %v5869
        %v6190 = vmax.f32 %v6189, %v5871
        %6191 = vmax.xlane.f32.xlu0 %v6190
        %v6192 = vpop.xlane.xlu0 %6191
        %v6193 = vmax.f32 %v5522, %v5524
        %v6194 = vmax.f32 %v6193, %v5875
        %v6195 = vmax.f32 %v6194, %v5877
        %6196 = vmax.xlane.f32.xlu0 %v6195
        %v6197 = vpop.xlane.xlu0 %6196
        %v6198 = vmax.f32 %v5526, %v5528
        %v6199 = vmax.f32 %v6198, %v5879
        %v6200 = vmax.f32 %v6199, %v5881
        %6201 = vmax.xlane.f32.xlu0 %v6200
        %v6202 = vpop.xlane.xlu0 %6201
        %v6203 = vmax.f32 %v5532, %v5534
        %v6204 = vmax.f32 %v6203, %v5885
        %v6205 = vmax.f32 %v6204, %v5887
        %6206 = vmax.xlane.f32.xlu0 %v6205
        %v6207 = vpop.xlane.xlu0 %6206
        %v6208 = vmax.f32 %v5536, %v5538
        %v6209 = vmax.f32 %v6208, %v5889
        %v6210 = vmax.f32 %v6209, %v5891
        %6211 = vmax.xlane.f32.xlu0 %v6210
        %v6212 = vpop.xlane.xlu0 %6211
        %v6213 = vmax.f32 %v5542, %v5544
        %v6214 = vmax.f32 %v6213, %v5895
        %v6215 = vmax.f32 %v6214, %v5897
        %6216 = vmax.xlane.f32.xlu0 %v6215
        %v6217 = vpop.xlane.xlu0 %6216
        %v6218 = vmax.f32 %v5546, %v5548
        %v6219 = vmax.f32 %v6218, %v5899
        %v6220 = vmax.f32 %v6219, %v5901
        %6221 = vmax.xlane.f32.xlu0 %v6220
        %v6222 = vpop.xlane.xlu0 %6221
        %v6223 = vmax.f32 %v5552, %v5554
        %v6224 = vmax.f32 %v6223, %v5905
        %v6225 = vmax.f32 %v6224, %v5907
        %6226 = vmax.xlane.f32.xlu0 %v6225
        %v6227 = vpop.xlane.xlu0 %6226
        %v6228 = vmax.f32 %v5556, %v5558
        %v6229 = vmax.f32 %v6228, %v5909
        %v6230 = vmax.f32 %v6229, %v5911
        %6231 = vmax.xlane.f32.xlu0 %v6230
        %v6232 = vpop.xlane.xlu0 %6231
        %v6233 = vmax.f32 %v5562, %v5564
        %v6234 = vmax.f32 %v6233, %v5915
        %v6235 = vmax.f32 %v6234, %v5917
        %6236 = vmax.xlane.f32.xlu0 %v6235
        %v6237 = vpop.xlane.xlu0 %6236
        %v6238 = vmax.f32 %v5566, %v5568
        %v6239 = vmax.f32 %v6238, %v5919
        %v6240 = vmax.f32 %v6239, %v5921
        %6241 = vmax.xlane.f32.xlu0 %v6240
        %v6242 = vpop.xlane.xlu0 %6241
        %v6243 = vmax.f32 %v5572, %v5574
        %v6244 = vmax.f32 %v6243, %v5925
        %v6245 = vmax.f32 %v6244, %v5927
        %6246 = vmax.xlane.f32.xlu0 %v6245
        %v6247 = vpop.xlane.xlu0 %6246
        %v6248 = vmax.f32 %v5576, %v5578
        %v6249 = vmax.f32 %v6248, %v5929
        %v6250 = vmax.f32 %v6249, %v5931
        %6251 = vmax.xlane.f32.xlu0 %v6250
        %v6252 = vpop.xlane.xlu0 %6251
        %v6253 = vmax.f32 %v5582, %v5584
        %v6254 = vmax.f32 %v6253, %v5935
        %v6255 = vmax.f32 %v6254, %v5937
        %6256 = vmax.xlane.f32.xlu0 %v6255
        %v6257 = vpop.xlane.xlu0 %6256
        %v6258 = vmax.f32 %v5586, %v5588
        %v6259 = vmax.f32 %v6258, %v5939
        %v6260 = vmax.f32 %v6259, %v5941
        %6261 = vmax.xlane.f32.xlu0 %v6260
        %v6262 = vpop.xlane.xlu0 %6261
        %v6263 = vmax.f32 %v5592, %v5594
        %v6264 = vmax.f32 %v6263, %v5945
        %v6265 = vmax.f32 %v6264, %v5947
        %6266 = vmax.xlane.f32.xlu0 %v6265
        %v6267 = vpop.xlane.xlu0 %6266
        %v6268 = vmax.f32 %v5596, %v5598
        %v6269 = vmax.f32 %v6268, %v5949
        %v6270 = vmax.f32 %v6269, %v5951
        %6271 = vmax.xlane.f32.xlu0 %v6270
        %v6272 = vpop.xlane.xlu0 %6271
        %v6273 = vmax.f32 %v5602, %v5604
        %v6274 = vmax.f32 %v6273, %v5955
        %v6275 = vmax.f32 %v6274, %v5957
        %6276 = vmax.xlane.f32.xlu0 %v6275
        %v6277 = vpop.xlane.xlu0 %6276
        %v6278 = vmax.f32 %v5606, %v5608
        %v6279 = vmax.f32 %v6278, %v5959
        %v6280 = vmax.f32 %v6279, %v5961
        %6281 = vmax.xlane.f32.xlu0 %v6280
        %v6282 = vpop.xlane.xlu0 %6281
        %v6283 = vmax.f32 %v5612, %v5614
        %v6284 = vmax.f32 %v6283, %v5965
        %v6285 = vmax.f32 %v6284, %v5967
        %6286 = vmax.xlane.f32.xlu0 %v6285
        %v6287 = vpop.xlane.xlu0 %6286
        %v6288 = vmax.f32 %v5616, %v5618
        %v6289 = vmax.f32 %v6288, %v5969
        %v6290 = vmax.f32 %v6289, %v5971
        %6291 = vmax.xlane.f32.xlu0 %v6290
        %v6292 = vpop.xlane.xlu0 %6291
        %v6293 = vmax.f32 %v5622, %v5624
        %v6294 = vmax.f32 %v6293, %v5975
        %v6295 = vmax.f32 %v6294, %v5977
        %6296 = vmax.xlane.f32.xlu0 %v6295
        %v6297 = vpop.xlane.xlu0 %6296
        %v6298 = vmax.f32 %v5626, %v5628
        %v6299 = vmax.f32 %v6298, %v5979
        %v6300 = vmax.f32 %v6299, %v5981
        %6301 = vmax.xlane.f32.xlu0 %v6300
        %v6302 = vpop.xlane.xlu0 %6301
        %v6303 = vmax.f32 %v5632, %v5634
        %v6304 = vmax.f32 %v6303, %v5985
        %v6305 = vmax.f32 %v6304, %v5987
        %6306 = vmax.xlane.f32.xlu0 %v6305
        %v6307 = vpop.xlane.xlu0 %6306
        %v6308 = vmax.f32 %v5636, %v5638
        %v6309 = vmax.f32 %v6308, %v5989
        %v6310 = vmax.f32 %v6309, %v5991
        %6311 = vmax.xlane.f32.xlu0 %v6310
        %v6312 = vpop.xlane.xlu0 %6311
        %v6313 = vmax.f32 %v5642, %v5644
        %v6314 = vmax.f32 %v6313, %v5995
        %v6315 = vmax.f32 %v6314, %v5997
        %6316 = vmax.xlane.f32.xlu0 %v6315
        %v6317 = vpop.xlane.xlu0 %6316
        %v6318 = vmax.f32 %v5646, %v5648
        %v6319 = vmax.f32 %v6318, %v5999
        %v6320 = vmax.f32 %v6319, %v6001
        %6321 = vmax.xlane.f32.xlu0 %v6320
        %v6322 = vpop.xlane.xlu0 %6321
        %v6323 = vmax.f32 %v5652, %v5654
        %v6324 = vmax.f32 %v6323, %v6005
        %v6325 = vmax.f32 %v6324, %v6007
        %6326 = vmax.xlane.f32.xlu0 %v6325
        %v6327 = vpop.xlane.xlu0 %6326
        %v6328 = vmax.f32 %v5656, %v5658
        %v6329 = vmax.f32 %v6328, %v6009
        %v6330 = vmax.f32 %v6329, %v6011
        %6331 = vmax.xlane.f32.xlu0 %v6330
        %v6332 = vpop.xlane.xlu0 %6331
        %v6333 = vmax.f32 %v5662, %v5664
        %v6334 = vmax.f32 %v6333, %v6015
        %v6335 = vmax.f32 %v6334, %v6017
        %6336 = vmax.xlane.f32.xlu0 %v6335
        %v6337 = vpop.xlane.xlu0 %6336
        %v6338 = vmax.f32 %v5666, %v5668
        %v6339 = vmax.f32 %v6338, %v6019
        %v6340 = vmax.f32 %v6339, %v6021
        %6341 = vmax.xlane.f32.xlu0 %v6340
        %v6342 = vpop.xlane.xlu0 %6341
        %v6343 = vsub.f32 %v5352, %v6027
        %v6344 = vsub.f32 %v5354, %v6027
        %v6345 = vsub.f32 %v5705, %v6027
        %v6346 = vsub.f32 %v5707, %v6027
        %v6347 = vsub.f32 %v5356, %v6032
        %v6348 = vsub.f32 %v5358, %v6032
        %v6349 = vsub.f32 %v5709, %v6032
        %v6350 = vsub.f32 %v5711, %v6032
        %v6351 = vsub.f32 %v5362, %v6037
        %v6352 = vsub.f32 %v5364, %v6037
        %v6353 = vsub.f32 %v5715, %v6037
        %v6354 = vsub.f32 %v5717, %v6037
        %v6355 = vsub.f32 %v5366, %v6042
        %v6356 = vsub.f32 %v5368, %v6042
        %v6357 = vsub.f32 %v5719, %v6042
        %v6358 = vsub.f32 %v5721, %v6042
        %v6359 = vsub.f32 %v5372, %v6047
        %v6360 = vsub.f32 %v5374, %v6047
        %v6361 = vsub.f32 %v5725, %v6047
        %v6362 = vsub.f32 %v5727, %v6047
        %v6363 = vsub.f32 %v5376, %v6052
        %v6364 = vsub.f32 %v5378, %v6052
        %v6365 = vsub.f32 %v5729, %v6052
        %v6366 = vsub.f32 %v5731, %v6052
        %v6367 = vsub.f32 %v5382, %v6057
        %v6368 = vsub.f32 %v5384, %v6057
        %v6369 = vsub.f32 %v5735, %v6057
        %v6370 = vsub.f32 %v5737, %v6057
        %v6371 = vsub.f32 %v5386, %v6062
        %v6372 = vsub.f32 %v5388, %v6062
        %v6373 = vsub.f32 %v5739, %v6062
        %v6374 = vsub.f32 %v5741, %v6062
        %v6375 = vsub.f32 %v5392, %v6067
        %v6376 = vsub.f32 %v5394, %v6067
        %v6377 = vsub.f32 %v5745, %v6067
        %v6378 = vsub.f32 %v5747, %v6067
        %v6379 = vsub.f32 %v5396, %v6072
        %v6380 = vsub.f32 %v5398, %v6072
        %v6381 = vsub.f32 %v5749, %v6072
        %v6382 = vsub.f32 %v5751, %v6072
        %v6383 = vsub.f32 %v5402, %v6077
        %v6384 = vsub.f32 %v5404, %v6077
        %v6385 = vsub.f32 %v5755, %v6077
        %v6386 = vsub.f32 %v5757, %v6077
        %v6387 = vsub.f32 %v5406, %v6082
        %v6388 = vsub.f32 %v5408, %v6082
        %v6389 = vsub.f32 %v5759, %v6082
        %v6390 = vsub.f32 %v5761, %v6082
        %v6391 = vsub.f32 %v5412, %v6087
        %v6392 = vsub.f32 %v5414, %v6087
        %v6393 = vsub.f32 %v5765, %v6087
        %v6394 = vsub.f32 %v5767, %v6087
        %v6395 = vsub.f32 %v5416, %v6092
        %v6396 = vsub.f32 %v5418, %v6092
        %v6397 = vsub.f32 %v5769, %v6092
        %v6398 = vsub.f32 %v5771, %v6092
        %v6399 = vsub.f32 %v5422, %v6097
        %v6400 = vsub.f32 %v5424, %v6097
        %v6401 = vsub.f32 %v5775, %v6097
        %v6402 = vsub.f32 %v5777, %v6097
        %v6403 = vsub.f32 %v5426, %v6102
        %v6404 = vsub.f32 %v5428, %v6102
        %v6405 = vsub.f32 %v5779, %v6102
        %v6406 = vsub.f32 %v5781, %v6102
        %v6407 = vsub.f32 %v5432, %v6107
        %v6408 = vsub.f32 %v5434, %v6107
        %v6409 = vsub.f32 %v5785, %v6107
        %v6410 = vsub.f32 %v5787, %v6107
        %v6411 = vsub.f32 %v5436, %v6112
        %v6412 = vsub.f32 %v5438, %v6112
        %v6413 = vsub.f32 %v5789, %v6112
        %v6414 = vsub.f32 %v5791, %v6112
        %v6415 = vsub.f32 %v5442, %v6117
        %v6416 = vsub.f32 %v5444, %v6117
        %v6417 = vsub.f32 %v5795, %v6117
        %v6418 = vsub.f32 %v5797, %v6117
        %v6419 = vsub.f32 %v5446, %v6122
        %v6420 = vsub.f32 %v5448, %v6122
        %v6421 = vsub.f32 %v5799, %v6122
        %v6422 = vsub.f32 %v5801, %v6122
        %v6423 = vsub.f32 %v5452, %v6127
        %v6424 = vsub.f32 %v5454, %v6127
        %v6425 = vsub.f32 %v5805, %v6127
        %v6426 = vsub.f32 %v5807, %v6127
        %v6427 = vsub.f32 %v5456, %v6132
        %v6428 = vsub.f32 %v5458, %v6132
        %v6429 = vsub.f32 %v5809, %v6132
        %v6430 = vsub.f32 %v5811, %v6132
        %v6431 = vsub.f32 %v5462, %v6137
        %v6432 = vsub.f32 %v5464, %v6137
        %v6433 = vsub.f32 %v5815, %v6137
        %v6434 = vsub.f32 %v5817, %v6137
        %v6435 = vsub.f32 %v5466, %v6142
        %v6436 = vsub.f32 %v5468, %v6142
        %v6437 = vsub.f32 %v5819, %v6142
        %v6438 = vsub.f32 %v5821, %v6142
        %v6439 = vsub.f32 %v5472, %v6147
        %v6440 = vsub.f32 %v5474, %v6147
        %v6441 = vsub.f32 %v5825, %v6147
        %v6442 = vsub.f32 %v5827, %v6147
        %v6443 = vsub.f32 %v5476, %v6152
        %v6444 = vsub.f32 %v5478, %v6152
        %v6445 = vsub.f32 %v5829, %v6152
        %v6446 = vsub.f32 %v5831, %v6152
        %v6447 = vsub.f32 %v5482, %v6157
        %v6448 = vsub.f32 %v5484, %v6157
        %v6449 = vsub.f32 %v5835, %v6157
        %v6450 = vsub.f32 %v5837, %v6157
        %v6451 = vsub.f32 %v5486, %v6162
        %v6452 = vsub.f32 %v5488, %v6162
        %v6453 = vsub.f32 %v5839, %v6162
        %v6454 = vsub.f32 %v5841, %v6162
        %v6455 = vsub.f32 %v5492, %v6167
        %v6456 = vsub.f32 %v5494, %v6167
        %v6457 = vsub.f32 %v5845, %v6167
        %v6458 = vsub.f32 %v5847, %v6167
        %v6459 = vsub.f32 %v5496, %v6172
        %v6460 = vsub.f32 %v5498, %v6172
        %v6461 = vsub.f32 %v5849, %v6172
        %v6462 = vsub.f32 %v5851, %v6172
        %v6463 = vsub.f32 %v5502, %v6177
        %v6464 = vsub.f32 %v5504, %v6177
        %v6465 = vsub.f32 %v5855, %v6177
        %v6466 = vsub.f32 %v5857, %v6177
        %v6467 = vsub.f32 %v5506, %v6182
        %v6468 = vsub.f32 %v5508, %v6182
        %v6469 = vsub.f32 %v5859, %v6182
        %v6470 = vsub.f32 %v5861, %v6182
        %v6471 = vsub.f32 %v5512, %v6187
        %v6472 = vsub.f32 %v5514, %v6187
        %v6473 = vsub.f32 %v5865, %v6187
        %v6474 = vsub.f32 %v5867, %v6187
        %v6475 = vsub.f32 %v5516, %v6192
        %v6476 = vsub.f32 %v5518, %v6192
        %v6477 = vsub.f32 %v5869, %v6192
        %v6478 = vsub.f32 %v5871, %v6192
        %v6479 = vsub.f32 %v5522, %v6197
        %v6480 = vsub.f32 %v5524, %v6197
        %v6481 = vsub.f32 %v5875, %v6197
        %v6482 = vsub.f32 %v5877, %v6197
        %v6483 = vsub.f32 %v5526, %v6202
        %v6484 = vsub.f32 %v5528, %v6202
        %v6485 = vsub.f32 %v5879, %v6202
        %v6486 = vsub.f32 %v5881, %v6202
        %v6487 = vsub.f32 %v5532, %v6207
        %v6488 = vsub.f32 %v5534, %v6207
        %v6489 = vsub.f32 %v5885, %v6207
        %v6490 = vsub.f32 %v5887, %v6207
        %v6491 = vsub.f32 %v5536, %v6212
        %v6492 = vsub.f32 %v5538, %v6212
        %v6493 = vsub.f32 %v5889, %v6212
        %v6494 = vsub.f32 %v5891, %v6212
        %v6495 = vsub.f32 %v5542, %v6217
        %v6496 = vsub.f32 %v5544, %v6217
        %v6497 = vsub.f32 %v5895, %v6217
        %v6498 = vsub.f32 %v5897, %v6217
        %v6499 = vsub.f32 %v5546, %v6222
        %v6500 = vsub.f32 %v5548, %v6222
        %v6501 = vsub.f32 %v5899, %v6222
        %v6502 = vsub.f32 %v5901, %v6222
        %v6503 = vsub.f32 %v5552, %v6227
        %v6504 = vsub.f32 %v5554, %v6227
        %v6505 = vsub.f32 %v5905, %v6227
        %v6506 = vsub.f32 %v5907, %v6227
        %v6507 = vsub.f32 %v5556, %v6232
        %v6508 = vsub.f32 %v5558, %v6232
        %v6509 = vsub.f32 %v5909, %v6232
        %v6510 = vsub.f32 %v5911, %v6232
        %v6511 = vsub.f32 %v5562, %v6237
        %v6512 = vsub.f32 %v5564, %v6237
        %v6513 = vsub.f32 %v5915, %v6237
        %v6514 = vsub.f32 %v5917, %v6237
        %v6515 = vsub.f32 %v5566, %v6242
        %v6516 = vsub.f32 %v5568, %v6242
        %v6517 = vsub.f32 %v5919, %v6242
        %v6518 = vsub.f32 %v5921, %v6242
        %v6519 = vsub.f32 %v5572, %v6247
        %v6520 = vsub.f32 %v5574, %v6247
        %v6521 = vsub.f32 %v5925, %v6247
        %v6522 = vsub.f32 %v5927, %v6247
        %v6523 = vsub.f32 %v5576, %v6252
        %v6524 = vsub.f32 %v5578, %v6252
        %v6525 = vsub.f32 %v5929, %v6252
        %v6526 = vsub.f32 %v5931, %v6252
        %v6527 = vsub.f32 %v5582, %v6257
        %v6528 = vsub.f32 %v5584, %v6257
        %v6529 = vsub.f32 %v5935, %v6257
        %v6530 = vsub.f32 %v5937, %v6257
        %v6531 = vsub.f32 %v5586, %v6262
        %v6532 = vsub.f32 %v5588, %v6262
        %v6533 = vsub.f32 %v5939, %v6262
        %v6534 = vsub.f32 %v5941, %v6262
        %v6535 = vsub.f32 %v5592, %v6267
        %v6536 = vsub.f32 %v5594, %v6267
        %v6537 = vsub.f32 %v5945, %v6267
        %v6538 = vsub.f32 %v5947, %v6267
        %v6539 = vsub.f32 %v5596, %v6272
        %v6540 = vsub.f32 %v5598, %v6272
        %v6541 = vsub.f32 %v5949, %v6272
        %v6542 = vsub.f32 %v5951, %v6272
        %v6543 = vsub.f32 %v5602, %v6277
        %v6544 = vsub.f32 %v5604, %v6277
        %v6545 = vsub.f32 %v5955, %v6277
        %v6546 = vsub.f32 %v5957, %v6277
        %v6547 = vsub.f32 %v5606, %v6282
        %v6548 = vsub.f32 %v5608, %v6282
        %v6549 = vsub.f32 %v5959, %v6282
        %v6550 = vsub.f32 %v5961, %v6282
        %v6551 = vsub.f32 %v5612, %v6287
        %v6552 = vsub.f32 %v5614, %v6287
        %v6553 = vsub.f32 %v5965, %v6287
        %v6554 = vsub.f32 %v5967, %v6287
        %v6555 = vsub.f32 %v5616, %v6292
        %v6556 = vsub.f32 %v5618, %v6292
        %v6557 = vsub.f32 %v5969, %v6292
        %v6558 = vsub.f32 %v5971, %v6292
        %v6559 = vsub.f32 %v5622, %v6297
        %v6560 = vsub.f32 %v5624, %v6297
        %v6561 = vsub.f32 %v5975, %v6297
        %v6562 = vsub.f32 %v5977, %v6297
        %v6563 = vsub.f32 %v5626, %v6302
        %v6564 = vsub.f32 %v5628, %v6302
        %v6565 = vsub.f32 %v5979, %v6302
        %v6566 = vsub.f32 %v5981, %v6302
        %v6567 = vsub.f32 %v5632, %v6307
        %v6568 = vsub.f32 %v5634, %v6307
        %v6569 = vsub.f32 %v5985, %v6307
        %v6570 = vsub.f32 %v5987, %v6307
        %v6571 = vsub.f32 %v5636, %v6312
        %v6572 = vsub.f32 %v5638, %v6312
        %v6573 = vsub.f32 %v5989, %v6312
        %v6574 = vsub.f32 %v5991, %v6312
        %v6575 = vsub.f32 %v5642, %v6317
        %v6576 = vsub.f32 %v5644, %v6317
        %v6577 = vsub.f32 %v5995, %v6317
        %v6578 = vsub.f32 %v5997, %v6317
        %v6579 = vsub.f32 %v5646, %v6322
        %v6580 = vsub.f32 %v5648, %v6322
        %v6581 = vsub.f32 %v5999, %v6322
        %v6582 = vsub.f32 %v6001, %v6322
        %v6583 = vsub.f32 %v5652, %v6327
        %v6584 = vsub.f32 %v5654, %v6327
        %v6585 = vsub.f32 %v6005, %v6327
        %v6586 = vsub.f32 %v6007, %v6327
        %v6587 = vsub.f32 %v5656, %v6332
        %v6588 = vsub.f32 %v5658, %v6332
        %v6589 = vsub.f32 %v6009, %v6332
        %v6590 = vsub.f32 %v6011, %v6332
        %v6591 = vsub.f32 %v5662, %v6337
        %v6592 = vsub.f32 %v5664, %v6337
        %v6593 = vsub.f32 %v6015, %v6337
        %v6594 = vsub.f32 %v6017, %v6337
        %v6595 = vsub.f32 %v5666, %v6342
        %v6596 = vsub.f32 %v5668, %v6342
        %v6597 = vsub.f32 %v6019, %v6342
        %v6598 = vsub.f32 %v6021, %v6342
        %v6599 = vmul.f32 %v6343, 1.442695
        %v6600 = vpow.pop %v6599
        %v6601 = vmul.f32 %v6344, 1.442695
        %v6602 = vpow.pop %v6601
        %v6603 = vmul.f32 %v6345, 1.442695
        %v6604 = vpow.pop %v6603
        %v6605 = vmul.f32 %v6346, 1.442695
        %v6606 = vpow.pop %v6605
        %v6607 = vmul.f32 %v6347, 1.442695
        %v6608 = vpow.pop %v6607
        %v6609 = vmul.f32 %v6348, 1.442695
        %v6610 = vpow.pop %v6609
        %v6611 = vmul.f32 %v6349, 1.442695
        %v6612 = vpow.pop %v6611
        %v6613 = vmul.f32 %v6350, 1.442695
        %v6614 = vpow.pop %v6613
        %v6615 = vmul.f32 %v6351, 1.442695
        %v6616 = vpow.pop %v6615
        %v6617 = vmul.f32 %v6352, 1.442695
        %v6618 = vpow.pop %v6617
        %v6619 = vmul.f32 %v6353, 1.442695
        %v6620 = vpow.pop %v6619
        %v6621 = vmul.f32 %v6354, 1.442695
        %v6622 = vpow.pop %v6621
        %v6623 = vmul.f32 %v6355, 1.442695
        %v6624 = vpow.pop %v6623
        %v6625 = vmul.f32 %v6356, 1.442695
        %v6626 = vpow.pop %v6625
        %v6627 = vmul.f32 %v6357, 1.442695
        %v6628 = vpow.pop %v6627
        %v6629 = vmul.f32 %v6358, 1.442695
        %v6630 = vpow.pop %v6629
        %v6631 = vmul.f32 %v6359, 1.442695
        %v6632 = vpow.pop %v6631
        %v6633 = vmul.f32 %v6360, 1.442695
        %v6634 = vpow.pop %v6633
        %v6635 = vmul.f32 %v6361, 1.442695
        %v6636 = vpow.pop %v6635
        %v6637 = vmul.f32 %v6362, 1.442695
        %v6638 = vpow.pop %v6637
        %v6639 = vmul.f32 %v6363, 1.442695
        %v6640 = vpow.pop %v6639
        %v6641 = vmul.f32 %v6364, 1.442695
        %v6642 = vpow.pop %v6641
        %v6643 = vmul.f32 %v6365, 1.442695
        %v6644 = vpow.pop %v6643
        %v6645 = vmul.f32 %v6366, 1.442695
        %v6646 = vpow.pop %v6645
        %v6647 = vmul.f32 %v6367, 1.442695
        %v6648 = vpow.pop %v6647
        %v6649 = vmul.f32 %v6368, 1.442695
        %v6650 = vpow.pop %v6649
        %v6651 = vmul.f32 %v6369, 1.442695
        %v6652 = vpow.pop %v6651
        %v6653 = vmul.f32 %v6370, 1.442695
        %v6654 = vpow.pop %v6653
        %v6655 = vmul.f32 %v6371, 1.442695
        %v6656 = vpow.pop %v6655
        %v6657 = vmul.f32 %v6372, 1.442695
        %v6658 = vpow.pop %v6657
        %v6659 = vmul.f32 %v6373, 1.442695
        %v6660 = vpow.pop %v6659
        %v6661 = vmul.f32 %v6374, 1.442695
        %v6662 = vpow.pop %v6661
        %v6663 = vmul.f32 %v6375, 1.442695
        %v6664 = vpow.pop %v6663
        %v6665 = vmul.f32 %v6376, 1.442695
        %v6666 = vpow.pop %v6665
        %v6667 = vmul.f32 %v6377, 1.442695
        %v6668 = vpow.pop %v6667
        %v6669 = vmul.f32 %v6378, 1.442695
        %v6670 = vpow.pop %v6669
        %v6671 = vmul.f32 %v6379, 1.442695
        %v6672 = vpow.pop %v6671
        %v6673 = vmul.f32 %v6380, 1.442695
        %v6674 = vpow.pop %v6673
        %v6675 = vmul.f32 %v6381, 1.442695
        %v6676 = vpow.pop %v6675
        %v6677 = vmul.f32 %v6382, 1.442695
        %v6678 = vpow.pop %v6677
        %v6679 = vmul.f32 %v6383, 1.442695
        %v6680 = vpow.pop %v6679
        %v6681 = vmul.f32 %v6384, 1.442695
        %v6682 = vpow.pop %v6681
        %v6683 = vmul.f32 %v6385, 1.442695
        %v6684 = vpow.pop %v6683
        %v6685 = vmul.f32 %v6386, 1.442695
        %v6686 = vpow.pop %v6685
        %v6687 = vmul.f32 %v6387, 1.442695
        %v6688 = vpow.pop %v6687
        %v6689 = vmul.f32 %v6388, 1.442695
        %v6690 = vpow.pop %v6689
        %v6691 = vmul.f32 %v6389, 1.442695
        %v6692 = vpow.pop %v6691
        %v6693 = vmul.f32 %v6390, 1.442695
        %v6694 = vpow.pop %v6693
        %v6695 = vmul.f32 %v6391, 1.442695
        %v6696 = vpow.pop %v6695
        %v6697 = vmul.f32 %v6392, 1.442695
        %v6698 = vpow.pop %v6697
        %v6699 = vmul.f32 %v6393, 1.442695
        %v6700 = vpow.pop %v6699
        %v6701 = vmul.f32 %v6394, 1.442695
        %v6702 = vpow.pop %v6701
        %v6703 = vmul.f32 %v6395, 1.442695
        %v6704 = vpow.pop %v6703
        %v6705 = vmul.f32 %v6396, 1.442695
        %v6706 = vpow.pop %v6705
        %v6707 = vmul.f32 %v6397, 1.442695
        %v6708 = vpow.pop %v6707
        %v6709 = vmul.f32 %v6398, 1.442695
        %v6710 = vpow.pop %v6709
        %v6711 = vmul.f32 %v6399, 1.442695
        %v6712 = vpow.pop %v6711
        %v6713 = vmul.f32 %v6400, 1.442695
        %v6714 = vpow.pop %v6713
        %v6715 = vmul.f32 %v6401, 1.442695
        %v6716 = vpow.pop %v6715
        %v6717 = vmul.f32 %v6402, 1.442695
        %v6718 = vpow.pop %v6717
        %v6719 = vmul.f32 %v6403, 1.442695
        %v6720 = vpow.pop %v6719
        %v6721 = vmul.f32 %v6404, 1.442695
        %v6722 = vpow.pop %v6721
        %v6723 = vmul.f32 %v6405, 1.442695
        %v6724 = vpow.pop %v6723
        %v6725 = vmul.f32 %v6406, 1.442695
        %v6726 = vpow.pop %v6725
        %v6727 = vmul.f32 %v6407, 1.442695
        %v6728 = vpow.pop %v6727
        %v6729 = vmul.f32 %v6408, 1.442695
        %v6730 = vpow.pop %v6729
        %v6731 = vmul.f32 %v6409, 1.442695
        %v6732 = vpow.pop %v6731
        %v6733 = vmul.f32 %v6410, 1.442695
        %v6734 = vpow.pop %v6733
        %v6735 = vmul.f32 %v6411, 1.442695
        %v6736 = vpow.pop %v6735
        %v6737 = vmul.f32 %v6412, 1.442695
        %v6738 = vpow.pop %v6737
        %v6739 = vmul.f32 %v6413, 1.442695
        %v6740 = vpow.pop %v6739
        %v6741 = vmul.f32 %v6414, 1.442695
        %v6742 = vpow.pop %v6741
        %v6743 = vmul.f32 %v6415, 1.442695
        %v6744 = vpow.pop %v6743
        %v6745 = vmul.f32 %v6416, 1.442695
        %v6746 = vpow.pop %v6745
        %v6747 = vmul.f32 %v6417, 1.442695
        %v6748 = vpow.pop %v6747
        %v6749 = vmul.f32 %v6418, 1.442695
        %v6750 = vpow.pop %v6749
        %v6751 = vmul.f32 %v6419, 1.442695
        %v6752 = vpow.pop %v6751
        %v6753 = vmul.f32 %v6420, 1.442695
        %v6754 = vpow.pop %v6753
        %v6755 = vmul.f32 %v6421, 1.442695
        %v6756 = vpow.pop %v6755
        %v6757 = vmul.f32 %v6422, 1.442695
        %v6758 = vpow.pop %v6757
        %v6759 = vmul.f32 %v6423, 1.442695
        %v6760 = vpow.pop %v6759
        %v6761 = vmul.f32 %v6424, 1.442695
        %v6762 = vpow.pop %v6761
        %v6763 = vmul.f32 %v6425, 1.442695
        %v6764 = vpow.pop %v6763
        %v6765 = vmul.f32 %v6426, 1.442695
        %v6766 = vpow.pop %v6765
        %v6767 = vmul.f32 %v6427, 1.442695
        %v6768 = vpow.pop %v6767
        %v6769 = vmul.f32 %v6428, 1.442695
        %v6770 = vpow.pop %v6769
        %v6771 = vmul.f32 %v6429, 1.442695
        %v6772 = vpow.pop %v6771
        %v6773 = vmul.f32 %v6430, 1.442695
        %v6774 = vpow.pop %v6773
        %v6775 = vmul.f32 %v6431, 1.442695
        %v6776 = vpow.pop %v6775
        %v6777 = vmul.f32 %v6432, 1.442695
        %v6778 = vpow.pop %v6777
        %v6779 = vmul.f32 %v6433, 1.442695
        %v6780 = vpow.pop %v6779
        %v6781 = vmul.f32 %v6434, 1.442695
        %v6782 = vpow.pop %v6781
        %v6783 = vmul.f32 %v6435, 1.442695
        %v6784 = vpow.pop %v6783
        %v6785 = vmul.f32 %v6436, 1.442695
        %v6786 = vpow.pop %v6785
        %v6787 = vmul.f32 %v6437, 1.442695
        %v6788 = vpow.pop %v6787
        %v6789 = vmul.f32 %v6438, 1.442695
        %v6790 = vpow.pop %v6789
        %v6791 = vmul.f32 %v6439, 1.442695
        %v6792 = vpow.pop %v6791
        %v6793 = vmul.f32 %v6440, 1.442695
        %v6794 = vpow.pop %v6793
        %v6795 = vmul.f32 %v6441, 1.442695
        %v6796 = vpow.pop %v6795
        %v6797 = vmul.f32 %v6442, 1.442695
        %v6798 = vpow.pop %v6797
        %v6799 = vmul.f32 %v6443, 1.442695
        %v6800 = vpow.pop %v6799
        %v6801 = vmul.f32 %v6444, 1.442695
        %v6802 = vpow.pop %v6801
        %v6803 = vmul.f32 %v6445, 1.442695
        %v6804 = vpow.pop %v6803
        %v6805 = vmul.f32 %v6446, 1.442695
        %v6806 = vpow.pop %v6805
        %v6807 = vmul.f32 %v6447, 1.442695
        %v6808 = vpow.pop %v6807
        %v6809 = vmul.f32 %v6448, 1.442695
        %v6810 = vpow.pop %v6809
        %v6811 = vmul.f32 %v6449, 1.442695
        %v6812 = vpow.pop %v6811
        %v6813 = vmul.f32 %v6450, 1.442695
        %v6814 = vpow.pop %v6813
        %v6815 = vmul.f32 %v6451, 1.442695
        %v6816 = vpow.pop %v6815
        %v6817 = vmul.f32 %v6452, 1.442695
        %v6818 = vpow.pop %v6817
        %v6819 = vmul.f32 %v6453, 1.442695
        %v6820 = vpow.pop %v6819
        %v6821 = vmul.f32 %v6454, 1.442695
        %v6822 = vpow.pop %v6821
        %v6823 = vmul.f32 %v6455, 1.442695
        %v6824 = vpow.pop %v6823
        %v6825 = vmul.f32 %v6456, 1.442695
        %v6826 = vpow.pop %v6825
        %v6827 = vmul.f32 %v6457, 1.442695
        %v6828 = vpow.pop %v6827
        %v6829 = vmul.f32 %v6458, 1.442695
        %v6830 = vpow.pop %v6829
        %v6831 = vmul.f32 %v6459, 1.442695
        %v6832 = vpow.pop %v6831
        %v6833 = vmul.f32 %v6460, 1.442695
        %v6834 = vpow.pop %v6833
        %v6835 = vmul.f32 %v6461, 1.442695
        %v6836 = vpow.pop %v6835
        %v6837 = vmul.f32 %v6462, 1.442695
        %v6838 = vpow.pop %v6837
        %v6839 = vmul.f32 %v6463, 1.442695
        %v6840 = vpow.pop %v6839
        %v6841 = vmul.f32 %v6464, 1.442695
        %v6842 = vpow.pop %v6841
        %v6843 = vmul.f32 %v6465, 1.442695
        %v6844 = vpow.pop %v6843
        %v6845 = vmul.f32 %v6466, 1.442695
        %v6846 = vpow.pop %v6845
        %v6847 = vmul.f32 %v6467, 1.442695
        %v6848 = vpow.pop %v6847
        %v6849 = vmul.f32 %v6468, 1.442695
        %v6850 = vpow.pop %v6849
        %v6851 = vmul.f32 %v6469, 1.442695
        %v6852 = vpow.pop %v6851
        %v6853 = vmul.f32 %v6470, 1.442695
        %v6854 = vpow.pop %v6853
        %v6855 = vmul.f32 %v6471, 1.442695
        %v6856 = vpow.pop %v6855
        %v6857 = vmul.f32 %v6472, 1.442695
        %v6858 = vpow.pop %v6857
        %v6859 = vmul.f32 %v6473, 1.442695
        %v6860 = vpow.pop %v6859
        %v6861 = vmul.f32 %v6474, 1.442695
        %v6862 = vpow.pop %v6861
        %v6863 = vmul.f32 %v6475, 1.442695
        %v6864 = vpow.pop %v6863
        %v6865 = vmul.f32 %v6476, 1.442695
        %v6866 = vpow.pop %v6865
        %v6867 = vmul.f32 %v6477, 1.442695
        %v6868 = vpow.pop %v6867
        %v6869 = vmul.f32 %v6478, 1.442695
        %v6870 = vpow.pop %v6869
        %v6871 = vmul.f32 %v6479, 1.442695
        %v6872 = vpow.pop %v6871
        %v6873 = vmul.f32 %v6480, 1.442695
        %v6874 = vpow.pop %v6873
        %v6875 = vmul.f32 %v6481, 1.442695
        %v6876 = vpow.pop %v6875
        %v6877 = vmul.f32 %v6482, 1.442695
        %v6878 = vpow.pop %v6877
        %v6879 = vmul.f32 %v6483, 1.442695
        %v6880 = vpow.pop %v6879
        %v6881 = vmul.f32 %v6484, 1.442695
        %v6882 = vpow.pop %v6881
        %v6883 = vmul.f32 %v6485, 1.442695
        %v6884 = vpow.pop %v6883
        %v6885 = vmul.f32 %v6486, 1.442695
        %v6886 = vpow.pop %v6885
        %v6887 = vmul.f32 %v6487, 1.442695
        %v6888 = vpow.pop %v6887
        %v6889 = vmul.f32 %v6488, 1.442695
        %v6890 = vpow.pop %v6889
        %v6891 = vmul.f32 %v6489, 1.442695
        %v6892 = vpow.pop %v6891
        %v6893 = vmul.f32 %v6490, 1.442695
        %v6894 = vpow.pop %v6893
        %v6895 = vmul.f32 %v6491, 1.442695
        %v6896 = vpow.pop %v6895
        %v6897 = vmul.f32 %v6492, 1.442695
        %v6898 = vpow.pop %v6897
        %v6899 = vmul.f32 %v6493, 1.442695
        %v6900 = vpow.pop %v6899
        %v6901 = vmul.f32 %v6494, 1.442695
        %v6902 = vpow.pop %v6901
        %v6903 = vmul.f32 %v6495, 1.442695
        %v6904 = vpow.pop %v6903
        %v6905 = vmul.f32 %v6496, 1.442695
        %v6906 = vpow.pop %v6905
        %v6907 = vmul.f32 %v6497, 1.442695
        %v6908 = vpow.pop %v6907
        %v6909 = vmul.f32 %v6498, 1.442695
        %v6910 = vpow.pop %v6909
        %v6911 = vmul.f32 %v6499, 1.442695
        %v6912 = vpow.pop %v6911
        %v6913 = vmul.f32 %v6500, 1.442695
        %v6914 = vpow.pop %v6913
        %v6915 = vmul.f32 %v6501, 1.442695
        %v6916 = vpow.pop %v6915
        %v6917 = vmul.f32 %v6502, 1.442695
        %v6918 = vpow.pop %v6917
        %v6919 = vmul.f32 %v6503, 1.442695
        %v6920 = vpow.pop %v6919
        %v6921 = vmul.f32 %v6504, 1.442695
        %v6922 = vpow.pop %v6921
        %v6923 = vmul.f32 %v6505, 1.442695
        %v6924 = vpow.pop %v6923
        %v6925 = vmul.f32 %v6506, 1.442695
        %v6926 = vpow.pop %v6925
        %v6927 = vmul.f32 %v6507, 1.442695
        %v6928 = vpow.pop %v6927
        %v6929 = vmul.f32 %v6508, 1.442695
        %v6930 = vpow.pop %v6929
        %v6931 = vmul.f32 %v6509, 1.442695
        %v6932 = vpow.pop %v6931
        %v6933 = vmul.f32 %v6510, 1.442695
        %v6934 = vpow.pop %v6933
        %v6935 = vmul.f32 %v6511, 1.442695
        %v6936 = vpow.pop %v6935
        %v6937 = vmul.f32 %v6512, 1.442695
        %v6938 = vpow.pop %v6937
        %v6939 = vmul.f32 %v6513, 1.442695
        %v6940 = vpow.pop %v6939
        %v6941 = vmul.f32 %v6514, 1.442695
        %v6942 = vpow.pop %v6941
        %v6943 = vmul.f32 %v6515, 1.442695
        %v6944 = vpow.pop %v6943
        %v6945 = vmul.f32 %v6516, 1.442695
        %v6946 = vpow.pop %v6945
        %v6947 = vmul.f32 %v6517, 1.442695
        %v6948 = vpow.pop %v6947
        %v6949 = vmul.f32 %v6518, 1.442695
        %v6950 = vpow.pop %v6949
        %v6951 = vmul.f32 %v6519, 1.442695
        %v6952 = vpow.pop %v6951
        %v6953 = vmul.f32 %v6520, 1.442695
        %v6954 = vpow.pop %v6953
        %v6955 = vmul.f32 %v6521, 1.442695
        %v6956 = vpow.pop %v6955
        %v6957 = vmul.f32 %v6522, 1.442695
        %v6958 = vpow.pop %v6957
        %v6959 = vmul.f32 %v6523, 1.442695
        %v6960 = vpow.pop %v6959
        %v6961 = vmul.f32 %v6524, 1.442695
        %v6962 = vpow.pop %v6961
        %v6963 = vmul.f32 %v6525, 1.442695
        %v6964 = vpow.pop %v6963
        %v6965 = vmul.f32 %v6526, 1.442695
        %v6966 = vpow.pop %v6965
        %v6967 = vmul.f32 %v6527, 1.442695
        %v6968 = vpow.pop %v6967
        %v6969 = vmul.f32 %v6528, 1.442695
        %v6970 = vpow.pop %v6969
        %v6971 = vmul.f32 %v6529, 1.442695
        %v6972 = vpow.pop %v6971
        %v6973 = vmul.f32 %v6530, 1.442695
        %v6974 = vpow.pop %v6973
        %v6975 = vmul.f32 %v6531, 1.442695
        %v6976 = vpow.pop %v6975
        %v6977 = vmul.f32 %v6532, 1.442695
        %v6978 = vpow.pop %v6977
        %v6979 = vmul.f32 %v6533, 1.442695
        %v6980 = vpow.pop %v6979
        %v6981 = vmul.f32 %v6534, 1.442695
        %v6982 = vpow.pop %v6981
        %v6983 = vmul.f32 %v6535, 1.442695
        %v6984 = vpow.pop %v6983
        %v6985 = vmul.f32 %v6536, 1.442695
        %v6986 = vpow.pop %v6985
        %v6987 = vmul.f32 %v6537, 1.442695
        %v6988 = vpow.pop %v6987
        %v6989 = vmul.f32 %v6538, 1.442695
        %v6990 = vpow.pop %v6989
        %v6991 = vmul.f32 %v6539, 1.442695
        %v6992 = vpow.pop %v6991
        %v6993 = vmul.f32 %v6540, 1.442695
        %v6994 = vpow.pop %v6993
        %v6995 = vmul.f32 %v6541, 1.442695
        %v6996 = vpow.pop %v6995
        %v6997 = vmul.f32 %v6542, 1.442695
        %v6998 = vpow.pop %v6997
        %v6999 = vmul.f32 %v6543, 1.442695
        %v7000 = vpow.pop %v6999
        %v7001 = vmul.f32 %v6544, 1.442695
        %v7002 = vpow.pop %v7001
        %v7003 = vmul.f32 %v6545, 1.442695
        %v7004 = vpow.pop %v7003
        %v7005 = vmul.f32 %v6546, 1.442695
        %v7006 = vpow.pop %v7005
        %v7007 = vmul.f32 %v6547, 1.442695
        %v7008 = vpow.pop %v7007
        %v7009 = vmul.f32 %v6548, 1.442695
        %v7010 = vpow.pop %v7009
        %v7011 = vmul.f32 %v6549, 1.442695
        %v7012 = vpow.pop %v7011
        %v7013 = vmul.f32 %v6550, 1.442695
        %v7014 = vpow.pop %v7013
        %v7015 = vmul.f32 %v6551, 1.442695
        %v7016 = vpow.pop %v7015
        %v7017 = vmul.f32 %v6552, 1.442695
        %v7018 = vpow.pop %v7017
        %v7019 = vmul.f32 %v6553, 1.442695
        %v7020 = vpow.pop %v7019
        %v7021 = vmul.f32 %v6554, 1.442695
        %v7022 = vpow.pop %v7021
        %v7023 = vmul.f32 %v6555, 1.442695
        %v7024 = vpow.pop %v7023
        %v7025 = vmul.f32 %v6556, 1.442695
        %v7026 = vpow.pop %v7025
        %v7027 = vmul.f32 %v6557, 1.442695
        %v7028 = vpow.pop %v7027
        %v7029 = vmul.f32 %v6558, 1.442695
        %v7030 = vpow.pop %v7029
        %v7031 = vmul.f32 %v6559, 1.442695
        %v7032 = vpow.pop %v7031
        %v7033 = vmul.f32 %v6560, 1.442695
        %v7034 = vpow.pop %v7033
        %v7035 = vmul.f32 %v6561, 1.442695
        %v7036 = vpow.pop %v7035
        %v7037 = vmul.f32 %v6562, 1.442695
        %v7038 = vpow.pop %v7037
        %v7039 = vmul.f32 %v6563, 1.442695
        %v7040 = vpow.pop %v7039
        %v7041 = vmul.f32 %v6564, 1.442695
        %v7042 = vpow.pop %v7041
        %v7043 = vmul.f32 %v6565, 1.442695
        %v7044 = vpow.pop %v7043
        %v7045 = vmul.f32 %v6566, 1.442695
        %v7046 = vpow.pop %v7045
        %v7047 = vmul.f32 %v6567, 1.442695
        %v7048 = vpow.pop %v7047
        %v7049 = vmul.f32 %v6568, 1.442695
        %v7050 = vpow.pop %v7049
        %v7051 = vmul.f32 %v6569, 1.442695
        %v7052 = vpow.pop %v7051
        %v7053 = vmul.f32 %v6570, 1.442695
        %v7054 = vpow.pop %v7053
        %v7055 = vmul.f32 %v6571, 1.442695
        %v7056 = vpow.pop %v7055
        %v7057 = vmul.f32 %v6572, 1.442695
        %v7058 = vpow.pop %v7057
        %v7059 = vmul.f32 %v6573, 1.442695
        %v7060 = vpow.pop %v7059
        %v7061 = vmul.f32 %v6574, 1.442695
        %v7062 = vpow.pop %v7061
        %v7063 = vmul.f32 %v6575, 1.442695
        %v7064 = vpow.pop %v7063
        %v7065 = vmul.f32 %v6576, 1.442695
        %v7066 = vpow.pop %v7065
        %v7067 = vmul.f32 %v6577, 1.442695
        %v7068 = vpow.pop %v7067
        %v7069 = vmul.f32 %v6578, 1.442695
        %v7070 = vpow.pop %v7069
        %v7071 = vmul.f32 %v6579, 1.442695
        %v7072 = vpow.pop %v7071
        %v7073 = vmul.f32 %v6580, 1.442695
        %v7074 = vpow.pop %v7073
        %v7075 = vmul.f32 %v6581, 1.442695
        %v7076 = vpow.pop %v7075
        %v7077 = vmul.f32 %v6582, 1.442695
        %v7078 = vpow.pop %v7077
        %v7079 = vmul.f32 %v6583, 1.442695
        %v7080 = vpow.pop %v7079
        %v7081 = vmul.f32 %v6584, 1.442695
        %v7082 = vpow.pop %v7081
        %v7083 = vmul.f32 %v6585, 1.442695
        %v7084 = vpow.pop %v7083
        %v7085 = vmul.f32 %v6586, 1.442695
        %v7086 = vpow.pop %v7085
        %v7087 = vmul.f32 %v6587, 1.442695
        %v7088 = vpow.pop %v7087
        %v7089 = vmul.f32 %v6588, 1.442695
        %v7090 = vpow.pop %v7089
        %v7091 = vmul.f32 %v6589, 1.442695
        %v7092 = vpow.pop %v7091
        %v7093 = vmul.f32 %v6590, 1.442695
        %v7094 = vpow.pop %v7093
        %v7095 = vmul.f32 %v6591, 1.442695
        %v7096 = vpow.pop %v7095
        %v7097 = vmul.f32 %v6592, 1.442695
        %v7098 = vpow.pop %v7097
        %v7099 = vmul.f32 %v6593, 1.442695
        %v7100 = vpow.pop %v7099
        %v7101 = vmul.f32 %v6594, 1.442695
        %v7102 = vpow.pop %v7101
        %v7103 = vmul.f32 %v6595, 1.442695
        %v7104 = vpow.pop %v7103
        %v7105 = vmul.f32 %v6596, 1.442695
        %v7106 = vpow.pop %v7105
        %v7107 = vmul.f32 %v6597, 1.442695
        %v7108 = vpow.pop %v7107
        %v7109 = vmul.f32 %v6598, 1.442695
        %v7110 = vpow.pop %v7109
        %v7111 = vadd.f32 %v6600, %v6602
        %v7112 = vadd.f32 %v7111, %v6604
        %v7113 = vadd.f32 %v7112, %v6606
        %7114 = vadd.xlane.f32.xlu0 %v7113
        %v7115 = vpop.xlane.xlu0 %7114
        %v7116 = vadd.f32 %v6608, %v6610
        %v7117 = vadd.f32 %v7116, %v6612
        %v7118 = vadd.f32 %v7117, %v6614
        %7119 = vadd.xlane.f32.xlu0 %v7118
        %v7120 = vpop.xlane.xlu0 %7119
        %v7121 = vadd.f32 %v6616, %v6618
        %v7122 = vadd.f32 %v7121, %v6620
        %v7123 = vadd.f32 %v7122, %v6622
        %7124 = vadd.xlane.f32.xlu0 %v7123
        %v7125 = vpop.xlane.xlu0 %7124
        %v7126 = vadd.f32 %v6624, %v6626
        %v7127 = vadd.f32 %v7126, %v6628
        %v7128 = vadd.f32 %v7127, %v6630
        %7129 = vadd.xlane.f32.xlu0 %v7128
        %v7130 = vpop.xlane.xlu0 %7129
        %v7131 = vadd.f32 %v6632, %v6634
        %v7132 = vadd.f32 %v7131, %v6636
        %v7133 = vadd.f32 %v7132, %v6638
        %7134 = vadd.xlane.f32.xlu0 %v7133
        %v7135 = vpop.xlane.xlu0 %7134
        %v7136 = vadd.f32 %v6640, %v6642
        %v7137 = vadd.f32 %v7136, %v6644
        %v7138 = vadd.f32 %v7137, %v6646
        %7139 = vadd.xlane.f32.xlu0 %v7138
        %v7140 = vpop.xlane.xlu0 %7139
        %v7141 = vadd.f32 %v6648, %v6650
        %v7142 = vadd.f32 %v7141, %v6652
        %v7143 = vadd.f32 %v7142, %v6654
        %7144 = vadd.xlane.f32.xlu0 %v7143
        %v7145 = vpop.xlane.xlu0 %7144
        %v7146 = vadd.f32 %v6656, %v6658
        %v7147 = vadd.f32 %v7146, %v6660
        %v7148 = vadd.f32 %v7147, %v6662
        %7149 = vadd.xlane.f32.xlu0 %v7148
        %v7150 = vpop.xlane.xlu0 %7149
        %v7151 = vadd.f32 %v6664, %v6666
        %v7152 = vadd.f32 %v7151, %v6668
        %v7153 = vadd.f32 %v7152, %v6670
        %7154 = vadd.xlane.f32.xlu0 %v7153
        %v7155 = vpop.xlane.xlu0 %7154
        %v7156 = vadd.f32 %v6672, %v6674
        %v7157 = vadd.f32 %v7156, %v6676
        %v7158 = vadd.f32 %v7157, %v6678
        %7159 = vadd.xlane.f32.xlu0 %v7158
        %v7160 = vpop.xlane.xlu0 %7159
        %v7161 = vadd.f32 %v6680, %v6682
        %v7162 = vadd.f32 %v7161, %v6684
        %v7163 = vadd.f32 %v7162, %v6686
        %7164 = vadd.xlane.f32.xlu0 %v7163
        %v7165 = vpop.xlane.xlu0 %7164
        %v7166 = vadd.f32 %v6688, %v6690
        %v7167 = vadd.f32 %v7166, %v6692
        %v7168 = vadd.f32 %v7167, %v6694
        %7169 = vadd.xlane.f32.xlu0 %v7168
        %v7170 = vpop.xlane.xlu0 %7169
        %v7171 = vadd.f32 %v6696, %v6698
        %v7172 = vadd.f32 %v7171, %v6700
        %v7173 = vadd.f32 %v7172, %v6702
        %7174 = vadd.xlane.f32.xlu0 %v7173
        %v7175 = vpop.xlane.xlu0 %7174
        %v7176 = vadd.f32 %v6704, %v6706
        %v7177 = vadd.f32 %v7176, %v6708
        %v7178 = vadd.f32 %v7177, %v6710
        %7179 = vadd.xlane.f32.xlu0 %v7178
        %v7180 = vpop.xlane.xlu0 %7179
        %v7181 = vadd.f32 %v6712, %v6714
        %v7182 = vadd.f32 %v7181, %v6716
        %v7183 = vadd.f32 %v7182, %v6718
        %7184 = vadd.xlane.f32.xlu0 %v7183
        %v7185 = vpop.xlane.xlu0 %7184
        %v7186 = vadd.f32 %v6720, %v6722
        %v7187 = vadd.f32 %v7186, %v6724
        %v7188 = vadd.f32 %v7187, %v6726
        %7189 = vadd.xlane.f32.xlu0 %v7188
        %v7190 = vpop.xlane.xlu0 %7189
        %v7191 = vadd.f32 %v6728, %v6730
        %v7192 = vadd.f32 %v7191, %v6732
        %v7193 = vadd.f32 %v7192, %v6734
        %7194 = vadd.xlane.f32.xlu0 %v7193
        %v7195 = vpop.xlane.xlu0 %7194
        %v7196 = vadd.f32 %v6736, %v6738
        %v7197 = vadd.f32 %v7196, %v6740
        %v7198 = vadd.f32 %v7197, %v6742
        %7199 = vadd.xlane.f32.xlu0 %v7198
        %v7200 = vpop.xlane.xlu0 %7199
        %v7201 = vadd.f32 %v6744, %v6746
        %v7202 = vadd.f32 %v7201, %v6748
        %v7203 = vadd.f32 %v7202, %v6750
        %7204 = vadd.xlane.f32.xlu0 %v7203
        %v7205 = vpop.xlane.xlu0 %7204
        %v7206 = vadd.f32 %v6752, %v6754
        %v7207 = vadd.f32 %v7206, %v6756
        %v7208 = vadd.f32 %v7207, %v6758
        %7209 = vadd.xlane.f32.xlu0 %v7208
        %v7210 = vpop.xlane.xlu0 %7209
        %v7211 = vadd.f32 %v6760, %v6762
        %v7212 = vadd.f32 %v7211, %v6764
        %v7213 = vadd.f32 %v7212, %v6766
        %7214 = vadd.xlane.f32.xlu0 %v7213
        %v7215 = vpop.xlane.xlu0 %7214
        %v7216 = vadd.f32 %v6768, %v6770
        %v7217 = vadd.f32 %v7216, %v6772
        %v7218 = vadd.f32 %v7217, %v6774
        %7219 = vadd.xlane.f32.xlu0 %v7218
        %v7220 = vpop.xlane.xlu0 %7219
        %v7221 = vadd.f32 %v6776, %v6778
        %v7222 = vadd.f32 %v7221, %v6780
        %v7223 = vadd.f32 %v7222, %v6782
        %7224 = vadd.xlane.f32.xlu0 %v7223
        %v7225 = vpop.xlane.xlu0 %7224
        %v7226 = vadd.f32 %v6784, %v6786
        %v7227 = vadd.f32 %v7226, %v6788
        %v7228 = vadd.f32 %v7227, %v6790
        %7229 = vadd.xlane.f32.xlu0 %v7228
        %v7230 = vpop.xlane.xlu0 %7229
        %v7231 = vadd.f32 %v6792, %v6794
        %v7232 = vadd.f32 %v7231, %v6796
        %v7233 = vadd.f32 %v7232, %v6798
        %7234 = vadd.xlane.f32.xlu0 %v7233
        %v7235 = vpop.xlane.xlu0 %7234
        %v7236 = vadd.f32 %v6800, %v6802
        %v7237 = vadd.f32 %v7236, %v6804
        %v7238 = vadd.f32 %v7237, %v6806
        %7239 = vadd.xlane.f32.xlu0 %v7238
        %v7240 = vpop.xlane.xlu0 %7239
        %v7241 = vadd.f32 %v6808, %v6810
        %v7242 = vadd.f32 %v7241, %v6812
        %v7243 = vadd.f32 %v7242, %v6814
        %7244 = vadd.xlane.f32.xlu0 %v7243
        %v7245 = vpop.xlane.xlu0 %7244
        %v7246 = vadd.f32 %v6816, %v6818
        %v7247 = vadd.f32 %v7246, %v6820
        %v7248 = vadd.f32 %v7247, %v6822
        %7249 = vadd.xlane.f32.xlu0 %v7248
        %v7250 = vpop.xlane.xlu0 %7249
        %v7251 = vadd.f32 %v6824, %v6826
        %v7252 = vadd.f32 %v7251, %v6828
        %v7253 = vadd.f32 %v7252, %v6830
        %7254 = vadd.xlane.f32.xlu0 %v7253
        %v7255 = vpop.xlane.xlu0 %7254
        %v7256 = vadd.f32 %v6832, %v6834
        %v7257 = vadd.f32 %v7256, %v6836
        %v7258 = vadd.f32 %v7257, %v6838
        %7259 = vadd.xlane.f32.xlu0 %v7258
        %v7260 = vpop.xlane.xlu0 %7259
        %v7261 = vadd.f32 %v6840, %v6842
        %v7262 = vadd.f32 %v7261, %v6844
        %v7263 = vadd.f32 %v7262, %v6846
        %7264 = vadd.xlane.f32.xlu0 %v7263
        %v7265 = vpop.xlane.xlu0 %7264
        %v7266 = vadd.f32 %v6848, %v6850
        %v7267 = vadd.f32 %v7266, %v6852
        %v7268 = vadd.f32 %v7267, %v6854
        %7269 = vadd.xlane.f32.xlu0 %v7268
        %v7270 = vpop.xlane.xlu0 %7269
        %v7271 = vadd.f32 %v6856, %v6858
        %v7272 = vadd.f32 %v7271, %v6860
        %v7273 = vadd.f32 %v7272, %v6862
        %7274 = vadd.xlane.f32.xlu0 %v7273
        %v7275 = vpop.xlane.xlu0 %7274
        %v7276 = vadd.f32 %v6864, %v6866
        %v7277 = vadd.f32 %v7276, %v6868
        %v7278 = vadd.f32 %v7277, %v6870
        %7279 = vadd.xlane.f32.xlu0 %v7278
        %v7280 = vpop.xlane.xlu0 %7279
        %v7281 = vadd.f32 %v6872, %v6874
        %v7282 = vadd.f32 %v7281, %v6876
        %v7283 = vadd.f32 %v7282, %v6878
        %7284 = vadd.xlane.f32.xlu0 %v7283
        %v7285 = vpop.xlane.xlu0 %7284
        %v7286 = vadd.f32 %v6880, %v6882
        %v7287 = vadd.f32 %v7286, %v6884
        %v7288 = vadd.f32 %v7287, %v6886
        %7289 = vadd.xlane.f32.xlu0 %v7288
        %v7290 = vpop.xlane.xlu0 %7289
        %v7291 = vadd.f32 %v6888, %v6890
        %v7292 = vadd.f32 %v7291, %v6892
        %v7293 = vadd.f32 %v7292, %v6894
        %7294 = vadd.xlane.f32.xlu0 %v7293
        %v7295 = vpop.xlane.xlu0 %7294
        %v7296 = vadd.f32 %v6896, %v6898
        %v7297 = vadd.f32 %v7296, %v6900
        %v7298 = vadd.f32 %v7297, %v6902
        %7299 = vadd.xlane.f32.xlu0 %v7298
        %v7300 = vpop.xlane.xlu0 %7299
        %v7301 = vadd.f32 %v6904, %v6906
        %v7302 = vadd.f32 %v7301, %v6908
        %v7303 = vadd.f32 %v7302, %v6910
        %7304 = vadd.xlane.f32.xlu0 %v7303
        %v7305 = vpop.xlane.xlu0 %7304
        %v7306 = vadd.f32 %v6912, %v6914
        %v7307 = vadd.f32 %v7306, %v6916
        %v7308 = vadd.f32 %v7307, %v6918
        %7309 = vadd.xlane.f32.xlu0 %v7308
        %v7310 = vpop.xlane.xlu0 %7309
        %v7311 = vadd.f32 %v6920, %v6922
        %v7312 = vadd.f32 %v7311, %v6924
        %v7313 = vadd.f32 %v7312, %v6926
        %7314 = vadd.xlane.f32.xlu0 %v7313
        %v7315 = vpop.xlane.xlu0 %7314
        %v7316 = vadd.f32 %v6928, %v6930
        %v7317 = vadd.f32 %v7316, %v6932
        %v7318 = vadd.f32 %v7317, %v6934
        %7319 = vadd.xlane.f32.xlu0 %v7318
        %v7320 = vpop.xlane.xlu0 %7319
        %v7321 = vadd.f32 %v6936, %v6938
        %v7322 = vadd.f32 %v7321, %v6940
        %v7323 = vadd.f32 %v7322, %v6942
        %7324 = vadd.xlane.f32.xlu0 %v7323
        %v7325 = vpop.xlane.xlu0 %7324
        %v7326 = vadd.f32 %v6944, %v6946
        %v7327 = vadd.f32 %v7326, %v6948
        %v7328 = vadd.f32 %v7327, %v6950
        %7329 = vadd.xlane.f32.xlu0 %v7328
        %v7330 = vpop.xlane.xlu0 %7329
        %v7331 = vadd.f32 %v6952, %v6954
        %v7332 = vadd.f32 %v7331, %v6956
        %v7333 = vadd.f32 %v7332, %v6958
        %7334 = vadd.xlane.f32.xlu0 %v7333
        %v7335 = vpop.xlane.xlu0 %7334
        %v7336 = vadd.f32 %v6960, %v6962
        %v7337 = vadd.f32 %v7336, %v6964
        %v7338 = vadd.f32 %v7337, %v6966
        %7339 = vadd.xlane.f32.xlu0 %v7338
        %v7340 = vpop.xlane.xlu0 %7339
        %v7341 = vadd.f32 %v6968, %v6970
        %v7342 = vadd.f32 %v7341, %v6972
        %v7343 = vadd.f32 %v7342, %v6974
        %7344 = vadd.xlane.f32.xlu0 %v7343
        %v7345 = vpop.xlane.xlu0 %7344
        %v7346 = vadd.f32 %v6976, %v6978
        %v7347 = vadd.f32 %v7346, %v6980
        %v7348 = vadd.f32 %v7347, %v6982
        %7349 = vadd.xlane.f32.xlu0 %v7348
        %v7350 = vpop.xlane.xlu0 %7349
        %v7351 = vadd.f32 %v6984, %v6986
        %v7352 = vadd.f32 %v7351, %v6988
        %v7353 = vadd.f32 %v7352, %v6990
        %7354 = vadd.xlane.f32.xlu0 %v7353
        %v7355 = vpop.xlane.xlu0 %7354
        %v7356 = vadd.f32 %v6992, %v6994
        %v7357 = vadd.f32 %v7356, %v6996
        %v7358 = vadd.f32 %v7357, %v6998
        %7359 = vadd.xlane.f32.xlu0 %v7358
        %v7360 = vpop.xlane.xlu0 %7359
        %v7361 = vadd.f32 %v7000, %v7002
        %v7362 = vadd.f32 %v7361, %v7004
        %v7363 = vadd.f32 %v7362, %v7006
        %7364 = vadd.xlane.f32.xlu0 %v7363
        %v7365 = vpop.xlane.xlu0 %7364
        %v7366 = vadd.f32 %v7008, %v7010
        %v7367 = vadd.f32 %v7366, %v7012
        %v7368 = vadd.f32 %v7367, %v7014
        %7369 = vadd.xlane.f32.xlu0 %v7368
        %v7370 = vpop.xlane.xlu0 %7369
        %v7371 = vadd.f32 %v7016, %v7018
        %v7372 = vadd.f32 %v7371, %v7020
        %v7373 = vadd.f32 %v7372, %v7022
        %7374 = vadd.xlane.f32.xlu0 %v7373
        %v7375 = vpop.xlane.xlu0 %7374
        %v7376 = vadd.f32 %v7024, %v7026
        %v7377 = vadd.f32 %v7376, %v7028
        %v7378 = vadd.f32 %v7377, %v7030
        %7379 = vadd.xlane.f32.xlu0 %v7378
        %v7380 = vpop.xlane.xlu0 %7379
        %v7381 = vadd.f32 %v7032, %v7034
        %v7382 = vadd.f32 %v7381, %v7036
        %v7383 = vadd.f32 %v7382, %v7038
        %7384 = vadd.xlane.f32.xlu0 %v7383
        %v7385 = vpop.xlane.xlu0 %7384
        %v7386 = vadd.f32 %v7040, %v7042
        %v7387 = vadd.f32 %v7386, %v7044
        %v7388 = vadd.f32 %v7387, %v7046
        %7389 = vadd.xlane.f32.xlu0 %v7388
        %v7390 = vpop.xlane.xlu0 %7389
        %v7391 = vadd.f32 %v7048, %v7050
        %v7392 = vadd.f32 %v7391, %v7052
        %v7393 = vadd.f32 %v7392, %v7054
        %7394 = vadd.xlane.f32.xlu0 %v7393
        %v7395 = vpop.xlane.xlu0 %7394
        %v7396 = vadd.f32 %v7056, %v7058
        %v7397 = vadd.f32 %v7396, %v7060
        %v7398 = vadd.f32 %v7397, %v7062
        %7399 = vadd.xlane.f32.xlu0 %v7398
        %v7400 = vpop.xlane.xlu0 %7399
        %v7401 = vadd.f32 %v7064, %v7066
        %v7402 = vadd.f32 %v7401, %v7068
        %v7403 = vadd.f32 %v7402, %v7070
        %7404 = vadd.xlane.f32.xlu0 %v7403
        %v7405 = vpop.xlane.xlu0 %7404
        %v7406 = vadd.f32 %v7072, %v7074
        %v7407 = vadd.f32 %v7406, %v7076
        %v7408 = vadd.f32 %v7407, %v7078
        %7409 = vadd.xlane.f32.xlu0 %v7408
        %v7410 = vpop.xlane.xlu0 %7409
        %v7411 = vadd.f32 %v7080, %v7082
        %v7412 = vadd.f32 %v7411, %v7084
        %v7413 = vadd.f32 %v7412, %v7086
        %7414 = vadd.xlane.f32.xlu0 %v7413
        %v7415 = vpop.xlane.xlu0 %7414
        %v7416 = vadd.f32 %v7088, %v7090
        %v7417 = vadd.f32 %v7416, %v7092
        %v7418 = vadd.f32 %v7417, %v7094
        %7419 = vadd.xlane.f32.xlu0 %v7418
        %v7420 = vpop.xlane.xlu0 %7419
        %v7421 = vadd.f32 %v7096, %v7098
        %v7422 = vadd.f32 %v7421, %v7100
        %v7423 = vadd.f32 %v7422, %v7102
        %7424 = vadd.xlane.f32.xlu0 %v7423
        %v7425 = vpop.xlane.xlu0 %7424
        %v7426 = vadd.f32 %v7104, %v7106
        %v7427 = vadd.f32 %v7426, %v7108
        %v7428 = vadd.f32 %v7427, %v7110
        %7429 = vadd.xlane.f32.xlu0 %v7428
        %v7430 = vpop.xlane.xlu0 %7429
        %v7431 = vlog2.pop %v7115
        %v7432 = vmul.f32 %v7431, 0.6931472
        %v7433 = vlog2.pop %v7120
        %v7434 = vmul.f32 %v7433, 0.6931472
        %v7435 = vlog2.pop %v7125
        %v7436 = vmul.f32 %v7435, 0.6931472
        %v7437 = vlog2.pop %v7130
        %v7438 = vmul.f32 %v7437, 0.6931472
        %v7439 = vlog2.pop %v7135
        %v7440 = vmul.f32 %v7439, 0.6931472
        %v7441 = vlog2.pop %v7140
        %v7442 = vmul.f32 %v7441, 0.6931472
        %v7443 = vlog2.pop %v7145
        %v7444 = vmul.f32 %v7443, 0.6931472
        %v7445 = vlog2.pop %v7150
        %v7446 = vmul.f32 %v7445, 0.6931472
        %v7447 = vlog2.pop %v7155
        %v7448 = vmul.f32 %v7447, 0.6931472
        %v7449 = vlog2.pop %v7160
        %v7450 = vmul.f32 %v7449, 0.6931472
        %v7451 = vlog2.pop %v7165
        %v7452 = vmul.f32 %v7451, 0.6931472
        %v7453 = vlog2.pop %v7170
        %v7454 = vmul.f32 %v7453, 0.6931472
        %v7455 = vlog2.pop %v7175
        %v7456 = vmul.f32 %v7455, 0.6931472
        %v7457 = vlog2.pop %v7180
        %v7458 = vmul.f32 %v7457, 0.6931472
        %v7459 = vlog2.pop %v7185
        %v7460 = vmul.f32 %v7459, 0.6931472
        %v7461 = vlog2.pop %v7190
        %v7462 = vmul.f32 %v7461, 0.6931472
        %v7463 = vlog2.pop %v7195
        %v7464 = vmul.f32 %v7463, 0.6931472
        %v7465 = vlog2.pop %v7200
        %v7466 = vmul.f32 %v7465, 0.6931472
        %v7467 = vlog2.pop %v7205
        %v7468 = vmul.f32 %v7467, 0.6931472
        %v7469 = vlog2.pop %v7210
        %v7470 = vmul.f32 %v7469, 0.6931472
        %v7471 = vlog2.pop %v7215
        %v7472 = vmul.f32 %v7471, 0.6931472
        %v7473 = vlog2.pop %v7220
        %v7474 = vmul.f32 %v7473, 0.6931472
        %v7475 = vlog2.pop %v7225
        %v7476 = vmul.f32 %v7475, 0.6931472
        %v7477 = vlog2.pop %v7230
        %v7478 = vmul.f32 %v7477, 0.6931472
        %v7479 = vlog2.pop %v7235
        %v7480 = vmul.f32 %v7479, 0.6931472
        %v7481 = vlog2.pop %v7240
        %v7482 = vmul.f32 %v7481, 0.6931472
        %v7483 = vlog2.pop %v7245
        %v7484 = vmul.f32 %v7483, 0.6931472
        %v7485 = vlog2.pop %v7250
        %v7486 = vmul.f32 %v7485, 0.6931472
        %v7487 = vlog2.pop %v7255
        %v7488 = vmul.f32 %v7487, 0.6931472
        %v7489 = vlog2.pop %v7260
        %v7490 = vmul.f32 %v7489, 0.6931472
        %v7491 = vlog2.pop %v7265
        %v7492 = vmul.f32 %v7491, 0.6931472
        %v7493 = vlog2.pop %v7270
        %v7494 = vmul.f32 %v7493, 0.6931472
        %v7495 = vlog2.pop %v7275
        %v7496 = vmul.f32 %v7495, 0.6931472
        %v7497 = vlog2.pop %v7280
        %v7498 = vmul.f32 %v7497, 0.6931472
        %v7499 = vlog2.pop %v7285
        %v7500 = vmul.f32 %v7499, 0.6931472
        %v7501 = vlog2.pop %v7290
        %v7502 = vmul.f32 %v7501, 0.6931472
        %v7503 = vlog2.pop %v7295
        %v7504 = vmul.f32 %v7503, 0.6931472
        %v7505 = vlog2.pop %v7300
        %v7506 = vmul.f32 %v7505, 0.6931472
        %v7507 = vlog2.pop %v7305
        %v7508 = vmul.f32 %v7507, 0.6931472
        %v7509 = vlog2.pop %v7310
        %v7510 = vmul.f32 %v7509, 0.6931472
        %v7511 = vlog2.pop %v7315
        %v7512 = vmul.f32 %v7511, 0.6931472
        %v7513 = vlog2.pop %v7320
        %v7514 = vmul.f32 %v7513, 0.6931472
        %v7515 = vlog2.pop %v7325
        %v7516 = vmul.f32 %v7515, 0.6931472
        %v7517 = vlog2.pop %v7330
        %v7518 = vmul.f32 %v7517, 0.6931472
        %v7519 = vlog2.pop %v7335
        %v7520 = vmul.f32 %v7519, 0.6931472
        %v7521 = vlog2.pop %v7340
        %v7522 = vmul.f32 %v7521, 0.6931472
        %v7523 = vlog2.pop %v7345
        %v7524 = vmul.f32 %v7523, 0.6931472
        %v7525 = vlog2.pop %v7350
        %v7526 = vmul.f32 %v7525, 0.6931472
        %v7527 = vlog2.pop %v7355
        %v7528 = vmul.f32 %v7527, 0.6931472
        %v7529 = vlog2.pop %v7360
        %v7530 = vmul.f32 %v7529, 0.6931472
        %v7531 = vlog2.pop %v7365
        %v7532 = vmul.f32 %v7531, 0.6931472
        %v7533 = vlog2.pop %v7370
        %v7534 = vmul.f32 %v7533, 0.6931472
        %v7535 = vlog2.pop %v7375
        %v7536 = vmul.f32 %v7535, 0.6931472
        %v7537 = vlog2.pop %v7380
        %v7538 = vmul.f32 %v7537, 0.6931472
        %v7539 = vlog2.pop %v7385
        %v7540 = vmul.f32 %v7539, 0.6931472
        %v7541 = vlog2.pop %v7390
        %v7542 = vmul.f32 %v7541, 0.6931472
        %v7543 = vlog2.pop %v7395
        %v7544 = vmul.f32 %v7543, 0.6931472
        %v7545 = vlog2.pop %v7400
        %v7546 = vmul.f32 %v7545, 0.6931472
        %v7547 = vlog2.pop %v7405
        %v7548 = vmul.f32 %v7547, 0.6931472
        %v7549 = vlog2.pop %v7410
        %v7550 = vmul.f32 %v7549, 0.6931472
        %v7551 = vlog2.pop %v7415
        %v7552 = vmul.f32 %v7551, 0.6931472
        %v7553 = vlog2.pop %v7420
        %v7554 = vmul.f32 %v7553, 0.6931472
        %v7555 = vlog2.pop %v7425
        %v7556 = vmul.f32 %v7555, 0.6931472
        %v7557 = vlog2.pop %v7430
        %v7558 = vmul.f32 %v7557, 0.6931472
        %v7559 = vsub.f32 %v6343, %v7432
        %v7560 = vsub.f32 %v6344, %v7432
        %v7561 = vsub.f32 %v6345, %v7432
        %v7562 = vsub.f32 %v6346, %v7432
        %v7563 = vsub.f32 %v6347, %v7434
        %v7564 = vsub.f32 %v6348, %v7434
        %v7565 = vsub.f32 %v6349, %v7434
        %v7566 = vsub.f32 %v6350, %v7434
        %v7567 = vsub.f32 %v6351, %v7436
        %v7568 = vsub.f32 %v6352, %v7436
        %v7569 = vsub.f32 %v6353, %v7436
        %v7570 = vsub.f32 %v6354, %v7436
        %v7571 = vsub.f32 %v6355, %v7438
        %v7572 = vsub.f32 %v6356, %v7438
        %v7573 = vsub.f32 %v6357, %v7438
        %v7574 = vsub.f32 %v6358, %v7438
        %v7575 = vsub.f32 %v6359, %v7440
        %v7576 = vsub.f32 %v6360, %v7440
        %v7577 = vsub.f32 %v6361, %v7440
        %v7578 = vsub.f32 %v6362, %v7440
        %v7579 = vsub.f32 %v6363, %v7442
        %v7580 = vsub.f32 %v6364, %v7442
        %v7581 = vsub.f32 %v6365, %v7442
        %v7582 = vsub.f32 %v6366, %v7442
        %v7583 = vsub.f32 %v6367, %v7444
        %v7584 = vsub.f32 %v6368, %v7444
        %v7585 = vsub.f32 %v6369, %v7444
        %v7586 = vsub.f32 %v6370, %v7444
        %v7587 = vsub.f32 %v6371, %v7446
        %v7588 = vsub.f32 %v6372, %v7446
        %v7589 = vsub.f32 %v6373, %v7446
        %v7590 = vsub.f32 %v6374, %v7446
        %v7591 = vsub.f32 %v6375, %v7448
        %v7592 = vsub.f32 %v6376, %v7448
        %v7593 = vsub.f32 %v6377, %v7448
        %v7594 = vsub.f32 %v6378, %v7448
        %v7595 = vsub.f32 %v6379, %v7450
        %v7596 = vsub.f32 %v6380, %v7450
        %v7597 = vsub.f32 %v6381, %v7450
        %v7598 = vsub.f32 %v6382, %v7450
        %v7599 = vsub.f32 %v6383, %v7452
        %v7600 = vsub.f32 %v6384, %v7452
        %v7601 = vsub.f32 %v6385, %v7452
        %v7602 = vsub.f32 %v6386, %v7452
        %v7603 = vsub.f32 %v6387, %v7454
        %v7604 = vsub.f32 %v6388, %v7454
        %v7605 = vsub.f32 %v6389, %v7454
        %v7606 = vsub.f32 %v6390, %v7454
        %v7607 = vsub.f32 %v6391, %v7456
        %v7608 = vsub.f32 %v6392, %v7456
        %v7609 = vsub.f32 %v6393, %v7456
        %v7610 = vsub.f32 %v6394, %v7456
        %v7611 = vsub.f32 %v6395, %v7458
        %v7612 = vsub.f32 %v6396, %v7458
        %v7613 = vsub.f32 %v6397, %v7458
        %v7614 = vsub.f32 %v6398, %v7458
        %v7615 = vsub.f32 %v6399, %v7460
        %v7616 = vsub.f32 %v6400, %v7460
        %v7617 = vsub.f32 %v6401, %v7460
        %v7618 = vsub.f32 %v6402, %v7460
        %v7619 = vsub.f32 %v6403, %v7462
        %v7620 = vsub.f32 %v6404, %v7462
        %v7621 = vsub.f32 %v6405, %v7462
        %v7622 = vsub.f32 %v6406, %v7462
        %v7623 = vsub.f32 %v6407, %v7464
        %v7624 = vsub.f32 %v6408, %v7464
        %v7625 = vsub.f32 %v6409, %v7464
        %v7626 = vsub.f32 %v6410, %v7464
        %v7627 = vsub.f32 %v6411, %v7466
        %v7628 = vsub.f32 %v6412, %v7466
        %v7629 = vsub.f32 %v6413, %v7466
        %v7630 = vsub.f32 %v6414, %v7466
        %v7631 = vsub.f32 %v6415, %v7468
        %v7632 = vsub.f32 %v6416, %v7468
        %v7633 = vsub.f32 %v6417, %v7468
        %v7634 = vsub.f32 %v6418, %v7468
        %v7635 = vsub.f32 %v6419, %v7470
        %v7636 = vsub.f32 %v6420, %v7470
        %v7637 = vsub.f32 %v6421, %v7470
        %v7638 = vsub.f32 %v6422, %v7470
        %v7639 = vsub.f32 %v6423, %v7472
        %v7640 = vsub.f32 %v6424, %v7472
        %v7641 = vsub.f32 %v6425, %v7472
        %v7642 = vsub.f32 %v6426, %v7472
        %v7643 = vsub.f32 %v6427, %v7474
        %v7644 = vsub.f32 %v6428, %v7474
        %v7645 = vsub.f32 %v6429, %v7474
        %v7646 = vsub.f32 %v6430, %v7474
        %v7647 = vsub.f32 %v6431, %v7476
        %v7648 = vsub.f32 %v6432, %v7476
        %v7649 = vsub.f32 %v6433, %v7476
        %v7650 = vsub.f32 %v6434, %v7476
        %v7651 = vsub.f32 %v6435, %v7478
        %v7652 = vsub.f32 %v6436, %v7478
        %v7653 = vsub.f32 %v6437, %v7478
        %v7654 = vsub.f32 %v6438, %v7478
        %v7655 = vsub.f32 %v6439, %v7480
        %v7656 = vsub.f32 %v6440, %v7480
        %v7657 = vsub.f32 %v6441, %v7480
        %v7658 = vsub.f32 %v6442, %v7480
        %v7659 = vsub.f32 %v6443, %v7482
        %v7660 = vsub.f32 %v6444, %v7482
        %v7661 = vsub.f32 %v6445, %v7482
        %v7662 = vsub.f32 %v6446, %v7482
        %v7663 = vsub.f32 %v6447, %v7484
        %v7664 = vsub.f32 %v6448, %v7484
        %v7665 = vsub.f32 %v6449, %v7484
        %v7666 = vsub.f32 %v6450, %v7484
        %v7667 = vsub.f32 %v6451, %v7486
        %v7668 = vsub.f32 %v6452, %v7486
        %v7669 = vsub.f32 %v6453, %v7486
        %v7670 = vsub.f32 %v6454, %v7486
        %v7671 = vsub.f32 %v6455, %v7488
        %v7672 = vsub.f32 %v6456, %v7488
        %v7673 = vsub.f32 %v6457, %v7488
        %v7674 = vsub.f32 %v6458, %v7488
        %v7675 = vsub.f32 %v6459, %v7490
        %v7676 = vsub.f32 %v6460, %v7490
        %v7677 = vsub.f32 %v6461, %v7490
        %v7678 = vsub.f32 %v6462, %v7490
        %v7679 = vsub.f32 %v6463, %v7492
        %v7680 = vsub.f32 %v6464, %v7492
        %v7681 = vsub.f32 %v6465, %v7492
        %v7682 = vsub.f32 %v6466, %v7492
        %v7683 = vsub.f32 %v6467, %v7494
        %v7684 = vsub.f32 %v6468, %v7494
        %v7685 = vsub.f32 %v6469, %v7494
        %v7686 = vsub.f32 %v6470, %v7494
        %v7687 = vsub.f32 %v6471, %v7496
        %v7688 = vsub.f32 %v6472, %v7496
        %v7689 = vsub.f32 %v6473, %v7496
        %v7690 = vsub.f32 %v6474, %v7496
        %v7691 = vsub.f32 %v6475, %v7498
        %v7692 = vsub.f32 %v6476, %v7498
        %v7693 = vsub.f32 %v6477, %v7498
        %v7694 = vsub.f32 %v6478, %v7498
        %v7695 = vsub.f32 %v6479, %v7500
        %v7696 = vsub.f32 %v6480, %v7500
        %v7697 = vsub.f32 %v6481, %v7500
        %v7698 = vsub.f32 %v6482, %v7500
        %v7699 = vsub.f32 %v6483, %v7502
        %v7700 = vsub.f32 %v6484, %v7502
        %v7701 = vsub.f32 %v6485, %v7502
        %v7702 = vsub.f32 %v6486, %v7502
        %v7703 = vsub.f32 %v6487, %v7504
        %v7704 = vsub.f32 %v6488, %v7504
        %v7705 = vsub.f32 %v6489, %v7504
        %v7706 = vsub.f32 %v6490, %v7504
        %v7707 = vsub.f32 %v6491, %v7506
        %v7708 = vsub.f32 %v6492, %v7506
        %v7709 = vsub.f32 %v6493, %v7506
        %v7710 = vsub.f32 %v6494, %v7506
        %v7711 = vsub.f32 %v6495, %v7508
        %v7712 = vsub.f32 %v6496, %v7508
        %v7713 = vsub.f32 %v6497, %v7508
        %v7714 = vsub.f32 %v6498, %v7508
        %v7715 = vsub.f32 %v6499, %v7510
        %v7716 = vsub.f32 %v6500, %v7510
        %v7717 = vsub.f32 %v6501, %v7510
        %v7718 = vsub.f32 %v6502, %v7510
        %v7719 = vsub.f32 %v6503, %v7512
        %v7720 = vsub.f32 %v6504, %v7512
        %v7721 = vsub.f32 %v6505, %v7512
        %v7722 = vsub.f32 %v6506, %v7512
        %v7723 = vsub.f32 %v6507, %v7514
        %v7724 = vsub.f32 %v6508, %v7514
        %v7725 = vsub.f32 %v6509, %v7514
        %v7726 = vsub.f32 %v6510, %v7514
        %v7727 = vsub.f32 %v6511, %v7516
        %v7728 = vsub.f32 %v6512, %v7516
        %v7729 = vsub.f32 %v6513, %v7516
        %v7730 = vsub.f32 %v6514, %v7516
        %v7731 = vsub.f32 %v6515, %v7518
        %v7732 = vsub.f32 %v6516, %v7518
        %v7733 = vsub.f32 %v6517, %v7518
        %v7734 = vsub.f32 %v6518, %v7518
        %v7735 = vsub.f32 %v6519, %v7520
        %v7736 = vsub.f32 %v6520, %v7520
        %v7737 = vsub.f32 %v6521, %v7520
        %v7738 = vsub.f32 %v6522, %v7520
        %v7739 = vsub.f32 %v6523, %v7522
        %v7740 = vsub.f32 %v6524, %v7522
        %v7741 = vsub.f32 %v6525, %v7522
        %v7742 = vsub.f32 %v6526, %v7522
        %v7743 = vsub.f32 %v6527, %v7524
        %v7744 = vsub.f32 %v6528, %v7524
        %v7745 = vsub.f32 %v6529, %v7524
        %v7746 = vsub.f32 %v6530, %v7524
        %v7747 = vsub.f32 %v6531, %v7526
        %v7748 = vsub.f32 %v6532, %v7526
        %v7749 = vsub.f32 %v6533, %v7526
        %v7750 = vsub.f32 %v6534, %v7526
        %v7751 = vsub.f32 %v6535, %v7528
        %v7752 = vsub.f32 %v6536, %v7528
        %v7753 = vsub.f32 %v6537, %v7528
        %v7754 = vsub.f32 %v6538, %v7528
        %v7755 = vsub.f32 %v6539, %v7530
        %v7756 = vsub.f32 %v6540, %v7530
        %v7757 = vsub.f32 %v6541, %v7530
        %v7758 = vsub.f32 %v6542, %v7530
        %v7759 = vsub.f32 %v6543, %v7532
        %v7760 = vsub.f32 %v6544, %v7532
        %v7761 = vsub.f32 %v6545, %v7532
        %v7762 = vsub.f32 %v6546, %v7532
        %v7763 = vsub.f32 %v6547, %v7534
        %v7764 = vsub.f32 %v6548, %v7534
        %v7765 = vsub.f32 %v6549, %v7534
        %v7766 = vsub.f32 %v6550, %v7534
        %v7767 = vsub.f32 %v6551, %v7536
        %v7768 = vsub.f32 %v6552, %v7536
        %v7769 = vsub.f32 %v6553, %v7536
        %v7770 = vsub.f32 %v6554, %v7536
        %v7771 = vsub.f32 %v6555, %v7538
        %v7772 = vsub.f32 %v6556, %v7538
        %v7773 = vsub.f32 %v6557, %v7538
        %v7774 = vsub.f32 %v6558, %v7538
        %v7775 = vsub.f32 %v6559, %v7540
        %v7776 = vsub.f32 %v6560, %v7540
        %v7777 = vsub.f32 %v6561, %v7540
        %v7778 = vsub.f32 %v6562, %v7540
        %v7779 = vsub.f32 %v6563, %v7542
        %v7780 = vsub.f32 %v6564, %v7542
        %v7781 = vsub.f32 %v6565, %v7542
        %v7782 = vsub.f32 %v6566, %v7542
        %v7783 = vsub.f32 %v6567, %v7544
        %v7784 = vsub.f32 %v6568, %v7544
        %v7785 = vsub.f32 %v6569, %v7544
        %v7786 = vsub.f32 %v6570, %v7544
        %v7787 = vsub.f32 %v6571, %v7546
        %v7788 = vsub.f32 %v6572, %v7546
        %v7789 = vsub.f32 %v6573, %v7546
        %v7790 = vsub.f32 %v6574, %v7546
        %v7791 = vsub.f32 %v6575, %v7548
        %v7792 = vsub.f32 %v6576, %v7548
        %v7793 = vsub.f32 %v6577, %v7548
        %v7794 = vsub.f32 %v6578, %v7548
        %v7795 = vsub.f32 %v6579, %v7550
        %v7796 = vsub.f32 %v6580, %v7550
        %v7797 = vsub.f32 %v6581, %v7550
        %v7798 = vsub.f32 %v6582, %v7550
        %v7799 = vsub.f32 %v6583, %v7552
        %v7800 = vsub.f32 %v6584, %v7552
        %v7801 = vsub.f32 %v6585, %v7552
        %v7802 = vsub.f32 %v6586, %v7552
        %v7803 = vsub.f32 %v6587, %v7554
        %v7804 = vsub.f32 %v6588, %v7554
        %v7805 = vsub.f32 %v6589, %v7554
        %v7806 = vsub.f32 %v6590, %v7554
        %v7807 = vsub.f32 %v6591, %v7556
        %v7808 = vsub.f32 %v6592, %v7556
        %v7809 = vsub.f32 %v6593, %v7556
        %v7810 = vsub.f32 %v6594, %v7556
        %v7811 = vsub.f32 %v6595, %v7558
        %v7812 = vsub.f32 %v6596, %v7558
        %v7813 = vsub.f32 %v6597, %v7558
        %v7814 = vsub.f32 %v6598, %v7558
        %v7815 = vpack.c.bf16 %v7563, %v7559
        %v7816 = vpack.c.bf16 %v7564, %v7560
        %v7817 = vpack.c.bf16 %v7565, %v7561
        %v7818 = vpack.c.bf16 %v7566, %v7562
        %v7819 = vpack.c.bf16 %v7571, %v7567
        %v7820 = vpack.c.bf16 %v7572, %v7568
        %v7821 = vpack.c.bf16 %v7573, %v7569
        %v7822 = vpack.c.bf16 %v7574, %v7570
        %v7823 = vpack.c.bf16 %v7579, %v7575
        %v7824 = vpack.c.bf16 %v7580, %v7576
        %v7825 = vpack.c.bf16 %v7581, %v7577
        %v7826 = vpack.c.bf16 %v7582, %v7578
        %v7827 = vpack.c.bf16 %v7587, %v7583
        %v7828 = vpack.c.bf16 %v7588, %v7584
        %v7829 = vpack.c.bf16 %v7589, %v7585
        %v7830 = vpack.c.bf16 %v7590, %v7586
        %v7831 = vpack.c.bf16 %v7595, %v7591
        %v7832 = vpack.c.bf16 %v7596, %v7592
        %v7833 = vpack.c.bf16 %v7597, %v7593
        %v7834 = vpack.c.bf16 %v7598, %v7594
        %v7835 = vpack.c.bf16 %v7603, %v7599
        %v7836 = vpack.c.bf16 %v7604, %v7600
        %v7837 = vpack.c.bf16 %v7605, %v7601
        %v7838 = vpack.c.bf16 %v7606, %v7602
        %v7839 = vpack.c.bf16 %v7611, %v7607
        %v7840 = vpack.c.bf16 %v7612, %v7608
        %v7841 = vpack.c.bf16 %v7613, %v7609
        %v7842 = vpack.c.bf16 %v7614, %v7610
        %v7843 = vpack.c.bf16 %v7619, %v7615
        %v7844 = vpack.c.bf16 %v7620, %v7616
        %v7845 = vpack.c.bf16 %v7621, %v7617
        %v7846 = vpack.c.bf16 %v7622, %v7618
        %v7847 = vpack.c.bf16 %v7627, %v7623
        %v7848 = vpack.c.bf16 %v7628, %v7624
        %v7849 = vpack.c.bf16 %v7629, %v7625
        %v7850 = vpack.c.bf16 %v7630, %v7626
        %v7851 = vpack.c.bf16 %v7635, %v7631
        %v7852 = vpack.c.bf16 %v7636, %v7632
        %v7853 = vpack.c.bf16 %v7637, %v7633
        %v7854 = vpack.c.bf16 %v7638, %v7634
        %v7855 = vpack.c.bf16 %v7643, %v7639
        %v7856 = vpack.c.bf16 %v7644, %v7640
        %v7857 = vpack.c.bf16 %v7645, %v7641
        %v7858 = vpack.c.bf16 %v7646, %v7642
        %v7859 = vpack.c.bf16 %v7651, %v7647
        %v7860 = vpack.c.bf16 %v7652, %v7648
        %v7861 = vpack.c.bf16 %v7653, %v7649
        %v7862 = vpack.c.bf16 %v7654, %v7650
        %v7863 = vpack.c.bf16 %v7659, %v7655
        %v7864 = vpack.c.bf16 %v7660, %v7656
        %v7865 = vpack.c.bf16 %v7661, %v7657
        %v7866 = vpack.c.bf16 %v7662, %v7658
        %v7867 = vpack.c.bf16 %v7667, %v7663
        %v7868 = vpack.c.bf16 %v7668, %v7664
        %v7869 = vpack.c.bf16 %v7669, %v7665
        %v7870 = vpack.c.bf16 %v7670, %v7666
        %v7871 = vpack.c.bf16 %v7675, %v7671
        %v7872 = vpack.c.bf16 %v7676, %v7672
        %v7873 = vpack.c.bf16 %v7677, %v7673
        %v7874 = vpack.c.bf16 %v7678, %v7674
        %v7875 = vpack.c.bf16 %v7683, %v7679
        %v7876 = vpack.c.bf16 %v7684, %v7680
        %v7877 = vpack.c.bf16 %v7685, %v7681
        %v7878 = vpack.c.bf16 %v7686, %v7682
        %v7879 = vpack.c.bf16 %v7691, %v7687
        %v7880 = vpack.c.bf16 %v7692, %v7688
        %v7881 = vpack.c.bf16 %v7693, %v7689
        %v7882 = vpack.c.bf16 %v7694, %v7690
        %v7883 = vpack.c.bf16 %v7699, %v7695
        %v7884 = vpack.c.bf16 %v7700, %v7696
        %v7885 = vpack.c.bf16 %v7701, %v7697
        %v7886 = vpack.c.bf16 %v7702, %v7698
        %v7887 = vpack.c.bf16 %v7707, %v7703
        %v7888 = vpack.c.bf16 %v7708, %v7704
        %v7889 = vpack.c.bf16 %v7709, %v7705
        %v7890 = vpack.c.bf16 %v7710, %v7706
        %v7891 = vpack.c.bf16 %v7715, %v7711
        %v7892 = vpack.c.bf16 %v7716, %v7712
        %v7893 = vpack.c.bf16 %v7717, %v7713
        %v7894 = vpack.c.bf16 %v7718, %v7714
        %v7895 = vpack.c.bf16 %v7723, %v7719
        %v7896 = vpack.c.bf16 %v7724, %v7720
        %v7897 = vpack.c.bf16 %v7725, %v7721
        %v7898 = vpack.c.bf16 %v7726, %v7722
        %v7899 = vpack.c.bf16 %v7731, %v7727
        %v7900 = vpack.c.bf16 %v7732, %v7728
        %v7901 = vpack.c.bf16 %v7733, %v7729
        %v7902 = vpack.c.bf16 %v7734, %v7730
        %v7903 = vpack.c.bf16 %v7739, %v7735
        %v7904 = vpack.c.bf16 %v7740, %v7736
        %v7905 = vpack.c.bf16 %v7741, %v7737
        %v7906 = vpack.c.bf16 %v7742, %v7738
        %v7907 = vpack.c.bf16 %v7747, %v7743
        %v7908 = vpack.c.bf16 %v7748, %v7744
        %v7909 = vpack.c.bf16 %v7749, %v7745
        %v7910 = vpack.c.bf16 %v7750, %v7746
        %v7911 = vpack.c.bf16 %v7755, %v7751
        %v7912 = vpack.c.bf16 %v7756, %v7752
        %v7913 = vpack.c.bf16 %v7757, %v7753
        %v7914 = vpack.c.bf16 %v7758, %v7754
        %v7915 = vpack.c.bf16 %v7763, %v7759
        %v7916 = vpack.c.bf16 %v7764, %v7760
        %v7917 = vpack.c.bf16 %v7765, %v7761
        %v7918 = vpack.c.bf16 %v7766, %v7762
        %v7919 = vpack.c.bf16 %v7771, %v7767
        %v7920 = vpack.c.bf16 %v7772, %v7768
        %v7921 = vpack.c.bf16 %v7773, %v7769
        %v7922 = vpack.c.bf16 %v7774, %v7770
        %v7923 = vpack.c.bf16 %v7779, %v7775
        %v7924 = vpack.c.bf16 %v7780, %v7776
        %v7925 = vpack.c.bf16 %v7781, %v7777
        %v7926 = vpack.c.bf16 %v7782, %v7778
        %v7927 = vpack.c.bf16 %v7787, %v7783
        %v7928 = vpack.c.bf16 %v7788, %v7784
        %v7929 = vpack.c.bf16 %v7789, %v7785
        %v7930 = vpack.c.bf16 %v7790, %v7786
        %v7931 = vpack.c.bf16 %v7795, %v7791
        %v7932 = vpack.c.bf16 %v7796, %v7792
        %v7933 = vpack.c.bf16 %v7797, %v7793
        %v7934 = vpack.c.bf16 %v7798, %v7794
        %v7935 = vpack.c.bf16 %v7803, %v7799
        %v7936 = vpack.c.bf16 %v7804, %v7800
        %v7937 = vpack.c.bf16 %v7805, %v7801
        %v7938 = vpack.c.bf16 %v7806, %v7802
        %v7939 = vpack.c.bf16 %v7811, %v7807
        %v7940 = vpack.c.bf16 %v7812, %v7808
        %v7941 = vpack.c.bf16 %v7813, %v7809
        %v7942 = vpack.c.bf16 %v7814, %v7810
        %v8071 = vunpack.c.l.b16 %v7815
        %v8072 = vunpack.c.l.b16 %v7816
        %v8073 = vunpack.c.l.b16 %v7817
        %v8074 = vunpack.c.l.b16 %v7818
        %v8075 = vunpack.c.h.b16 %v7815
        %v8076 = vunpack.c.h.b16 %v7816
        %v8077 = vunpack.c.h.b16 %v7817
        %v8078 = vunpack.c.h.b16 %v7818
        %v8079 = vunpack.c.l.b16 %v7819
        %v8080 = vunpack.c.l.b16 %v7820
        %v8081 = vunpack.c.l.b16 %v7821
        %v8082 = vunpack.c.l.b16 %v7822
        %v8083 = vunpack.c.h.b16 %v7819
        %v8084 = vunpack.c.h.b16 %v7820
        %v8085 = vunpack.c.h.b16 %v7821
        %v8086 = vunpack.c.h.b16 %v7822
        %v8087 = vunpack.c.l.b16 %v7823
        %v8088 = vunpack.c.l.b16 %v7824
        %v8089 = vunpack.c.l.b16 %v7825
        %v8090 = vunpack.c.l.b16 %v7826
        %v8091 = vunpack.c.h.b16 %v7823
        %v8092 = vunpack.c.h.b16 %v7824
        %v8093 = vunpack.c.h.b16 %v7825
        %v8094 = vunpack.c.h.b16 %v7826
        %v8095 = vunpack.c.l.b16 %v7827
        %v8096 = vunpack.c.l.b16 %v7828
        %v8097 = vunpack.c.l.b16 %v7829
        %v8098 = vunpack.c.l.b16 %v7830
        %v8099 = vunpack.c.h.b16 %v7827
        %v8100 = vunpack.c.h.b16 %v7828
        %v8101 = vunpack.c.h.b16 %v7829
        %v8102 = vunpack.c.h.b16 %v7830
        %v8103 = vunpack.c.l.b16 %v7831
        %v8104 = vunpack.c.l.b16 %v7832
        %v8105 = vunpack.c.l.b16 %v7833
        %v8106 = vunpack.c.l.b16 %v7834
        %v8107 = vunpack.c.h.b16 %v7831
        %v8108 = vunpack.c.h.b16 %v7832
        %v8109 = vunpack.c.h.b16 %v7833
        %v8110 = vunpack.c.h.b16 %v7834
        %v8111 = vunpack.c.l.b16 %v7835
        %v8112 = vunpack.c.l.b16 %v7836
        %v8113 = vunpack.c.l.b16 %v7837
        %v8114 = vunpack.c.l.b16 %v7838
        %v8115 = vunpack.c.h.b16 %v7835
        %v8116 = vunpack.c.h.b16 %v7836
        %v8117 = vunpack.c.h.b16 %v7837
        %v8118 = vunpack.c.h.b16 %v7838
        %v8119 = vunpack.c.l.b16 %v7839
        %v8120 = vunpack.c.l.b16 %v7840
        %v8121 = vunpack.c.l.b16 %v7841
        %v8122 = vunpack.c.l.b16 %v7842
        %v8123 = vunpack.c.h.b16 %v7839
        %v8124 = vunpack.c.h.b16 %v7840
        %v8125 = vunpack.c.h.b16 %v7841
        %v8126 = vunpack.c.h.b16 %v7842
        %v8127 = vunpack.c.l.b16 %v7843
        %v8128 = vunpack.c.l.b16 %v7844
        %v8129 = vunpack.c.l.b16 %v7845
        %v8130 = vunpack.c.l.b16 %v7846
        %v8131 = vunpack.c.h.b16 %v7843
        %v8132 = vunpack.c.h.b16 %v7844
        %v8133 = vunpack.c.h.b16 %v7845
        %v8134 = vunpack.c.h.b16 %v7846
        %v8135 = vunpack.c.l.b16 %v7847
        %v8136 = vunpack.c.l.b16 %v7848
        %v8137 = vunpack.c.l.b16 %v7849
        %v8138 = vunpack.c.l.b16 %v7850
        %v8139 = vunpack.c.h.b16 %v7847
        %v8140 = vunpack.c.h.b16 %v7848
        %v8141 = vunpack.c.h.b16 %v7849
        %v8142 = vunpack.c.h.b16 %v7850
        %v8143 = vunpack.c.l.b16 %v7851
        %v8144 = vunpack.c.l.b16 %v7852
        %v8145 = vunpack.c.l.b16 %v7853
        %v8146 = vunpack.c.l.b16 %v7854
        %v8147 = vunpack.c.h.b16 %v7851
        %v8148 = vunpack.c.h.b16 %v7852
        %v8149 = vunpack.c.h.b16 %v7853
        %v8150 = vunpack.c.h.b16 %v7854
        %v8151 = vunpack.c.l.b16 %v7855
        %v8152 = vunpack.c.l.b16 %v7856
        %v8153 = vunpack.c.l.b16 %v7857
        %v8154 = vunpack.c.l.b16 %v7858
        %v8155 = vunpack.c.h.b16 %v7855
        %v8156 = vunpack.c.h.b16 %v7856
        %v8157 = vunpack.c.h.b16 %v7857
        %v8158 = vunpack.c.h.b16 %v7858
        %v8159 = vunpack.c.l.b16 %v7859
        %v8160 = vunpack.c.l.b16 %v7860
        %v8161 = vunpack.c.l.b16 %v7861
        %v8162 = vunpack.c.l.b16 %v7862
        %v8163 = vunpack.c.h.b16 %v7859
        %v8164 = vunpack.c.h.b16 %v7860
        %v8165 = vunpack.c.h.b16 %v7861
        %v8166 = vunpack.c.h.b16 %v7862
        %v8167 = vunpack.c.l.b16 %v7863
        %v8168 = vunpack.c.l.b16 %v7864
        %v8169 = vunpack.c.l.b16 %v7865
        %v8170 = vunpack.c.l.b16 %v7866
        %v8171 = vunpack.c.h.b16 %v7863
        %v8172 = vunpack.c.h.b16 %v7864
        %v8173 = vunpack.c.h.b16 %v7865
        %v8174 = vunpack.c.h.b16 %v7866
        %v8175 = vunpack.c.l.b16 %v7867
        %v8176 = vunpack.c.l.b16 %v7868
        %v8177 = vunpack.c.l.b16 %v7869
        %v8178 = vunpack.c.l.b16 %v7870
        %v8179 = vunpack.c.h.b16 %v7867
        %v8180 = vunpack.c.h.b16 %v7868
        %v8181 = vunpack.c.h.b16 %v7869
        %v8182 = vunpack.c.h.b16 %v7870
        %v8183 = vunpack.c.l.b16 %v7871
        %v8184 = vunpack.c.l.b16 %v7872
        %v8185 = vunpack.c.l.b16 %v7873
        %v8186 = vunpack.c.l.b16 %v7874
        %v8187 = vunpack.c.h.b16 %v7871
        %v8188 = vunpack.c.h.b16 %v7872
        %v8189 = vunpack.c.h.b16 %v7873
        %v8190 = vunpack.c.h.b16 %v7874
        %v8191 = vunpack.c.l.b16 %v7875
        %v8192 = vunpack.c.l.b16 %v7876
        %v8193 = vunpack.c.l.b16 %v7877
        %v8194 = vunpack.c.l.b16 %v7878
        %v8195 = vunpack.c.h.b16 %v7875
        %v8196 = vunpack.c.h.b16 %v7876
        %v8197 = vunpack.c.h.b16 %v7877
        %v8198 = vunpack.c.h.b16 %v7878
        %v8199 = vunpack.c.l.b16 %v7879
        %v8200 = vunpack.c.l.b16 %v7880
        %v8201 = vunpack.c.l.b16 %v7881
        %v8202 = vunpack.c.l.b16 %v7882
        %v8203 = vunpack.c.h.b16 %v7879
        %v8204 = vunpack.c.h.b16 %v7880
        %v8205 = vunpack.c.h.b16 %v7881
        %v8206 = vunpack.c.h.b16 %v7882
        %v8207 = vunpack.c.l.b16 %v7883
        %v8208 = vunpack.c.l.b16 %v7884
        %v8209 = vunpack.c.l.b16 %v7885
        %v8210 = vunpack.c.l.b16 %v7886
        %v8211 = vunpack.c.h.b16 %v7883
        %v8212 = vunpack.c.h.b16 %v7884
        %v8213 = vunpack.c.h.b16 %v7885
        %v8214 = vunpack.c.h.b16 %v7886
        %v8215 = vunpack.c.l.b16 %v7887
        %v8216 = vunpack.c.l.b16 %v7888
        %v8217 = vunpack.c.l.b16 %v7889
        %v8218 = vunpack.c.l.b16 %v7890
        %v8219 = vunpack.c.h.b16 %v7887
        %v8220 = vunpack.c.h.b16 %v7888
        %v8221 = vunpack.c.h.b16 %v7889
        %v8222 = vunpack.c.h.b16 %v7890
        %v8223 = vunpack.c.l.b16 %v7891
        %v8224 = vunpack.c.l.b16 %v7892
        %v8225 = vunpack.c.l.b16 %v7893
        %v8226 = vunpack.c.l.b16 %v7894
        %v8227 = vunpack.c.h.b16 %v7891
        %v8228 = vunpack.c.h.b16 %v7892
        %v8229 = vunpack.c.h.b16 %v7893
        %v8230 = vunpack.c.h.b16 %v7894
        %v8231 = vunpack.c.l.b16 %v7895
        %v8232 = vunpack.c.l.b16 %v7896
        %v8233 = vunpack.c.l.b16 %v7897
        %v8234 = vunpack.c.l.b16 %v7898
        %v8235 = vunpack.c.h.b16 %v7895
        %v8236 = vunpack.c.h.b16 %v7896
        %v8237 = vunpack.c.h.b16 %v7897
        %v8238 = vunpack.c.h.b16 %v7898
        %v8239 = vunpack.c.l.b16 %v7899
        %v8240 = vunpack.c.l.b16 %v7900
        %v8241 = vunpack.c.l.b16 %v7901
        %v8242 = vunpack.c.l.b16 %v7902
        %v8243 = vunpack.c.h.b16 %v7899
        %v8244 = vunpack.c.h.b16 %v7900
        %v8245 = vunpack.c.h.b16 %v7901
        %v8246 = vunpack.c.h.b16 %v7902
        %v8247 = vunpack.c.l.b16 %v7903
        %v8248 = vunpack.c.l.b16 %v7904
        %v8249 = vunpack.c.l.b16 %v7905
        %v8250 = vunpack.c.l.b16 %v7906
        %v8251 = vunpack.c.h.b16 %v7903
        %v8252 = vunpack.c.h.b16 %v7904
        %v8253 = vunpack.c.h.b16 %v7905
        %v8254 = vunpack.c.h.b16 %v7906
        %v8255 = vunpack.c.l.b16 %v7907
        %v8256 = vunpack.c.l.b16 %v7908
        %v8257 = vunpack.c.l.b16 %v7909
        %v8258 = vunpack.c.l.b16 %v7910
        %v8259 = vunpack.c.h.b16 %v7907
        %v8260 = vunpack.c.h.b16 %v7908
        %v8261 = vunpack.c.h.b16 %v7909
        %v8262 = vunpack.c.h.b16 %v7910
        %v8263 = vunpack.c.l.b16 %v7911
        %v8264 = vunpack.c.l.b16 %v7912
        %v8265 = vunpack.c.l.b16 %v7913
        %v8266 = vunpack.c.l.b16 %v7914
        %v8267 = vunpack.c.h.b16 %v7911
        %v8268 = vunpack.c.h.b16 %v7912
        %v8269 = vunpack.c.h.b16 %v7913
        %v8270 = vunpack.c.h.b16 %v7914
        %v8271 = vunpack.c.l.b16 %v7915
        %v8272 = vunpack.c.l.b16 %v7916
        %v8273 = vunpack.c.l.b16 %v7917
        %v8274 = vunpack.c.l.b16 %v7918
        %v8275 = vunpack.c.h.b16 %v7915
        %v8276 = vunpack.c.h.b16 %v7916
        %v8277 = vunpack.c.h.b16 %v7917
        %v8278 = vunpack.c.h.b16 %v7918
        %v8279 = vunpack.c.l.b16 %v7919
        %v8280 = vunpack.c.l.b16 %v7920
        %v8281 = vunpack.c.l.b16 %v7921
        %v8282 = vunpack.c.l.b16 %v7922
        %v8283 = vunpack.c.h.b16 %v7919
        %v8284 = vunpack.c.h.b16 %v7920
        %v8285 = vunpack.c.h.b16 %v7921
        %v8286 = vunpack.c.h.b16 %v7922
        %v8287 = vunpack.c.l.b16 %v7923
        %v8288 = vunpack.c.l.b16 %v7924
        %v8289 = vunpack.c.l.b16 %v7925
        %v8290 = vunpack.c.l.b16 %v7926
        %v8291 = vunpack.c.h.b16 %v7923
        %v8292 = vunpack.c.h.b16 %v7924
        %v8293 = vunpack.c.h.b16 %v7925
        %v8294 = vunpack.c.h.b16 %v7926
        %v8295 = vunpack.c.l.b16 %v7927
        %v8296 = vunpack.c.l.b16 %v7928
        %v8297 = vunpack.c.l.b16 %v7929
        %v8298 = vunpack.c.l.b16 %v7930
        %v8299 = vunpack.c.h.b16 %v7927
        %v8300 = vunpack.c.h.b16 %v7928
        %v8301 = vunpack.c.h.b16 %v7929
        %v8302 = vunpack.c.h.b16 %v7930
        %v8303 = vunpack.c.l.b16 %v7931
        %v8304 = vunpack.c.l.b16 %v7932
        %v8305 = vunpack.c.l.b16 %v7933
        %v8306 = vunpack.c.l.b16 %v7934
        %v8307 = vunpack.c.h.b16 %v7931
        %v8308 = vunpack.c.h.b16 %v7932
        %v8309 = vunpack.c.h.b16 %v7933
        %v8310 = vunpack.c.h.b16 %v7934
        %v8311 = vunpack.c.l.b16 %v7935
        %v8312 = vunpack.c.l.b16 %v7936
        %v8313 = vunpack.c.l.b16 %v7937
        %v8314 = vunpack.c.l.b16 %v7938
        %v8315 = vunpack.c.h.b16 %v7935
        %v8316 = vunpack.c.h.b16 %v7936
        %v8317 = vunpack.c.h.b16 %v7937
        %v8318 = vunpack.c.h.b16 %v7938
        %v8319 = vunpack.c.l.b16 %v7939
        %v8320 = vunpack.c.l.b16 %v7940
        %v8321 = vunpack.c.l.b16 %v7941
        %v8322 = vunpack.c.l.b16 %v7942
        %v8323 = vunpack.c.h.b16 %v7939
        %v8324 = vunpack.c.h.b16 %v7940
        %v8325 = vunpack.c.h.b16 %v7941
        %v8326 = vunpack.c.h.b16 %v7942
        %v8327 = vpack.c.b16 %v8072, %v8071
        %v8328 = vpack.c.b16 %v8074, %v8073
        %v8329 = vpack.c.b16 %v8076, %v8075
        %v8330 = vpack.c.b16 %v8078, %v8077
        %v8331 = vpack.c.b16 %v8080, %v8079
        %v8332 = vpack.c.b16 %v8082, %v8081
        %v8333 = vpack.c.b16 %v8084, %v8083
        %v8334 = vpack.c.b16 %v8086, %v8085
        %v8335 = vpack.c.b16 %v8088, %v8087
        %v8336 = vpack.c.b16 %v8090, %v8089
        %v8337 = vpack.c.b16 %v8092, %v8091
        %v8338 = vpack.c.b16 %v8094, %v8093
        %v8339 = vpack.c.b16 %v8096, %v8095
        %v8340 = vpack.c.b16 %v8098, %v8097
        %v8341 = vpack.c.b16 %v8100, %v8099
        %v8342 = vpack.c.b16 %v8102, %v8101
        %v8343 = vpack.c.b16 %v8104, %v8103
        %v8344 = vpack.c.b16 %v8106, %v8105
        %v8345 = vpack.c.b16 %v8108, %v8107
        %v8346 = vpack.c.b16 %v8110, %v8109
        %v8347 = vpack.c.b16 %v8112, %v8111
        %v8348 = vpack.c.b16 %v8114, %v8113
        %v8349 = vpack.c.b16 %v8116, %v8115
        %v8350 = vpack.c.b16 %v8118, %v8117
        %v8351 = vpack.c.b16 %v8120, %v8119
        %v8352 = vpack.c.b16 %v8122, %v8121
        %v8353 = vpack.c.b16 %v8124, %v8123
        %v8354 = vpack.c.b16 %v8126, %v8125
        %v8355 = vpack.c.b16 %v8128, %v8127
        %v8356 = vpack.c.b16 %v8130, %v8129
        %v8357 = vpack.c.b16 %v8132, %v8131
        %v8358 = vpack.c.b16 %v8134, %v8133
        %v8359 = vpack.c.b16 %v8136, %v8135
        %v8360 = vpack.c.b16 %v8138, %v8137
        %v8361 = vpack.c.b16 %v8140, %v8139
        %v8362 = vpack.c.b16 %v8142, %v8141
        %v8363 = vpack.c.b16 %v8144, %v8143
        %v8364 = vpack.c.b16 %v8146, %v8145
        %v8365 = vpack.c.b16 %v8148, %v8147
        %v8366 = vpack.c.b16 %v8150, %v8149
        %v8367 = vpack.c.b16 %v8152, %v8151
        %v8368 = vpack.c.b16 %v8154, %v8153
        %v8369 = vpack.c.b16 %v8156, %v8155
        %v8370 = vpack.c.b16 %v8158, %v8157
        %v8371 = vpack.c.b16 %v8160, %v8159
        %v8372 = vpack.c.b16 %v8162, %v8161
        %v8373 = vpack.c.b16 %v8164, %v8163
        %v8374 = vpack.c.b16 %v8166, %v8165
        %v8375 = vpack.c.b16 %v8168, %v8167
        %v8376 = vpack.c.b16 %v8170, %v8169
        %v8377 = vpack.c.b16 %v8172, %v8171
        %v8378 = vpack.c.b16 %v8174, %v8173
        %v8379 = vpack.c.b16 %v8176, %v8175
        %v8380 = vpack.c.b16 %v8178, %v8177
        %v8381 = vpack.c.b16 %v8180, %v8179
        %v8382 = vpack.c.b16 %v8182, %v8181
        %v8383 = vpack.c.b16 %v8184, %v8183
        %v8384 = vpack.c.b16 %v8186, %v8185
        %v8385 = vpack.c.b16 %v8188, %v8187
        %v8386 = vpack.c.b16 %v8190, %v8189
        %v8387 = vpack.c.b16 %v8192, %v8191
        %v8388 = vpack.c.b16 %v8194, %v8193
        %v8389 = vpack.c.b16 %v8196, %v8195
        %v8390 = vpack.c.b16 %v8198, %v8197
        %v8391 = vpack.c.b16 %v8200, %v8199
        %v8392 = vpack.c.b16 %v8202, %v8201
        %v8393 = vpack.c.b16 %v8204, %v8203
        %v8394 = vpack.c.b16 %v8206, %v8205
        %v8395 = vpack.c.b16 %v8208, %v8207
        %v8396 = vpack.c.b16 %v8210, %v8209
        %v8397 = vpack.c.b16 %v8212, %v8211
        %v8398 = vpack.c.b16 %v8214, %v8213
        %v8399 = vpack.c.b16 %v8216, %v8215
        %v8400 = vpack.c.b16 %v8218, %v8217
        %v8401 = vpack.c.b16 %v8220, %v8219
        %v8402 = vpack.c.b16 %v8222, %v8221
        %v8403 = vpack.c.b16 %v8224, %v8223
        %v8404 = vpack.c.b16 %v8226, %v8225
        %v8405 = vpack.c.b16 %v8228, %v8227
        %v8406 = vpack.c.b16 %v8230, %v8229
        %v8407 = vpack.c.b16 %v8232, %v8231
        %v8408 = vpack.c.b16 %v8234, %v8233
        %v8409 = vpack.c.b16 %v8236, %v8235
        %v8410 = vpack.c.b16 %v8238, %v8237
        %v8411 = vpack.c.b16 %v8240, %v8239
        %v8412 = vpack.c.b16 %v8242, %v8241
        %v8413 = vpack.c.b16 %v8244, %v8243
        %v8414 = vpack.c.b16 %v8246, %v8245
        %v8415 = vpack.c.b16 %v8248, %v8247
        %v8416 = vpack.c.b16 %v8250, %v8249
        %v8417 = vpack.c.b16 %v8252, %v8251
        %v8418 = vpack.c.b16 %v8254, %v8253
        %v8419 = vpack.c.b16 %v8256, %v8255
        %v8420 = vpack.c.b16 %v8258, %v8257
        %v8421 = vpack.c.b16 %v8260, %v8259
        %v8422 = vpack.c.b16 %v8262, %v8261
        %v8423 = vpack.c.b16 %v8264, %v8263
        %v8424 = vpack.c.b16 %v8266, %v8265
        %v8425 = vpack.c.b16 %v8268, %v8267
        %v8426 = vpack.c.b16 %v8270, %v8269
        %v8427 = vpack.c.b16 %v8272, %v8271
        %v8428 = vpack.c.b16 %v8274, %v8273
        %v8429 = vpack.c.b16 %v8276, %v8275
        %v8430 = vpack.c.b16 %v8278, %v8277
        %v8431 = vpack.c.b16 %v8280, %v8279
        %v8432 = vpack.c.b16 %v8282, %v8281
        %v8433 = vpack.c.b16 %v8284, %v8283
        %v8434 = vpack.c.b16 %v8286, %v8285
        %v8435 = vpack.c.b16 %v8288, %v8287
        %v8436 = vpack.c.b16 %v8290, %v8289
        %v8437 = vpack.c.b16 %v8292, %v8291
        %v8438 = vpack.c.b16 %v8294, %v8293
        %v8439 = vpack.c.b16 %v8296, %v8295
        %v8440 = vpack.c.b16 %v8298, %v8297
        %v8441 = vpack.c.b16 %v8300, %v8299
        %v8442 = vpack.c.b16 %v8302, %v8301
        %v8443 = vpack.c.b16 %v8304, %v8303
        %v8444 = vpack.c.b16 %v8306, %v8305
        %v8445 = vpack.c.b16 %v8308, %v8307
        %v8446 = vpack.c.b16 %v8310, %v8309
        %v8447 = vpack.c.b16 %v8312, %v8311
        %v8448 = vpack.c.b16 %v8314, %v8313
        %v8449 = vpack.c.b16 %v8316, %v8315
        %v8450 = vpack.c.b16 %v8318, %v8317
        %v8451 = vpack.c.b16 %v8320, %v8319
        %v8452 = vpack.c.b16 %v8322, %v8321
        %v8453 = vpack.c.b16 %v8324, %v8323
        %v8454 = vpack.c.b16 %v8326, %v8325
        %8583 = vst [vmem:[%s191] sm:$0xff] %v8327
        %8584 = vst [vmem:[%s191 + $0x8] sm:$0xff] %v8328
        %8585 = vst [vmem:[%s191 + $0x10] sm:$0xff] %v8329
        %8586 = vst [vmem:[%s191 + $0x18] sm:$0xff] %v8330
        %8587 = vst [vmem:[%s191 + $0x20] sm:$0xff] %v8331
        %8588 = vst [vmem:[%s191 + $0x28] sm:$0xff] %v8332
        %8589 = vst [vmem:[%s191 + $0x30] sm:$0xff] %v8333
        %8590 = vst [vmem:[%s191 + $0x38] sm:$0xff] %v8334
        %8591 = vst [vmem:[%s191 + $0x40] sm:$0xff] %v8335
        %8592 = vst [vmem:[%s191 + $0x48] sm:$0xff] %v8336
        %8593 = vst [vmem:[%s191 + $0x50] sm:$0xff] %v8337
        %8594 = vst [vmem:[%s191 + $0x58] sm:$0xff] %v8338
        %8595 = vst [vmem:[%s191 + $0x60] sm:$0xff] %v8339
        %8596 = vst [vmem:[%s191 + $0x68] sm:$0xff] %v8340
        %8597 = vst [vmem:[%s191 + $0x70] sm:$0xff] %v8341
        %8598 = vst [vmem:[%s191 + $0x78] sm:$0xff] %v8342
        %8599 = vst [vmem:[%s191 + $0x80] sm:$0xff] %v8343
        %8600 = vst [vmem:[%s191 + $0x88] sm:$0xff] %v8344
        %8601 = vst [vmem:[%s191 + $0x90] sm:$0xff] %v8345
        %8602 = vst [vmem:[%s191 + $0x98] sm:$0xff] %v8346
        %8603 = vst [vmem:[%s191 + $0xa0] sm:$0xff] %v8347
        %8604 = vst [vmem:[%s191 + $0xa8] sm:$0xff] %v8348
        %8605 = vst [vmem:[%s191 + $0xb0] sm:$0xff] %v8349
        %8606 = vst [vmem:[%s191 + $0xb8] sm:$0xff] %v8350
        %8607 = vst [vmem:[%s191 + $0xc0] sm:$0xff] %v8351
        %8608 = vst [vmem:[%s191 + $0xc8] sm:$0xff] %v8352
        %8609 = vst [vmem:[%s191 + $0xd0] sm:$0xff] %v8353
        %8610 = vst [vmem:[%s191 + $0xd8] sm:$0xff] %v8354
        %8611 = vst [vmem:[%s191 + $0xe0] sm:$0xff] %v8355
        %8612 = vst [vmem:[%s191 + $0xe8] sm:$0xff] %v8356
        %8613 = vst [vmem:[%s191 + $0xf0] sm:$0xff] %v8357
        %8614 = vst [vmem:[%s191 + $0xf8] sm:$0xff] %v8358
        %8615 = vst [vmem:[%s191 + $0x100] sm:$0xff] %v8359
        %8616 = vst [vmem:[%s191 + $0x108] sm:$0xff] %v8360
        %8617 = vst [vmem:[%s191 + $0x110] sm:$0xff] %v8361
        %8618 = vst [vmem:[%s191 + $0x118] sm:$0xff] %v8362
        %8619 = vst [vmem:[%s191 + $0x120] sm:$0xff] %v8363
        %8620 = vst [vmem:[%s191 + $0x128] sm:$0xff] %v8364
        %8621 = vst [vmem:[%s191 + $0x130] sm:$0xff] %v8365
        %8622 = vst [vmem:[%s191 + $0x138] sm:$0xff] %v8366
        %8623 = vst [vmem:[%s191 + $0x140] sm:$0xff] %v8367
        %8624 = vst [vmem:[%s191 + $0x148] sm:$0xff] %v8368
        %8625 = vst [vmem:[%s191 + $0x150] sm:$0xff] %v8369
        %8626 = vst [vmem:[%s191 + $0x158] sm:$0xff] %v8370
        %8627 = vst [vmem:[%s191 + $0x160] sm:$0xff] %v8371
        %8628 = vst [vmem:[%s191 + $0x168] sm:$0xff] %v8372
        %8629 = vst [vmem:[%s191 + $0x170] sm:$0xff] %v8373
        %8630 = vst [vmem:[%s191 + $0x178] sm:$0xff] %v8374
        %8631 = vst [vmem:[%s191 + $0x180] sm:$0xff] %v8375
        %8632 = vst [vmem:[%s191 + $0x188] sm:$0xff] %v8376
        %8633 = vst [vmem:[%s191 + $0x190] sm:$0xff] %v8377
        %8634 = vst [vmem:[%s191 + $0x198] sm:$0xff] %v8378
        %8635 = vst [vmem:[%s191 + $0x1a0] sm:$0xff] %v8379
        %8636 = vst [vmem:[%s191 + $0x1a8] sm:$0xff] %v8380
        %8637 = vst [vmem:[%s191 + $0x1b0] sm:$0xff] %v8381
        %8638 = vst [vmem:[%s191 + $0x1b8] sm:$0xff] %v8382
        %8639 = vst [vmem:[%s191 + $0x1c0] sm:$0xff] %v8383
        %8640 = vst [vmem:[%s191 + $0x1c8] sm:$0xff] %v8384
        %8641 = vst [vmem:[%s191 + $0x1d0] sm:$0xff] %v8385
        %8642 = vst [vmem:[%s191 + $0x1d8] sm:$0xff] %v8386
        %8643 = vst [vmem:[%s191 + $0x1e0] sm:$0xff] %v8387
        %8644 = vst [vmem:[%s191 + $0x1e8] sm:$0xff] %v8388
        %8645 = vst [vmem:[%s191 + $0x1f0] sm:$0xff] %v8389
        %8646 = vst [vmem:[%s191 + $0x1f8] sm:$0xff] %v8390
        %8647 = vst [vmem:[%s191 + $0x200] sm:$0xff] %v8391
        %8648 = vst [vmem:[%s191 + $0x208] sm:$0xff] %v8392
        %8649 = vst [vmem:[%s191 + $0x210] sm:$0xff] %v8393
        %8650 = vst [vmem:[%s191 + $0x218] sm:$0xff] %v8394
        %8651 = vst [vmem:[%s191 + $0x220] sm:$0xff] %v8395
        %8652 = vst [vmem:[%s191 + $0x228] sm:$0xff] %v8396
        %8653 = vst [vmem:[%s191 + $0x230] sm:$0xff] %v8397
        %8654 = vst [vmem:[%s191 + $0x238] sm:$0xff] %v8398
        %8655 = vst [vmem:[%s191 + $0x240] sm:$0xff] %v8399
        %8656 = vst [vmem:[%s191 + $0x248] sm:$0xff] %v8400
        %8657 = vst [vmem:[%s191 + $0x250] sm:$0xff] %v8401
        %8658 = vst [vmem:[%s191 + $0x258] sm:$0xff] %v8402
        %8659 = vst [vmem:[%s191 + $0x260] sm:$0xff] %v8403
        %8660 = vst [vmem:[%s191 + $0x268] sm:$0xff] %v8404
        %8661 = vst [vmem:[%s191 + $0x270] sm:$0xff] %v8405
        %8662 = vst [vmem:[%s191 + $0x278] sm:$0xff] %v8406
        %8663 = vst [vmem:[%s191 + $0x280] sm:$0xff] %v8407
        %8664 = vst [vmem:[%s191 + $0x288] sm:$0xff] %v8408
        %8665 = vst [vmem:[%s191 + $0x290] sm:$0xff] %v8409
        %8666 = vst [vmem:[%s191 + $0x298] sm:$0xff] %v8410
        %8667 = vst [vmem:[%s191 + $0x2a0] sm:$0xff] %v8411
        %8668 = vst [vmem:[%s191 + $0x2a8] sm:$0xff] %v8412
        %8669 = vst [vmem:[%s191 + $0x2b0] sm:$0xff] %v8413
        %8670 = vst [vmem:[%s191 + $0x2b8] sm:$0xff] %v8414
        %8671 = vst [vmem:[%s191 + $0x2c0] sm:$0xff] %v8415
        %8672 = vst [vmem:[%s191 + $0x2c8] sm:$0xff] %v8416
        %8673 = vst [vmem:[%s191 + $0x2d0] sm:$0xff] %v8417
        %8674 = vst [vmem:[%s191 + $0x2d8] sm:$0xff] %v8418
        %8675 = vst [vmem:[%s191 + $0x2e0] sm:$0xff] %v8419
        %8676 = vst [vmem:[%s191 + $0x2e8] sm:$0xff] %v8420
        %8677 = vst [vmem:[%s191 + $0x2f0] sm:$0xff] %v8421
        %8678 = vst [vmem:[%s191 + $0x2f8] sm:$0xff] %v8422
        %8679 = vst [vmem:[%s191 + $0x300] sm:$0xff] %v8423
        %8680 = vst [vmem:[%s191 + $0x308] sm:$0xff] %v8424
        %8681 = vst [vmem:[%s191 + $0x310] sm:$0xff] %v8425
        %8682 = vst [vmem:[%s191 + $0x318] sm:$0xff] %v8426
        %8683 = vst [vmem:[%s191 + $0x320] sm:$0xff] %v8427
        %8684 = vst [vmem:[%s191 + $0x328] sm:$0xff] %v8428
        %8685 = vst [vmem:[%s191 + $0x330] sm:$0xff] %v8429
        %8686 = vst [vmem:[%s191 + $0x338] sm:$0xff] %v8430
        %8687 = vst [vmem:[%s191 + $0x340] sm:$0xff] %v8431
        %8688 = vst [vmem:[%s191 + $0x348] sm:$0xff] %v8432
        %8689 = vst [vmem:[%s191 + $0x350] sm:$0xff] %v8433
        %8690 = vst [vmem:[%s191 + $0x358] sm:$0xff] %v8434
        %8691 = vst [vmem:[%s191 + $0x360] sm:$0xff] %v8435
        %8692 = vst [vmem:[%s191 + $0x368] sm:$0xff] %v8436
        %8693 = vst [vmem:[%s191 + $0x370] sm:$0xff] %v8437
        %8694 = vst [vmem:[%s191 + $0x378] sm:$0xff] %v8438
        %8695 = vst [vmem:[%s191 + $0x380] sm:$0xff] %v8439
        %8696 = vst [vmem:[%s191 + $0x388] sm:$0xff] %v8440
        %8697 = vst [vmem:[%s191 + $0x390] sm:$0xff] %v8441
        %8698 = vst [vmem:[%s191 + $0x398] sm:$0xff] %v8442
        %8699 = vst [vmem:[%s191 + $0x3a0] sm:$0xff] %v8443
        %8700 = vst [vmem:[%s191 + $0x3a8] sm:$0xff] %v8444
        %8701 = vst [vmem:[%s191 + $0x3b0] sm:$0xff] %v8445
        %8702 = vst [vmem:[%s191 + $0x3b8] sm:$0xff] %v8446
        %8703 = vst [vmem:[%s191 + $0x3c0] sm:$0xff] %v8447
        %8704 = vst [vmem:[%s191 + $0x3c8] sm:$0xff] %v8448
        %8705 = vst [vmem:[%s191 + $0x3d0] sm:$0xff] %v8449
        %8706 = vst [vmem:[%s191 + $0x3d8] sm:$0xff] %v8450
        %8707 = vst [vmem:[%s191 + $0x3e0] sm:$0xff] %v8451
        %8708 = vst [vmem:[%s191 + $0x3e8] sm:$0xff] %v8452
        %8709 = vst [vmem:[%s191 + $0x3f0] sm:$0xff] %v8453
        %8710 = vst [vmem:[%s191 + $0x3f8] sm:$0xff] %v8454
        %s8711 = sand.u32 %s115, 1
        %s8712 = scalar_lea.sflag [#allocation3], %s8711
        %s8713 = sand.u32 %s115, 1
        %s8714 = smul.addr %s8713, 1024
        %s8715 = scalar_lea.vmem [#allocation2], %s8714
        // Predicated region
        $region37: #{cbow_forward.1} parent=35 // pred_check
          %p8716 = pneg %p125
        $region38: #{cbow_forward.1} parent=35 // pred_check_branch
          %8718 = sbr.rel (%p8716) target = $region40
        $region39: #{cbow_forward.1} parent=35 // pred_region
          %s8719 = smul.u32 64, %s18
          %s8721 = ssub.s32 16384, 16384
          %8722 = vsyncadd %s8712, %s8721
          %s8723 = smul.addr %s8719, 4
          %s8724 = smul.addr %s8723, 64
          %s8725 = scalar_lea.hbm %s4, %s8724
          %s8726 = sshll.u32 %s8715, 4
          %s8727 = int_to_ptr.vmem [resolvable:$true] %s8726
          %8732 = dma.vmem_to_hbm [thread:$0]  %s8727, 16384, %s8725, %s8712, 256, 256, 16
        $region40: #{cbow_forward.1} parent=35 // pred_fallthru
          _
      $region36: #{cbow_forward.1} parent=5 // pred_fallthru
        _
      %p8733 = scmp.le.s32.totalorder 2, %s13
      // Predicated region
      $region41: #{cbow_forward.1} parent=5 // pred_check
        %p8734 = pneg %p8733
      $region42: #{cbow_forward.1} parent=5 // pred_check_branch
        %8736 = sbr.rel (%p8734) target = $region44
      $region43: #{cbow_forward.1} parent=5 // pred_region
        %s8737 = ssub.s32 %s13, 2
        // Predicated region
        $region45: #{cbow_forward.1} parent=43 // pred_check
          %p8738 = pneg %p131
        $region46: #{cbow_forward.1} parent=43 // pred_check_branch
          %8740 = sbr.rel (%p8738) target = $region48
        $region47: #{cbow_forward.1} parent=43 // pred_region
          %s8741 = sand.u32 %s116, 1
          %s8742 = scalar_lea.sflag [#allocation3], %s8741
          %s8743 = sand.u32 %s116, 1
          %s8744 = smul.addr %s8743, 1024
          %s8745 = scalar_lea.vmem [#allocation2], %s8744
          %8746 = dma.done %s8742, 16384
        $region48: #{cbow_forward.1} parent=43 // pred_fallthru
          _
      $region44: #{cbow_forward.1} parent=5 // pred_fallthru
        _
    $region6: #{cbow_forward.1} parent=1 // loop_footer
      %s17 = sadd.s32 1, %s13
    $region7: #{cbow_forward.1} parent=1 // loop_footer_branch
      %12 = sbr.rel target = $region3
    $region8: #{cbow_forward.1} parent=1 // loop_exit
      _
    %8747 = vsyncpa [#allocation3], 1
    %s8748 = scalar_lea.sflag [#allocation3], 1
    %8749 = vsyncpa %s8748, 1

</llo_original>
